<compile_context>
chip_gen: v5e
topology: v5e:2x2
jax: 0.10.0
libtpu: 0.0.40
codegen_flags: <defaults>
</compile_context>

<pallas_src>
import functools

import numpy as np
import jax
import jax.numpy as jnp
from jax import lax
from jax.experimental import pallas as pl
from jax.experimental.pallas import tpu as pltpu

_TAIL = 16  # tail padding so every shifted flat slice stays in bounds


def _flat_dims(tile_h, w):
    """Derived sizes of the flat (row-stride Wp) tile layout."""
    wp = w + 4                        # padded row stride
    lx = (tile_h + 4) * wp + _TAIL    # flat padded input tile length
    l1 = (tile_h + 2) * wp + 8        # conv1 output length (incl. garbage cols)
    l2 = tile_h * wp                  # conv2 / output length (incl. garbage cols)
    return wp, lx, l1, l2


# --------------------------------------------------------------------------
# Fused residual-block kernel (one batch element x one row tile per step).
# The padded spatial tile arrives flattened to (Lx, Cin): rows laid out
# back-to-back with stride Wp, so every 3x3 tap is a contiguous row slice and
# each conv is 9 accumulated MXU matmuls -- no im2col, no in-kernel reshapes.
# The per-row "garbage" columns produced by the flat trick are masked out of
# h1 (reproducing conv2's zero SAME padding) and stripped from the output.
# When `fuse_upsample` is set (last block only) the epilogue also writes the
# four nearest-neighbour replicas, so no separate resize kernel is needed.
# --------------------------------------------------------------------------
def _res_block_kernel(*refs, th, W, has_proj, fuse_upsample):
    if has_proj:
        (x_ref, m_ref, w1_ref, b1_ref, w2_ref, b2_ref, ws_ref, bs_ref,
         o_ref, x_scr, h1_scr, res_scr) = refs
    else:
        (x_ref, m_ref, w1_ref, b1_ref, w2_ref, b2_ref,
         o_ref, x_scr, h1_scr, res_scr) = refs

    wp, _, l1, l2 = _flat_dims(th, W)
    cmid = w1_ref.shape[-1]
    cout = w2_ref.shape[-1]

    # stage the bf16 tile as f32 in VMEM; all shifted slices below read f32.
    x_scr[...] = x_ref[...].astype(jnp.float32)

    # ---- conv1 (3x3, SAME) as 9 shifted matmuls, bf16 MXU / f32 accumulate ----
    acc1 = jnp.zeros((l1, cmid), jnp.float32)
    for dy in range(3):
        for dx in range(3):
            s = dy * wp + dx
            tap = x_scr[s:s + l1, :].astype(jnp.bfloat16)
            acc1 = acc1 + jnp.dot(tap, w1_ref[dy * 3 + dx],
                                  preferred_element_type=jnp.float32)
    acc1 = acc1 + b1_ref[...]

    # SiLU = x * sigmoid(x); reciprocal goes to the EUP slot.
    h1 = acc1 * pl.reciprocal(1.0 + jnp.exp(-acc1), approx=True)
    # mask positions outside the valid image (== conv2's zero SAME padding).
    h1_scr[...] = h1 * m_ref[...]

    # ---- conv2 (3x3, SAME) ----
    acc2 = jnp.zeros((l2, cout), jnp.float32)
    for dy in range(3):
        for dx in range(3):
            s = dy * wp + dx
            tap = h1_scr[s:s + l2, :].astype(jnp.bfloat16)
            acc2 = acc2 + jnp.dot(tap, w2_ref[dy * 3 + dx],
                                  preferred_element_type=jnp.float32)
    acc2 = acc2 + b2_ref[...]

    # ---- skip connection + residual add (f32) ----
    xc = x_scr[2 * wp + 2:2 * wp + 2 + l2, :]            # tile center, (L2, Cin)
    if has_proj:
        skip = jnp.dot(xc.astype(jnp.bfloat16), ws_ref[...],
                       preferred_element_type=jnp.float32) + bs_ref[...]
    else:
        skip = xc                                        # identity skip: no matmul
    res_scr[...] = acc2 + skip

    if fuse_upsample:
        # last block: strip garbage columns and write the 2x2 nearest-neighbour
        # replicas directly (f32). Host only does one transpose+reshape to NCHW.
        for y in range(th):
            row = res_scr[y * wp:y * wp + W, :].astype(o_ref.dtype)
            o_ref[0, 0, y] = row
            o_ref[0, 1, y] = row
            o_ref[1, 0, y] = row
            o_ref[1, 1, y] = row
    else:
        # strip garbage columns -> clean (tile_h, W, Cout) bf16 output tile
        for y in range(th):
            o_ref[y] = res_scr[y * wp:y * wp + W, :].astype(o_ref.dtype)


# ------------------------------ host-side glue ------------------------------

def _pick_tile_h(h, target):
    th = max(1, min(target, h))
    while h % th:
        th -= 1
    return th


def _to_tiles(a, tile_h):
    """(N, H, W, C) -> flat, 2-padded, halo'd row tiles (N, T, Lx, C) in bf16."""
    n, h, w, c = a.shape
    t_cnt = h // tile_h
    wp, lx, _, _ = _flat_dims(tile_h, w)
    ap = jnp.pad(a, ((0, 0), (2, 2), (2, 2), (0, 0)))
    wins = jnp.stack(
        [ap[:, t * tile_h:t * tile_h + tile_h + 4] for t in range(t_cnt)], axis=1)
    flat = wins.reshape(n, t_cnt, (tile_h + 4) * wp, c)
    flat = jnp.pad(flat, ((0, 0), (0, 0), (0, _TAIL), (0, 0)))
    assert flat.shape[2] == lx
    return flat.astype(jnp.bfloat16)


def _h1_mask(t_cnt, tile_h, w, h):
    """Per-row-tile validity mask for the extended conv1 output (f32 0/1)."""
    wp, _, l1, _ = _flat_dims(tile_h, w)
    idx = np.arange(l1)
    col = idx % wp
    row = idx // wp
    masks = []
    for t in range(t_cnt):
        grow = t * tile_h + row - 1
        masks.append((col >= 1) & (col <= w) & (grow >= 0) & (grow < h))
    return jnp.asarray(np.stack(masks)[..., None].astype(np.float32))  # (T, L1, 1)


def _residual_block(tiles, mask, p, *, tile_h, W, H, fuse_upsample=False):
    n, t_cnt, lx, cin = tiles.shape
    cmid = p["w1f"].shape[-1]
    cout = p["w2f"].shape[-1]
    has_proj = p["wsf"] is not None
    if not has_proj:
        assert cin == cout
    wp, lx_chk, l1, l2 = _flat_dims(tile_h, W)
    assert lx == lx_chk

    kern = functools.partial(_res_block_kernel, th=tile_h, W=W,
                             has_proj=has_proj, fuse_upsample=fuse_upsample)

    in_specs = [
        pl.BlockSpec((None, None, lx, cin), lambda i, t: (i, t, 0, 0)),
        pl.BlockSpec((None, l1, 1), lambda i, t: (t, 0, 0)),
        pl.BlockSpec((9, cin, cmid), lambda i, t: (0, 0, 0)),
        pl.BlockSpec((1, cmid), lambda i, t: (0, 0)),
        pl.BlockSpec((9, cmid, cout), lambda i, t: (0, 0, 0)),
        pl.BlockSpec((1, cout), lambda i, t: (0, 0)),
    ]
    args = [tiles, mask, p["w1f"], p["b1f"], p["w2f"], p["b2f"]]
    if has_proj:
        in_specs += [pl.BlockSpec((cin, cout), lambda i, t: (0, 0)),
                     pl.BlockSpec((1, cout), lambda i, t: (0, 0))]
        args += [p["wsf"], p["bsf"]]

    if fuse_upsample:
        # rep[n, di, dj, y, x, c] == block_out[n, y, x, c] for all (di, dj)
        out_shape = jax.ShapeDtypeStruct((n, 2, 2, H, W, cout), jnp.float32)
        out_specs = pl.BlockSpec((None, 2, 2, tile_h, W, cout),
                                 lambda i, t: (i, 0, 0, t, 0, 0))
        out_bytes = n * 4 * H * W * cout * 4
    else:
        out_shape = jax.ShapeDtypeStruct((n, H, W, cout), jnp.bfloat16)
        out_specs = pl.BlockSpec((None, tile_h, W, cout), lambda i, t: (i, t, 0, 0))
        out_bytes = n * H * W * cout * 2

    flops = 2 * n * t_cnt * (l1 * 9 * cin * cmid + l2 * 9 * cmid * cout
                             + (l2 * cin * cout if has_proj else 0))
    bytes_accessed = int(tiles.size * 2 + mask.size * 4 + out_bytes
                         + sum(int(a.size) * a.dtype.itemsize for a in args[2:]))

    return pl.pallas_call(
        kern,
        out_shape=out_shape,
        grid=(n, t_cnt),
        in_specs=in_specs,
        out_specs=out_specs,
        scratch_shapes=[pltpu.VMEM((lx, cin), jnp.float32),
                        pltpu.VMEM((l1, cmid), jnp.float32),
                        pltpu.VMEM((l2, cout), jnp.float32)],
        compiler_params=pltpu.CompilerParams(
            dimension_semantics=("parallel", "parallel")),
        cost_estimate=pl.CostEstimate(flops=flops,
                                      transcendentals=n * t_cnt * l1 * cmid,
                                      bytes_accessed=bytes_accessed),
    )(*args)


# -------------------------------- the module --------------------------------

class ResizeResidualLayer:
    """JAX/Pallas port of ResizeResidualLayerABC (concrete instantiation)."""

    def __init__(self, scale_factor, in_channels, out_channels, n_blocks=2,
                 tile_h=8, key=None):
        # TODO(synk): only integer scale_factor == 2 (nearest upsample) implemented.
        assert scale_factor == 2, "only nearest-neighbor x2 resize implemented"
        self.scale_factor = scale_factor
        self.in_channels = in_channels
        self.out_channels = out_channels
        self.n_blocks = n_blocks
        self.tile_h = tile_h  # row-tile height; tune per generation VMEM for real sizes
        key = jax.random.PRNGKey(0) if key is None else key

        self.blocks = []
        for i in range(n_blocks):
            cin = in_channels if i == 0 else out_channels
            key, k1, k2, k3 = jax.random.split(key, 4)
            w1 = 0.1 * jax.random.normal(k1, (3, 3, cin, out_channels), jnp.float32)
            b1 = jnp.zeros((out_channels,), jnp.float32)
            w2 = 0.1 * jax.random.normal(k2, (3, 3, out_channels, out_channels),
                                         jnp.float32)
            b2 = jnp.zeros((out_channels,), jnp.float32)
            blk = dict(
                w1=w1, b1=b1, w2=w2, b2=b2,
                w1f=w1.reshape(9, cin, out_channels).astype(jnp.bfloat16),
                b1f=b1.reshape(1, out_channels),
                w2f=w2.reshape(9, out_channels, out_channels).astype(jnp.bfloat16),
                b2f=b2.reshape(1, out_channels),
            )
            if cin != out_channels:
                wskip = 0.1 * jax.random.normal(k3, (cin, out_channels), jnp.float32)
                bskip = jnp.zeros((out_channels,), jnp.float32)
                blk.update(wskip=wskip, bskip=bskip,
                           wsf=wskip.astype(jnp.bfloat16),
                           bsf=bskip.reshape(1, out_channels))
            else:
                blk.update(wskip=None, bskip=None, wsf=None, bsf=None)  # identity skip
            self.blocks.append(blk)

    def __call__(self, x_nchw):
        # public API matches PyTorch NCHW; compute in NHWC (channels on lanes)
        a = jnp.transpose(x_nchw, (0, 2, 3, 1))
        n, h, w, _ = a.shape
        th = _pick_tile_h(h, self.tile_h)
        mask = _h1_mask(h // th, th, w, h)
        nb = len(self.blocks)
        for bi, p in enumerate(self.blocks):
            tiles = _to_tiles(a, th)
            a = _residual_block(tiles, mask, p, tile_h=th, W=w, H=h,
                                fuse_upsample=(bi == nb - 1))
        # a = rep[n, di, dj, Y, x, c] (f32) from the fused last block.
        # rep -> out[n, c, 2Y+di, 2x+dj]: one transpose + (free) reshape to NCHW.
        cout = a.shape[-1]
        return a.transpose(0, 5, 3, 1, 4, 2).reshape(n, cout, 2 * h, 2 * w)


# ------------------------------- pure-JAX ref --------------------------------

def _ref_forward(x_nchw, blocks):
    h = jnp.transpose(x_nchw, (0, 2, 3, 1)).astype(jnp.float32)
    dn = ("NHWC", "HWIO", "NHWC")
    for p in blocks:
        a1 = lax.conv_general_dilated(h, p["w1"], (1, 1), "SAME",
                                      dimension_numbers=dn) + p["b1"]
        h1 = a1 * jax.nn.sigmoid(a1)
        h2 = lax.conv_general_dilated(h1, p["w2"], (1, 1), "SAME",
                                      dimension_numbers=dn) + p["b2"]
        if p["wskip"] is not None:
            skip = jnp.einsum("nhwc,co->nhwo", h, p["wskip"]) + p["bskip"]
        else:
            skip = h
        h = h2 + skip
    h = jnp.repeat(jnp.repeat(h, 2, axis=1), 2, axis=2)
    return jnp.transpose(h, (0, 3, 1, 2))


if __name__ == "__main__":
    N, C_IN, C_OUT, H, W = 2, 4, 8, 16, 16
    key = jax.random.PRNGKey(0)
    kx, kp = jax.random.split(key)
    x = jax.random.normal(kx, (N, C_IN, H, W), jnp.float32)  # NCHW like PyTorch

    layer = ResizeResidualLayer(scale_factor=2, in_channels=C_IN,
                                out_channels=C_OUT, n_blocks=2, tile_h=8, key=kp)

    fwd = jax.jit(lambda v: layer(v))
    y = jax.block_until_ready(fwd(x))
    assert y.shape == (N, C_OUT, 2 * H, 2 * W), y.shape

    y_ref = _ref_forward(x, layer.blocks)
    max_err = float(jnp.max(jnp.abs(y - y_ref)))
    # bf16 MXU matmuls + bf16 inter-block activations => loosened tolerance
    assert jnp.allclose(y, y_ref, atol=5e-2, rtol=5e-2), max_err

    print("KERNEL_OK")
</pallas_src>

<mosaic_0001>
module attributes {stable_mosaic.version = 11 : i64} {
  func.func @_res_block_kernel(%arg0: i32, %arg1: i32, %arg2: memref<1x1x256x4xbf16, #tpu.memory_space<vmem>>, %arg3: memref<1x208x1xf32, #tpu.memory_space<vmem>>, %arg4: memref<9x4x8xbf16, #tpu.memory_space<vmem>>, %arg5: memref<1x8xf32, #tpu.memory_space<vmem>>, %arg6: memref<9x8x8xbf16, #tpu.memory_space<vmem>>, %arg7: memref<1x8xf32, #tpu.memory_space<vmem>>, %arg8: memref<4x8xbf16, #tpu.memory_space<vmem>>, %arg9: memref<1x8xf32, #tpu.memory_space<vmem>>, %arg10: memref<1x8x16x8xbf16, #tpu.memory_space<vmem>>, %arg11: memref<256x4xf32, #tpu.memory_space<vmem>>, %arg12: memref<208x8xf32, #tpu.memory_space<vmem>>, %arg13: memref<160x8xf32, #tpu.memory_space<vmem>>) attributes {dimension_semantics = [#tpu.dimension_semantics<parallel>, #tpu.dimension_semantics<parallel>], iteration_bounds = array<i64: 2, 2>, scalar_prefetch = 0 : i64, scratch_operands = 3 : i64, tpu.core_type = #tpu.core_type<tc>, window_params = [{transform_indices = @transform_0, window_bounds = array<i64: 1, 1, 256, 4>}, {transform_indices = @transform_1, window_bounds = array<i64: 1, 208, 1>}, {pipeline_mode = #tpu.pipeline_mode<synchronous>, transform_indices = @transform_2, window_bounds = array<i64: 9, 4, 8>}, {pipeline_mode = #tpu.pipeline_mode<synchronous>, transform_indices = @transform_3, window_bounds = array<i64: 1, 8>}, {pipeline_mode = #tpu.pipeline_mode<synchronous>, transform_indices = @transform_4, window_bounds = array<i64: 9, 8, 8>}, {pipeline_mode = #tpu.pipeline_mode<synchronous>, transform_indices = @transform_5, window_bounds = array<i64: 1, 8>}, {pipeline_mode = #tpu.pipeline_mode<synchronous>, transform_indices = @transform_6, window_bounds = array<i64: 4, 8>}, {pipeline_mode = #tpu.pipeline_mode<synchronous>, transform_indices = @transform_7, window_bounds = array<i64: 1, 8>}, {transform_indices = @transform_8, window_bounds = array<i64: 1, 8, 16, 8>}]} {
    %c0 = arith.constant 0 : index
    %c0_0 = arith.constant 0 : index
    %c0_1 = arith.constant 0 : index
    %c0_2 = arith.constant 0 : index
    %0 = vector.load %arg2[%c0, %c0_0, %c0_1, %c0_2] : memref<1x1x256x4xbf16, #tpu.memory_space<vmem>>, vector<1x1x256x4xbf16>
    %1 = vector.shape_cast %0 : vector<1x1x256x4xbf16> to vector<256x4xbf16>
    %2 = arith.extf %1 : vector<256x4xbf16> to vector<256x4xf32>
    %c0_3 = arith.constant 0 : index
    %c0_4 = arith.constant 0 : index
    %3 = vector.load %arg11[%c0_3, %c0_4] : memref<256x4xf32, #tpu.memory_space<vmem>>, vector<256x4xf32>
    tpu.vector_store %arg11[%c0_3, %c0_4], %2 {strides = array<i32>} : memref<256x4xf32, #tpu.memory_space<vmem>>, vector<256x4xf32>,
    %cst = arith.constant 0.000000e+00 : f32
    %4 = vector.broadcast %cst : f32 to vector<208x8xf32>
    %c0_5 = arith.constant 0 : index
    %c0_6 = arith.constant 0 : index
    %5 = vector.load %arg11[%c0_5, %c0_6] : memref<256x4xf32, #tpu.memory_space<vmem>>, vector<208x4xf32>
    %6 = arith.truncf %5 : vector<208x4xf32> to vector<208x4xbf16>
    %c0_7 = arith.constant 0 : index
    %c0_8 = arith.constant 0 : index
    %c0_9 = arith.constant 0 : index
    %7 = vector.load %arg4[%c0_7, %c0_8, %c0_9] : memref<9x4x8xbf16, #tpu.memory_space<vmem>>, vector<1x4x8xbf16>
    %8 = vector.shape_cast %7 : vector<1x4x8xbf16> to vector<4x8xbf16>
    %cst_10 = arith.constant dense<0.000000e+00> : vector<208x8xf32>
    %9 = tpu.matmul %6, %8, %cst_10 {dimension_numbers = #tpu.dot_dimension_numbers<[1], [0], [0], [1], [0, 0, 1, 1], [], []>} : vector<208x4xbf16>, vector<4x8xbf16>, vector<208x8xf32> -> vector<208x8xf32>
    %10 = arith.addf %4, %9 : vector<208x8xf32>
    %c1 = arith.constant 1 : index
    %c0_11 = arith.constant 0 : index
    %11 = vector.load %arg11[%c1, %c0_11] : memref<256x4xf32, #tpu.memory_space<vmem>>, vector<208x4xf32>
    %12 = arith.truncf %11 : vector<208x4xf32> to vector<208x4xbf16>
    %c1_12 = arith.constant 1 : index
    %c0_13 = arith.constant 0 : index
    %c0_14 = arith.constant 0 : index
    %13 = vector.load %arg4[%c1_12, %c0_13, %c0_14] : memref<9x4x8xbf16, #tpu.memory_space<vmem>>, vector<1x4x8xbf16>
    %14 = vector.shape_cast %13 : vector<1x4x8xbf16> to vector<4x8xbf16>
    %cst_15 = arith.constant dense<0.000000e+00> : vector<208x8xf32>
    %15 = tpu.matmul %12, %14, %cst_15 {dimension_numbers = #tpu.dot_dimension_numbers<[1], [0], [0], [1], [0, 0, 1, 1], [], []>} : vector<208x4xbf16>, vector<4x8xbf16>, vector<208x8xf32> -> vector<208x8xf32>
    %16 = arith.addf %10, %15 : vector<208x8xf32>
    %c2 = arith.constant 2 : index
    %c0_16 = arith.constant 0 : index
    %17 = vector.load %arg11[%c2, %c0_16] : memref<256x4xf32, #tpu.memory_space<vmem>>, vector<208x4xf32>
    %18 = arith.truncf %17 : vector<208x4xf32> to vector<208x4xbf16>
    %c2_17 = arith.constant 2 : index
    %c0_18 = arith.constant 0 : index
    %c0_19 = arith.constant 0 : index
    %19 = vector.load %arg4[%c2_17, %c0_18, %c0_19] : memref<9x4x8xbf16, #tpu.memory_space<vmem>>, vector<1x4x8xbf16>
    %20 = vector.shape_cast %19 : vector<1x4x8xbf16> to vector<4x8xbf16>
    %cst_20 = arith.constant dense<0.000000e+00> : vector<208x8xf32>
    %21 = tpu.matmul %18, %20, %cst_20 {dimension_numbers = #tpu.dot_dimension_numbers<[1], [0], [0], [1], [0, 0, 1, 1], [], []>} : vector<208x4xbf16>, vector<4x8xbf16>, vector<208x8xf32> -> vector<208x8xf32>
    %22 = arith.addf %16, %21 : vector<208x8xf32>
    %c20 = arith.constant 20 : index
    %c0_21 = arith.constant 0 : index
    %23 = vector.load %arg11[%c20, %c0_21] : memref<256x4xf32, #tpu.memory_space<vmem>>, vector<208x4xf32>
    %24 = arith.truncf %23 : vector<208x4xf32> to vector<208x4xbf16>
    %c3 = arith.constant 3 : index
    %c0_22 = arith.constant 0 : index
    %c0_23 = arith.constant 0 : index
    %25 = vector.load %arg4[%c3, %c0_22, %c0_23] : memref<9x4x8xbf16, #tpu.memory_space<vmem>>, vector<1x4x8xbf16>
    %26 = vector.shape_cast %25 : vector<1x4x8xbf16> to vector<4x8xbf16>
    %cst_24 = arith.constant dense<0.000000e+00> : vector<208x8xf32>
    %27 = tpu.matmul %24, %26, %cst_24 {dimension_numbers = #tpu.dot_dimension_numbers<[1], [0], [0], [1], [0, 0, 1, 1], [], []>} : vector<208x4xbf16>, vector<4x8xbf16>, vector<208x8xf32> -> vector<208x8xf32>
    %28 = arith.addf %22, %27 : vector<208x8xf32>
    %c21 = arith.constant 21 : index
    %c0_25 = arith.constant 0 : index
    %29 = vector.load %arg11[%c21, %c0_25] : memref<256x4xf32, #tpu.memory_space<vmem>>, vector<208x4xf32>
    %30 = arith.truncf %29 : vector<208x4xf32> to vector<208x4xbf16>
    %c4 = arith.constant 4 : index
    %c0_26 = arith.constant 0 : index
    %c0_27 = arith.constant 0 : index
    %31 = vector.load %arg4[%c4, %c0_26, %c0_27] : memref<9x4x8xbf16, #tpu.memory_space<vmem>>, vector<1x4x8xbf16>
    %32 = vector.shape_cast %31 : vector<1x4x8xbf16> to vector<4x8xbf16>
    %cst_28 = arith.constant dense<0.000000e+00> : vector<208x8xf32>
    %33 = tpu.matmul %30, %32, %cst_28 {dimension_numbers = #tpu.dot_dimension_numbers<[1], [0], [0], [1], [0, 0, 1, 1], [], []>} : vector<208x4xbf16>, vector<4x8xbf16>, vector<208x8xf32> -> vector<208x8xf32>
    %34 = arith.addf %28, %33 : vector<208x8xf32>
    %c22 = arith.constant 22 : index
    %c0_29 = arith.constant 0 : index
    %35 = vector.load %arg11[%c22, %c0_29] : memref<256x4xf32, #tpu.memory_space<vmem>>, vector<208x4xf32>
    %36 = arith.truncf %35 : vector<208x4xf32> to vector<208x4xbf16>
    %c5 = arith.constant 5 : index
    %c0_30 = arith.constant 0 : index
    %c0_31 = arith.constant 0 : index
    %37 = vector.load %arg4[%c5, %c0_30, %c0_31] : memref<9x4x8xbf16, #tpu.memory_space<vmem>>, vector<1x4x8xbf16>
    %38 = vector.shape_cast %37 : vector<1x4x8xbf16> to vector<4x8xbf16>
    %cst_32 = arith.constant dense<0.000000e+00> : vector<208x8xf32>
    %39 = tpu.matmul %36, %38, %cst_32 {dimension_numbers = #tpu.dot_dimension_numbers<[1], [0], [0], [1], [0, 0, 1, 1], [], []>} : vector<208x4xbf16>, vector<4x8xbf16>, vector<208x8xf32> -> vector<208x8xf32>
    %40 = arith.addf %34, %39 : vector<208x8xf32>
    %c40 = arith.constant 40 : index
    %c0_33 = arith.constant 0 : index
    %41 = vector.load %arg11[%c40, %c0_33] : memref<256x4xf32, #tpu.memory_space<vmem>>, vector<208x4xf32>
    %42 = arith.truncf %41 : vector<208x4xf32> to vector<208x4xbf16>
    %c6 = arith.constant 6 : index
    %c0_34 = arith.constant 0 : index
    %c0_35 = arith.constant 0 : index
    %43 = vector.load %arg4[%c6, %c0_34, %c0_35] : memref<9x4x8xbf16, #tpu.memory_space<vmem>>, vector<1x4x8xbf16>
    %44 = vector.shape_cast %43 : vector<1x4x8xbf16> to vector<4x8xbf16>
    %cst_36 = arith.constant dense<0.000000e+00> : vector<208x8xf32>
    %45 = tpu.matmul %42, %44, %cst_36 {dimension_numbers = #tpu.dot_dimension_numbers<[1], [0], [0], [1], [0, 0, 1, 1], [], []>} : vector<208x4xbf16>, vector<4x8xbf16>, vector<208x8xf32> -> vector<208x8xf32>
    %46 = arith.addf %40, %45 : vector<208x8xf32>
    %c41 = arith.constant 41 : index
    %c0_37 = arith.constant 0 : index
    %47 = vector.load %arg11[%c41, %c0_37] : memref<256x4xf32, #tpu.memory_space<vmem>>, vector<208x4xf32>
    %48 = arith.truncf %47 : vector<208x4xf32> to vector<208x4xbf16>
    %c7 = arith.constant 7 : index
    %c0_38 = arith.constant 0 : index
    %c0_39 = arith.constant 0 : index
    %49 = vector.load %arg4[%c7, %c0_38, %c0_39] : memref<9x4x8xbf16, #tpu.memory_space<vmem>>, vector<1x4x8xbf16>
    %50 = vector.shape_cast %49 : vector<1x4x8xbf16> to vector<4x8xbf16>
    %cst_40 = arith.constant dense<0.000000e+00> : vector<208x8xf32>
    %51 = tpu.matmul %48, %50, %cst_40 {dimension_numbers = #tpu.dot_dimension_numbers<[1], [0], [0], [1], [0, 0, 1, 1], [], []>} : vector<208x4xbf16>, vector<4x8xbf16>, vector<208x8xf32> -> vector<208x8xf32>
    %52 = arith.addf %46, %51 : vector<208x8xf32>
    %c42 = arith.constant 42 : index
    %c0_41 = arith.constant 0 : index
    %53 = vector.load %arg11[%c42, %c0_41] : memref<256x4xf32, #tpu.memory_space<vmem>>, vector<208x4xf32>
    %54 = arith.truncf %53 : vector<208x4xf32> to vector<208x4xbf16>
    %c8 = arith.constant 8 : index
    %c0_42 = arith.constant 0 : index
    %c0_43 = arith.constant 0 : index
    %55 = vector.load %arg4[%c8, %c0_42, %c0_43] : memref<9x4x8xbf16, #tpu.memory_space<vmem>>, vector<1x4x8xbf16>
    %56 = vector.shape_cast %55 : vector<1x4x8xbf16> to vector<4x8xbf16>
    %cst_44 = arith.constant dense<0.000000e+00> : vector<208x8xf32>
    %57 = tpu.matmul %54, %56, %cst_44 {dimension_numbers = #tpu.dot_dimension_numbers<[1], [0], [0], [1], [0, 0, 1, 1], [], []>} : vector<208x4xbf16>, vector<4x8xbf16>, vector<208x8xf32> -> vector<208x8xf32>
    %58 = arith.addf %52, %57 : vector<208x8xf32>
    %c0_45 = arith.constant 0 : index
    %c0_46 = arith.constant 0 : index
    %59 = vector.load %arg5[%c0_45, %c0_46] : memref<1x8xf32, #tpu.memory_space<vmem>>, vector<1x8xf32>
    %60 = vector.broadcast %59 : vector<1x8xf32> to vector<208x8xf32>
    %61 = arith.addf %58, %60 : vector<208x8xf32>
    %cst_47 = arith.constant 0.000000e+00 : f32
    %62 = vector.broadcast %cst_47 : f32 to vector<208x8xf32>
    %63 = arith.subf %62, %61 : vector<208x8xf32>
    %64 = math.exp %63 : vector<208x8xf32>
    %cst_48 = arith.constant 1.000000e+00 : f32
    %65 = vector.broadcast %cst_48 : f32 to vector<208x8xf32>
    %66 = arith.addf %65, %64 : vector<208x8xf32>
    %67 = tpu.reciprocal %66 {approx = true} : vector<208x8xf32> -> vector<208x8xf32>
    %68 = arith.mulf %61, %67 : vector<208x8xf32>
    %c0_49 = arith.constant 0 : index
    %c0_50 = arith.constant 0 : index
    %c0_51 = arith.constant 0 : index
    %69 = vector.load %arg3[%c0_49, %c0_50, %c0_51] : memref<1x208x1xf32, #tpu.memory_space<vmem>>, vector<1x208x1xf32>
    %70 = vector.shape_cast %69 : vector<1x208x1xf32> to vector<208x1xf32>
    %71 = vector.broadcast %70 : vector<208x1xf32> to vector<208x8xf32>
    %72 = arith.mulf %68, %71 : vector<208x8xf32>
    %c0_52 = arith.constant 0 : index
    %c0_53 = arith.constant 0 : index
    %73 = vector.load %arg12[%c0_52, %c0_53] : memref<208x8xf32, #tpu.memory_space<vmem>>, vector<208x8xf32>
    tpu.vector_store %arg12[%c0_52, %c0_53], %72 {strides = array<i32>} : memref<208x8xf32, #tpu.memory_space<vmem>>, vector<208x8xf32>,
    %cst_54 = arith.constant 0.000000e+00 : f32
    %74 = vector.broadcast %cst_54 : f32 to vector<160x8xf32>
    %c0_55 = arith.constant 0 : index
    %c0_56 = arith.constant 0 : index
    %75 = vector.load %arg12[%c0_55, %c0_56] : memref<208x8xf32, #tpu.memory_space<vmem>>, vector<160x8xf32>
    %76 = arith.truncf %75 : vector<160x8xf32> to vector<160x8xbf16>
    %c0_57 = arith.constant 0 : index
    %c0_58 = arith.constant 0 : index
    %c0_59 = arith.constant 0 : index
    %77 = vector.load %arg6[%c0_57, %c0_58, %c0_59] : memref<9x8x8xbf16, #tpu.memory_space<vmem>>, vector<1x8x8xbf16>
    %78 = vector.shape_cast %77 : vector<1x8x8xbf16> to vector<8x8xbf16>
    %cst_60 = arith.constant dense<0.000000e+00> : vector<160x8xf32>
    %79 = tpu.matmul %76, %78, %cst_60 {dimension_numbers = #tpu.dot_dimension_numbers<[1], [0], [0], [1], [0, 0, 1, 1], [], []>} : vector<160x8xbf16>, vector<8x8xbf16>, vector<160x8xf32> -> vector<160x8xf32>
    %80 = arith.addf %74, %79 : vector<160x8xf32>
    %c1_61 = arith.constant 1 : index
    %c0_62 = arith.constant 0 : index
    %81 = vector.load %arg12[%c1_61, %c0_62] : memref<208x8xf32, #tpu.memory_space<vmem>>, vector<160x8xf32>
    %82 = arith.truncf %81 : vector<160x8xf32> to vector<160x8xbf16>
    %c1_63 = arith.constant 1 : index
    %c0_64 = arith.constant 0 : index
    %c0_65 = arith.constant 0 : index
    %83 = vector.load %arg6[%c1_63, %c0_64, %c0_65] : memref<9x8x8xbf16, #tpu.memory_space<vmem>>, vector<1x8x8xbf16>
    %84 = vector.shape_cast %83 : vector<1x8x8xbf16> to vector<8x8xbf16>
    %cst_66 = arith.constant dense<0.000000e+00> : vector<160x8xf32>
    %85 = tpu.matmul %82, %84, %cst_66 {dimension_numbers = #tpu.dot_dimension_numbers<[1], [0], [0], [1], [0, 0, 1, 1], [], []>} : vector<160x8xbf16>, vector<8x8xbf16>, vector<160x8xf32> -> vector<160x8xf32>
    %86 = arith.addf %80, %85 : vector<160x8xf32>
    %c2_67 = arith.constant 2 : index
    %c0_68 = arith.constant 0 : index
    %87 = vector.load %arg12[%c2_67, %c0_68] : memref<208x8xf32, #tpu.memory_space<vmem>>, vector<160x8xf32>
    %88 = arith.truncf %87 : vector<160x8xf32> to vector<160x8xbf16>
    %c2_69 = arith.constant 2 : index
    %c0_70 = arith.constant 0 : index
    %c0_71 = arith.constant 0 : index
    %89 = vector.load %arg6[%c2_69, %c0_70, %c0_71] : memref<9x8x8xbf16, #tpu.memory_space<vmem>>, vector<1x8x8xbf16>
    %90 = vector.shape_cast %89 : vector<1x8x8xbf16> to vector<8x8xbf16>
    %cst_72 = arith.constant dense<0.000000e+00> : vector<160x8xf32>
    %91 = tpu.matmul %88, %90, %cst_72 {dimension_numbers = #tpu.dot_dimension_numbers<[1], [0], [0], [1], [0, 0, 1, 1], [], []>} : vector<160x8xbf16>, vector<8x8xbf16>, vector<160x8xf32> -> vector<160x8xf32>
    %92 = arith.addf %86, %91 : vector<160x8xf32>
    %c20_73 = arith.constant 20 : index
    %c0_74 = arith.constant 0 : index
    %93 = vector.load %arg12[%c20_73, %c0_74] : memref<208x8xf32, #tpu.memory_space<vmem>>, vector<160x8xf32>
    %94 = arith.truncf %93 : vector<160x8xf32> to vector<160x8xbf16>
    %c3_75 = arith.constant 3 : index
    %c0_76 = arith.constant 0 : index
    %c0_77 = arith.constant 0 : index
    %95 = vector.load %arg6[%c3_75, %c0_76, %c0_77] : memref<9x8x8xbf16, #tpu.memory_space<vmem>>, vector<1x8x8xbf16>
    %96 = vector.shape_cast %95 : vector<1x8x8xbf16> to vector<8x8xbf16>
    %cst_78 = arith.constant dense<0.000000e+00> : vector<160x8xf32>
    %97 = tpu.matmul %94, %96, %cst_78 {dimension_numbers = #tpu.dot_dimension_numbers<[1], [0], [0], [1], [0, 0, 1, 1], [], []>} : vector<160x8xbf16>, vector<8x8xbf16>, vector<160x8xf32> -> vector<160x8xf32>
    %98 = arith.addf %92, %97 : vector<160x8xf32>
    %c21_79 = arith.constant 21 : index
    %c0_80 = arith.constant 0 : index
    %99 = vector.load %arg12[%c21_79, %c0_80] : memref<208x8xf32, #tpu.memory_space<vmem>>, vector<160x8xf32>
    %100 = arith.truncf %99 : vector<160x8xf32> to vector<160x8xbf16>
    %c4_81 = arith.constant 4 : index
    %c0_82 = arith.constant 0 : index
    %c0_83 = arith.constant 0 : index
    %101 = vector.load %arg6[%c4_81, %c0_82, %c0_83] : memref<9x8x8xbf16, #tpu.memory_space<vmem>>, vector<1x8x8xbf16>
    %102 = vector.shape_cast %101 : vector<1x8x8xbf16> to vector<8x8xbf16>
    %cst_84 = arith.constant dense<0.000000e+00> : vector<160x8xf32>
    %103 = tpu.matmul %100, %102, %cst_84 {dimension_numbers = #tpu.dot_dimension_numbers<[1], [0], [0], [1], [0, 0, 1, 1], [], []>} : vector<160x8xbf16>, vector<8x8xbf16>, vector<160x8xf32> -> vector<160x8xf32>
    %104 = arith.addf %98, %103 : vector<160x8xf32>
    %c22_85 = arith.constant 22 : index
    %c0_86 = arith.constant 0 : index
    %105 = vector.load %arg12[%c22_85, %c0_86] : memref<208x8xf32, #tpu.memory_space<vmem>>, vector<160x8xf32>
    %106 = arith.truncf %105 : vector<160x8xf32> to vector<160x8xbf16>
    %c5_87 = arith.constant 5 : index
    %c0_88 = arith.constant 0 : index
    %c0_89 = arith.constant 0 : index
    %107 = vector.load %arg6[%c5_87, %c0_88, %c0_89] : memref<9x8x8xbf16, #tpu.memory_space<vmem>>, vector<1x8x8xbf16>
    %108 = vector.shape_cast %107 : vector<1x8x8xbf16> to vector<8x8xbf16>
    %cst_90 = arith.constant dense<0.000000e+00> : vector<160x8xf32>
    %109 = tpu.matmul %106, %108, %cst_90 {dimension_numbers = #tpu.dot_dimension_numbers<[1], [0], [0], [1], [0, 0, 1, 1], [], []>} : vector<160x8xbf16>, vector<8x8xbf16>, vector<160x8xf32> -> vector<160x8xf32>
    %110 = arith.addf %104, %109 : vector<160x8xf32>
    %c40_91 = arith.constant 40 : index
    %c0_92 = arith.constant 0 : index
    %111 = vector.load %arg12[%c40_91, %c0_92] : memref<208x8xf32, #tpu.memory_space<vmem>>, vector<160x8xf32>
    %112 = arith.truncf %111 : vector<160x8xf32> to vector<160x8xbf16>
    %c6_93 = arith.constant 6 : index
    %c0_94 = arith.constant 0 : index
    %c0_95 = arith.constant 0 : index
    %113 = vector.load %arg6[%c6_93, %c0_94, %c0_95] : memref<9x8x8xbf16, #tpu.memory_space<vmem>>, vector<1x8x8xbf16>
    %114 = vector.shape_cast %113 : vector<1x8x8xbf16> to vector<8x8xbf16>
    %cst_96 = arith.constant dense<0.000000e+00> : vector<160x8xf32>
    %115 = tpu.matmul %112, %114, %cst_96 {dimension_numbers = #tpu.dot_dimension_numbers<[1], [0], [0], [1], [0, 0, 1, 1], [], []>} : vector<160x8xbf16>, vector<8x8xbf16>, vector<160x8xf32> -> vector<160x8xf32>
    %116 = arith.addf %110, %115 : vector<160x8xf32>
    %c41_97 = arith.constant 41 : index
    %c0_98 = arith.constant 0 : index
    %117 = vector.load %arg12[%c41_97, %c0_98] : memref<208x8xf32, #tpu.memory_space<vmem>>, vector<160x8xf32>
    %118 = arith.truncf %117 : vector<160x8xf32> to vector<160x8xbf16>
    %c7_99 = arith.constant 7 : index
    %c0_100 = arith.constant 0 : index
    %c0_101 = arith.constant 0 : index
    %119 = vector.load %arg6[%c7_99, %c0_100, %c0_101] : memref<9x8x8xbf16, #tpu.memory_space<vmem>>, vector<1x8x8xbf16>
    %120 = vector.shape_cast %119 : vector<1x8x8xbf16> to vector<8x8xbf16>
    %cst_102 = arith.constant dense<0.000000e+00> : vector<160x8xf32>
    %121 = tpu.matmul %118, %120, %cst_102 {dimension_numbers = #tpu.dot_dimension_numbers<[1], [0], [0], [1], [0, 0, 1, 1], [], []>} : vector<160x8xbf16>, vector<8x8xbf16>, vector<160x8xf32> -> vector<160x8xf32>
    %122 = arith.addf %116, %121 : vector<160x8xf32>
    %c42_103 = arith.constant 42 : index
    %c0_104 = arith.constant 0 : index
    %123 = vector.load %arg12[%c42_103, %c0_104] : memref<208x8xf32, #tpu.memory_space<vmem>>, vector<160x8xf32>
    %124 = arith.truncf %123 : vector<160x8xf32> to vector<160x8xbf16>
    %c8_105 = arith.constant 8 : index
    %c0_106 = arith.constant 0 : index
    %c0_107 = arith.constant 0 : index
    %125 = vector.load %arg6[%c8_105, %c0_106, %c0_107] : memref<9x8x8xbf16, #tpu.memory_space<vmem>>, vector<1x8x8xbf16>
    %126 = vector.shape_cast %125 : vector<1x8x8xbf16> to vector<8x8xbf16>
    %cst_108 = arith.constant dense<0.000000e+00> : vector<160x8xf32>
    %127 = tpu.matmul %124, %126, %cst_108 {dimension_numbers = #tpu.dot_dimension_numbers<[1], [0], [0], [1], [0, 0, 1, 1], [], []>} : vector<160x8xbf16>, vector<8x8xbf16>, vector<160x8xf32> -> vector<160x8xf32>
    %128 = arith.addf %122, %127 : vector<160x8xf32>
    %c0_109 = arith.constant 0 : index
    %c0_110 = arith.constant 0 : index
    %129 = vector.load %arg7[%c0_109, %c0_110] : memref<1x8xf32, #tpu.memory_space<vmem>>, vector<1x8xf32>
    %130 = vector.broadcast %129 : vector<1x8xf32> to vector<160x8xf32>
    %131 = arith.addf %128, %130 : vector<160x8xf32>
    %c42_111 = arith.constant 42 : index
    %c0_112 = arith.constant 0 : index
    %132 = vector.load %arg11[%c42_111, %c0_112] : memref<256x4xf32, #tpu.memory_space<vmem>>, vector<160x4xf32>
    %133 = arith.truncf %132 : vector<160x4xf32> to vector<160x4xbf16>
    %c0_113 = arith.constant 0 : index
    %c0_114 = arith.constant 0 : index
    %134 = vector.load %arg8[%c0_113, %c0_114] : memref<4x8xbf16, #tpu.memory_space<vmem>>, vector<4x8xbf16>
    %cst_115 = arith.constant dense<0.000000e+00> : vector<160x8xf32>
    %135 = tpu.matmul %133, %134, %cst_115 {dimension_numbers = #tpu.dot_dimension_numbers<[1], [0], [0], [1], [0, 0, 1, 1], [], []>} : vector<160x4xbf16>, vector<4x8xbf16>, vector<160x8xf32> -> vector<160x8xf32>
    %c0_116 = arith.constant 0 : index
    %c0_117 = arith.constant 0 : index
    %136 = vector.load %arg9[%c0_116, %c0_117] : memref<1x8xf32, #tpu.memory_space<vmem>>, vector<1x8xf32>
    %137 = vector.broadcast %136 : vector<1x8xf32> to vector<160x8xf32>
    %138 = arith.addf %135, %137 : vector<160x8xf32>
    %139 = arith.addf %131, %138 : vector<160x8xf32>
    %c0_118 = arith.constant 0 : index
    %c0_119 = arith.constant 0 : index
    %140 = vector.load %arg13[%c0_118, %c0_119] : memref<160x8xf32, #tpu.memory_space<vmem>>, vector<160x8xf32>
    tpu.vector_store %arg13[%c0_118, %c0_119], %139 {strides = array<i32>} : memref<160x8xf32, #tpu.memory_space<vmem>>, vector<160x8xf32>,
    %c0_120 = arith.constant 0 : index
    %c0_121 = arith.constant 0 : index
    %141 = vector.load %arg13[%c0_120, %c0_121] : memref<160x8xf32, #tpu.memory_space<vmem>>, vector<16x8xf32>
    %142 = arith.truncf %141 : vector<16x8xf32> to vector<16x8xbf16>
    %c0_122 = arith.constant 0 : index
    %c0_123 = arith.constant 0 : index
    %c0_124 = arith.constant 0 : index
    %c0_125 = arith.constant 0 : index
    %143 = vector.load %arg10[%c0_122, %c0_123, %c0_124, %c0_125] : memref<1x8x16x8xbf16, #tpu.memory_space<vmem>>, vector<1x1x16x8xbf16>
    %144 = vector.shape_cast %143 : vector<1x1x16x8xbf16> to vector<16x8xbf16>
    %145 = vector.shape_cast %142 : vector<16x8xbf16> to vector<1x1x16x8xbf16>
    tpu.vector_store %arg10[%c0_122, %c0_123, %c0_124, %c0_125], %145 {strides = array<i32>} : memref<1x8x16x8xbf16, #tpu.memory_space<vmem>>, vector<1x1x16x8xbf16>,
    %c20_126 = arith.constant 20 : index
    %c0_127 = arith.constant 0 : index
    %146 = vector.load %arg13[%c20_126, %c0_127] : memref<160x8xf32, #tpu.memory_space<vmem>>, vector<16x8xf32>
    %147 = arith.truncf %146 : vector<16x8xf32> to vector<16x8xbf16>
    %c0_128 = arith.constant 0 : index
    %c1_129 = arith.constant 1 : index
    %c0_130 = arith.constant 0 : index
    %c0_131 = arith.constant 0 : index
    %148 = vector.load %arg10[%c0_128, %c1_129, %c0_130, %c0_131] : memref<1x8x16x8xbf16, #tpu.memory_space<vmem>>, vector<1x1x16x8xbf16>
    %149 = vector.shape_cast %148 : vector<1x1x16x8xbf16> to vector<16x8xbf16>
    %150 = vector.shape_cast %147 : vector<16x8xbf16> to vector<1x1x16x8xbf16>
    tpu.vector_store %arg10[%c0_128, %c1_129, %c0_130, %c0_131], %150 {strides = array<i32>} : memref<1x8x16x8xbf16, #tpu.memory_space<vmem>>, vector<1x1x16x8xbf16>,
    %c40_132 = arith.constant 40 : index
    %c0_133 = arith.constant 0 : index
    %151 = vector.load %arg13[%c40_132, %c0_133] : memref<160x8xf32, #tpu.memory_space<vmem>>, vector<16x8xf32>
    %152 = arith.truncf %151 : vector<16x8xf32> to vector<16x8xbf16>
    %c0_134 = arith.constant 0 : index
    %c2_135 = arith.constant 2 : index
    %c0_136 = arith.constant 0 : index
    %c0_137 = arith.constant 0 : index
    %153 = vector.load %arg10[%c0_134, %c2_135, %c0_136, %c0_137] : memref<1x8x16x8xbf16, #tpu.memory_space<vmem>>, vector<1x1x16x8xbf16>
    %154 = vector.shape_cast %153 : vector<1x1x16x8xbf16> to vector<16x8xbf16>
    %155 = vector.shape_cast %152 : vector<16x8xbf16> to vector<1x1x16x8xbf16>
    tpu.vector_store %arg10[%c0_134, %c2_135, %c0_136, %c0_137], %155 {strides = array<i32>} : memref<1x8x16x8xbf16, #tpu.memory_space<vmem>>, vector<1x1x16x8xbf16>,
    %c60 = arith.constant 60 : index
    %c0_138 = arith.constant 0 : index
    %156 = vector.load %arg13[%c60, %c0_138] : memref<160x8xf32, #tpu.memory_space<vmem>>, vector<16x8xf32>
    %157 = arith.truncf %156 : vector<16x8xf32> to vector<16x8xbf16>
    %c0_139 = arith.constant 0 : index
    %c3_140 = arith.constant 3 : index
    %c0_141 = arith.constant 0 : index
    %c0_142 = arith.constant 0 : index
    %158 = vector.load %arg10[%c0_139, %c3_140, %c0_141, %c0_142] : memref<1x8x16x8xbf16, #tpu.memory_space<vmem>>, vector<1x1x16x8xbf16>
    %159 = vector.shape_cast %158 : vector<1x1x16x8xbf16> to vector<16x8xbf16>
    %160 = vector.shape_cast %157 : vector<16x8xbf16> to vector<1x1x16x8xbf16>
    tpu.vector_store %arg10[%c0_139, %c3_140, %c0_141, %c0_142], %160 {strides = array<i32>} : memref<1x8x16x8xbf16, #tpu.memory_space<vmem>>, vector<1x1x16x8xbf16>,
    %c80 = arith.constant 80 : index
    %c0_143 = arith.constant 0 : index
    %161 = vector.load %arg13[%c80, %c0_143] : memref<160x8xf32, #tpu.memory_space<vmem>>, vector<16x8xf32>
    %162 = arith.truncf %161 : vector<16x8xf32> to vector<16x8xbf16>
    %c0_144 = arith.constant 0 : index
    %c4_145 = arith.constant 4 : index
    %c0_146 = arith.constant 0 : index
    %c0_147 = arith.constant 0 : index
    %163 = vector.load %arg10[%c0_144, %c4_145, %c0_146, %c0_147] : memref<1x8x16x8xbf16, #tpu.memory_space<vmem>>, vector<1x1x16x8xbf16>
    %164 = vector.shape_cast %163 : vector<1x1x16x8xbf16> to vector<16x8xbf16>
    %165 = vector.shape_cast %162 : vector<16x8xbf16> to vector<1x1x16x8xbf16>
    tpu.vector_store %arg10[%c0_144, %c4_145, %c0_146, %c0_147], %165 {strides = array<i32>} : memref<1x8x16x8xbf16, #tpu.memory_space<vmem>>, vector<1x1x16x8xbf16>,
    %c100 = arith.constant 100 : index
    %c0_148 = arith.constant 0 : index
    %166 = vector.load %arg13[%c100, %c0_148] : memref<160x8xf32, #tpu.memory_space<vmem>>, vector<16x8xf32>
    %167 = arith.truncf %166 : vector<16x8xf32> to vector<16x8xbf16>
    %c0_149 = arith.constant 0 : index
    %c5_150 = arith.constant 5 : index
    %c0_151 = arith.constant 0 : index
    %c0_152 = arith.constant 0 : index
    %168 = vector.load %arg10[%c0_149, %c5_150, %c0_151, %c0_152] : memref<1x8x16x8xbf16, #tpu.memory_space<vmem>>, vector<1x1x16x8xbf16>
    %169 = vector.shape_cast %168 : vector<1x1x16x8xbf16> to vector<16x8xbf16>
    %170 = vector.shape_cast %167 : vector<16x8xbf16> to vector<1x1x16x8xbf16>
    tpu.vector_store %arg10[%c0_149, %c5_150, %c0_151, %c0_152], %170 {strides = array<i32>} : memref<1x8x16x8xbf16, #tpu.memory_space<vmem>>, vector<1x1x16x8xbf16>,
    %c120 = arith.constant 120 : index
    %c0_153 = arith.constant 0 : index
    %171 = vector.load %arg13[%c120, %c0_153] : memref<160x8xf32, #tpu.memory_space<vmem>>, vector<16x8xf32>
    %172 = arith.truncf %171 : vector<16x8xf32> to vector<16x8xbf16>
    %c0_154 = arith.constant 0 : index
    %c6_155 = arith.constant 6 : index
    %c0_156 = arith.constant 0 : index
    %c0_157 = arith.constant 0 : index
    %173 = vector.load %arg10[%c0_154, %c6_155, %c0_156, %c0_157] : memref<1x8x16x8xbf16, #tpu.memory_space<vmem>>, vector<1x1x16x8xbf16>
    %174 = vector.shape_cast %173 : vector<1x1x16x8xbf16> to vector<16x8xbf16>
    %175 = vector.shape_cast %172 : vector<16x8xbf16> to vector<1x1x16x8xbf16>
    tpu.vector_store %arg10[%c0_154, %c6_155, %c0_156, %c0_157], %175 {strides = array<i32>} : memref<1x8x16x8xbf16, #tpu.memory_space<vmem>>, vector<1x1x16x8xbf16>,
    %c140 = arith.constant 140 : index
    %c0_158 = arith.constant 0 : index
    %176 = vector.load %arg13[%c140, %c0_158] : memref<160x8xf32, #tpu.memory_space<vmem>>, vector<16x8xf32>
    %177 = arith.truncf %176 : vector<16x8xf32> to vector<16x8xbf16>
    %c0_159 = arith.constant 0 : index
    %c7_160 = arith.constant 7 : index
    %c0_161 = arith.constant 0 : index
    %c0_162 = arith.constant 0 : index
    %178 = vector.load %arg10[%c0_159, %c7_160, %c0_161, %c0_162] : memref<1x8x16x8xbf16, #tpu.memory_space<vmem>>, vector<1x1x16x8xbf16>
    %179 = vector.shape_cast %178 : vector<1x1x16x8xbf16> to vector<16x8xbf16>
    %180 = vector.shape_cast %177 : vector<16x8xbf16> to vector<1x1x16x8xbf16>
    tpu.vector_store %arg10[%c0_159, %c7_160, %c0_161, %c0_162], %180 {strides = array<i32>} : memref<1x8x16x8xbf16, #tpu.memory_space<vmem>>, vector<1x1x16x8xbf16>,
    return
  }
  func.func @transform_0(%arg0: i32, %arg1: i32) -> (i32, i32, i32, i32) {
    %c0_i32 = arith.constant 0 : i32
    %c0_i32_0 = arith.constant 0 : i32
    %c0_i32_1 = arith.constant 0 : i32
    return %arg0, %arg1, %c0_i32, %c0_i32_0 : i32, i32, i32, i32
  }
  func.func @transform_1(%arg0: i32, %arg1: i32) -> (i32, i32, i32) {
    %c0_i32 = arith.constant 0 : i32
    %c0_i32_0 = arith.constant 0 : i32
    %c0_i32_1 = arith.constant 0 : i32
    return %arg1, %c0_i32, %c0_i32_0 : i32, i32, i32
  }
  func.func @transform_2(%arg0: i32, %arg1: i32) -> (i32, i32, i32) {
    %c0_i32 = arith.constant 0 : i32
    %c0_i32_0 = arith.constant 0 : i32
    %c0_i32_1 = arith.constant 0 : i32
    %c0_i32_2 = arith.constant 0 : i32
    return %c0_i32, %c0_i32_0, %c0_i32_1 : i32, i32, i32
  }
  func.func @transform_3(%arg0: i32, %arg1: i32) -> (i32, i32) {
    %c0_i32 = arith.constant 0 : i32
    %c0_i32_0 = arith.constant 0 : i32
    %c0_i32_1 = arith.constant 0 : i32
    return %c0_i32, %c0_i32_0 : i32, i32
  }
  func.func @transform_4(%arg0: i32, %arg1: i32) -> (i32, i32, i32) {
    %c0_i32 = arith.constant 0 : i32
    %c0_i32_0 = arith.constant 0 : i32
    %c0_i32_1 = arith.constant 0 : i32
    %c0_i32_2 = arith.constant 0 : i32
    return %c0_i32, %c0_i32_0, %c0_i32_1 : i32, i32, i32
  }
  func.func @transform_5(%arg0: i32, %arg1: i32) -> (i32, i32) {
    %c0_i32 = arith.constant 0 : i32
    %c0_i32_0 = arith.constant 0 : i32
    %c0_i32_1 = arith.constant 0 : i32
    return %c0_i32, %c0_i32_0 : i32, i32
  }
  func.func @transform_6(%arg0: i32, %arg1: i32) -> (i32, i32) {
    %c0_i32 = arith.constant 0 : i32
    %c0_i32_0 = arith.constant 0 : i32
    %c0_i32_1 = arith.constant 0 : i32
    return %c0_i32, %c0_i32_0 : i32, i32
  }
  func.func @transform_7(%arg0: i32, %arg1: i32) -> (i32, i32) {
    %c0_i32 = arith.constant 0 : i32
    %c0_i32_0 = arith.constant 0 : i32
    %c0_i32_1 = arith.constant 0 : i32
    return %c0_i32, %c0_i32_0 : i32, i32
  }
  func.func @transform_8(%arg0: i32, %arg1: i32) -> (i32, i32, i32, i32) {
    %c0_i32 = arith.constant 0 : i32
    %c0_i32_0 = arith.constant 0 : i32
    %c0_i32_1 = arith.constant 0 : i32
    return %arg0, %arg1, %c0_i32, %c0_i32_0 : i32, i32, i32, i32
  }
}

module attributes {stable_mosaic.version = 11 : i64} {
  func.func @_res_block_kernel(%arg0: i32, %arg1: i32, %arg2: memref<1x1x256x8xbf16, #tpu.memory_space<vmem>>, %arg3: memref<1x208x1xf32, #tpu.memory_space<vmem>>, %arg4: memref<9x8x8xbf16, #tpu.memory_space<vmem>>, %arg5: memref<1x8xf32, #tpu.memory_space<vmem>>, %arg6: memref<9x8x8xbf16, #tpu.memory_space<vmem>>, %arg7: memref<1x8xf32, #tpu.memory_space<vmem>>, %arg8: memref<1x2x2x8x16x8xf32, #tpu.memory_space<vmem>>, %arg9: memref<256x8xf32, #tpu.memory_space<vmem>>, %arg10: memref<208x8xf32, #tpu.memory_space<vmem>>, %arg11: memref<160x8xf32, #tpu.memory_space<vmem>>) attributes {dimension_semantics = [#tpu.dimension_semantics<parallel>, #tpu.dimension_semantics<parallel>], iteration_bounds = array<i64: 2, 2>, scalar_prefetch = 0 : i64, scratch_operands = 3 : i64, tpu.core_type = #tpu.core_type<tc>, window_params = [{transform_indices = @transform_0, window_bounds = array<i64: 1, 1, 256, 8>}, {transform_indices = @transform_1, window_bounds = array<i64: 1, 208, 1>}, {pipeline_mode = #tpu.pipeline_mode<synchronous>, transform_indices = @transform_2, window_bounds = array<i64: 9, 8, 8>}, {pipeline_mode = #tpu.pipeline_mode<synchronous>, transform_indices = @transform_3, window_bounds = array<i64: 1, 8>}, {pipeline_mode = #tpu.pipeline_mode<synchronous>, transform_indices = @transform_4, window_bounds = array<i64: 9, 8, 8>}, {pipeline_mode = #tpu.pipeline_mode<synchronous>, transform_indices = @transform_5, window_bounds = array<i64: 1, 8>}, {transform_indices = @transform_6, window_bounds = array<i64: 1, 2, 2, 8, 16, 8>}]} {
    %c0 = arith.constant 0 : index
    %c0_0 = arith.constant 0 : index
    %c0_1 = arith.constant 0 : index
    %c0_2 = arith.constant 0 : index
    %0 = vector.load %arg2[%c0, %c0_0, %c0_1, %c0_2] : memref<1x1x256x8xbf16, #tpu.memory_space<vmem>>, vector<1x1x256x8xbf16>
    %1 = vector.shape_cast %0 : vector<1x1x256x8xbf16> to vector<256x8xbf16>
    %2 = arith.extf %1 : vector<256x8xbf16> to vector<256x8xf32>
    %c0_3 = arith.constant 0 : index
    %c0_4 = arith.constant 0 : index
    %3 = vector.load %arg9[%c0_3, %c0_4] : memref<256x8xf32, #tpu.memory_space<vmem>>, vector<256x8xf32>
    tpu.vector_store %arg9[%c0_3, %c0_4], %2 {strides = array<i32>} : memref<256x8xf32, #tpu.memory_space<vmem>>, vector<256x8xf32>,
    %cst = arith.constant 0.000000e+00 : f32
    %4 = vector.broadcast %cst : f32 to vector<208x8xf32>
    %c0_5 = arith.constant 0 : index
    %c0_6 = arith.constant 0 : index
    %5 = vector.load %arg9[%c0_5, %c0_6] : memref<256x8xf32, #tpu.memory_space<vmem>>, vector<208x8xf32>
    %6 = arith.truncf %5 : vector<208x8xf32> to vector<208x8xbf16>
    %c0_7 = arith.constant 0 : index
    %c0_8 = arith.constant 0 : index
    %c0_9 = arith.constant 0 : index
    %7 = vector.load %arg4[%c0_7, %c0_8, %c0_9] : memref<9x8x8xbf16, #tpu.memory_space<vmem>>, vector<1x8x8xbf16>
    %8 = vector.shape_cast %7 : vector<1x8x8xbf16> to vector<8x8xbf16>
    %cst_10 = arith.constant dense<0.000000e+00> : vector<208x8xf32>
    %9 = tpu.matmul %6, %8, %cst_10 {dimension_numbers = #tpu.dot_dimension_numbers<[1], [0], [0], [1], [0, 0, 1, 1], [], []>} : vector<208x8xbf16>, vector<8x8xbf16>, vector<208x8xf32> -> vector<208x8xf32>
    %10 = arith.addf %4, %9 : vector<208x8xf32>
    %c1 = arith.constant 1 : index
    %c0_11 = arith.constant 0 : index
    %11 = vector.load %arg9[%c1, %c0_11] : memref<256x8xf32, #tpu.memory_space<vmem>>, vector<208x8xf32>
    %12 = arith.truncf %11 : vector<208x8xf32> to vector<208x8xbf16>
    %c1_12 = arith.constant 1 : index
    %c0_13 = arith.constant 0 : index
    %c0_14 = arith.constant 0 : index
    %13 = vector.load %arg4[%c1_12, %c0_13, %c0_14] : memref<9x8x8xbf16, #tpu.memory_space<vmem>>, vector<1x8x8xbf16>
    %14 = vector.shape_cast %13 : vector<1x8x8xbf16> to vector<8x8xbf16>
    %cst_15 = arith.constant dense<0.000000e+00> : vector<208x8xf32>
    %15 = tpu.matmul %12, %14, %cst_15 {dimension_numbers = #tpu.dot_dimension_numbers<[1], [0], [0], [1], [0, 0, 1, 1], [], []>} : vector<208x8xbf16>, vector<8x8xbf16>, vector<208x8xf32> -> vector<208x8xf32>
    %16 = arith.addf %10, %15 : vector<208x8xf32>
    %c2 = arith.constant 2 : index
    %c0_16 = arith.constant 0 : index
    %17 = vector.load %arg9[%c2, %c0_16] : memref<256x8xf32, #tpu.memory_space<vmem>>, vector<208x8xf32>
    %18 = arith.truncf %17 : vector<208x8xf32> to vector<208x8xbf16>
    %c2_17 = arith.constant 2 : index
    %c0_18 = arith.constant 0 : index
    %c0_19 = arith.constant 0 : index
    %19 = vector.load %arg4[%c2_17, %c0_18, %c0_19] : memref<9x8x8xbf16, #tpu.memory_space<vmem>>, vector<1x8x8xbf16>
    %20 = vector.shape_cast %19 : vector<1x8x8xbf16> to vector<8x8xbf16>
    %cst_20 = arith.constant dense<0.000000e+00> : vector<208x8xf32>
    %21 = tpu.matmul %18, %20, %cst_20 {dimension_numbers = #tpu.dot_dimension_numbers<[1], [0], [0], [1], [0, 0, 1, 1], [], []>} : vector<208x8xbf16>, vector<8x8xbf16>, vector<208x8xf32> -> vector<208x8xf32>
    %22 = arith.addf %16, %21 : vector<208x8xf32>
    %c20 = arith.constant 20 : index
    %c0_21 = arith.constant 0 : index
    %23 = vector.load %arg9[%c20, %c0_21] : memref<256x8xf32, #tpu.memory_space<vmem>>, vector<208x8xf32>
    %24 = arith.truncf %23 : vector<208x8xf32> to vector<208x8xbf16>
    %c3 = arith.constant 3 : index
    %c0_22 = arith.constant 0 : index
    %c0_23 = arith.constant 0 : index
    %25 = vector.load %arg4[%c3, %c0_22, %c0_23] : memref<9x8x8xbf16, #tpu.memory_space<vmem>>, vector<1x8x8xbf16>
    %26 = vector.shape_cast %25 : vector<1x8x8xbf16> to vector<8x8xbf16>
    %cst_24 = arith.constant dense<0.000000e+00> : vector<208x8xf32>
    %27 = tpu.matmul %24, %26, %cst_24 {dimension_numbers = #tpu.dot_dimension_numbers<[1], [0], [0], [1], [0, 0, 1, 1], [], []>} : vector<208x8xbf16>, vector<8x8xbf16>, vector<208x8xf32> -> vector<208x8xf32>
    %28 = arith.addf %22, %27 : vector<208x8xf32>
    %c21 = arith.constant 21 : index
    %c0_25 = arith.constant 0 : index
    %29 = vector.load %arg9[%c21, %c0_25] : memref<256x8xf32, #tpu.memory_space<vmem>>, vector<208x8xf32>
    %30 = arith.truncf %29 : vector<208x8xf32> to vector<208x8xbf16>
    %c4 = arith.constant 4 : index
    %c0_26 = arith.constant 0 : index
    %c0_27 = arith.constant 0 : index
    %31 = vector.load %arg4[%c4, %c0_26, %c0_27] : memref<9x8x8xbf16, #tpu.memory_space<vmem>>, vector<1x8x8xbf16>
    %32 = vector.shape_cast %31 : vector<1x8x8xbf16> to vector<8x8xbf16>
    %cst_28 = arith.constant dense<0.000000e+00> : vector<208x8xf32>
    %33 = tpu.matmul %30, %32, %cst_28 {dimension_numbers = #tpu.dot_dimension_numbers<[1], [0], [0], [1], [0, 0, 1, 1], [], []>} : vector<208x8xbf16>, vector<8x8xbf16>, vector<208x8xf32> -> vector<208x8xf32>
    %34 = arith.addf %28, %33 : vector<208x8xf32>
    %c22 = arith.constant 22 : index
    %c0_29 = arith.constant 0 : index
    %35 = vector.load %arg9[%c22, %c0_29] : memref<256x8xf32, #tpu.memory_space<vmem>>, vector<208x8xf32>
    %36 = arith.truncf %35 : vector<208x8xf32> to vector<208x8xbf16>
    %c5 = arith.constant 5 : index
    %c0_30 = arith.constant 0 : index
    %c0_31 = arith.constant 0 : index
    %37 = vector.load %arg4[%c5, %c0_30, %c0_31] : memref<9x8x8xbf16, #tpu.memory_space<vmem>>, vector<1x8x8xbf16>
    %38 = vector.shape_cast %37 : vector<1x8x8xbf16> to vector<8x8xbf16>
    %cst_32 = arith.constant dense<0.000000e+00> : vector<208x8xf32>
    %39 = tpu.matmul %36, %38, %cst_32 {dimension_numbers = #tpu.dot_dimension_numbers<[1], [0], [0], [1], [0, 0, 1, 1], [], []>} : vector<208x8xbf16>, vector<8x8xbf16>, vector<208x8xf32> -> vector<208x8xf32>
    %40 = arith.addf %34, %39 : vector<208x8xf32>
    %c40 = arith.constant 40 : index
    %c0_33 = arith.constant 0 : index
    %41 = vector.load %arg9[%c40, %c0_33] : memref<256x8xf32, #tpu.memory_space<vmem>>, vector<208x8xf32>
    %42 = arith.truncf %41 : vector<208x8xf32> to vector<208x8xbf16>
    %c6 = arith.constant 6 : index
    %c0_34 = arith.constant 0 : index
    %c0_35 = arith.constant 0 : index
    %43 = vector.load %arg4[%c6, %c0_34, %c0_35] : memref<9x8x8xbf16, #tpu.memory_space<vmem>>, vector<1x8x8xbf16>
    %44 = vector.shape_cast %43 : vector<1x8x8xbf16> to vector<8x8xbf16>
    %cst_36 = arith.constant dense<0.000000e+00> : vector<208x8xf32>
    %45 = tpu.matmul %42, %44, %cst_36 {dimension_numbers = #tpu.dot_dimension_numbers<[1], [0], [0], [1], [0, 0, 1, 1], [], []>} : vector<208x8xbf16>, vector<8x8xbf16>, vector<208x8xf32> -> vector<208x8xf32>
    %46 = arith.addf %40, %45 : vector<208x8xf32>
    %c41 = arith.constant 41 : index
    %c0_37 = arith.constant 0 : index
    %47 = vector.load %arg9[%c41, %c0_37] : memref<256x8xf32, #tpu.memory_space<vmem>>, vector<208x8xf32>
    %48 = arith.truncf %47 : vector<208x8xf32> to vector<208x8xbf16>
    %c7 = arith.constant 7 : index
    %c0_38 = arith.constant 0 : index
    %c0_39 = arith.constant 0 : index
    %49 = vector.load %arg4[%c7, %c0_38, %c0_39] : memref<9x8x8xbf16, #tpu.memory_space<vmem>>, vector<1x8x8xbf16>
    %50 = vector.shape_cast %49 : vector<1x8x8xbf16> to vector<8x8xbf16>
    %cst_40 = arith.constant dense<0.000000e+00> : vector<208x8xf32>
    %51 = tpu.matmul %48, %50, %cst_40 {dimension_numbers = #tpu.dot_dimension_numbers<[1], [0], [0], [1], [0, 0, 1, 1], [], []>} : vector<208x8xbf16>, vector<8x8xbf16>, vector<208x8xf32> -> vector<208x8xf32>
    %52 = arith.addf %46, %51 : vector<208x8xf32>
    %c42 = arith.constant 42 : index
    %c0_41 = arith.constant 0 : index
    %53 = vector.load %arg9[%c42, %c0_41] : memref<256x8xf32, #tpu.memory_space<vmem>>, vector<208x8xf32>
    %54 = arith.truncf %53 : vector<208x8xf32> to vector<208x8xbf16>
    %c8 = arith.constant 8 : index
    %c0_42 = arith.constant 0 : index
    %c0_43 = arith.constant 0 : index
    %55 = vector.load %arg4[%c8, %c0_42, %c0_43] : memref<9x8x8xbf16, #tpu.memory_space<vmem>>, vector<1x8x8xbf16>
    %56 = vector.shape_cast %55 : vector<1x8x8xbf16> to vector<8x8xbf16>
    %cst_44 = arith.constant dense<0.000000e+00> : vector<208x8xf32>
    %57 = tpu.matmul %54, %56, %cst_44 {dimension_numbers = #tpu.dot_dimension_numbers<[1], [0], [0], [1], [0, 0, 1, 1], [], []>} : vector<208x8xbf16>, vector<8x8xbf16>, vector<208x8xf32> -> vector<208x8xf32>
    %58 = arith.addf %52, %57 : vector<208x8xf32>
    %c0_45 = arith.constant 0 : index
    %c0_46 = arith.constant 0 : index
    %59 = vector.load %arg5[%c0_45, %c0_46] : memref<1x8xf32, #tpu.memory_space<vmem>>, vector<1x8xf32>
    %60 = vector.broadcast %59 : vector<1x8xf32> to vector<208x8xf32>
    %61 = arith.addf %58, %60 : vector<208x8xf32>
    %cst_47 = arith.constant 0.000000e+00 : f32
    %62 = vector.broadcast %cst_47 : f32 to vector<208x8xf32>
    %63 = arith.subf %62, %61 : vector<208x8xf32>
    %64 = math.exp %63 : vector<208x8xf32>
    %cst_48 = arith.constant 1.000000e+00 : f32
    %65 = vector.broadcast %cst_48 : f32 to vector<208x8xf32>
    %66 = arith.addf %65, %64 : vector<208x8xf32>
    %67 = tpu.reciprocal %66 {approx = true} : vector<208x8xf32> -> vector<208x8xf32>
    %68 = arith.mulf %61, %67 : vector<208x8xf32>
    %c0_49 = arith.constant 0 : index
    %c0_50 = arith.constant 0 : index
    %c0_51 = arith.constant 0 : index
    %69 = vector.load %arg3[%c0_49, %c0_50, %c0_51] : memref<1x208x1xf32, #tpu.memory_space<vmem>>, vector<1x208x1xf32>
    %70 = vector.shape_cast %69 : vector<1x208x1xf32> to vector<208x1xf32>
    %71 = vector.broadcast %70 : vector<208x1xf32> to vector<208x8xf32>
    %72 = arith.mulf %68, %71 : vector<208x8xf32>
    %c0_52 = arith.constant 0 : index
    %c0_53 = arith.constant 0 : index
    %73 = vector.load %arg10[%c0_52, %c0_53] : memref<208x8xf32, #tpu.memory_space<vmem>>, vector<208x8xf32>
    tpu.vector_store %arg10[%c0_52, %c0_53], %72 {strides = array<i32>} : memref<208x8xf32, #tpu.memory_space<vmem>>, vector<208x8xf32>,
    %cst_54 = arith.constant 0.000000e+00 : f32
    %74 = vector.broadcast %cst_54 : f32 to vector<160x8xf32>
    %c0_55 = arith.constant 0 : index
    %c0_56 = arith.constant 0 : index
    %75 = vector.load %arg10[%c0_55, %c0_56] : memref<208x8xf32, #tpu.memory_space<vmem>>, vector<160x8xf32>
    %76 = arith.truncf %75 : vector<160x8xf32> to vector<160x8xbf16>
    %c0_57 = arith.constant 0 : index
    %c0_58 = arith.constant 0 : index
    %c0_59 = arith.constant 0 : index
    %77 = vector.load %arg6[%c0_57, %c0_58, %c0_59] : memref<9x8x8xbf16, #tpu.memory_space<vmem>>, vector<1x8x8xbf16>
    %78 = vector.shape_cast %77 : vector<1x8x8xbf16> to vector<8x8xbf16>
    %cst_60 = arith.constant dense<0.000000e+00> : vector<160x8xf32>
    %79 = tpu.matmul %76, %78, %cst_60 {dimension_numbers = #tpu.dot_dimension_numbers<[1], [0], [0], [1], [0, 0, 1, 1], [], []>} : vector<160x8xbf16>, vector<8x8xbf16>, vector<160x8xf32> -> vector<160x8xf32>
    %80 = arith.addf %74, %79 : vector<160x8xf32>
    %c1_61 = arith.constant 1 : index
    %c0_62 = arith.constant 0 : index
    %81 = vector.load %arg10[%c1_61, %c0_62] : memref<208x8xf32, #tpu.memory_space<vmem>>, vector<160x8xf32>
    %82 = arith.truncf %81 : vector<160x8xf32> to vector<160x8xbf16>
    %c1_63 = arith.constant 1 : index
    %c0_64 = arith.constant 0 : index
    %c0_65 = arith.constant 0 : index
    %83 = vector.load %arg6[%c1_63, %c0_64, %c0_65] : memref<9x8x8xbf16, #tpu.memory_space<vmem>>, vector<1x8x8xbf16>
    %84 = vector.shape_cast %83 : vector<1x8x8xbf16> to vector<8x8xbf16>
    %cst_66 = arith.constant dense<0.000000e+00> : vector<160x8xf32>
    %85 = tpu.matmul %82, %84, %cst_66 {dimension_numbers = #tpu.dot_dimension_numbers<[1], [0], [0], [1], [0, 0, 1, 1], [], []>} : vector<160x8xbf16>, vector<8x8xbf16>, vector<160x8xf32> -> vector<160x8xf32>
    %86 = arith.addf %80, %85 : vector<160x8xf32>
    %c2_67 = arith.constant 2 : index
    %c0_68 = arith.constant 0 : index
    %87 = vector.load %arg10[%c2_67, %c0_68] : memref<208x8xf32, #tpu.memory_space<vmem>>, vector<160x8xf32>
    %88 = arith.truncf %87 : vector<160x8xf32> to vector<160x8xbf16>
    %c2_69 = arith.constant 2 : index
    %c0_70 = arith.constant 0 : index
    %c0_71 = arith.constant 0 : index
    %89 = vector.load %arg6[%c2_69, %c0_70, %c0_71] : memref<9x8x8xbf16, #tpu.memory_space<vmem>>, vector<1x8x8xbf16>
    %90 = vector.shape_cast %89 : vector<1x8x8xbf16> to vector<8x8xbf16>
    %cst_72 = arith.constant dense<0.000000e+00> : vector<160x8xf32>
    %91 = tpu.matmul %88, %90, %cst_72 {dimension_numbers = #tpu.dot_dimension_numbers<[1], [0], [0], [1], [0, 0, 1, 1], [], []>} : vector<160x8xbf16>, vector<8x8xbf16>, vector<160x8xf32> -> vector<160x8xf32>
    %92 = arith.addf %86, %91 : vector<160x8xf32>
    %c20_73 = arith.constant 20 : index
    %c0_74 = arith.constant 0 : index
    %93 = vector.load %arg10[%c20_73, %c0_74] : memref<208x8xf32, #tpu.memory_space<vmem>>, vector<160x8xf32>
    %94 = arith.truncf %93 : vector<160x8xf32> to vector<160x8xbf16>
    %c3_75 = arith.constant 3 : index
    %c0_76 = arith.constant 0 : index
    %c0_77 = arith.constant 0 : index
    %95 = vector.load %arg6[%c3_75, %c0_76, %c0_77] : memref<9x8x8xbf16, #tpu.memory_space<vmem>>, vector<1x8x8xbf16>
    %96 = vector.shape_cast %95 : vector<1x8x8xbf16> to vector<8x8xbf16>
    %cst_78 = arith.constant dense<0.000000e+00> : vector<160x8xf32>
    %97 = tpu.matmul %94, %96, %cst_78 {dimension_numbers = #tpu.dot_dimension_numbers<[1], [0], [0], [1], [0, 0, 1, 1], [], []>} : vector<160x8xbf16>, vector<8x8xbf16>, vector<160x8xf32> -> vector<160x8xf32>
    %98 = arith.addf %92, %97 : vector<160x8xf32>
    %c21_79 = arith.constant 21 : index
    %c0_80 = arith.constant 0 : index
    %99 = vector.load %arg10[%c21_79, %c0_80] : memref<208x8xf32, #tpu.memory_space<vmem>>, vector<160x8xf32>
    %100 = arith.truncf %99 : vector<160x8xf32> to vector<160x8xbf16>
    %c4_81 = arith.constant 4 : index
    %c0_82 = arith.constant 0 : index
    %c0_83 = arith.constant 0 : index
    %101 = vector.load %arg6[%c4_81, %c0_82, %c0_83] : memref<9x8x8xbf16, #tpu.memory_space<vmem>>, vector<1x8x8xbf16>
    %102 = vector.shape_cast %101 : vector<1x8x8xbf16> to vector<8x8xbf16>
    %cst_84 = arith.constant dense<0.000000e+00> : vector<160x8xf32>
    %103 = tpu.matmul %100, %102, %cst_84 {dimension_numbers = #tpu.dot_dimension_numbers<[1], [0], [0], [1], [0, 0, 1, 1], [], []>} : vector<160x8xbf16>, vector<8x8xbf16>, vector<160x8xf32> -> vector<160x8xf32>
    %104 = arith.addf %98, %103 : vector<160x8xf32>
    %c22_85 = arith.constant 22 : index
    %c0_86 = arith.constant 0 : index
    %105 = vector.load %arg10[%c22_85, %c0_86] : memref<208x8xf32, #tpu.memory_space<vmem>>, vector<160x8xf32>
    %106 = arith.truncf %105 : vector<160x8xf32> to vector<160x8xbf16>
    %c5_87 = arith.constant 5 : index
    %c0_88 = arith.constant 0 : index
    %c0_89 = arith.constant 0 : index
    %107 = vector.load %arg6[%c5_87, %c0_88, %c0_89] : memref<9x8x8xbf16, #tpu.memory_space<vmem>>, vector<1x8x8xbf16>
    %108 = vector.shape_cast %107 : vector<1x8x8xbf16> to vector<8x8xbf16>
    %cst_90 = arith.constant dense<0.000000e+00> : vector<160x8xf32>
    %109 = tpu.matmul %106, %108, %cst_90 {dimension_numbers = #tpu.dot_dimension_numbers<[1], [0], [0], [1], [0, 0, 1, 1], [], []>} : vector<160x8xbf16>, vector<8x8xbf16>, vector<160x8xf32> -> vector<160x8xf32>
    %110 = arith.addf %104, %109 : vector<160x8xf32>
    %c40_91 = arith.constant 40 : index
    %c0_92 = arith.constant 0 : index
    %111 = vector.load %arg10[%c40_91, %c0_92] : memref<208x8xf32, #tpu.memory_space<vmem>>, vector<160x8xf32>
    %112 = arith.truncf %111 : vector<160x8xf32> to vector<160x8xbf16>
    %c6_93 = arith.constant 6 : index
    %c0_94 = arith.constant 0 : index
    %c0_95 = arith.constant 0 : index
    %113 = vector.load %arg6[%c6_93, %c0_94, %c0_95] : memref<9x8x8xbf16, #tpu.memory_space<vmem>>, vector<1x8x8xbf16>
    %114 = vector.shape_cast %113 : vector<1x8x8xbf16> to vector<8x8xbf16>
    %cst_96 = arith.constant dense<0.000000e+00> : vector<160x8xf32>
    %115 = tpu.matmul %112, %114, %cst_96 {dimension_numbers = #tpu.dot_dimension_numbers<[1], [0], [0], [1], [0, 0, 1, 1], [], []>} : vector<160x8xbf16>, vector<8x8xbf16>, vector<160x8xf32> -> vector<160x8xf32>
    %116 = arith.addf %110, %115 : vector<160x8xf32>
    %c41_97 = arith.constant 41 : index
    %c0_98 = arith.constant 0 : index
    %117 = vector.load %arg10[%c41_97, %c0_98] : memref<208x8xf32, #tpu.memory_space<vmem>>, vector<160x8xf32>
    %118 = arith.truncf %117 : vector<160x8xf32> to vector<160x8xbf16>
    %c7_99 = arith.constant 7 : index
    %c0_100 = arith.constant 0 : index
    %c0_101 = arith.constant 0 : index
    %119 = vector.load %arg6[%c7_99, %c0_100, %c0_101] : memref<9x8x8xbf16, #tpu.memory_space<vmem>>, vector<1x8x8xbf16>
    %120 = vector.shape_cast %119 : vector<1x8x8xbf16> to vector<8x8xbf16>
    %cst_102 = arith.constant dense<0.000000e+00> : vector<160x8xf32>
    %121 = tpu.matmul %118, %120, %cst_102 {dimension_numbers = #tpu.dot_dimension_numbers<[1], [0], [0], [1], [0, 0, 1, 1], [], []>} : vector<160x8xbf16>, vector<8x8xbf16>, vector<160x8xf32> -> vector<160x8xf32>
    %122 = arith.addf %116, %121 : vector<160x8xf32>
    %c42_103 = arith.constant 42 : index
    %c0_104 = arith.constant 0 : index
    %123 = vector.load %arg10[%c42_103, %c0_104] : memref<208x8xf32, #tpu.memory_space<vmem>>, vector<160x8xf32>
    %124 = arith.truncf %123 : vector<160x8xf32> to vector<160x8xbf16>
    %c8_105 = arith.constant 8 : index
    %c0_106 = arith.constant 0 : index
    %c0_107 = arith.constant 0 : index
    %125 = vector.load %arg6[%c8_105, %c0_106, %c0_107] : memref<9x8x8xbf16, #tpu.memory_space<vmem>>, vector<1x8x8xbf16>
    %126 = vector.shape_cast %125 : vector<1x8x8xbf16> to vector<8x8xbf16>
    %cst_108 = arith.constant dense<0.000000e+00> : vector<160x8xf32>
    %127 = tpu.matmul %124, %126, %cst_108 {dimension_numbers = #tpu.dot_dimension_numbers<[1], [0], [0], [1], [0, 0, 1, 1], [], []>} : vector<160x8xbf16>, vector<8x8xbf16>, vector<160x8xf32> -> vector<160x8xf32>
    %128 = arith.addf %122, %127 : vector<160x8xf32>
    %c0_109 = arith.constant 0 : index
    %c0_110 = arith.constant 0 : index
    %129 = vector.load %arg7[%c0_109, %c0_110] : memref<1x8xf32, #tpu.memory_space<vmem>>, vector<1x8xf32>
    %130 = vector.broadcast %129 : vector<1x8xf32> to vector<160x8xf32>
    %131 = arith.addf %128, %130 : vector<160x8xf32>
    %c42_111 = arith.constant 42 : index
    %c0_112 = arith.constant 0 : index
    %132 = vector.load %arg9[%c42_111, %c0_112] : memref<256x8xf32, #tpu.memory_space<vmem>>, vector<160x8xf32>
    %133 = arith.addf %131, %132 : vector<160x8xf32>
    %c0_113 = arith.constant 0 : index
    %c0_114 = arith.constant 0 : index
    %134 = vector.load %arg11[%c0_113, %c0_114] : memref<160x8xf32, #tpu.memory_space<vmem>>, vector<160x8xf32>
    tpu.vector_store %arg11[%c0_113, %c0_114], %133 {strides = array<i32>} : memref<160x8xf32, #tpu.memory_space<vmem>>, vector<160x8xf32>,
    %c0_115 = arith.constant 0 : index
    %c0_116 = arith.constant 0 : index
    %135 = vector.load %arg11[%c0_115, %c0_116] : memref<160x8xf32, #tpu.memory_space<vmem>>, vector<16x8xf32>
    %c0_117 = arith.constant 0 : index
    %c0_118 = arith.constant 0 : index
    %c0_119 = arith.constant 0 : index
    %c0_120 = arith.constant 0 : index
    %c0_121 = arith.constant 0 : index
    %c0_122 = arith.constant 0 : index
    %136 = vector.load %arg8[%c0_117, %c0_118, %c0_119, %c0_120, %c0_121, %c0_122] : memref<1x2x2x8x16x8xf32, #tpu.memory_space<vmem>>, vector<1x1x1x1x16x8xf32>
    %137 = vector.shape_cast %136 : vector<1x1x1x1x16x8xf32> to vector<16x8xf32>
    %138 = vector.shape_cast %135 : vector<16x8xf32> to vector<1x1x1x1x16x8xf32>
    tpu.vector_store %arg8[%c0_117, %c0_118, %c0_119, %c0_120, %c0_121, %c0_122], %138 {strides = array<i32>} : memref<1x2x2x8x16x8xf32, #tpu.memory_space<vmem>>, vector<1x1x1x1x16x8xf32>,
    %c0_123 = arith.constant 0 : index
    %c0_124 = arith.constant 0 : index
    %c1_125 = arith.constant 1 : index
    %c0_126 = arith.constant 0 : index
    %c0_127 = arith.constant 0 : index
    %c0_128 = arith.constant 0 : index
    %139 = vector.load %arg8[%c0_123, %c0_124, %c1_125, %c0_126, %c0_127, %c0_128] : memref<1x2x2x8x16x8xf32, #tpu.memory_space<vmem>>, vector<1x1x1x1x16x8xf32>
    %140 = vector.shape_cast %139 : vector<1x1x1x1x16x8xf32> to vector<16x8xf32>
    %141 = vector.shape_cast %135 : vector<16x8xf32> to vector<1x1x1x1x16x8xf32>
    tpu.vector_store %arg8[%c0_123, %c0_124, %c1_125, %c0_126, %c0_127, %c0_128], %141 {strides = array<i32>} : memref<1x2x2x8x16x8xf32, #tpu.memory_space<vmem>>, vector<1x1x1x1x16x8xf32>,
    %c0_129 = arith.constant 0 : index
    %c1_130 = arith.constant 1 : index
    %c0_131 = arith.constant 0 : index
    %c0_132 = arith.constant 0 : index
    %c0_133 = arith.constant 0 : index
    %c0_134 = arith.constant 0 : index
    %142 = vector.load %arg8[%c0_129, %c1_130, %c0_131, %c0_132, %c0_133, %c0_134] : memref<1x2x2x8x16x8xf32, #tpu.memory_space<vmem>>, vector<1x1x1x1x16x8xf32>
    %143 = vector.shape_cast %142 : vector<1x1x1x1x16x8xf32> to vector<16x8xf32>
    %144 = vector.shape_cast %135 : vector<16x8xf32> to vector<1x1x1x1x16x8xf32>
    tpu.vector_store %arg8[%c0_129, %c1_130, %c0_131, %c0_132, %c0_133, %c0_134], %144 {strides = array<i32>} : memref<1x2x2x8x16x8xf32, #tpu.memory_space<vmem>>, vector<1x1x1x1x16x8xf32>,
    %c0_135 = arith.constant 0 : index
    %c1_136 = arith.constant 1 : index
    %c1_137 = arith.constant 1 : index
    %c0_138 = arith.constant 0 : index
    %c0_139 = arith.constant 0 : index
    %c0_140 = arith.constant 0 : index
    %145 = vector.load %arg8[%c0_135, %c1_136, %c1_137, %c0_138, %c0_139, %c0_140] : memref<1x2x2x8x16x8xf32, #tpu.memory_space<vmem>>, vector<1x1x1x1x16x8xf32>
    %146 = vector.shape_cast %145 : vector<1x1x1x1x16x8xf32> to vector<16x8xf32>
    %147 = vector.shape_cast %135 : vector<16x8xf32> to vector<1x1x1x1x16x8xf32>
    tpu.vector_store %arg8[%c0_135, %c1_136, %c1_137, %c0_138, %c0_139, %c0_140], %147 {strides = array<i32>} : memref<1x2x2x8x16x8xf32, #tpu.memory_space<vmem>>, vector<1x1x1x1x16x8xf32>,
    %c20_141 = arith.constant 20 : index
    %c0_142 = arith.constant 0 : index
    %148 = vector.load %arg11[%c20_141, %c0_142] : memref<160x8xf32, #tpu.memory_space<vmem>>, vector<16x8xf32>
    %c0_143 = arith.constant 0 : index
    %c0_144 = arith.constant 0 : index
    %c0_145 = arith.constant 0 : index
    %c1_146 = arith.constant 1 : index
    %c0_147 = arith.constant 0 : index
    %c0_148 = arith.constant 0 : index
    %149 = vector.load %arg8[%c0_143, %c0_144, %c0_145, %c1_146, %c0_147, %c0_148] : memref<1x2x2x8x16x8xf32, #tpu.memory_space<vmem>>, vector<1x1x1x1x16x8xf32>
    %150 = vector.shape_cast %149 : vector<1x1x1x1x16x8xf32> to vector<16x8xf32>
    %151 = vector.shape_cast %148 : vector<16x8xf32> to vector<1x1x1x1x16x8xf32>
    tpu.vector_store %arg8[%c0_143, %c0_144, %c0_145, %c1_146, %c0_147, %c0_148], %151 {strides = array<i32>} : memref<1x2x2x8x16x8xf32, #tpu.memory_space<vmem>>, vector<1x1x1x1x16x8xf32>,
    %c0_149 = arith.constant 0 : index
    %c0_150 = arith.constant 0 : index
    %c1_151 = arith.constant 1 : index
    %c1_152 = arith.constant 1 : index
    %c0_153 = arith.constant 0 : index
    %c0_154 = arith.constant 0 : index
    %152 = vector.load %arg8[%c0_149, %c0_150, %c1_151, %c1_152, %c0_153, %c0_154] : memref<1x2x2x8x16x8xf32, #tpu.memory_space<vmem>>, vector<1x1x1x1x16x8xf32>
    %153 = vector.shape_cast %152 : vector<1x1x1x1x16x8xf32> to vector<16x8xf32>
    %154 = vector.shape_cast %148 : vector<16x8xf32> to vector<1x1x1x1x16x8xf32>
    tpu.vector_store %arg8[%c0_149, %c0_150, %c1_151, %c1_152, %c0_153, %c0_154], %154 {strides = array<i32>} : memref<1x2x2x8x16x8xf32, #tpu.memory_space<vmem>>, vector<1x1x1x1x16x8xf32>,
    %c0_155 = arith.constant 0 : index
    %c1_156 = arith.constant 1 : index
    %c0_157 = arith.constant 0 : index
    %c1_158 = arith.constant 1 : index
    %c0_159 = arith.constant 0 : index
    %c0_160 = arith.constant 0 : index
    %155 = vector.load %arg8[%c0_155, %c1_156, %c0_157, %c1_158, %c0_159, %c0_160] : memref<1x2x2x8x16x8xf32, #tpu.memory_space<vmem>>, vector<1x1x1x1x16x8xf32>
    %156 = vector.shape_cast %155 : vector<1x1x1x1x16x8xf32> to vector<16x8xf32>
    %157 = vector.shape_cast %148 : vector<16x8xf32> to vector<1x1x1x1x16x8xf32>
    tpu.vector_store %arg8[%c0_155, %c1_156, %c0_157, %c1_158, %c0_159, %c0_160], %157 {strides = array<i32>} : memref<1x2x2x8x16x8xf32, #tpu.memory_space<vmem>>, vector<1x1x1x1x16x8xf32>,
    %c0_161 = arith.constant 0 : index
    %c1_162 = arith.constant 1 : index
    %c1_163 = arith.constant 1 : index
    %c1_164 = arith.constant 1 : index
    %c0_165 = arith.constant 0 : index
    %c0_166 = arith.constant 0 : index
    %158 = vector.load %arg8[%c0_161, %c1_162, %c1_163, %c1_164, %c0_165, %c0_166] : memref<1x2x2x8x16x8xf32, #tpu.memory_space<vmem>>, vector<1x1x1x1x16x8xf32>
    %159 = vector.shape_cast %158 : vector<1x1x1x1x16x8xf32> to vector<16x8xf32>
    %160 = vector.shape_cast %148 : vector<16x8xf32> to vector<1x1x1x1x16x8xf32>
    tpu.vector_store %arg8[%c0_161, %c1_162, %c1_163, %c1_164, %c0_165, %c0_166], %160 {strides = array<i32>} : memref<1x2x2x8x16x8xf32, #tpu.memory_space<vmem>>, vector<1x1x1x1x16x8xf32>,
    %c40_167 = arith.constant 40 : index
    %c0_168 = arith.constant 0 : index
    %161 = vector.load %arg11[%c40_167, %c0_168] : memref<160x8xf32, #tpu.memory_space<vmem>>, vector<16x8xf32>
    %c0_169 = arith.constant 0 : index
    %c0_170 = arith.constant 0 : index
    %c0_171 = arith.constant 0 : index
    %c2_172 = arith.constant 2 : index
    %c0_173 = arith.constant 0 : index
    %c0_174 = arith.constant 0 : index
    %162 = vector.load %arg8[%c0_169, %c0_170, %c0_171, %c2_172, %c0_173, %c0_174] : memref<1x2x2x8x16x8xf32, #tpu.memory_space<vmem>>, vector<1x1x1x1x16x8xf32>
    %163 = vector.shape_cast %162 : vector<1x1x1x1x16x8xf32> to vector<16x8xf32>
    %164 = vector.shape_cast %161 : vector<16x8xf32> to vector<1x1x1x1x16x8xf32>
    tpu.vector_store %arg8[%c0_169, %c0_170, %c0_171, %c2_172, %c0_173, %c0_174], %164 {strides = array<i32>} : memref<1x2x2x8x16x8xf32, #tpu.memory_space<vmem>>, vector<1x1x1x1x16x8xf32>,
    %c0_175 = arith.constant 0 : index
    %c0_176 = arith.constant 0 : index
    %c1_177 = arith.constant 1 : index
    %c2_178 = arith.constant 2 : index
    %c0_179 = arith.constant 0 : index
    %c0_180 = arith.constant 0 : index
    %165 = vector.load %arg8[%c0_175, %c0_176, %c1_177, %c2_178, %c0_179, %c0_180] : memref<1x2x2x8x16x8xf32, #tpu.memory_space<vmem>>, vector<1x1x1x1x16x8xf32>
    %166 = vector.shape_cast %165 : vector<1x1x1x1x16x8xf32> to vector<16x8xf32>
    %167 = vector.shape_cast %161 : vector<16x8xf32> to vector<1x1x1x1x16x8xf32>
    tpu.vector_store %arg8[%c0_175, %c0_176, %c1_177, %c2_178, %c0_179, %c0_180], %167 {strides = array<i32>} : memref<1x2x2x8x16x8xf32, #tpu.memory_space<vmem>>, vector<1x1x1x1x16x8xf32>,
    %c0_181 = arith.constant 0 : index
    %c1_182 = arith.constant 1 : index
    %c0_183 = arith.constant 0 : index
    %c2_184 = arith.constant 2 : index
    %c0_185 = arith.constant 0 : index
    %c0_186 = arith.constant 0 : index
    %168 = vector.load %arg8[%c0_181, %c1_182, %c0_183, %c2_184, %c0_185, %c0_186] : memref<1x2x2x8x16x8xf32, #tpu.memory_space<vmem>>, vector<1x1x1x1x16x8xf32>
    %169 = vector.shape_cast %168 : vector<1x1x1x1x16x8xf32> to vector<16x8xf32>
    %170 = vector.shape_cast %161 : vector<16x8xf32> to vector<1x1x1x1x16x8xf32>
    tpu.vector_store %arg8[%c0_181, %c1_182, %c0_183, %c2_184, %c0_185, %c0_186], %170 {strides = array<i32>} : memref<1x2x2x8x16x8xf32, #tpu.memory_space<vmem>>, vector<1x1x1x1x16x8xf32>,
    %c0_187 = arith.constant 0 : index
    %c1_188 = arith.constant 1 : index
    %c1_189 = arith.constant 1 : index
    %c2_190 = arith.constant 2 : index
    %c0_191 = arith.constant 0 : index
    %c0_192 = arith.constant 0 : index
    %171 = vector.load %arg8[%c0_187, %c1_188, %c1_189, %c2_190, %c0_191, %c0_192] : memref<1x2x2x8x16x8xf32, #tpu.memory_space<vmem>>, vector<1x1x1x1x16x8xf32>
    %172 = vector.shape_cast %171 : vector<1x1x1x1x16x8xf32> to vector<16x8xf32>
    %173 = vector.shape_cast %161 : vector<16x8xf32> to vector<1x1x1x1x16x8xf32>
    tpu.vector_store %arg8[%c0_187, %c1_188, %c1_189, %c2_190, %c0_191, %c0_192], %173 {strides = array<i32>} : memref<1x2x2x8x16x8xf32, #tpu.memory_space<vmem>>, vector<1x1x1x1x16x8xf32>,
    %c60 = arith.constant 60 : index
    %c0_193 = arith.constant 0 : index
    %174 = vector.load %arg11[%c60, %c0_193] : memref<160x8xf32, #tpu.memory_space<vmem>>, vector<16x8xf32>
    %c0_194 = arith.constant 0 : index
    %c0_195 = arith.constant 0 : index
    %c0_196 = arith.constant 0 : index
    %c3_197 = arith.constant 3 : index
    %c0_198 = arith.constant 0 : index
    %c0_199 = arith.constant 0 : index
    %175 = vector.load %arg8[%c0_194, %c0_195, %c0_196, %c3_197, %c0_198, %c0_199] : memref<1x2x2x8x16x8xf32, #tpu.memory_space<vmem>>, vector<1x1x1x1x16x8xf32>
    %176 = vector.shape_cast %175 : vector<1x1x1x1x16x8xf32> to vector<16x8xf32>
    %177 = vector.shape_cast %174 : vector<16x8xf32> to vector<1x1x1x1x16x8xf32>
    tpu.vector_store %arg8[%c0_194, %c0_195, %c0_196, %c3_197, %c0_198, %c0_199], %177 {strides = array<i32>} : memref<1x2x2x8x16x8xf32, #tpu.memory_space<vmem>>, vector<1x1x1x1x16x8xf32>,
    %c0_200 = arith.constant 0 : index
    %c0_201 = arith.constant 0 : index
    %c1_202 = arith.constant 1 : index
    %c3_203 = arith.constant 3 : index
    %c0_204 = arith.constant 0 : index
    %c0_205 = arith.constant 0 : index
    %178 = vector.load %arg8[%c0_200, %c0_201, %c1_202, %c3_203, %c0_204, %c0_205] : memref<1x2x2x8x16x8xf32, #tpu.memory_space<vmem>>, vector<1x1x1x1x16x8xf32>
    %179 = vector.shape_cast %178 : vector<1x1x1x1x16x8xf32> to vector<16x8xf32>
    %180 = vector.shape_cast %174 : vector<16x8xf32> to vector<1x1x1x1x16x8xf32>
    tpu.vector_store %arg8[%c0_200, %c0_201, %c1_202, %c3_203, %c0_204, %c0_205], %180 {strides = array<i32>} : memref<1x2x2x8x16x8xf32, #tpu.memory_space<vmem>>, vector<1x1x1x1x16x8xf32>,
    %c0_206 = arith.constant 0 : index
    %c1_207 = arith.constant 1 : index
    %c0_208 = arith.constant 0 : index
    %c3_209 = arith.constant 3 : index
    %c0_210 = arith.constant 0 : index
    %c0_211 = arith.constant 0 : index
    %181 = vector.load %arg8[%c0_206, %c1_207, %c0_208, %c3_209, %c0_210, %c0_211] : memref<1x2x2x8x16x8xf32, #tpu.memory_space<vmem>>, vector<1x1x1x1x16x8xf32>
    %182 = vector.shape_cast %181 : vector<1x1x1x1x16x8xf32> to vector<16x8xf32>
    %183 = vector.shape_cast %174 : vector<16x8xf32> to vector<1x1x1x1x16x8xf32>
    tpu.vector_store %arg8[%c0_206, %c1_207, %c0_208, %c3_209, %c0_210, %c0_211], %183 {strides = array<i32>} : memref<1x2x2x8x16x8xf32, #tpu.memory_space<vmem>>, vector<1x1x1x1x16x8xf32>,
    %c0_212 = arith.constant 0 : index
    %c1_213 = arith.constant 1 : index
    %c1_214 = arith.constant 1 : index
    %c3_215 = arith.constant 3 : index
    %c0_216 = arith.constant 0 : index
    %c0_217 = arith.constant 0 : index
    %184 = vector.load %arg8[%c0_212, %c1_213, %c1_214, %c3_215, %c0_216, %c0_217] : memref<1x2x2x8x16x8xf32, #tpu.memory_space<vmem>>, vector<1x1x1x1x16x8xf32>
    %185 = vector.shape_cast %184 : vector<1x1x1x1x16x8xf32> to vector<16x8xf32>
    %186 = vector.shape_cast %174 : vector<16x8xf32> to vector<1x1x1x1x16x8xf32>
    tpu.vector_store %arg8[%c0_212, %c1_213, %c1_214, %c3_215, %c0_216, %c0_217], %186 {strides = array<i32>} : memref<1x2x2x8x16x8xf32, #tpu.memory_space<vmem>>, vector<1x1x1x1x16x8xf32>,
    %c80 = arith.constant 80 : index
    %c0_218 = arith.constant 0 : index
    %187 = vector.load %arg11[%c80, %c0_218] : memref<160x8xf32, #tpu.memory_space<vmem>>, vector<16x8xf32>
    %c0_219 = arith.constant 0 : index
    %c0_220 = arith.constant 0 : index
    %c0_221 = arith.constant 0 : index
    %c4_222 = arith.constant 4 : index
    %c0_223 = arith.constant 0 : index
    %c0_224 = arith.constant 0 : index
    %188 = vector.load %arg8[%c0_219, %c0_220, %c0_221, %c4_222, %c0_223, %c0_224] : memref<1x2x2x8x16x8xf32, #tpu.memory_space<vmem>>, vector<1x1x1x1x16x8xf32>
    %189 = vector.shape_cast %188 : vector<1x1x1x1x16x8xf32> to vector<16x8xf32>
    %190 = vector.shape_cast %187 : vector<16x8xf32> to vector<1x1x1x1x16x8xf32>
    tpu.vector_store %arg8[%c0_219, %c0_220, %c0_221, %c4_222, %c0_223, %c0_224], %190 {strides = array<i32>} : memref<1x2x2x8x16x8xf32, #tpu.memory_space<vmem>>, vector<1x1x1x1x16x8xf32>,
    %c0_225 = arith.constant 0 : index
    %c0_226 = arith.constant 0 : index
    %c1_227 = arith.constant 1 : index
    %c4_228 = arith.constant 4 : index
    %c0_229 = arith.constant 0 : index
    %c0_230 = arith.constant 0 : index
    %191 = vector.load %arg8[%c0_225, %c0_226, %c1_227, %c4_228, %c0_229, %c0_230] : memref<1x2x2x8x16x8xf32, #tpu.memory_space<vmem>>, vector<1x1x1x1x16x8xf32>
    %192 = vector.shape_cast %191 : vector<1x1x1x1x16x8xf32> to vector<16x8xf32>
    %193 = vector.shape_cast %187 : vector<16x8xf32> to vector<1x1x1x1x16x8xf32>
    tpu.vector_store %arg8[%c0_225, %c0_226, %c1_227, %c4_228, %c0_229, %c0_230], %193 {strides = array<i32>} : memref<1x2x2x8x16x8xf32, #tpu.memory_space<vmem>>, vector<1x1x1x1x16x8xf32>,
    %c0_231 = arith.constant 0 : index
    %c1_232 = arith.constant 1 : index
    %c0_233 = arith.constant 0 : index
    %c4_234 = arith.constant 4 : index
    %c0_235 = arith.constant 0 : index
    %c0_236 = arith.constant 0 : index
    %194 = vector.load %arg8[%c0_231, %c1_232, %c0_233, %c4_234, %c0_235, %c0_236] : memref<1x2x2x8x16x8xf32, #tpu.memory_space<vmem>>, vector<1x1x1x1x16x8xf32>
    %195 = vector.shape_cast %194 : vector<1x1x1x1x16x8xf32> to vector<16x8xf32>
    %196 = vector.shape_cast %187 : vector<16x8xf32> to vector<1x1x1x1x16x8xf32>
    tpu.vector_store %arg8[%c0_231, %c1_232, %c0_233, %c4_234, %c0_235, %c0_236], %196 {strides = array<i32>} : memref<1x2x2x8x16x8xf32, #tpu.memory_space<vmem>>, vector<1x1x1x1x16x8xf32>,
    %c0_237 = arith.constant 0 : index
    %c1_238 = arith.constant 1 : index
    %c1_239 = arith.constant 1 : index
    %c4_240 = arith.constant 4 : index
    %c0_241 = arith.constant 0 : index
    %c0_242 = arith.constant 0 : index
    %197 = vector.load %arg8[%c0_237, %c1_238, %c1_239, %c4_240, %c0_241, %c0_242] : memref<1x2x2x8x16x8xf32, #tpu.memory_space<vmem>>, vector<1x1x1x1x16x8xf32>
    %198 = vector.shape_cast %197 : vector<1x1x1x1x16x8xf32> to vector<16x8xf32>
    %199 = vector.shape_cast %187 : vector<16x8xf32> to vector<1x1x1x1x16x8xf32>
    tpu.vector_store %arg8[%c0_237, %c1_238, %c1_239, %c4_240, %c0_241, %c0_242], %199 {strides = array<i32>} : memref<1x2x2x8x16x8xf32, #tpu.memory_space<vmem>>, vector<1x1x1x1x16x8xf32>,
    %c100 = arith.constant 100 : index
    %c0_243 = arith.constant 0 : index
    %200 = vector.load %arg11[%c100, %c0_243] : memref<160x8xf32, #tpu.memory_space<vmem>>, vector<16x8xf32>
    %c0_244 = arith.constant 0 : index
    %c0_245 = arith.constant 0 : index
    %c0_246 = arith.constant 0 : index
    %c5_247 = arith.constant 5 : index
    %c0_248 = arith.constant 0 : index
    %c0_249 = arith.constant 0 : index
    %201 = vector.load %arg8[%c0_244, %c0_245, %c0_246, %c5_247, %c0_248, %c0_249] : memref<1x2x2x8x16x8xf32, #tpu.memory_space<vmem>>, vector<1x1x1x1x16x8xf32>
    %202 = vector.shape_cast %201 : vector<1x1x1x1x16x8xf32> to vector<16x8xf32>
    %203 = vector.shape_cast %200 : vector<16x8xf32> to vector<1x1x1x1x16x8xf32>
    tpu.vector_store %arg8[%c0_244, %c0_245, %c0_246, %c5_247, %c0_248, %c0_249], %203 {strides = array<i32>} : memref<1x2x2x8x16x8xf32, #tpu.memory_space<vmem>>, vector<1x1x1x1x16x8xf32>,
    %c0_250 = arith.constant 0 : index
    %c0_251 = arith.constant 0 : index
    %c1_252 = arith.constant 1 : index
    %c5_253 = arith.constant 5 : index
    %c0_254 = arith.constant 0 : index
    %c0_255 = arith.constant 0 : index
    %204 = vector.load %arg8[%c0_250, %c0_251, %c1_252, %c5_253, %c0_254, %c0_255] : memref<1x2x2x8x16x8xf32, #tpu.memory_space<vmem>>, vector<1x1x1x1x16x8xf32>
    %205 = vector.shape_cast %204 : vector<1x1x1x1x16x8xf32> to vector<16x8xf32>
    %206 = vector.shape_cast %200 : vector<16x8xf32> to vector<1x1x1x1x16x8xf32>
    tpu.vector_store %arg8[%c0_250, %c0_251, %c1_252, %c5_253, %c0_254, %c0_255], %206 {strides = array<i32>} : memref<1x2x2x8x16x8xf32, #tpu.memory_space<vmem>>, vector<1x1x1x1x16x8xf32>,
    %c0_256 = arith.constant 0 : index
    %c1_257 = arith.constant 1 : index
    %c0_258 = arith.constant 0 : index
    %c5_259 = arith.constant 5 : index
    %c0_260 = arith.constant 0 : index
    %c0_261 = arith.constant 0 : index
    %207 = vector.load %arg8[%c0_256, %c1_257, %c0_258, %c5_259, %c0_260, %c0_261] : memref<1x2x2x8x16x8xf32, #tpu.memory_space<vmem>>, vector<1x1x1x1x16x8xf32>
    %208 = vector.shape_cast %207 : vector<1x1x1x1x16x8xf32> to vector<16x8xf32>
    %209 = vector.shape_cast %200 : vector<16x8xf32> to vector<1x1x1x1x16x8xf32>
    tpu.vector_store %arg8[%c0_256, %c1_257, %c0_258, %c5_259, %c0_260, %c0_261], %209 {strides = array<i32>} : memref<1x2x2x8x16x8xf32, #tpu.memory_space<vmem>>, vector<1x1x1x1x16x8xf32>,
    %c0_262 = arith.constant 0 : index
    %c1_263 = arith.constant 1 : index
    %c1_264 = arith.constant 1 : index
    %c5_265 = arith.constant 5 : index
    %c0_266 = arith.constant 0 : index
    %c0_267 = arith.constant 0 : index
    %210 = vector.load %arg8[%c0_262, %c1_263, %c1_264, %c5_265, %c0_266, %c0_267] : memref<1x2x2x8x16x8xf32, #tpu.memory_space<vmem>>, vector<1x1x1x1x16x8xf32>
    %211 = vector.shape_cast %210 : vector<1x1x1x1x16x8xf32> to vector<16x8xf32>
    %212 = vector.shape_cast %200 : vector<16x8xf32> to vector<1x1x1x1x16x8xf32>
    tpu.vector_store %arg8[%c0_262, %c1_263, %c1_264, %c5_265, %c0_266, %c0_267], %212 {strides = array<i32>} : memref<1x2x2x8x16x8xf32, #tpu.memory_space<vmem>>, vector<1x1x1x1x16x8xf32>,
    %c120 = arith.constant 120 : index
    %c0_268 = arith.constant 0 : index
    %213 = vector.load %arg11[%c120, %c0_268] : memref<160x8xf32, #tpu.memory_space<vmem>>, vector<16x8xf32>
    %c0_269 = arith.constant 0 : index
    %c0_270 = arith.constant 0 : index
    %c0_271 = arith.constant 0 : index
    %c6_272 = arith.constant 6 : index
    %c0_273 = arith.constant 0 : index
    %c0_274 = arith.constant 0 : index
    %214 = vector.load %arg8[%c0_269, %c0_270, %c0_271, %c6_272, %c0_273, %c0_274] : memref<1x2x2x8x16x8xf32, #tpu.memory_space<vmem>>, vector<1x1x1x1x16x8xf32>
    %215 = vector.shape_cast %214 : vector<1x1x1x1x16x8xf32> to vector<16x8xf32>
    %216 = vector.shape_cast %213 : vector<16x8xf32> to vector<1x1x1x1x16x8xf32>
    tpu.vector_store %arg8[%c0_269, %c0_270, %c0_271, %c6_272, %c0_273, %c0_274], %216 {strides = array<i32>} : memref<1x2x2x8x16x8xf32, #tpu.memory_space<vmem>>, vector<1x1x1x1x16x8xf32>,
    %c0_275 = arith.constant 0 : index
    %c0_276 = arith.constant 0 : index
    %c1_277 = arith.constant 1 : index
    %c6_278 = arith.constant 6 : index
    %c0_279 = arith.constant 0 : index
    %c0_280 = arith.constant 0 : index
    %217 = vector.load %arg8[%c0_275, %c0_276, %c1_277, %c6_278, %c0_279, %c0_280] : memref<1x2x2x8x16x8xf32, #tpu.memory_space<vmem>>, vector<1x1x1x1x16x8xf32>
    %218 = vector.shape_cast %217 : vector<1x1x1x1x16x8xf32> to vector<16x8xf32>
    %219 = vector.shape_cast %213 : vector<16x8xf32> to vector<1x1x1x1x16x8xf32>
    tpu.vector_store %arg8[%c0_275, %c0_276, %c1_277, %c6_278, %c0_279, %c0_280], %219 {strides = array<i32>} : memref<1x2x2x8x16x8xf32, #tpu.memory_space<vmem>>, vector<1x1x1x1x16x8xf32>,
    %c0_281 = arith.constant 0 : index
    %c1_282 = arith.constant 1 : index
    %c0_283 = arith.constant 0 : index
    %c6_284 = arith.constant 6 : index
    %c0_285 = arith.constant 0 : index
    %c0_286 = arith.constant 0 : index
    %220 = vector.load %arg8[%c0_281, %c1_282, %c0_283, %c6_284, %c0_285, %c0_286] : memref<1x2x2x8x16x8xf32, #tpu.memory_space<vmem>>, vector<1x1x1x1x16x8xf32>
    %221 = vector.shape_cast %220 : vector<1x1x1x1x16x8xf32> to vector<16x8xf32>
    %222 = vector.shape_cast %213 : vector<16x8xf32> to vector<1x1x1x1x16x8xf32>
    tpu.vector_store %arg8[%c0_281, %c1_282, %c0_283, %c6_284, %c0_285, %c0_286], %222 {strides = array<i32>} : memref<1x2x2x8x16x8xf32, #tpu.memory_space<vmem>>, vector<1x1x1x1x16x8xf32>,
    %c0_287 = arith.constant 0 : index
    %c1_288 = arith.constant 1 : index
    %c1_289 = arith.constant 1 : index
    %c6_290 = arith.constant 6 : index
    %c0_291 = arith.constant 0 : index
    %c0_292 = arith.constant 0 : index
    %223 = vector.load %arg8[%c0_287, %c1_288, %c1_289, %c6_290, %c0_291, %c0_292] : memref<1x2x2x8x16x8xf32, #tpu.memory_space<vmem>>, vector<1x1x1x1x16x8xf32>
    %224 = vector.shape_cast %223 : vector<1x1x1x1x16x8xf32> to vector<16x8xf32>
    %225 = vector.shape_cast %213 : vector<16x8xf32> to vector<1x1x1x1x16x8xf32>
    tpu.vector_store %arg8[%c0_287, %c1_288, %c1_289, %c6_290, %c0_291, %c0_292], %225 {strides = array<i32>} : memref<1x2x2x8x16x8xf32, #tpu.memory_space<vmem>>, vector<1x1x1x1x16x8xf32>,
    %c140 = arith.constant 140 : index
    %c0_293 = arith.constant 0 : index
    %226 = vector.load %arg11[%c140, %c0_293] : memref<160x8xf32, #tpu.memory_space<vmem>>, vector<16x8xf32>
    %c0_294 = arith.constant 0 : index
    %c0_295 = arith.constant 0 : index
    %c0_296 = arith.constant 0 : index
    %c7_297 = arith.constant 7 : index
    %c0_298 = arith.constant 0 : index
    %c0_299 = arith.constant 0 : index
    %227 = vector.load %arg8[%c0_294, %c0_295, %c0_296, %c7_297, %c0_298, %c0_299] : memref<1x2x2x8x16x8xf32, #tpu.memory_space<vmem>>, vector<1x1x1x1x16x8xf32>
    %228 = vector.shape_cast %227 : vector<1x1x1x1x16x8xf32> to vector<16x8xf32>
    %229 = vector.shape_cast %226 : vector<16x8xf32> to vector<1x1x1x1x16x8xf32>
    tpu.vector_store %arg8[%c0_294, %c0_295, %c0_296, %c7_297, %c0_298, %c0_299], %229 {strides = array<i32>} : memref<1x2x2x8x16x8xf32, #tpu.memory_space<vmem>>, vector<1x1x1x1x16x8xf32>,
    %c0_300 = arith.constant 0 : index
    %c0_301 = arith.constant 0 : index
    %c1_302 = arith.constant 1 : index
    %c7_303 = arith.constant 7 : index
    %c0_304 = arith.constant 0 : index
    %c0_305 = arith.constant 0 : index
    %230 = vector.load %arg8[%c0_300, %c0_301, %c1_302, %c7_303, %c0_304, %c0_305] : memref<1x2x2x8x16x8xf32, #tpu.memory_space<vmem>>, vector<1x1x1x1x16x8xf32>
    %231 = vector.shape_cast %230 : vector<1x1x1x1x16x8xf32> to vector<16x8xf32>
    %232 = vector.shape_cast %226 : vector<16x8xf32> to vector<1x1x1x1x16x8xf32>
    tpu.vector_store %arg8[%c0_300, %c0_301, %c1_302, %c7_303, %c0_304, %c0_305], %232 {strides = array<i32>} : memref<1x2x2x8x16x8xf32, #tpu.memory_space<vmem>>, vector<1x1x1x1x16x8xf32>,
    %c0_306 = arith.constant 0 : index
    %c1_307 = arith.constant 1 : index
    %c0_308 = arith.constant 0 : index
    %c7_309 = arith.constant 7 : index
    %c0_310 = arith.constant 0 : index
    %c0_311 = arith.constant 0 : index
    %233 = vector.load %arg8[%c0_306, %c1_307, %c0_308, %c7_309, %c0_310, %c0_311] : memref<1x2x2x8x16x8xf32, #tpu.memory_space<vmem>>, vector<1x1x1x1x16x8xf32>
    %234 = vector.shape_cast %233 : vector<1x1x1x1x16x8xf32> to vector<16x8xf32>
    %235 = vector.shape_cast %226 : vector<16x8xf32> to vector<1x1x1x1x16x8xf32>
    tpu.vector_store %arg8[%c0_306, %c1_307, %c0_308, %c7_309, %c0_310, %c0_311], %235 {strides = array<i32>} : memref<1x2x2x8x16x8xf32, #tpu.memory_space<vmem>>, vector<1x1x1x1x16x8xf32>,
    %c0_312 = arith.constant 0 : index
    %c1_313 = arith.constant 1 : index
    %c1_314 = arith.constant 1 : index
    %c7_315 = arith.constant 7 : index
    %c0_316 = arith.constant 0 : index
    %c0_317 = arith.constant 0 : index
    %236 = vector.load %arg8[%c0_312, %c1_313, %c1_314, %c7_315, %c0_316, %c0_317] : memref<1x2x2x8x16x8xf32, #tpu.memory_space<vmem>>, vector<1x1x1x1x16x8xf32>
    %237 = vector.shape_cast %236 : vector<1x1x1x1x16x8xf32> to vector<16x8xf32>
    %238 = vector.shape_cast %226 : vector<16x8xf32> to vector<1x1x1x1x16x8xf32>
    tpu.vector_store %arg8[%c0_312, %c1_313, %c1_314, %c7_315, %c0_316, %c0_317], %238 {strides = array<i32>} : memref<1x2x2x8x16x8xf32, #tpu.memory_space<vmem>>, vector<1x1x1x1x16x8xf32>,
    return
  }
  func.func @transform_0(%arg0: i32, %arg1: i32) -> (i32, i32, i32, i32) {
    %c0_i32 = arith.constant 0 : i32
    %c0_i32_0 = arith.constant 0 : i32
    %c0_i32_1 = arith.constant 0 : i32
    return %arg0, %arg1, %c0_i32, %c0_i32_0 : i32, i32, i32, i32
  }
  func.func @transform_1(%arg0: i32, %arg1: i32) -> (i32, i32, i32) {
    %c0_i32 = arith.constant 0 : i32
    %c0_i32_0 = arith.constant 0 : i32
    %c0_i32_1 = arith.constant 0 : i32
    return %arg1, %c0_i32, %c0_i32_0 : i32, i32, i32
  }
  func.func @transform_2(%arg0: i32, %arg1: i32) -> (i32, i32, i32) {
    %c0_i32 = arith.constant 0 : i32
    %c0_i32_0 = arith.constant 0 : i32
    %c0_i32_1 = arith.constant 0 : i32
    %c0_i32_2 = arith.constant 0 : i32
    return %c0_i32, %c0_i32_0, %c0_i32_1 : i32, i32, i32
  }
  func.func @transform_3(%arg0: i32, %arg1: i32) -> (i32, i32) {
    %c0_i32 = arith.constant 0 : i32
    %c0_i32_0 = arith.constant 0 : i32
    %c0_i32_1 = arith.constant 0 : i32
    return %c0_i32, %c0_i32_0 : i32, i32
  }
  func.func @transform_4(%arg0: i32, %arg1: i32) -> (i32, i32, i32) {
    %c0_i32 = arith.constant 0 : i32
    %c0_i32_0 = arith.constant 0 : i32
    %c0_i32_1 = arith.constant 0 : i32
    %c0_i32_2 = arith.constant 0 : i32
    return %c0_i32, %c0_i32_0, %c0_i32_1 : i32, i32, i32
  }
  func.func @transform_5(%arg0: i32, %arg1: i32) -> (i32, i32) {
    %c0_i32 = arith.constant 0 : i32
    %c0_i32_0 = arith.constant 0 : i32
    %c0_i32_1 = arith.constant 0 : i32
    return %c0_i32, %c0_i32_0 : i32, i32
  }
  func.func @transform_6(%arg0: i32, %arg1: i32) -> (i32, i32, i32, i32, i32, i32) {
    %c0_i32 = arith.constant 0 : i32
    %c0_i32_0 = arith.constant 0 : i32
    %c0_i32_1 = arith.constant 0 : i32
    %c0_i32_2 = arith.constant 0 : i32
    %c0_i32_3 = arith.constant 0 : i32
    return %arg0, %c0_i32, %c0_i32_0, %arg1, %c0_i32_1, %c0_i32_2 : i32, i32, i32, i32, i32, i32
  }
}

</mosaic_0001>

<llo_original>
// kernel: _lambda_.2
$region0: #{_lambda_.2}
  #allocation0 [shape = 'u32[]', space=smem, size = 0x4, offset = 0x4, fixed_abs, tag = 'smem constant byte address 0x4 - core index']
  #allocation1 [shape = 'u32[72,128]{1,0:T(1,128)}', space=vmem, size = 0x9000, scoped, tag = 'internal scratch']
  #allocation2 [shape = 'f32[256,4]{1,0:T(8,128)}', space=vmem, size = 0x20000, scoped, tag = 'scratch operand']
  #allocation3 [shape = 'f32[208,8]{1,0:T(8,128)}', space=vmem, size = 0x1a000, scoped, tag = 'scratch operand']
  #allocation4 [shape = 'f32[160,8]{1,0:T(8,128)}', space=vmem, size = 0x14000, scoped, tag = 'scratch operand']
  %s0 = inlined_call_operand.vmem [shape: bf16[2,2,256,4], index: 0, kind: input, shape index: {}]
  %s1 = inlined_call_operand.vmem [shape: f32[2,208,1], index: 1, kind: input, shape index: {}]
  %s2 = inlined_call_operand.vmem [shape: bf16[9,4,8], index: 2, kind: input, shape index: {}]
  %s3 = inlined_call_operand.vmem [shape: f32[1,8], index: 3, kind: input, shape index: {}, may-alias: {3,5,7}]
  %s4 = inlined_call_operand.vmem [shape: bf16[9,8,8], index: 4, kind: input, shape index: {}]
  %s5 = inlined_call_operand.vmem [shape: f32[1,8], index: 5, kind: input, shape index: {}, may-alias: {3,5,7}]
  %s6 = inlined_call_operand.vmem [shape: bf16[4,8], index: 6, kind: input, shape index: {}]
  %s7 = inlined_call_operand.vmem [shape: f32[1,8], index: 7, kind: input, shape index: {}, may-alias: {3,5,7}]
  %s8 = inlined_call_operand.vmem [shape: bf16[2,16,16,8], index: 8, kind: output, shape index: {}]
  %s9 = sld [smem:[#allocation0]]
  $region65: #{_lambda_.2} parent=0
    _
  %s11 = ssub.s32 1, %s9
  %s12 = scalar_select 0, %s11, %s9
  loop: start=0, step=1, limit=6
  $region2: #{_lambda_.2} parent=0 // loop_pre_header
    _
  $region3: #{_lambda_.2} parent=0 // loop_header
    %s14 = sphi 0, %s18
    %p15 = scmp.ge.s32.totalorder %s14, 6
    %s21 = sphi 0, %s33
    %s22 = sphi 0, %s29
    %s23 = sphi 0, %s21
    %s24 = sphi 0, %s22
    %s25 = sphi 0, %s23
    %s26 = sphi 0, %s24
    %s38 = sphi 0, %s40
    %s41 = sphi 0, %s38
    %s42 = sphi 0, %s41
    %s58 = sphi 0, %s42
    %s64 = sphi 0, %s66
    %s67 = sphi 0, %s64
    %s68 = sphi 0, %s67
    %s84 = sphi 0, %s68
    %s88 = sphi 0, %s88
    %s90 = sphi 0, %s88
    %s91 = sphi 0, %s90
    %s105 = sphi 0, %s91
    %s109 = sphi 0, %s109
    %s111 = sphi 0, %s109
    %s112 = sphi 0, %s111
    %s126 = sphi 0, %s112
    %s130 = sphi 0, %s130
    %s132 = sphi 0, %s130
    %s133 = sphi 0, %s132
    %s147 = sphi 0, %s133
    %s151 = sphi 0, %s151
    %s153 = sphi 0, %s151
    %s154 = sphi 0, %s153
    %s168 = sphi 0, %s154
    %s172 = sphi 0, %s172
    %s174 = sphi 0, %s172
    %s175 = sphi 0, %s174
    %s189 = sphi 0, %s175
    %s193 = sphi 0, %s193
    %s195 = sphi 0, %s193
    %s196 = sphi 0, %s195
    %s210 = sphi 0, %s196
    %s218 = sphi 0, %s220
    %s221 = sphi 0, %s218
    %s222 = sphi 0, %s221
    %s238 = sphi 0, %s222
  $region4: #{_lambda_.2} parent=0 // loop_header_branch
    %17 = sbr.rel (%p15) target = $region8
  $region5: #{_lambda_.2} parent=0 // loop_body
    %s19 = ssub.s32 %s14, 1
    %s20 = ssub.s32 %s14, 2
    %s27 = sadd.s32 1, %s22
    %p28 = scmp.ge.s32.totalorder %s27, 2
    %s29 = scalar_select %p28, 0, %s27
    %s30 = sadd.s32 1, %s21
    %s31 = scalar_select %p28, %s30, %s21
    %p32 = scmp.ge.s32.totalorder %s31, 2
    %s33 = scalar_select %p32, 0, %s31
    %s34 = ssub.s32 %s21, %s33
    %s35 = ssub.s32 %s22, %s29
    %s36 = sor.u32 %s34, %s35
    %p37 = scmp.eq.s32.totalorder %s36, 0
    %s39 = sadd.s32 %s38, 1
    %s40 = scalar_select %p37, %s38, %s39
    %p43 = pneg %p37
    %p44 = scmp.eq.s32.totalorder %s14, 3
    %p45 = por %p43, %p44
    %p46 = scmp.ne.s32.totalorder %s38, %s41
    %p47 = scmp.eq.s32.totalorder %s14, 0
    %p48 = por %p46, %p47
    %p49 = scmp.ne.s32.totalorder %s38, %s41
    %p50 = scmp.eq.s32.totalorder %s19, 3
    %p51 = por %p49, %p50
    %p52 = scmp.ne.s32.totalorder %s41, %s42
    %p53 = scmp.eq.s32.totalorder %s19, 0
    %p54 = por %p52, %p53
    %p55 = scmp.ne.s32.totalorder %s41, %s42
    %p56 = scmp.eq.s32.totalorder %s20, 3
    %p57 = por %p55, %p56
    %p59 = scmp.ne.s32.totalorder %s42, %s58
    %p60 = scmp.eq.s32.totalorder %s20, 0
    %p61 = por %p59, %p60
    %s62 = ssub.s32 %s22, %s29
    %p63 = scmp.eq.s32.totalorder %s62, 0
    %s65 = sadd.s32 %s64, 1
    %s66 = scalar_select %p63, %s64, %s65
    %p69 = pneg %p63
    %p70 = scmp.eq.s32.totalorder %s14, 3
    %p71 = por %p69, %p70
    %p72 = scmp.ne.s32.totalorder %s64, %s67
    %p73 = scmp.eq.s32.totalorder %s14, 0
    %p74 = por %p72, %p73
    %p75 = scmp.ne.s32.totalorder %s64, %s67
    %p76 = scmp.eq.s32.totalorder %s19, 3
    %p77 = por %p75, %p76
    %p78 = scmp.ne.s32.totalorder %s67, %s68
    %p79 = scmp.eq.s32.totalorder %s19, 0
    %p80 = por %p78, %p79
    %p81 = scmp.ne.s32.totalorder %s67, %s68
    %p82 = scmp.eq.s32.totalorder %s20, 3
    %p83 = por %p81, %p82
    %p85 = scmp.ne.s32.totalorder %s68, %s84
    %p86 = scmp.eq.s32.totalorder %s20, 0
    %p87 = por %p85, %p86
    %s89 = sadd.s32 %s88, 1
    %p92 = scmp.eq.s32.totalorder %s14, 3
    %p93 = scmp.ne.s32.totalorder %s88, %s90
    %p94 = scmp.eq.s32.totalorder %s14, 0
    %p95 = por %p93, %p94
    %p96 = scmp.ne.s32.totalorder %s88, %s90
    %p97 = scmp.eq.s32.totalorder %s19, 3
    %p98 = por %p96, %p97
    %p99 = scmp.ne.s32.totalorder %s90, %s91
    %p100 = scmp.eq.s32.totalorder %s19, 0
    %p101 = por %p99, %p100
    %p102 = scmp.ne.s32.totalorder %s90, %s91
    %p103 = scmp.eq.s32.totalorder %s20, 3
    %p104 = por %p102, %p103
    %p106 = scmp.ne.s32.totalorder %s91, %s105
    %p107 = scmp.eq.s32.totalorder %s20, 0
    %p108 = por %p106, %p107
    %s110 = sadd.s32 %s109, 1
    %p113 = scmp.eq.s32.totalorder %s14, 3
    %p114 = scmp.ne.s32.totalorder %s109, %s111
    %p115 = scmp.eq.s32.totalorder %s14, 0
    %p116 = por %p114, %p115
    %p117 = scmp.ne.s32.totalorder %s109, %s111
    %p118 = scmp.eq.s32.totalorder %s19, 3
    %p119 = por %p117, %p118
    %p120 = scmp.ne.s32.totalorder %s111, %s112
    %p121 = scmp.eq.s32.totalorder %s19, 0
    %p122 = por %p120, %p121
    %p123 = scmp.ne.s32.totalorder %s111, %s112
    %p124 = scmp.eq.s32.totalorder %s20, 3
    %p125 = por %p123, %p124
    %p127 = scmp.ne.s32.totalorder %s112, %s126
    %p128 = scmp.eq.s32.totalorder %s20, 0
    %p129 = por %p127, %p128
    %s131 = sadd.s32 %s130, 1
    %p134 = scmp.eq.s32.totalorder %s14, 3
    %p135 = scmp.ne.s32.totalorder %s130, %s132
    %p136 = scmp.eq.s32.totalorder %s14, 0
    %p137 = por %p135, %p136
    %p138 = scmp.ne.s32.totalorder %s130, %s132
    %p139 = scmp.eq.s32.totalorder %s19, 3
    %p140 = por %p138, %p139
    %p141 = scmp.ne.s32.totalorder %s132, %s133
    %p142 = scmp.eq.s32.totalorder %s19, 0
    %p143 = por %p141, %p142
    %p144 = scmp.ne.s32.totalorder %s132, %s133
    %p145 = scmp.eq.s32.totalorder %s20, 3
    %p146 = por %p144, %p145
    %p148 = scmp.ne.s32.totalorder %s133, %s147
    %p149 = scmp.eq.s32.totalorder %s20, 0
    %p150 = por %p148, %p149
    %s152 = sadd.s32 %s151, 1
    %p155 = scmp.eq.s32.totalorder %s14, 3
    %p156 = scmp.ne.s32.totalorder %s151, %s153
    %p157 = scmp.eq.s32.totalorder %s14, 0
    %p158 = por %p156, %p157
    %p159 = scmp.ne.s32.totalorder %s151, %s153
    %p160 = scmp.eq.s32.totalorder %s19, 3
    %p161 = por %p159, %p160
    %p162 = scmp.ne.s32.totalorder %s153, %s154
    %p163 = scmp.eq.s32.totalorder %s19, 0
    %p164 = por %p162, %p163
    %p165 = scmp.ne.s32.totalorder %s153, %s154
    %p166 = scmp.eq.s32.totalorder %s20, 3
    %p167 = por %p165, %p166
    %p169 = scmp.ne.s32.totalorder %s154, %s168
    %p170 = scmp.eq.s32.totalorder %s20, 0
    %p171 = por %p169, %p170
    %s173 = sadd.s32 %s172, 1
    %p176 = scmp.eq.s32.totalorder %s14, 3
    %p177 = scmp.ne.s32.totalorder %s172, %s174
    %p178 = scmp.eq.s32.totalorder %s14, 0
    %p179 = por %p177, %p178
    %p180 = scmp.ne.s32.totalorder %s172, %s174
    %p181 = scmp.eq.s32.totalorder %s19, 3
    %p182 = por %p180, %p181
    %p183 = scmp.ne.s32.totalorder %s174, %s175
    %p184 = scmp.eq.s32.totalorder %s19, 0
    %p185 = por %p183, %p184
    %p186 = scmp.ne.s32.totalorder %s174, %s175
    %p187 = scmp.eq.s32.totalorder %s20, 3
    %p188 = por %p186, %p187
    %p190 = scmp.ne.s32.totalorder %s175, %s189
    %p191 = scmp.eq.s32.totalorder %s20, 0
    %p192 = por %p190, %p191
    %s194 = sadd.s32 %s193, 1
    %p197 = scmp.eq.s32.totalorder %s14, 3
    %p198 = scmp.ne.s32.totalorder %s193, %s195
    %p199 = scmp.eq.s32.totalorder %s14, 0
    %p200 = por %p198, %p199
    %p201 = scmp.ne.s32.totalorder %s193, %s195
    %p202 = scmp.eq.s32.totalorder %s19, 3
    %p203 = por %p201, %p202
    %p204 = scmp.ne.s32.totalorder %s195, %s196
    %p205 = scmp.eq.s32.totalorder %s19, 0
    %p206 = por %p204, %p205
    %p207 = scmp.ne.s32.totalorder %s195, %s196
    %p208 = scmp.eq.s32.totalorder %s20, 3
    %p209 = por %p207, %p208
    %p211 = scmp.ne.s32.totalorder %s196, %s210
    %p212 = scmp.eq.s32.totalorder %s20, 0
    %p213 = por %p211, %p212
    %s214 = ssub.s32 %s21, %s33
    %s215 = ssub.s32 %s22, %s29
    %s216 = sor.u32 %s214, %s215
    %p217 = scmp.eq.s32.totalorder %s216, 0
    %s219 = sadd.s32 %s218, 1
    %s220 = scalar_select %p217, %s218, %s219
    %p223 = pneg %p217
    %p224 = scmp.eq.s32.totalorder %s14, 3
    %p225 = por %p223, %p224
    %p226 = scmp.ne.s32.totalorder %s218, %s221
    %p227 = scmp.eq.s32.totalorder %s14, 0
    %p228 = por %p226, %p227
    %p229 = scmp.ne.s32.totalorder %s218, %s221
    %p230 = scmp.eq.s32.totalorder %s19, 3
    %p231 = por %p229, %p230
    %p232 = scmp.ne.s32.totalorder %s221, %s222
    %p233 = scmp.eq.s32.totalorder %s19, 0
    %p234 = por %p232, %p233
    %p235 = scmp.ne.s32.totalorder %s221, %s222
    %p236 = scmp.eq.s32.totalorder %s20, 3
    %p237 = por %p235, %p236
    %p239 = scmp.ne.s32.totalorder %s222, %s238
    %p240 = scmp.eq.s32.totalorder %s20, 0
    %p241 = por %p239, %p240
    %p242 = scmp.le.s32.totalorder 1, %s14
    %p243 = scmp.lt.s32.totalorder %s14, 5
    %p244 = pnand %p242, %p243
    %p245 = pneg %p244
    // Predicated region
    $region9: #{_lambda_.2} parent=5 // pred_check
      _
    $region10: #{_lambda_.2} parent=5 // pred_check_branch
      %247 = sbr.rel (%p244) target = $region12
    $region11: #{_lambda_.2} parent=5 // pred_region
      %s248 = ssub.s32 %s14, 1
      // Predicated region
      $region13: #{_lambda_.2} parent=11 // pred_check
        %p249 = pneg %p101
      $region14: #{_lambda_.2} parent=11 // pred_check_branch
        %251 = sbr.rel (%p249) target = $region16
      $region15: #{_lambda_.2} parent=11 // pred_region
        _
      $region16: #{_lambda_.2} parent=11 // pred_fallthru
        _
      // Predicated region
      $region17: #{_lambda_.2} parent=11 // pred_check
        %p252 = pneg %p122
      $region18: #{_lambda_.2} parent=11 // pred_check_branch
        %254 = sbr.rel (%p252) target = $region20
      $region19: #{_lambda_.2} parent=11 // pred_region
        _
      $region20: #{_lambda_.2} parent=11 // pred_fallthru
        _
      // Predicated region
      $region21: #{_lambda_.2} parent=11 // pred_check
        %p255 = pneg %p143
      $region22: #{_lambda_.2} parent=11 // pred_check_branch
        %257 = sbr.rel (%p255) target = $region24
      $region23: #{_lambda_.2} parent=11 // pred_region
        _
      $region24: #{_lambda_.2} parent=11 // pred_fallthru
        _
      // Predicated region
      $region25: #{_lambda_.2} parent=11 // pred_check
        %p258 = pneg %p164
      $region26: #{_lambda_.2} parent=11 // pred_check_branch
        %260 = sbr.rel (%p258) target = $region28
      $region27: #{_lambda_.2} parent=11 // pred_region
        _
      $region28: #{_lambda_.2} parent=11 // pred_fallthru
        _
      // Predicated region
      $region29: #{_lambda_.2} parent=11 // pred_check
        %p261 = pneg %p185
      $region30: #{_lambda_.2} parent=11 // pred_check_branch
        %263 = sbr.rel (%p261) target = $region32
      $region31: #{_lambda_.2} parent=11 // pred_region
        _
      $region32: #{_lambda_.2} parent=11 // pred_fallthru
        _
      // Predicated region
      $region33: #{_lambda_.2} parent=11 // pred_check
        %p264 = pneg %p206
      $region34: #{_lambda_.2} parent=11 // pred_check_branch
        %266 = sbr.rel (%p264) target = $region36
      $region35: #{_lambda_.2} parent=11 // pred_region
        _
      $region36: #{_lambda_.2} parent=11 // pred_fallthru
        _
    $region12: #{_lambda_.2} parent=5 // pred_fallthru
      _
    %p267 = scmp.lt.s32.totalorder %s14, 4
    // Predicated region
    $region37: #{_lambda_.2} parent=5 // pred_check
      %p268 = pneg %p267
    $region38: #{_lambda_.2} parent=5 // pred_check_branch
      %270 = sbr.rel (%p268) target = $region40
    $region39: #{_lambda_.2} parent=5 // pred_region
      // Predicated region
      $region41: #{_lambda_.2} parent=39 // pred_check
        %p271 = pneg %p48
      $region42: #{_lambda_.2} parent=39 // pred_check_branch
        %273 = sbr.rel (%p271) target = $region44
      $region43: #{_lambda_.2} parent=39 // pred_region
        %p274 = scmp.lt.s32.totalorder %s21, 1
        %s275 = scalar_select %p274, %s21, 1
        %p276 = scmp.lt.s32.totalorder %s22, 1
        %s277 = scalar_select %p276, %s22, 1
        %s278 = smul.addr %s277, 32
        %s279 = smul.addr %s275, 64
        %s280 = sadd.s32 %s278, %s279
        %s281 = smul.addr %s280, 4
        %s282 = scalar_lea.vmem %s0, %s281
      $region44: #{_lambda_.2} parent=39 // pred_fallthru
        _
      // Predicated region
      $region45: #{_lambda_.2} parent=39 // pred_check
        %p283 = pneg %p74
      $region46: #{_lambda_.2} parent=39 // pred_check_branch
        %285 = sbr.rel (%p283) target = $region48
      $region47: #{_lambda_.2} parent=39 // pred_region
        %p286 = scmp.lt.s32.totalorder %s22, 1
        %s287 = scalar_select %p286, %s22, 1
        %s288 = smul.addr %s287, 26
        %s289 = smul.addr %s288, 8
        %s290 = scalar_lea.vmem %s1, %s289
      $region48: #{_lambda_.2} parent=39 // pred_fallthru
        _
    $region40: #{_lambda_.2} parent=5 // pred_fallthru
      _
    %p291 = scmp.le.s32.totalorder 1, %s14
    %p292 = scmp.lt.s32.totalorder %s14, 5
    %p293 = pnand %p291, %p292
    %p294 = pneg %p293
    // Predicated region
    $region49: #{_lambda_.2} parent=5 // pred_check
      _
    $region50: #{_lambda_.2} parent=5 // pred_check_branch
      %296 = sbr.rel (%p293) target = $region52
    $region51: #{_lambda_.2} parent=5 // pred_region
      %s297 = ssub.s32 %s14, 1
      %p298 = scmp.lt.s32.totalorder %s23, 1
      %s299 = scalar_select %p298, %s23, 1
      %p300 = scmp.lt.s32.totalorder %s24, 1
      %s301 = scalar_select %p300, %s24, 1
      %s302 = smul.addr %s301, 32
      %s303 = smul.addr %s299, 64
      %s304 = sadd.s32 %s302, %s303
      %s305 = smul.addr %s304, 4
      %s306 = scalar_lea.vmem %s0, %s305
      %p307 = pneg %p54
      %p308 = pneg %p51
      %p309 = scmp.lt.s32.totalorder %s24, 1
      %s310 = scalar_select %p309, %s24, 1
      %s311 = smul.addr %s310, 26
      %s312 = smul.addr %s311, 8
      %s313 = scalar_lea.vmem %s1, %s312
      %p314 = pneg %p80
      %p315 = pneg %p77
      %p316 = pneg %p101
      %p317 = pneg %p98
      %p318 = pneg %p122
      %p319 = pneg %p119
      %p320 = pneg %p143
      %p321 = pneg %p140
      %p322 = pneg %p164
      %p323 = pneg %p161
      %p324 = pneg %p185
      %p325 = pneg %p182
      %p326 = pneg %p206
      %p327 = pneg %p203
      %p328 = pneg %p234
      %p329 = pneg %p231
      %s330 = smul.u32 8, %s24
      %p331 = scmp.lt.s32.totalorder %s23, 1
      %s332 = scalar_select %p331, %s23, 1
      %p333 = scmp.lt.s32.totalorder %s330, 15
      %s334 = scalar_select %p333, %s330, 15
      %s335 = smul.addr %s334, 2
      %s336 = smul.addr %s332, 32
      %s337 = sadd.s32 %s335, %s336
      %s338 = smul.addr %s337, 4
      %s339 = scalar_lea.vmem %s8, %s338
      %p340 = scmp.lt.s32.totalorder %s23, 1
      %s341 = scalar_select %p340, %s23, 1
      %p342 = scmp.lt.s32.totalorder %s24, 1
      %s343 = scalar_select %p342, %s24, 1
      %s344 = smul.addr %s343, 32
      %s345 = smul.addr %s341, 64
      %s346 = sadd.s32 %s344, %s345
      %s347 = smul.addr %s346, 4
      %s348 = scalar_lea.vmem %s0, %s347
      %p349 = scmp.lt.s32.totalorder %s24, 1
      %s350 = scalar_select %p349, %s24, 1
      %s351 = smul.addr %s350, 26
      %s352 = smul.addr %s351, 8
      %s353 = scalar_lea.vmem %s1, %s352
      %s354 = smul.u32 8, %s24
      %p355 = scmp.lt.s32.totalorder %s23, 1
      %s356 = scalar_select %p355, %s23, 1
      %p357 = scmp.lt.s32.totalorder %s354, 15
      %s358 = scalar_select %p357, %s354, 15
      %s359 = smul.addr %s358, 2
      %s360 = smul.addr %s356, 32
      %s361 = sadd.s32 %s359, %s360
      %s362 = smul.addr %s361, 4
      %s363 = scalar_lea.vmem %s8, %s362
      %s364 = smul.u32 8, %s24
      %v366 = vld [vmem:[%s348] sm:$0xf]
      %v367 = vld [vmem:[%s348 + $0x4] sm:$0xf]
      %v368 = vld [vmem:[%s348 + $0x8] sm:$0xf]
      %v369 = vld [vmem:[%s348 + $0xc] sm:$0xf]
      %v370 = vld [vmem:[%s348 + $0x10] sm:$0xf]
      %v371 = vld [vmem:[%s348 + $0x14] sm:$0xf]
      %v372 = vld [vmem:[%s348 + $0x18] sm:$0xf]
      %v373 = vld [vmem:[%s348 + $0x1c] sm:$0xf]
      %v374 = vld [vmem:[%s348 + $0x20] sm:$0xf]
      %v375 = vld [vmem:[%s348 + $0x24] sm:$0xf]
      %v376 = vld [vmem:[%s348 + $0x28] sm:$0xf]
      %v377 = vld [vmem:[%s348 + $0x2c] sm:$0xf]
      %v378 = vld [vmem:[%s348 + $0x30] sm:$0xf]
      %v379 = vld [vmem:[%s348 + $0x34] sm:$0xf]
      %v380 = vld [vmem:[%s348 + $0x38] sm:$0xf]
      %v381 = vld [vmem:[%s348 + $0x3c] sm:$0xf]
      %v382 = vld [vmem:[%s348 + $0x40] sm:$0xf]
      %v383 = vld [vmem:[%s348 + $0x44] sm:$0xf]
      %v384 = vld [vmem:[%s348 + $0x48] sm:$0xf]
      %v385 = vld [vmem:[%s348 + $0x4c] sm:$0xf]
      %v386 = vld [vmem:[%s348 + $0x50] sm:$0xf]
      %v387 = vld [vmem:[%s348 + $0x54] sm:$0xf]
      %v388 = vld [vmem:[%s348 + $0x58] sm:$0xf]
      %v389 = vld [vmem:[%s348 + $0x5c] sm:$0xf]
      %v390 = vld [vmem:[%s348 + $0x60] sm:$0xf]
      %v391 = vld [vmem:[%s348 + $0x64] sm:$0xf]
      %v392 = vld [vmem:[%s348 + $0x68] sm:$0xf]
      %v393 = vld [vmem:[%s348 + $0x6c] sm:$0xf]
      %v394 = vld [vmem:[%s348 + $0x70] sm:$0xf]
      %v395 = vld [vmem:[%s348 + $0x74] sm:$0xf]
      %v396 = vld [vmem:[%s348 + $0x78] sm:$0xf]
      %v397 = vld [vmem:[%s348 + $0x7c] sm:$0xf]
      %v398 = vunpack.c.l.bf16 %v366
      %v399 = vunpack.c.l.bf16 %v367
      %v400 = vunpack.c.l.bf16 %v368
      %v401 = vunpack.c.l.bf16 %v369
      %v402 = vunpack.c.l.bf16 %v370
      %v403 = vunpack.c.l.bf16 %v371
      %v404 = vunpack.c.l.bf16 %v372
      %v405 = vunpack.c.l.bf16 %v373
      %v406 = vunpack.c.l.bf16 %v374
      %v407 = vunpack.c.l.bf16 %v375
      %v408 = vunpack.c.l.bf16 %v376
      %v409 = vunpack.c.l.bf16 %v377
      %v410 = vunpack.c.l.bf16 %v378
      %v411 = vunpack.c.l.bf16 %v379
      %v412 = vunpack.c.l.bf16 %v380
      %v413 = vunpack.c.l.bf16 %v381
      %v414 = vunpack.c.l.bf16 %v382
      %v415 = vunpack.c.l.bf16 %v383
      %v416 = vunpack.c.l.bf16 %v384
      %v417 = vunpack.c.l.bf16 %v385
      %v418 = vunpack.c.l.bf16 %v386
      %v419 = vunpack.c.l.bf16 %v387
      %v420 = vunpack.c.l.bf16 %v388
      %v421 = vunpack.c.l.bf16 %v389
      %v422 = vunpack.c.l.bf16 %v390
      %v423 = vunpack.c.l.bf16 %v391
      %v424 = vunpack.c.l.bf16 %v392
      %v425 = vunpack.c.l.bf16 %v393
      %v426 = vunpack.c.l.bf16 %v394
      %v427 = vunpack.c.l.bf16 %v395
      %v428 = vunpack.c.l.bf16 %v396
      %v429 = vunpack.c.l.bf16 %v397
      %vm430 = vcmask 31744
      %431 = vst.msk [vmem:[#allocation2] sm:$0xff] %vm430, %v398
      %432 = vst.msk [vmem:[#allocation2 + $0x8] sm:$0xff] %vm430, %v399
      %433 = vst.msk [vmem:[#allocation2 + $0x10] sm:$0xff] %vm430, %v400
      %434 = vst.msk [vmem:[#allocation2 + $0x18] sm:$0xff] %vm430, %v401
      %435 = vst.msk [vmem:[#allocation2 + $0x20] sm:$0xff] %vm430, %v402
      %436 = vst.msk [vmem:[#allocation2 + $0x28] sm:$0xff] %vm430, %v403
      %437 = vst.msk [vmem:[#allocation2 + $0x30] sm:$0xff] %vm430, %v404
      %438 = vst.msk [vmem:[#allocation2 + $0x38] sm:$0xff] %vm430, %v405
      %439 = vst.msk [vmem:[#allocation2 + $0x40] sm:$0xff] %vm430, %v406
      %440 = vst.msk [vmem:[#allocation2 + $0x48] sm:$0xff] %vm430, %v407
      %441 = vst.msk [vmem:[#allocation2 + $0x50] sm:$0xff] %vm430, %v408
      %442 = vst.msk [vmem:[#allocation2 + $0x58] sm:$0xff] %vm430, %v409
      %443 = vst.msk [vmem:[#allocation2 + $0x60] sm:$0xff] %vm430, %v410
      %444 = vst.msk [vmem:[#allocation2 + $0x68] sm:$0xff] %vm430, %v411
      %445 = vst.msk [vmem:[#allocation2 + $0x70] sm:$0xff] %vm430, %v412
      %446 = vst.msk [vmem:[#allocation2 + $0x78] sm:$0xff] %vm430, %v413
      %447 = vst.msk [vmem:[#allocation2 + $0x80] sm:$0xff] %vm430, %v414
      %448 = vst.msk [vmem:[#allocation2 + $0x88] sm:$0xff] %vm430, %v415
      %449 = vst.msk [vmem:[#allocation2 + $0x90] sm:$0xff] %vm430, %v416
      %450 = vst.msk [vmem:[#allocation2 + $0x98] sm:$0xff] %vm430, %v417
      %451 = vst.msk [vmem:[#allocation2 + $0xa0] sm:$0xff] %vm430, %v418
      %452 = vst.msk [vmem:[#allocation2 + $0xa8] sm:$0xff] %vm430, %v419
      %453 = vst.msk [vmem:[#allocation2 + $0xb0] sm:$0xff] %vm430, %v420
      %454 = vst.msk [vmem:[#allocation2 + $0xb8] sm:$0xff] %vm430, %v421
      %455 = vst.msk [vmem:[#allocation2 + $0xc0] sm:$0xff] %vm430, %v422
      %456 = vst.msk [vmem:[#allocation2 + $0xc8] sm:$0xff] %vm430, %v423
      %457 = vst.msk [vmem:[#allocation2 + $0xd0] sm:$0xff] %vm430, %v424
      %458 = vst.msk [vmem:[#allocation2 + $0xd8] sm:$0xff] %vm430, %v425
      %459 = vst.msk [vmem:[#allocation2 + $0xe0] sm:$0xff] %vm430, %v426
      %460 = vst.msk [vmem:[#allocation2 + $0xe8] sm:$0xff] %vm430, %v427
      %461 = vst.msk [vmem:[#allocation2 + $0xf0] sm:$0xff] %vm430, %v428
      %462 = vst.msk [vmem:[#allocation2 + $0xf8] sm:$0xff] %vm430, %v429
      %v463 = vld [vmem:[#allocation2] sm:$0xff]
      %v464 = vld [vmem:[#allocation2 + $0x8] sm:$0xff]
      %v465 = vld [vmem:[#allocation2 + $0x10] sm:$0xff]
      %v466 = vld [vmem:[#allocation2 + $0x18] sm:$0xff]
      %v467 = vld [vmem:[#allocation2 + $0x20] sm:$0xff]
      %v468 = vld [vmem:[#allocation2 + $0x28] sm:$0xff]
      %v469 = vld [vmem:[#allocation2 + $0x30] sm:$0xff]
      %v470 = vld [vmem:[#allocation2 + $0x38] sm:$0xff]
      %v471 = vld [vmem:[#allocation2 + $0x40] sm:$0xff]
      %v472 = vld [vmem:[#allocation2 + $0x48] sm:$0xff]
      %v473 = vld [vmem:[#allocation2 + $0x50] sm:$0xff]
      %v474 = vld [vmem:[#allocation2 + $0x58] sm:$0xff]
      %v475 = vld [vmem:[#allocation2 + $0x60] sm:$0xff]
      %v476 = vld [vmem:[#allocation2 + $0x68] sm:$0xff]
      %v477 = vld [vmem:[#allocation2 + $0x70] sm:$0xff]
      %v478 = vld [vmem:[#allocation2 + $0x78] sm:$0xff]
      %v479 = vld [vmem:[#allocation2 + $0x80] sm:$0xff]
      %v480 = vld [vmem:[#allocation2 + $0x88] sm:$0xff]
      %v481 = vld [vmem:[#allocation2 + $0x90] sm:$0xff]
      %v482 = vld [vmem:[#allocation2 + $0x98] sm:$0xff]
      %v483 = vld [vmem:[#allocation2 + $0xa0] sm:$0xff]
      %v484 = vld [vmem:[#allocation2 + $0xa8] sm:$0xff]
      %v485 = vld [vmem:[#allocation2 + $0xb0] sm:$0xff]
      %v486 = vld [vmem:[#allocation2 + $0xb8] sm:$0xff]
      %v487 = vld [vmem:[#allocation2 + $0xc0] sm:$0xff]
      %v488 = vld [vmem:[#allocation2 + $0xc8] sm:$0xff]
      %v489 = vpack.c.bf16 %v464, %v463
      %v490 = vpack.c.bf16 %v466, %v465
      %v491 = vpack.c.bf16 %v468, %v467
      %v492 = vpack.c.bf16 %v470, %v469
      %v493 = vpack.c.bf16 %v472, %v471
      %v494 = vpack.c.bf16 %v474, %v473
      %v495 = vpack.c.bf16 %v476, %v475
      %v496 = vpack.c.bf16 %v478, %v477
      %v497 = vpack.c.bf16 %v480, %v479
      %v498 = vpack.c.bf16 %v482, %v481
      %v499 = vpack.c.bf16 %v484, %v483
      %v500 = vpack.c.bf16 %v486, %v485
      %v501 = vpack.c.bf16 %v488, %v487
      %v502 = vld [vmem:[%s2] sm:$0x3]
      %v503 = vld [vmem:[#allocation2 + $0x1] sm:$0xff]
      %v504 = vld [vmem:[#allocation2 + $0x9] sm:$0xff]
      %v505 = vld [vmem:[#allocation2 + $0x11] sm:$0xff]
      %v506 = vld [vmem:[#allocation2 + $0x19] sm:$0xff]
      %v507 = vld [vmem:[#allocation2 + $0x21] sm:$0xff]
      %v508 = vld [vmem:[#allocation2 + $0x29] sm:$0xff]
      %v509 = vld [vmem:[#allocation2 + $0x31] sm:$0xff]
      %v510 = vld [vmem:[#allocation2 + $0x39] sm:$0xff]
      %v511 = vld [vmem:[#allocation2 + $0x41] sm:$0xff]
      %v512 = vld [vmem:[#allocation2 + $0x49] sm:$0xff]
      %v513 = vld [vmem:[#allocation2 + $0x51] sm:$0xff]
      %v514 = vld [vmem:[#allocation2 + $0x59] sm:$0xff]
      %v515 = vld [vmem:[#allocation2 + $0x61] sm:$0xff]
      %v516 = vld [vmem:[#allocation2 + $0x69] sm:$0xff]
      %v517 = vld [vmem:[#allocation2 + $0x71] sm:$0xff]
      %v518 = vld [vmem:[#allocation2 + $0x79] sm:$0xff]
      %v519 = vld [vmem:[#allocation2 + $0x81] sm:$0xff]
      %v520 = vld [vmem:[#allocation2 + $0x89] sm:$0xff]
      %v521 = vld [vmem:[#allocation2 + $0x91] sm:$0xff]
      %v522 = vld [vmem:[#allocation2 + $0x99] sm:$0xff]
      %v523 = vld [vmem:[#allocation2 + $0xa1] sm:$0xff]
      %v524 = vld [vmem:[#allocation2 + $0xa9] sm:$0xff]
      %v525 = vld [vmem:[#allocation2 + $0xb1] sm:$0xff]
      %v526 = vld [vmem:[#allocation2 + $0xb9] sm:$0xff]
      %v527 = vld [vmem:[#allocation2 + $0xc1] sm:$0xff]
      %v528 = vld [vmem:[#allocation2 + $0xc9] sm:$0xff]
      %v529 = vpack.c.bf16 %v504, %v503
      %v530 = vpack.c.bf16 %v506, %v505
      %v531 = vpack.c.bf16 %v508, %v507
      %v532 = vpack.c.bf16 %v510, %v509
      %v533 = vpack.c.bf16 %v512, %v511
      %v534 = vpack.c.bf16 %v514, %v513
      %v535 = vpack.c.bf16 %v516, %v515
      %v536 = vpack.c.bf16 %v518, %v517
      %v537 = vpack.c.bf16 %v520, %v519
      %v538 = vpack.c.bf16 %v522, %v521
      %v539 = vpack.c.bf16 %v524, %v523
      %v540 = vpack.c.bf16 %v526, %v525
      %v541 = vpack.c.bf16 %v528, %v527
      %s542 = scalar_lea.vmem %s2, 2
      %v543 = vld [vmem:[%s542] sm:$0x3]
      %v545 = vsel %vm430, %v529, 0
      %v548 = vsel %vm430, %v530, 0
      %v551 = vsel %vm430, %v531, 0
      %v554 = vsel %vm430, %v532, 0
      %v557 = vsel %vm430, %v533, 0
      %v560 = vsel %vm430, %v534, 0
      %v563 = vsel %vm430, %v535, 0
      %v566 = vsel %vm430, %v536, 0
      %v569 = vsel %vm430, %v537, 0
      %v572 = vsel %vm430, %v538, 0
      %v575 = vsel %vm430, %v539, 0
      %v578 = vsel %vm430, %v540, 0
      %v581 = vsel %vm430, %v541, 0
      %vm583 = vcmask 1041408
      %v585 = vsel %vm583, %v543, 0
      %587 = vmatpush.bf16.msra.mxu0 0
      %588 = vmatpush.bf16.msra.mxu0 0
      %589 = vmatpush.bf16.msra.mxu0 0
      %590 = vmatpush.bf16.msra.mxu0 0
      %591 = vmatpush.bf16.msra.mxu0 0
      %592 = vmatpush.bf16.msra.mxu0 0
      %593 = vmatpush.bf16.msra.mxu0 0
      %594 = vmatpush.bf16.msra.mxu0 %v585
      %595 = vmatmul.bf16.gmra.mxu0 %v545
      %v596 = vpop.f32.mrf.mxu0
      %v597 = vadd.f32 0.0, %v596
      %v598 = vpop.f32.mrf.mxu0
      %v599 = vadd.f32 0.0, %v598
      %600 = vmatmul.bf16.gmra.mxu0 %v548
      %v601 = vpop.f32.mrf.mxu0
      %v602 = vadd.f32 0.0, %v601
      %v603 = vpop.f32.mrf.mxu0
      %v604 = vadd.f32 0.0, %v603
      %605 = vmatmul.bf16.gmra.mxu0 %v551
      %v606 = vpop.f32.mrf.mxu0
      %v607 = vadd.f32 0.0, %v606
      %v608 = vpop.f32.mrf.mxu0
      %v609 = vadd.f32 0.0, %v608
      %610 = vmatmul.bf16.gmra.mxu0 %v554
      %v611 = vpop.f32.mrf.mxu0
      %v612 = vadd.f32 0.0, %v611
      %v613 = vpop.f32.mrf.mxu0
      %v614 = vadd.f32 0.0, %v613
      %615 = vmatmul.bf16.gmra.mxu0 %v557
      %v616 = vpop.f32.mrf.mxu0
      %v617 = vadd.f32 0.0, %v616
      %v618 = vpop.f32.mrf.mxu0
      %v619 = vadd.f32 0.0, %v618
      %620 = vmatmul.bf16.gmra.mxu0 %v560
      %v621 = vpop.f32.mrf.mxu0
      %v622 = vadd.f32 0.0, %v621
      %v623 = vpop.f32.mrf.mxu0
      %v624 = vadd.f32 0.0, %v623
      %625 = vmatmul.bf16.gmra.mxu0 %v563
      %v626 = vpop.f32.mrf.mxu0
      %v627 = vadd.f32 0.0, %v626
      %v628 = vpop.f32.mrf.mxu0
      %v629 = vadd.f32 0.0, %v628
      %630 = vmatmul.bf16.gmra.mxu0 %v566
      %v631 = vpop.f32.mrf.mxu0
      %v632 = vadd.f32 0.0, %v631
      %v633 = vpop.f32.mrf.mxu0
      %v634 = vadd.f32 0.0, %v633
      %635 = vmatmul.bf16.gmra.mxu0 %v569
      %v636 = vpop.f32.mrf.mxu0
      %v637 = vadd.f32 0.0, %v636
      %v638 = vpop.f32.mrf.mxu0
      %v639 = vadd.f32 0.0, %v638
      %640 = vmatmul.bf16.gmra.mxu0 %v572
      %v641 = vpop.f32.mrf.mxu0
      %v642 = vadd.f32 0.0, %v641
      %v643 = vpop.f32.mrf.mxu0
      %v644 = vadd.f32 0.0, %v643
      %645 = vmatmul.bf16.gmra.mxu0 %v575
      %v646 = vpop.f32.mrf.mxu0
      %v647 = vadd.f32 0.0, %v646
      %v648 = vpop.f32.mrf.mxu0
      %v649 = vadd.f32 0.0, %v648
      %650 = vmatmul.bf16.gmra.mxu0 %v578
      %v651 = vpop.f32.mrf.mxu0
      %v652 = vadd.f32 0.0, %v651
      %v653 = vpop.f32.mrf.mxu0
      %v654 = vadd.f32 0.0, %v653
      %655 = vmatmul.bf16.gmra.mxu0 %v581
      %v656 = vpop.f32.mrf.mxu0
      %v657 = vadd.f32 0.0, %v656
      %v658 = vpop.f32.mrf.mxu0
      %v659 = vadd.f32 0.0, %v658
      %660 = vdwg.mxu0
      %v662 = vsel %vm430, %v489, 0
      %v665 = vsel %vm430, %v490, 0
      %v668 = vsel %vm430, %v491, 0
      %v671 = vsel %vm430, %v492, 0
      %v674 = vsel %vm430, %v493, 0
      %v677 = vsel %vm430, %v494, 0
      %v680 = vsel %vm430, %v495, 0
      %v683 = vsel %vm430, %v496, 0
      %v686 = vsel %vm430, %v497, 0
      %v689 = vsel %vm430, %v498, 0
      %v692 = vsel %vm430, %v499, 0
      %v695 = vsel %vm430, %v500, 0
      %v698 = vsel %vm430, %v501, 0
      %v701 = vsel %vm583, %v502, 0
      %703 = vmatpush.bf16.msra.mxu0 0
      %704 = vmatpush.bf16.msra.mxu0 0
      %705 = vmatpush.bf16.msra.mxu0 0
      %706 = vmatpush.bf16.msra.mxu0 0
      %707 = vmatpush.bf16.msra.mxu0 0
      %708 = vmatpush.bf16.msra.mxu0 0
      %709 = vmatpush.bf16.msra.mxu0 0
      %710 = vmatpush.bf16.msra.mxu0 %v701
      %711 = vmatmul.bf16.gmra.mxu0 %v662
      %v712 = vpop.f32.mrf.mxu0
      %v713 = vadd.f32 %v597, %v712
      %v714 = vpop.f32.mrf.mxu0
      %v715 = vadd.f32 %v599, %v714
      %716 = vmatmul.bf16.gmra.mxu0 %v665
      %v717 = vpop.f32.mrf.mxu0
      %v718 = vadd.f32 %v602, %v717
      %v719 = vpop.f32.mrf.mxu0
      %v720 = vadd.f32 %v604, %v719
      %721 = vmatmul.bf16.gmra.mxu0 %v668
      %v722 = vpop.f32.mrf.mxu0
      %v723 = vadd.f32 %v607, %v722
      %v724 = vpop.f32.mrf.mxu0
      %v725 = vadd.f32 %v609, %v724
      %726 = vmatmul.bf16.gmra.mxu0 %v671
      %v727 = vpop.f32.mrf.mxu0
      %v728 = vadd.f32 %v612, %v727
      %v729 = vpop.f32.mrf.mxu0
      %v730 = vadd.f32 %v614, %v729
      %731 = vmatmul.bf16.gmra.mxu0 %v674
      %v732 = vpop.f32.mrf.mxu0
      %v733 = vadd.f32 %v617, %v732
      %v734 = vpop.f32.mrf.mxu0
      %v735 = vadd.f32 %v619, %v734
      %736 = vmatmul.bf16.gmra.mxu0 %v677
      %v737 = vpop.f32.mrf.mxu0
      %v738 = vadd.f32 %v622, %v737
      %v739 = vpop.f32.mrf.mxu0
      %v740 = vadd.f32 %v624, %v739
      %741 = vmatmul.bf16.gmra.mxu0 %v680
      %v742 = vpop.f32.mrf.mxu0
      %v743 = vadd.f32 %v627, %v742
      %v744 = vpop.f32.mrf.mxu0
      %v745 = vadd.f32 %v629, %v744
      %746 = vmatmul.bf16.gmra.mxu0 %v683
      %v747 = vpop.f32.mrf.mxu0
      %v748 = vadd.f32 %v632, %v747
      %v749 = vpop.f32.mrf.mxu0
      %v750 = vadd.f32 %v634, %v749
      %751 = vmatmul.bf16.gmra.mxu0 %v686
      %v752 = vpop.f32.mrf.mxu0
      %v753 = vadd.f32 %v637, %v752
      %v754 = vpop.f32.mrf.mxu0
      %v755 = vadd.f32 %v639, %v754
      %756 = vmatmul.bf16.gmra.mxu0 %v689
      %v757 = vpop.f32.mrf.mxu0
      %v758 = vadd.f32 %v642, %v757
      %v759 = vpop.f32.mrf.mxu0
      %v760 = vadd.f32 %v644, %v759
      %761 = vmatmul.bf16.gmra.mxu0 %v692
      %v762 = vpop.f32.mrf.mxu0
      %v763 = vadd.f32 %v647, %v762
      %v764 = vpop.f32.mrf.mxu0
      %v765 = vadd.f32 %v649, %v764
      %766 = vmatmul.bf16.gmra.mxu0 %v695
      %v767 = vpop.f32.mrf.mxu0
      %v768 = vadd.f32 %v652, %v767
      %v769 = vpop.f32.mrf.mxu0
      %v770 = vadd.f32 %v654, %v769
      %771 = vmatmul.bf16.gmra.mxu0 %v698
      %v772 = vpop.f32.mrf.mxu0
      %v773 = vadd.f32 %v657, %v772
      %v774 = vpop.f32.mrf.mxu0
      %v775 = vadd.f32 %v659, %v774
      %776 = vdwg.mxu0
      %v777 = vld [vmem:[#allocation2 + $0x2] sm:$0xff]
      %v778 = vld [vmem:[#allocation2 + $0xa] sm:$0xff]
      %v779 = vld [vmem:[#allocation2 + $0x12] sm:$0xff]
      %v780 = vld [vmem:[#allocation2 + $0x1a] sm:$0xff]
      %v781 = vld [vmem:[#allocation2 + $0x22] sm:$0xff]
      %v782 = vld [vmem:[#allocation2 + $0x2a] sm:$0xff]
      %v783 = vld [vmem:[#allocation2 + $0x32] sm:$0xff]
      %v784 = vld [vmem:[#allocation2 + $0x3a] sm:$0xff]
      %v785 = vld [vmem:[#allocation2 + $0x42] sm:$0xff]
      %v786 = vld [vmem:[#allocation2 + $0x4a] sm:$0xff]
      %v787 = vld [vmem:[#allocation2 + $0x52] sm:$0xff]
      %v788 = vld [vmem:[#allocation2 + $0x5a] sm:$0xff]
      %v789 = vld [vmem:[#allocation2 + $0x62] sm:$0xff]
      %v790 = vld [vmem:[#allocation2 + $0x6a] sm:$0xff]
      %v791 = vld [vmem:[#allocation2 + $0x72] sm:$0xff]
      %v792 = vld [vmem:[#allocation2 + $0x7a] sm:$0xff]
      %v793 = vld [vmem:[#allocation2 + $0x82] sm:$0xff]
      %v794 = vld [vmem:[#allocation2 + $0x8a] sm:$0xff]
      %v795 = vld [vmem:[#allocation2 + $0x92] sm:$0xff]
      %v796 = vld [vmem:[#allocation2 + $0x9a] sm:$0xff]
      %v797 = vld [vmem:[#allocation2 + $0xa2] sm:$0xff]
      %v798 = vld [vmem:[#allocation2 + $0xaa] sm:$0xff]
      %v799 = vld [vmem:[#allocation2 + $0xb2] sm:$0xff]
      %v800 = vld [vmem:[#allocation2 + $0xba] sm:$0xff]
      %v801 = vld [vmem:[#allocation2 + $0xc2] sm:$0xff]
      %v802 = vld [vmem:[#allocation2 + $0xca] sm:$0xff]
      %v803 = vpack.c.bf16 %v778, %v777
      %v804 = vpack.c.bf16 %v780, %v779
      %v805 = vpack.c.bf16 %v782, %v781
      %v806 = vpack.c.bf16 %v784, %v783
      %v807 = vpack.c.bf16 %v786, %v785
      %v808 = vpack.c.bf16 %v788, %v787
      %v809 = vpack.c.bf16 %v790, %v789
      %v810 = vpack.c.bf16 %v792, %v791
      %v811 = vpack.c.bf16 %v794, %v793
      %v812 = vpack.c.bf16 %v796, %v795
      %v813 = vpack.c.bf16 %v798, %v797
      %v814 = vpack.c.bf16 %v800, %v799
      %v815 = vpack.c.bf16 %v802, %v801
      %s816 = scalar_lea.vmem %s2, 4
      %v817 = vld [vmem:[%s816] sm:$0x3]
      %v819 = vsel %vm430, %v803, 0
      %v822 = vsel %vm430, %v804, 0
      %v825 = vsel %vm430, %v805, 0
      %v828 = vsel %vm430, %v806, 0
      %v831 = vsel %vm430, %v807, 0
      %v834 = vsel %vm430, %v808, 0
      %v837 = vsel %vm430, %v809, 0
      %v840 = vsel %vm430, %v810, 0
      %v843 = vsel %vm430, %v811, 0
      %v846 = vsel %vm430, %v812, 0
      %v849 = vsel %vm430, %v813, 0
      %v852 = vsel %vm430, %v814, 0
      %v855 = vsel %vm430, %v815, 0
      %v858 = vsel %vm583, %v817, 0
      %860 = vmatpush.bf16.msra.mxu0 0
      %861 = vmatpush.bf16.msra.mxu0 0
      %862 = vmatpush.bf16.msra.mxu0 0
      %863 = vmatpush.bf16.msra.mxu0 0
      %864 = vmatpush.bf16.msra.mxu0 0
      %865 = vmatpush.bf16.msra.mxu0 0
      %866 = vmatpush.bf16.msra.mxu0 0
      %867 = vmatpush.bf16.msra.mxu0 %v858
      %868 = vmatmul.bf16.gmra.mxu0 %v819
      %v869 = vpop.f32.mrf.mxu0
      %v870 = vadd.f32 0.0, %v869
      %v871 = vpop.f32.mrf.mxu0
      %v872 = vadd.f32 0.0, %v871
      %873 = vmatmul.bf16.gmra.mxu0 %v822
      %v874 = vpop.f32.mrf.mxu0
      %v875 = vadd.f32 0.0, %v874
      %v876 = vpop.f32.mrf.mxu0
      %v877 = vadd.f32 0.0, %v876
      %878 = vmatmul.bf16.gmra.mxu0 %v825
      %v879 = vpop.f32.mrf.mxu0
      %v880 = vadd.f32 0.0, %v879
      %v881 = vpop.f32.mrf.mxu0
      %v882 = vadd.f32 0.0, %v881
      %883 = vmatmul.bf16.gmra.mxu0 %v828
      %v884 = vpop.f32.mrf.mxu0
      %v885 = vadd.f32 0.0, %v884
      %v886 = vpop.f32.mrf.mxu0
      %v887 = vadd.f32 0.0, %v886
      %888 = vmatmul.bf16.gmra.mxu0 %v831
      %v889 = vpop.f32.mrf.mxu0
      %v890 = vadd.f32 0.0, %v889
      %v891 = vpop.f32.mrf.mxu0
      %v892 = vadd.f32 0.0, %v891
      %893 = vmatmul.bf16.gmra.mxu0 %v834
      %v894 = vpop.f32.mrf.mxu0
      %v895 = vadd.f32 0.0, %v894
      %v896 = vpop.f32.mrf.mxu0
      %v897 = vadd.f32 0.0, %v896
      %898 = vmatmul.bf16.gmra.mxu0 %v837
      %v899 = vpop.f32.mrf.mxu0
      %v900 = vadd.f32 0.0, %v899
      %v901 = vpop.f32.mrf.mxu0
      %v902 = vadd.f32 0.0, %v901
      %903 = vmatmul.bf16.gmra.mxu0 %v840
      %v904 = vpop.f32.mrf.mxu0
      %v905 = vadd.f32 0.0, %v904
      %v906 = vpop.f32.mrf.mxu0
      %v907 = vadd.f32 0.0, %v906
      %908 = vmatmul.bf16.gmra.mxu0 %v843
      %v909 = vpop.f32.mrf.mxu0
      %v910 = vadd.f32 0.0, %v909
      %v911 = vpop.f32.mrf.mxu0
      %v912 = vadd.f32 0.0, %v911
      %913 = vmatmul.bf16.gmra.mxu0 %v846
      %v914 = vpop.f32.mrf.mxu0
      %v915 = vadd.f32 0.0, %v914
      %v916 = vpop.f32.mrf.mxu0
      %v917 = vadd.f32 0.0, %v916
      %918 = vmatmul.bf16.gmra.mxu0 %v849
      %v919 = vpop.f32.mrf.mxu0
      %v920 = vadd.f32 0.0, %v919
      %v921 = vpop.f32.mrf.mxu0
      %v922 = vadd.f32 0.0, %v921
      %923 = vmatmul.bf16.gmra.mxu0 %v852
      %v924 = vpop.f32.mrf.mxu0
      %v925 = vadd.f32 0.0, %v924
      %v926 = vpop.f32.mrf.mxu0
      %v927 = vadd.f32 0.0, %v926
      %928 = vmatmul.bf16.gmra.mxu0 %v855
      %v929 = vpop.f32.mrf.mxu0
      %v930 = vadd.f32 0.0, %v929
      %v931 = vpop.f32.mrf.mxu0
      %v932 = vadd.f32 0.0, %v931
      %933 = vdwg.mxu0
      %v934 = vadd.f32 %v713, %v870
      %v935 = vadd.f32 %v715, %v872
      %v936 = vadd.f32 %v718, %v875
      %v937 = vadd.f32 %v720, %v877
      %v938 = vadd.f32 %v723, %v880
      %v939 = vadd.f32 %v725, %v882
      %v940 = vadd.f32 %v728, %v885
      %v941 = vadd.f32 %v730, %v887
      %v942 = vadd.f32 %v733, %v890
      %v943 = vadd.f32 %v735, %v892
      %v944 = vadd.f32 %v738, %v895
      %v945 = vadd.f32 %v740, %v897
      %v946 = vadd.f32 %v743, %v900
      %v947 = vadd.f32 %v745, %v902
      %v948 = vadd.f32 %v748, %v905
      %v949 = vadd.f32 %v750, %v907
      %v950 = vadd.f32 %v753, %v910
      %v951 = vadd.f32 %v755, %v912
      %v952 = vadd.f32 %v758, %v915
      %v953 = vadd.f32 %v760, %v917
      %v954 = vadd.f32 %v763, %v920
      %v955 = vadd.f32 %v765, %v922
      %v956 = vadd.f32 %v768, %v925
      %v957 = vadd.f32 %v770, %v927
      %v958 = vadd.f32 %v773, %v930
      %v959 = vadd.f32 %v775, %v932
      %v960 = vld [vmem:[#allocation2 + $0x14] sm:$0xff]
      %v961 = vld [vmem:[#allocation2 + $0x1c] sm:$0xff]
      %v962 = vld [vmem:[#allocation2 + $0x24] sm:$0xff]
      %v963 = vld [vmem:[#allocation2 + $0x2c] sm:$0xff]
      %v964 = vld [vmem:[#allocation2 + $0x34] sm:$0xff]
      %v965 = vld [vmem:[#allocation2 + $0x3c] sm:$0xff]
      %v966 = vld [vmem:[#allocation2 + $0x44] sm:$0xff]
      %v967 = vld [vmem:[#allocation2 + $0x4c] sm:$0xff]
      %v968 = vld [vmem:[#allocation2 + $0x54] sm:$0xff]
      %v969 = vld [vmem:[#allocation2 + $0x5c] sm:$0xff]
      %v970 = vld [vmem:[#allocation2 + $0x64] sm:$0xff]
      %v971 = vld [vmem:[#allocation2 + $0x6c] sm:$0xff]
      %v972 = vld [vmem:[#allocation2 + $0x74] sm:$0xff]
      %v973 = vld [vmem:[#allocation2 + $0x7c] sm:$0xff]
      %v974 = vld [vmem:[#allocation2 + $0x84] sm:$0xff]
      %v975 = vld [vmem:[#allocation2 + $0x8c] sm:$0xff]
      %v976 = vld [vmem:[#allocation2 + $0x94] sm:$0xff]
      %v977 = vld [vmem:[#allocation2 + $0x9c] sm:$0xff]
      %v978 = vld [vmem:[#allocation2 + $0xa4] sm:$0xff]
      %v979 = vld [vmem:[#allocation2 + $0xac] sm:$0xff]
      %v980 = vld [vmem:[#allocation2 + $0xb4] sm:$0xff]
      %v981 = vld [vmem:[#allocation2 + $0xbc] sm:$0xff]
      %v982 = vld [vmem:[#allocation2 + $0xc4] sm:$0xff]
      %v983 = vld [vmem:[#allocation2 + $0xcc] sm:$0xff]
      %v984 = vld [vmem:[#allocation2 + $0xd4] sm:$0xff]
      %v985 = vld [vmem:[#allocation2 + $0xdc] sm:$0xff]
      %v986 = vpack.c.bf16 %v961, %v960
      %v987 = vpack.c.bf16 %v963, %v962
      %v988 = vpack.c.bf16 %v965, %v964
      %v989 = vpack.c.bf16 %v967, %v966
      %v990 = vpack.c.bf16 %v969, %v968
      %v991 = vpack.c.bf16 %v971, %v970
      %v992 = vpack.c.bf16 %v973, %v972
      %v993 = vpack.c.bf16 %v975, %v974
      %v994 = vpack.c.bf16 %v977, %v976
      %v995 = vpack.c.bf16 %v979, %v978
      %v996 = vpack.c.bf16 %v981, %v980
      %v997 = vpack.c.bf16 %v983, %v982
      %v998 = vpack.c.bf16 %v985, %v984
      %s999 = scalar_lea.vmem %s2, 6
      %v1000 = vld [vmem:[%s999] sm:$0x3]
      %v1002 = vsel %vm430, %v986, 0
      %v1005 = vsel %vm430, %v987, 0
      %v1008 = vsel %vm430, %v988, 0
      %v1011 = vsel %vm430, %v989, 0
      %v1014 = vsel %vm430, %v990, 0
      %v1017 = vsel %vm430, %v991, 0
      %v1020 = vsel %vm430, %v992, 0
      %v1023 = vsel %vm430, %v993, 0
      %v1026 = vsel %vm430, %v994, 0
      %v1029 = vsel %vm430, %v995, 0
      %v1032 = vsel %vm430, %v996, 0
      %v1035 = vsel %vm430, %v997, 0
      %v1038 = vsel %vm430, %v998, 0
      %v1041 = vsel %vm583, %v1000, 0
      %1043 = vmatpush.bf16.msra.mxu0 0
      %1044 = vmatpush.bf16.msra.mxu0 0
      %1045 = vmatpush.bf16.msra.mxu0 0
      %1046 = vmatpush.bf16.msra.mxu0 0
      %1047 = vmatpush.bf16.msra.mxu0 0
      %1048 = vmatpush.bf16.msra.mxu0 0
      %1049 = vmatpush.bf16.msra.mxu0 0
      %1050 = vmatpush.bf16.msra.mxu0 %v1041
      %1051 = vmatmul.bf16.gmra.mxu0 %v1002
      %v1052 = vpop.f32.mrf.mxu0
      %v1053 = vadd.f32 0.0, %v1052
      %v1054 = vpop.f32.mrf.mxu0
      %v1055 = vadd.f32 0.0, %v1054
      %1056 = vmatmul.bf16.gmra.mxu0 %v1005
      %v1057 = vpop.f32.mrf.mxu0
      %v1058 = vadd.f32 0.0, %v1057
      %v1059 = vpop.f32.mrf.mxu0
      %v1060 = vadd.f32 0.0, %v1059
      %1061 = vmatmul.bf16.gmra.mxu0 %v1008
      %v1062 = vpop.f32.mrf.mxu0
      %v1063 = vadd.f32 0.0, %v1062
      %v1064 = vpop.f32.mrf.mxu0
      %v1065 = vadd.f32 0.0, %v1064
      %1066 = vmatmul.bf16.gmra.mxu0 %v1011
      %v1067 = vpop.f32.mrf.mxu0
      %v1068 = vadd.f32 0.0, %v1067
      %v1069 = vpop.f32.mrf.mxu0
      %v1070 = vadd.f32 0.0, %v1069
      %1071 = vmatmul.bf16.gmra.mxu0 %v1014
      %v1072 = vpop.f32.mrf.mxu0
      %v1073 = vadd.f32 0.0, %v1072
      %v1074 = vpop.f32.mrf.mxu0
      %v1075 = vadd.f32 0.0, %v1074
      %1076 = vmatmul.bf16.gmra.mxu0 %v1017
      %v1077 = vpop.f32.mrf.mxu0
      %v1078 = vadd.f32 0.0, %v1077
      %v1079 = vpop.f32.mrf.mxu0
      %v1080 = vadd.f32 0.0, %v1079
      %1081 = vmatmul.bf16.gmra.mxu0 %v1020
      %v1082 = vpop.f32.mrf.mxu0
      %v1083 = vadd.f32 0.0, %v1082
      %v1084 = vpop.f32.mrf.mxu0
      %v1085 = vadd.f32 0.0, %v1084
      %1086 = vmatmul.bf16.gmra.mxu0 %v1023
      %v1087 = vpop.f32.mrf.mxu0
      %v1088 = vadd.f32 0.0, %v1087
      %v1089 = vpop.f32.mrf.mxu0
      %v1090 = vadd.f32 0.0, %v1089
      %1091 = vmatmul.bf16.gmra.mxu0 %v1026
      %v1092 = vpop.f32.mrf.mxu0
      %v1093 = vadd.f32 0.0, %v1092
      %v1094 = vpop.f32.mrf.mxu0
      %v1095 = vadd.f32 0.0, %v1094
      %1096 = vmatmul.bf16.gmra.mxu0 %v1029
      %v1097 = vpop.f32.mrf.mxu0
      %v1098 = vadd.f32 0.0, %v1097
      %v1099 = vpop.f32.mrf.mxu0
      %v1100 = vadd.f32 0.0, %v1099
      %1101 = vmatmul.bf16.gmra.mxu0 %v1032
      %v1102 = vpop.f32.mrf.mxu0
      %v1103 = vadd.f32 0.0, %v1102
      %v1104 = vpop.f32.mrf.mxu0
      %v1105 = vadd.f32 0.0, %v1104
      %1106 = vmatmul.bf16.gmra.mxu0 %v1035
      %v1107 = vpop.f32.mrf.mxu0
      %v1108 = vadd.f32 0.0, %v1107
      %v1109 = vpop.f32.mrf.mxu0
      %v1110 = vadd.f32 0.0, %v1109
      %1111 = vmatmul.bf16.gmra.mxu0 %v1038
      %v1112 = vpop.f32.mrf.mxu0
      %v1113 = vadd.f32 0.0, %v1112
      %v1114 = vpop.f32.mrf.mxu0
      %v1115 = vadd.f32 0.0, %v1114
      %1116 = vdwg.mxu0
      %v1117 = vadd.f32 %v934, %v1053
      %v1118 = vadd.f32 %v935, %v1055
      %v1119 = vadd.f32 %v936, %v1058
      %v1120 = vadd.f32 %v937, %v1060
      %v1121 = vadd.f32 %v938, %v1063
      %v1122 = vadd.f32 %v939, %v1065
      %v1123 = vadd.f32 %v940, %v1068
      %v1124 = vadd.f32 %v941, %v1070
      %v1125 = vadd.f32 %v942, %v1073
      %v1126 = vadd.f32 %v943, %v1075
      %v1127 = vadd.f32 %v944, %v1078
      %v1128 = vadd.f32 %v945, %v1080
      %v1129 = vadd.f32 %v946, %v1083
      %v1130 = vadd.f32 %v947, %v1085
      %v1131 = vadd.f32 %v948, %v1088
      %v1132 = vadd.f32 %v949, %v1090
      %v1133 = vadd.f32 %v950, %v1093
      %v1134 = vadd.f32 %v951, %v1095
      %v1135 = vadd.f32 %v952, %v1098
      %v1136 = vadd.f32 %v953, %v1100
      %v1137 = vadd.f32 %v954, %v1103
      %v1138 = vadd.f32 %v955, %v1105
      %v1139 = vadd.f32 %v956, %v1108
      %v1140 = vadd.f32 %v957, %v1110
      %v1141 = vadd.f32 %v958, %v1113
      %v1142 = vadd.f32 %v959, %v1115
      %v1143 = vld [vmem:[#allocation2 + $0x15] sm:$0xff]
      %v1144 = vld [vmem:[#allocation2 + $0x1d] sm:$0xff]
      %v1145 = vld [vmem:[#allocation2 + $0x25] sm:$0xff]
      %v1146 = vld [vmem:[#allocation2 + $0x2d] sm:$0xff]
      %v1147 = vld [vmem:[#allocation2 + $0x35] sm:$0xff]
      %v1148 = vld [vmem:[#allocation2 + $0x3d] sm:$0xff]
      %v1149 = vld [vmem:[#allocation2 + $0x45] sm:$0xff]
      %v1150 = vld [vmem:[#allocation2 + $0x4d] sm:$0xff]
      %v1151 = vld [vmem:[#allocation2 + $0x55] sm:$0xff]
      %v1152 = vld [vmem:[#allocation2 + $0x5d] sm:$0xff]
      %v1153 = vld [vmem:[#allocation2 + $0x65] sm:$0xff]
      %v1154 = vld [vmem:[#allocation2 + $0x6d] sm:$0xff]
      %v1155 = vld [vmem:[#allocation2 + $0x75] sm:$0xff]
      %v1156 = vld [vmem:[#allocation2 + $0x7d] sm:$0xff]
      %v1157 = vld [vmem:[#allocation2 + $0x85] sm:$0xff]
      %v1158 = vld [vmem:[#allocation2 + $0x8d] sm:$0xff]
      %v1159 = vld [vmem:[#allocation2 + $0x95] sm:$0xff]
      %v1160 = vld [vmem:[#allocation2 + $0x9d] sm:$0xff]
      %v1161 = vld [vmem:[#allocation2 + $0xa5] sm:$0xff]
      %v1162 = vld [vmem:[#allocation2 + $0xad] sm:$0xff]
      %v1163 = vld [vmem:[#allocation2 + $0xb5] sm:$0xff]
      %v1164 = vld [vmem:[#allocation2 + $0xbd] sm:$0xff]
      %v1165 = vld [vmem:[#allocation2 + $0xc5] sm:$0xff]
      %v1166 = vld [vmem:[#allocation2 + $0xcd] sm:$0xff]
      %v1167 = vld [vmem:[#allocation2 + $0xd5] sm:$0xff]
      %v1168 = vld [vmem:[#allocation2 + $0xdd] sm:$0xff]
      %v1169 = vpack.c.bf16 %v1144, %v1143
      %v1170 = vpack.c.bf16 %v1146, %v1145
      %v1171 = vpack.c.bf16 %v1148, %v1147
      %v1172 = vpack.c.bf16 %v1150, %v1149
      %v1173 = vpack.c.bf16 %v1152, %v1151
      %v1174 = vpack.c.bf16 %v1154, %v1153
      %v1175 = vpack.c.bf16 %v1156, %v1155
      %v1176 = vpack.c.bf16 %v1158, %v1157
      %v1177 = vpack.c.bf16 %v1160, %v1159
      %v1178 = vpack.c.bf16 %v1162, %v1161
      %v1179 = vpack.c.bf16 %v1164, %v1163
      %v1180 = vpack.c.bf16 %v1166, %v1165
      %v1181 = vpack.c.bf16 %v1168, %v1167
      %s1182 = scalar_lea.vmem %s2, 8
      %v1183 = vld [vmem:[%s1182] sm:$0x3]
      %v1185 = vsel %vm430, %v1169, 0
      %v1188 = vsel %vm430, %v1170, 0
      %v1191 = vsel %vm430, %v1171, 0
      %v1194 = vsel %vm430, %v1172, 0
      %v1197 = vsel %vm430, %v1173, 0
      %v1200 = vsel %vm430, %v1174, 0
      %v1203 = vsel %vm430, %v1175, 0
      %v1206 = vsel %vm430, %v1176, 0
      %v1209 = vsel %vm430, %v1177, 0
      %v1212 = vsel %vm430, %v1178, 0
      %v1215 = vsel %vm430, %v1179, 0
      %v1218 = vsel %vm430, %v1180, 0
      %v1221 = vsel %vm430, %v1181, 0
      %v1224 = vsel %vm583, %v1183, 0
      %1226 = vmatpush.bf16.msra.mxu0 0
      %1227 = vmatpush.bf16.msra.mxu0 0
      %1228 = vmatpush.bf16.msra.mxu0 0
      %1229 = vmatpush.bf16.msra.mxu0 0
      %1230 = vmatpush.bf16.msra.mxu0 0
      %1231 = vmatpush.bf16.msra.mxu0 0
      %1232 = vmatpush.bf16.msra.mxu0 0
      %1233 = vmatpush.bf16.msra.mxu0 %v1224
      %1234 = vmatmul.bf16.gmra.mxu0 %v1185
      %v1235 = vpop.f32.mrf.mxu0
      %v1236 = vadd.f32 0.0, %v1235
      %v1237 = vpop.f32.mrf.mxu0
      %v1238 = vadd.f32 0.0, %v1237
      %1239 = vmatmul.bf16.gmra.mxu0 %v1188
      %v1240 = vpop.f32.mrf.mxu0
      %v1241 = vadd.f32 0.0, %v1240
      %v1242 = vpop.f32.mrf.mxu0
      %v1243 = vadd.f32 0.0, %v1242
      %1244 = vmatmul.bf16.gmra.mxu0 %v1191
      %v1245 = vpop.f32.mrf.mxu0
      %v1246 = vadd.f32 0.0, %v1245
      %v1247 = vpop.f32.mrf.mxu0
      %v1248 = vadd.f32 0.0, %v1247
      %1249 = vmatmul.bf16.gmra.mxu0 %v1194
      %v1250 = vpop.f32.mrf.mxu0
      %v1251 = vadd.f32 0.0, %v1250
      %v1252 = vpop.f32.mrf.mxu0
      %v1253 = vadd.f32 0.0, %v1252
      %1254 = vmatmul.bf16.gmra.mxu0 %v1197
      %v1255 = vpop.f32.mrf.mxu0
      %v1256 = vadd.f32 0.0, %v1255
      %v1257 = vpop.f32.mrf.mxu0
      %v1258 = vadd.f32 0.0, %v1257
      %1259 = vmatmul.bf16.gmra.mxu0 %v1200
      %v1260 = vpop.f32.mrf.mxu0
      %v1261 = vadd.f32 0.0, %v1260
      %v1262 = vpop.f32.mrf.mxu0
      %v1263 = vadd.f32 0.0, %v1262
      %1264 = vmatmul.bf16.gmra.mxu0 %v1203
      %v1265 = vpop.f32.mrf.mxu0
      %v1266 = vadd.f32 0.0, %v1265
      %v1267 = vpop.f32.mrf.mxu0
      %v1268 = vadd.f32 0.0, %v1267
      %1269 = vmatmul.bf16.gmra.mxu0 %v1206
      %v1270 = vpop.f32.mrf.mxu0
      %v1271 = vadd.f32 0.0, %v1270
      %v1272 = vpop.f32.mrf.mxu0
      %v1273 = vadd.f32 0.0, %v1272
      %1274 = vmatmul.bf16.gmra.mxu0 %v1209
      %v1275 = vpop.f32.mrf.mxu0
      %v1276 = vadd.f32 0.0, %v1275
      %v1277 = vpop.f32.mrf.mxu0
      %v1278 = vadd.f32 0.0, %v1277
      %1279 = vmatmul.bf16.gmra.mxu0 %v1212
      %v1280 = vpop.f32.mrf.mxu0
      %v1281 = vadd.f32 0.0, %v1280
      %v1282 = vpop.f32.mrf.mxu0
      %v1283 = vadd.f32 0.0, %v1282
      %1284 = vmatmul.bf16.gmra.mxu0 %v1215
      %v1285 = vpop.f32.mrf.mxu0
      %v1286 = vadd.f32 0.0, %v1285
      %v1287 = vpop.f32.mrf.mxu0
      %v1288 = vadd.f32 0.0, %v1287
      %1289 = vmatmul.bf16.gmra.mxu0 %v1218
      %v1290 = vpop.f32.mrf.mxu0
      %v1291 = vadd.f32 0.0, %v1290
      %v1292 = vpop.f32.mrf.mxu0
      %v1293 = vadd.f32 0.0, %v1292
      %1294 = vmatmul.bf16.gmra.mxu0 %v1221
      %v1295 = vpop.f32.mrf.mxu0
      %v1296 = vadd.f32 0.0, %v1295
      %v1297 = vpop.f32.mrf.mxu0
      %v1298 = vadd.f32 0.0, %v1297
      %1299 = vdwg.mxu0
      %v1300 = vadd.f32 %v1117, %v1236
      %v1301 = vadd.f32 %v1118, %v1238
      %v1302 = vadd.f32 %v1119, %v1241
      %v1303 = vadd.f32 %v1120, %v1243
      %v1304 = vadd.f32 %v1121, %v1246
      %v1305 = vadd.f32 %v1122, %v1248
      %v1306 = vadd.f32 %v1123, %v1251
      %v1307 = vadd.f32 %v1124, %v1253
      %v1308 = vadd.f32 %v1125, %v1256
      %v1309 = vadd.f32 %v1126, %v1258
      %v1310 = vadd.f32 %v1127, %v1261
      %v1311 = vadd.f32 %v1128, %v1263
      %v1312 = vadd.f32 %v1129, %v1266
      %v1313 = vadd.f32 %v1130, %v1268
      %v1314 = vadd.f32 %v1131, %v1271
      %v1315 = vadd.f32 %v1132, %v1273
      %v1316 = vadd.f32 %v1133, %v1276
      %v1317 = vadd.f32 %v1134, %v1278
      %v1318 = vadd.f32 %v1135, %v1281
      %v1319 = vadd.f32 %v1136, %v1283
      %v1320 = vadd.f32 %v1137, %v1286
      %v1321 = vadd.f32 %v1138, %v1288
      %v1322 = vadd.f32 %v1139, %v1291
      %v1323 = vadd.f32 %v1140, %v1293
      %v1324 = vadd.f32 %v1141, %v1296
      %v1325 = vadd.f32 %v1142, %v1298
      %v1326 = vld [vmem:[#allocation2 + $0x16] sm:$0xff]
      %v1327 = vld [vmem:[#allocation2 + $0x1e] sm:$0xff]
      %v1328 = vld [vmem:[#allocation2 + $0x26] sm:$0xff]
      %v1329 = vld [vmem:[#allocation2 + $0x2e] sm:$0xff]
      %v1330 = vld [vmem:[#allocation2 + $0x36] sm:$0xff]
      %v1331 = vld [vmem:[#allocation2 + $0x3e] sm:$0xff]
      %v1332 = vld [vmem:[#allocation2 + $0x46] sm:$0xff]
      %v1333 = vld [vmem:[#allocation2 + $0x4e] sm:$0xff]
      %v1334 = vld [vmem:[#allocation2 + $0x56] sm:$0xff]
      %v1335 = vld [vmem:[#allocation2 + $0x5e] sm:$0xff]
      %v1336 = vld [vmem:[#allocation2 + $0x66] sm:$0xff]
      %v1337 = vld [vmem:[#allocation2 + $0x6e] sm:$0xff]
      %v1338 = vld [vmem:[#allocation2 + $0x76] sm:$0xff]
      %v1339 = vld [vmem:[#allocation2 + $0x7e] sm:$0xff]
      %v1340 = vld [vmem:[#allocation2 + $0x86] sm:$0xff]
      %v1341 = vld [vmem:[#allocation2 + $0x8e] sm:$0xff]
      %v1342 = vld [vmem:[#allocation2 + $0x96] sm:$0xff]
      %v1343 = vld [vmem:[#allocation2 + $0x9e] sm:$0xff]
      %v1344 = vld [vmem:[#allocation2 + $0xa6] sm:$0xff]
      %v1345 = vld [vmem:[#allocation2 + $0xae] sm:$0xff]
      %v1346 = vld [vmem:[#allocation2 + $0xb6] sm:$0xff]
      %v1347 = vld [vmem:[#allocation2 + $0xbe] sm:$0xff]
      %v1348 = vld [vmem:[#allocation2 + $0xc6] sm:$0xff]
      %v1349 = vld [vmem:[#allocation2 + $0xce] sm:$0xff]
      %v1350 = vld [vmem:[#allocation2 + $0xd6] sm:$0xff]
      %v1351 = vld [vmem:[#allocation2 + $0xde] sm:$0xff]
      %v1352 = vpack.c.bf16 %v1327, %v1326
      %v1353 = vpack.c.bf16 %v1329, %v1328
      %v1354 = vpack.c.bf16 %v1331, %v1330
      %v1355 = vpack.c.bf16 %v1333, %v1332
      %v1356 = vpack.c.bf16 %v1335, %v1334
      %v1357 = vpack.c.bf16 %v1337, %v1336
      %v1358 = vpack.c.bf16 %v1339, %v1338
      %v1359 = vpack.c.bf16 %v1341, %v1340
      %v1360 = vpack.c.bf16 %v1343, %v1342
      %v1361 = vpack.c.bf16 %v1345, %v1344
      %v1362 = vpack.c.bf16 %v1347, %v1346
      %v1363 = vpack.c.bf16 %v1349, %v1348
      %v1364 = vpack.c.bf16 %v1351, %v1350
      %s1365 = scalar_lea.vmem %s2, 10
      %v1366 = vld [vmem:[%s1365] sm:$0x3]
      %v1368 = vsel %vm430, %v1352, 0
      %v1371 = vsel %vm430, %v1353, 0
      %v1374 = vsel %vm430, %v1354, 0
      %v1377 = vsel %vm430, %v1355, 0
      %v1380 = vsel %vm430, %v1356, 0
      %v1383 = vsel %vm430, %v1357, 0
      %v1386 = vsel %vm430, %v1358, 0
      %v1389 = vsel %vm430, %v1359, 0
      %v1392 = vsel %vm430, %v1360, 0
      %v1395 = vsel %vm430, %v1361, 0
      %v1398 = vsel %vm430, %v1362, 0
      %v1401 = vsel %vm430, %v1363, 0
      %v1404 = vsel %vm430, %v1364, 0
      %v1407 = vsel %vm583, %v1366, 0
      %1409 = vmatpush.bf16.msra.mxu0 0
      %1410 = vmatpush.bf16.msra.mxu0 0
      %1411 = vmatpush.bf16.msra.mxu0 0
      %1412 = vmatpush.bf16.msra.mxu0 0
      %1413 = vmatpush.bf16.msra.mxu0 0
      %1414 = vmatpush.bf16.msra.mxu0 0
      %1415 = vmatpush.bf16.msra.mxu0 0
      %1416 = vmatpush.bf16.msra.mxu0 %v1407
      %1417 = vmatmul.bf16.gmra.mxu0 %v1368
      %v1418 = vpop.f32.mrf.mxu0
      %v1419 = vadd.f32 0.0, %v1418
      %v1420 = vpop.f32.mrf.mxu0
      %v1421 = vadd.f32 0.0, %v1420
      %1422 = vmatmul.bf16.gmra.mxu0 %v1371
      %v1423 = vpop.f32.mrf.mxu0
      %v1424 = vadd.f32 0.0, %v1423
      %v1425 = vpop.f32.mrf.mxu0
      %v1426 = vadd.f32 0.0, %v1425
      %1427 = vmatmul.bf16.gmra.mxu0 %v1374
      %v1428 = vpop.f32.mrf.mxu0
      %v1429 = vadd.f32 0.0, %v1428
      %v1430 = vpop.f32.mrf.mxu0
      %v1431 = vadd.f32 0.0, %v1430
      %1432 = vmatmul.bf16.gmra.mxu0 %v1377
      %v1433 = vpop.f32.mrf.mxu0
      %v1434 = vadd.f32 0.0, %v1433
      %v1435 = vpop.f32.mrf.mxu0
      %v1436 = vadd.f32 0.0, %v1435
      %1437 = vmatmul.bf16.gmra.mxu0 %v1380
      %v1438 = vpop.f32.mrf.mxu0
      %v1439 = vadd.f32 0.0, %v1438
      %v1440 = vpop.f32.mrf.mxu0
      %v1441 = vadd.f32 0.0, %v1440
      %1442 = vmatmul.bf16.gmra.mxu0 %v1383
      %v1443 = vpop.f32.mrf.mxu0
      %v1444 = vadd.f32 0.0, %v1443
      %v1445 = vpop.f32.mrf.mxu0
      %v1446 = vadd.f32 0.0, %v1445
      %1447 = vmatmul.bf16.gmra.mxu0 %v1386
      %v1448 = vpop.f32.mrf.mxu0
      %v1449 = vadd.f32 0.0, %v1448
      %v1450 = vpop.f32.mrf.mxu0
      %v1451 = vadd.f32 0.0, %v1450
      %1452 = vmatmul.bf16.gmra.mxu0 %v1389
      %v1453 = vpop.f32.mrf.mxu0
      %v1454 = vadd.f32 0.0, %v1453
      %v1455 = vpop.f32.mrf.mxu0
      %v1456 = vadd.f32 0.0, %v1455
      %1457 = vmatmul.bf16.gmra.mxu0 %v1392
      %v1458 = vpop.f32.mrf.mxu0
      %v1459 = vadd.f32 0.0, %v1458
      %v1460 = vpop.f32.mrf.mxu0
      %v1461 = vadd.f32 0.0, %v1460
      %1462 = vmatmul.bf16.gmra.mxu0 %v1395
      %v1463 = vpop.f32.mrf.mxu0
      %v1464 = vadd.f32 0.0, %v1463
      %v1465 = vpop.f32.mrf.mxu0
      %v1466 = vadd.f32 0.0, %v1465
      %1467 = vmatmul.bf16.gmra.mxu0 %v1398
      %v1468 = vpop.f32.mrf.mxu0
      %v1469 = vadd.f32 0.0, %v1468
      %v1470 = vpop.f32.mrf.mxu0
      %v1471 = vadd.f32 0.0, %v1470
      %1472 = vmatmul.bf16.gmra.mxu0 %v1401
      %v1473 = vpop.f32.mrf.mxu0
      %v1474 = vadd.f32 0.0, %v1473
      %v1475 = vpop.f32.mrf.mxu0
      %v1476 = vadd.f32 0.0, %v1475
      %1477 = vmatmul.bf16.gmra.mxu0 %v1404
      %v1478 = vpop.f32.mrf.mxu0
      %v1479 = vadd.f32 0.0, %v1478
      %v1480 = vpop.f32.mrf.mxu0
      %v1481 = vadd.f32 0.0, %v1480
      %1482 = vdwg.mxu0
      %v1483 = vadd.f32 %v1300, %v1419
      %v1484 = vadd.f32 %v1301, %v1421
      %v1485 = vadd.f32 %v1302, %v1424
      %v1486 = vadd.f32 %v1303, %v1426
      %v1487 = vadd.f32 %v1304, %v1429
      %v1488 = vadd.f32 %v1305, %v1431
      %v1489 = vadd.f32 %v1306, %v1434
      %v1490 = vadd.f32 %v1307, %v1436
      %v1491 = vadd.f32 %v1308, %v1439
      %v1492 = vadd.f32 %v1309, %v1441
      %v1493 = vadd.f32 %v1310, %v1444
      %v1494 = vadd.f32 %v1311, %v1446
      %v1495 = vadd.f32 %v1312, %v1449
      %v1496 = vadd.f32 %v1313, %v1451
      %v1497 = vadd.f32 %v1314, %v1454
      %v1498 = vadd.f32 %v1315, %v1456
      %v1499 = vadd.f32 %v1316, %v1459
      %v1500 = vadd.f32 %v1317, %v1461
      %v1501 = vadd.f32 %v1318, %v1464
      %v1502 = vadd.f32 %v1319, %v1466
      %v1503 = vadd.f32 %v1320, %v1469
      %v1504 = vadd.f32 %v1321, %v1471
      %v1505 = vadd.f32 %v1322, %v1474
      %v1506 = vadd.f32 %v1323, %v1476
      %v1507 = vadd.f32 %v1324, %v1479
      %v1508 = vadd.f32 %v1325, %v1481
      %v1509 = vld [vmem:[#allocation2 + $0x28] sm:$0xff]
      %v1510 = vld [vmem:[#allocation2 + $0x30] sm:$0xff]
      %v1511 = vld [vmem:[#allocation2 + $0x38] sm:$0xff]
      %v1512 = vld [vmem:[#allocation2 + $0x40] sm:$0xff]
      %v1513 = vld [vmem:[#allocation2 + $0x48] sm:$0xff]
      %v1514 = vld [vmem:[#allocation2 + $0x50] sm:$0xff]
      %v1515 = vld [vmem:[#allocation2 + $0x58] sm:$0xff]
      %v1516 = vld [vmem:[#allocation2 + $0x60] sm:$0xff]
      %v1517 = vld [vmem:[#allocation2 + $0x68] sm:$0xff]
      %v1518 = vld [vmem:[#allocation2 + $0x70] sm:$0xff]
      %v1519 = vld [vmem:[#allocation2 + $0x78] sm:$0xff]
      %v1520 = vld [vmem:[#allocation2 + $0x80] sm:$0xff]
      %v1521 = vld [vmem:[#allocation2 + $0x88] sm:$0xff]
      %v1522 = vld [vmem:[#allocation2 + $0x90] sm:$0xff]
      %v1523 = vld [vmem:[#allocation2 + $0x98] sm:$0xff]
      %v1524 = vld [vmem:[#allocation2 + $0xa0] sm:$0xff]
      %v1525 = vld [vmem:[#allocation2 + $0xa8] sm:$0xff]
      %v1526 = vld [vmem:[#allocation2 + $0xb0] sm:$0xff]
      %v1527 = vld [vmem:[#allocation2 + $0xb8] sm:$0xff]
      %v1528 = vld [vmem:[#allocation2 + $0xc0] sm:$0xff]
      %v1529 = vld [vmem:[#allocation2 + $0xc8] sm:$0xff]
      %v1530 = vld [vmem:[#allocation2 + $0xd0] sm:$0xff]
      %v1531 = vld [vmem:[#allocation2 + $0xd8] sm:$0xff]
      %v1532 = vld [vmem:[#allocation2 + $0xe0] sm:$0xff]
      %v1533 = vld [vmem:[#allocation2 + $0xe8] sm:$0xff]
      %v1534 = vld [vmem:[#allocation2 + $0xf0] sm:$0xff]
      %v1535 = vpack.c.bf16 %v1510, %v1509
      %v1536 = vpack.c.bf16 %v1512, %v1511
      %v1537 = vpack.c.bf16 %v1514, %v1513
      %v1538 = vpack.c.bf16 %v1516, %v1515
      %v1539 = vpack.c.bf16 %v1518, %v1517
      %v1540 = vpack.c.bf16 %v1520, %v1519
      %v1541 = vpack.c.bf16 %v1522, %v1521
      %v1542 = vpack.c.bf16 %v1524, %v1523
      %v1543 = vpack.c.bf16 %v1526, %v1525
      %v1544 = vpack.c.bf16 %v1528, %v1527
      %v1545 = vpack.c.bf16 %v1530, %v1529
      %v1546 = vpack.c.bf16 %v1532, %v1531
      %v1547 = vpack.c.bf16 %v1534, %v1533
      %s1548 = scalar_lea.vmem %s2, 12
      %v1549 = vld [vmem:[%s1548] sm:$0x3]
      %v1551 = vsel %vm430, %v1535, 0
      %v1554 = vsel %vm430, %v1536, 0
      %v1557 = vsel %vm430, %v1537, 0
      %v1560 = vsel %vm430, %v1538, 0
      %v1563 = vsel %vm430, %v1539, 0
      %v1566 = vsel %vm430, %v1540, 0
      %v1569 = vsel %vm430, %v1541, 0
      %v1572 = vsel %vm430, %v1542, 0
      %v1575 = vsel %vm430, %v1543, 0
      %v1578 = vsel %vm430, %v1544, 0
      %v1581 = vsel %vm430, %v1545, 0
      %v1584 = vsel %vm430, %v1546, 0
      %v1587 = vsel %vm430, %v1547, 0
      %v1590 = vsel %vm583, %v1549, 0
      %1592 = vmatpush.bf16.msra.mxu0 0
      %1593 = vmatpush.bf16.msra.mxu0 0
      %1594 = vmatpush.bf16.msra.mxu0 0
      %1595 = vmatpush.bf16.msra.mxu0 0
      %1596 = vmatpush.bf16.msra.mxu0 0
      %1597 = vmatpush.bf16.msra.mxu0 0
      %1598 = vmatpush.bf16.msra.mxu0 0
      %1599 = vmatpush.bf16.msra.mxu0 %v1590
      %1600 = vmatmul.bf16.gmra.mxu0 %v1551
      %v1601 = vpop.f32.mrf.mxu0
      %v1602 = vadd.f32 0.0, %v1601
      %v1603 = vpop.f32.mrf.mxu0
      %v1604 = vadd.f32 0.0, %v1603
      %1605 = vmatmul.bf16.gmra.mxu0 %v1554
      %v1606 = vpop.f32.mrf.mxu0
      %v1607 = vadd.f32 0.0, %v1606
      %v1608 = vpop.f32.mrf.mxu0
      %v1609 = vadd.f32 0.0, %v1608
      %1610 = vmatmul.bf16.gmra.mxu0 %v1557
      %v1611 = vpop.f32.mrf.mxu0
      %v1612 = vadd.f32 0.0, %v1611
      %v1613 = vpop.f32.mrf.mxu0
      %v1614 = vadd.f32 0.0, %v1613
      %1615 = vmatmul.bf16.gmra.mxu0 %v1560
      %v1616 = vpop.f32.mrf.mxu0
      %v1617 = vadd.f32 0.0, %v1616
      %v1618 = vpop.f32.mrf.mxu0
      %v1619 = vadd.f32 0.0, %v1618
      %1620 = vmatmul.bf16.gmra.mxu0 %v1563
      %v1621 = vpop.f32.mrf.mxu0
      %v1622 = vadd.f32 0.0, %v1621
      %v1623 = vpop.f32.mrf.mxu0
      %v1624 = vadd.f32 0.0, %v1623
      %1625 = vmatmul.bf16.gmra.mxu0 %v1566
      %v1626 = vpop.f32.mrf.mxu0
      %v1627 = vadd.f32 0.0, %v1626
      %v1628 = vpop.f32.mrf.mxu0
      %v1629 = vadd.f32 0.0, %v1628
      %1630 = vmatmul.bf16.gmra.mxu0 %v1569
      %v1631 = vpop.f32.mrf.mxu0
      %v1632 = vadd.f32 0.0, %v1631
      %v1633 = vpop.f32.mrf.mxu0
      %v1634 = vadd.f32 0.0, %v1633
      %1635 = vmatmul.bf16.gmra.mxu0 %v1572
      %v1636 = vpop.f32.mrf.mxu0
      %v1637 = vadd.f32 0.0, %v1636
      %v1638 = vpop.f32.mrf.mxu0
      %v1639 = vadd.f32 0.0, %v1638
      %1640 = vmatmul.bf16.gmra.mxu0 %v1575
      %v1641 = vpop.f32.mrf.mxu0
      %v1642 = vadd.f32 0.0, %v1641
      %v1643 = vpop.f32.mrf.mxu0
      %v1644 = vadd.f32 0.0, %v1643
      %1645 = vmatmul.bf16.gmra.mxu0 %v1578
      %v1646 = vpop.f32.mrf.mxu0
      %v1647 = vadd.f32 0.0, %v1646
      %v1648 = vpop.f32.mrf.mxu0
      %v1649 = vadd.f32 0.0, %v1648
      %1650 = vmatmul.bf16.gmra.mxu0 %v1581
      %v1651 = vpop.f32.mrf.mxu0
      %v1652 = vadd.f32 0.0, %v1651
      %v1653 = vpop.f32.mrf.mxu0
      %v1654 = vadd.f32 0.0, %v1653
      %1655 = vmatmul.bf16.gmra.mxu0 %v1584
      %v1656 = vpop.f32.mrf.mxu0
      %v1657 = vadd.f32 0.0, %v1656
      %v1658 = vpop.f32.mrf.mxu0
      %v1659 = vadd.f32 0.0, %v1658
      %1660 = vmatmul.bf16.gmra.mxu0 %v1587
      %v1661 = vpop.f32.mrf.mxu0
      %v1662 = vadd.f32 0.0, %v1661
      %v1663 = vpop.f32.mrf.mxu0
      %v1664 = vadd.f32 0.0, %v1663
      %1665 = vdwg.mxu0
      %v1666 = vadd.f32 %v1483, %v1602
      %v1667 = vadd.f32 %v1484, %v1604
      %v1668 = vadd.f32 %v1485, %v1607
      %v1669 = vadd.f32 %v1486, %v1609
      %v1670 = vadd.f32 %v1487, %v1612
      %v1671 = vadd.f32 %v1488, %v1614
      %v1672 = vadd.f32 %v1489, %v1617
      %v1673 = vadd.f32 %v1490, %v1619
      %v1674 = vadd.f32 %v1491, %v1622
      %v1675 = vadd.f32 %v1492, %v1624
      %v1676 = vadd.f32 %v1493, %v1627
      %v1677 = vadd.f32 %v1494, %v1629
      %v1678 = vadd.f32 %v1495, %v1632
      %v1679 = vadd.f32 %v1496, %v1634
      %v1680 = vadd.f32 %v1497, %v1637
      %v1681 = vadd.f32 %v1498, %v1639
      %v1682 = vadd.f32 %v1499, %v1642
      %v1683 = vadd.f32 %v1500, %v1644
      %v1684 = vadd.f32 %v1501, %v1647
      %v1685 = vadd.f32 %v1502, %v1649
      %v1686 = vadd.f32 %v1503, %v1652
      %v1687 = vadd.f32 %v1504, %v1654
      %v1688 = vadd.f32 %v1505, %v1657
      %v1689 = vadd.f32 %v1506, %v1659
      %v1690 = vadd.f32 %v1507, %v1662
      %v1691 = vadd.f32 %v1508, %v1664
      %v1692 = vld [vmem:[#allocation2 + $0x29] sm:$0xff]
      %v1693 = vld [vmem:[#allocation2 + $0x31] sm:$0xff]
      %v1694 = vld [vmem:[#allocation2 + $0x39] sm:$0xff]
      %v1695 = vld [vmem:[#allocation2 + $0x41] sm:$0xff]
      %v1696 = vld [vmem:[#allocation2 + $0x49] sm:$0xff]
      %v1697 = vld [vmem:[#allocation2 + $0x51] sm:$0xff]
      %v1698 = vld [vmem:[#allocation2 + $0x59] sm:$0xff]
      %v1699 = vld [vmem:[#allocation2 + $0x61] sm:$0xff]
      %v1700 = vld [vmem:[#allocation2 + $0x69] sm:$0xff]
      %v1701 = vld [vmem:[#allocation2 + $0x71] sm:$0xff]
      %v1702 = vld [vmem:[#allocation2 + $0x79] sm:$0xff]
      %v1703 = vld [vmem:[#allocation2 + $0x81] sm:$0xff]
      %v1704 = vld [vmem:[#allocation2 + $0x89] sm:$0xff]
      %v1705 = vld [vmem:[#allocation2 + $0x91] sm:$0xff]
      %v1706 = vld [vmem:[#allocation2 + $0x99] sm:$0xff]
      %v1707 = vld [vmem:[#allocation2 + $0xa1] sm:$0xff]
      %v1708 = vld [vmem:[#allocation2 + $0xa9] sm:$0xff]
      %v1709 = vld [vmem:[#allocation2 + $0xb1] sm:$0xff]
      %v1710 = vld [vmem:[#allocation2 + $0xb9] sm:$0xff]
      %v1711 = vld [vmem:[#allocation2 + $0xc1] sm:$0xff]
      %v1712 = vld [vmem:[#allocation2 + $0xc9] sm:$0xff]
      %v1713 = vld [vmem:[#allocation2 + $0xd1] sm:$0xff]
      %v1714 = vld [vmem:[#allocation2 + $0xd9] sm:$0xff]
      %v1715 = vld [vmem:[#allocation2 + $0xe1] sm:$0xff]
      %v1716 = vld [vmem:[#allocation2 + $0xe9] sm:$0xff]
      %v1717 = vld [vmem:[#allocation2 + $0xf1] sm:$0xff]
      %v1718 = vpack.c.bf16 %v1693, %v1692
      %v1719 = vpack.c.bf16 %v1695, %v1694
      %v1720 = vpack.c.bf16 %v1697, %v1696
      %v1721 = vpack.c.bf16 %v1699, %v1698
      %v1722 = vpack.c.bf16 %v1701, %v1700
      %v1723 = vpack.c.bf16 %v1703, %v1702
      %v1724 = vpack.c.bf16 %v1705, %v1704
      %v1725 = vpack.c.bf16 %v1707, %v1706
      %v1726 = vpack.c.bf16 %v1709, %v1708
      %v1727 = vpack.c.bf16 %v1711, %v1710
      %v1728 = vpack.c.bf16 %v1713, %v1712
      %v1729 = vpack.c.bf16 %v1715, %v1714
      %v1730 = vpack.c.bf16 %v1717, %v1716
      %s1731 = scalar_lea.vmem %s2, 14
      %v1732 = vld [vmem:[%s1731] sm:$0x3]
      %v1734 = vsel %vm430, %v1718, 0
      %v1737 = vsel %vm430, %v1719, 0
      %v1740 = vsel %vm430, %v1720, 0
      %v1743 = vsel %vm430, %v1721, 0
      %v1746 = vsel %vm430, %v1722, 0
      %v1749 = vsel %vm430, %v1723, 0
      %v1752 = vsel %vm430, %v1724, 0
      %v1755 = vsel %vm430, %v1725, 0
      %v1758 = vsel %vm430, %v1726, 0
      %v1761 = vsel %vm430, %v1727, 0
      %v1764 = vsel %vm430, %v1728, 0
      %v1767 = vsel %vm430, %v1729, 0
      %v1770 = vsel %vm430, %v1730, 0
      %v1773 = vsel %vm583, %v1732, 0
      %1775 = vmatpush.bf16.msra.mxu0 0
      %1776 = vmatpush.bf16.msra.mxu0 0
      %1777 = vmatpush.bf16.msra.mxu0 0
      %1778 = vmatpush.bf16.msra.mxu0 0
      %1779 = vmatpush.bf16.msra.mxu0 0
      %1780 = vmatpush.bf16.msra.mxu0 0
      %1781 = vmatpush.bf16.msra.mxu0 0
      %1782 = vmatpush.bf16.msra.mxu0 %v1773
      %1783 = vmatmul.bf16.gmra.mxu0 %v1734
      %v1784 = vpop.f32.mrf.mxu0
      %v1785 = vadd.f32 0.0, %v1784
      %v1786 = vpop.f32.mrf.mxu0
      %v1787 = vadd.f32 0.0, %v1786
      %1788 = vmatmul.bf16.gmra.mxu0 %v1737
      %v1789 = vpop.f32.mrf.mxu0
      %v1790 = vadd.f32 0.0, %v1789
      %v1791 = vpop.f32.mrf.mxu0
      %v1792 = vadd.f32 0.0, %v1791
      %1793 = vmatmul.bf16.gmra.mxu0 %v1740
      %v1794 = vpop.f32.mrf.mxu0
      %v1795 = vadd.f32 0.0, %v1794
      %v1796 = vpop.f32.mrf.mxu0
      %v1797 = vadd.f32 0.0, %v1796
      %1798 = vmatmul.bf16.gmra.mxu0 %v1743
      %v1799 = vpop.f32.mrf.mxu0
      %v1800 = vadd.f32 0.0, %v1799
      %v1801 = vpop.f32.mrf.mxu0
      %v1802 = vadd.f32 0.0, %v1801
      %1803 = vmatmul.bf16.gmra.mxu0 %v1746
      %v1804 = vpop.f32.mrf.mxu0
      %v1805 = vadd.f32 0.0, %v1804
      %v1806 = vpop.f32.mrf.mxu0
      %v1807 = vadd.f32 0.0, %v1806
      %1808 = vmatmul.bf16.gmra.mxu0 %v1749
      %v1809 = vpop.f32.mrf.mxu0
      %v1810 = vadd.f32 0.0, %v1809
      %v1811 = vpop.f32.mrf.mxu0
      %v1812 = vadd.f32 0.0, %v1811
      %1813 = vmatmul.bf16.gmra.mxu0 %v1752
      %v1814 = vpop.f32.mrf.mxu0
      %v1815 = vadd.f32 0.0, %v1814
      %v1816 = vpop.f32.mrf.mxu0
      %v1817 = vadd.f32 0.0, %v1816
      %1818 = vmatmul.bf16.gmra.mxu0 %v1755
      %v1819 = vpop.f32.mrf.mxu0
      %v1820 = vadd.f32 0.0, %v1819
      %v1821 = vpop.f32.mrf.mxu0
      %v1822 = vadd.f32 0.0, %v1821
      %1823 = vmatmul.bf16.gmra.mxu0 %v1758
      %v1824 = vpop.f32.mrf.mxu0
      %v1825 = vadd.f32 0.0, %v1824
      %v1826 = vpop.f32.mrf.mxu0
      %v1827 = vadd.f32 0.0, %v1826
      %1828 = vmatmul.bf16.gmra.mxu0 %v1761
      %v1829 = vpop.f32.mrf.mxu0
      %v1830 = vadd.f32 0.0, %v1829
      %v1831 = vpop.f32.mrf.mxu0
      %v1832 = vadd.f32 0.0, %v1831
      %1833 = vmatmul.bf16.gmra.mxu0 %v1764
      %v1834 = vpop.f32.mrf.mxu0
      %v1835 = vadd.f32 0.0, %v1834
      %v1836 = vpop.f32.mrf.mxu0
      %v1837 = vadd.f32 0.0, %v1836
      %1838 = vmatmul.bf16.gmra.mxu0 %v1767
      %v1839 = vpop.f32.mrf.mxu0
      %v1840 = vadd.f32 0.0, %v1839
      %v1841 = vpop.f32.mrf.mxu0
      %v1842 = vadd.f32 0.0, %v1841
      %1843 = vmatmul.bf16.gmra.mxu0 %v1770
      %v1844 = vpop.f32.mrf.mxu0
      %v1845 = vadd.f32 0.0, %v1844
      %v1846 = vpop.f32.mrf.mxu0
      %v1847 = vadd.f32 0.0, %v1846
      %1848 = vdwg.mxu0
      %v1849 = vadd.f32 %v1666, %v1785
      %v1850 = vadd.f32 %v1667, %v1787
      %v1851 = vadd.f32 %v1668, %v1790
      %v1852 = vadd.f32 %v1669, %v1792
      %v1853 = vadd.f32 %v1670, %v1795
      %v1854 = vadd.f32 %v1671, %v1797
      %v1855 = vadd.f32 %v1672, %v1800
      %v1856 = vadd.f32 %v1673, %v1802
      %v1857 = vadd.f32 %v1674, %v1805
      %v1858 = vadd.f32 %v1675, %v1807
      %v1859 = vadd.f32 %v1676, %v1810
      %v1860 = vadd.f32 %v1677, %v1812
      %v1861 = vadd.f32 %v1678, %v1815
      %v1862 = vadd.f32 %v1679, %v1817
      %v1863 = vadd.f32 %v1680, %v1820
      %v1864 = vadd.f32 %v1681, %v1822
      %v1865 = vadd.f32 %v1682, %v1825
      %v1866 = vadd.f32 %v1683, %v1827
      %v1867 = vadd.f32 %v1684, %v1830
      %v1868 = vadd.f32 %v1685, %v1832
      %v1869 = vadd.f32 %v1686, %v1835
      %v1870 = vadd.f32 %v1687, %v1837
      %v1871 = vadd.f32 %v1688, %v1840
      %v1872 = vadd.f32 %v1689, %v1842
      %v1873 = vadd.f32 %v1690, %v1845
      %v1874 = vadd.f32 %v1691, %v1847
      %v1875 = vld [vmem:[#allocation2 + $0x2a] sm:$0xff]
      %v1876 = vld [vmem:[#allocation2 + $0x32] sm:$0xff]
      %v1877 = vld [vmem:[#allocation2 + $0x3a] sm:$0xff]
      %v1878 = vld [vmem:[#allocation2 + $0x42] sm:$0xff]
      %v1879 = vld [vmem:[#allocation2 + $0x4a] sm:$0xff]
      %v1880 = vld [vmem:[#allocation2 + $0x52] sm:$0xff]
      %v1881 = vld [vmem:[#allocation2 + $0x5a] sm:$0xff]
      %v1882 = vld [vmem:[#allocation2 + $0x62] sm:$0xff]
      %v1883 = vld [vmem:[#allocation2 + $0x6a] sm:$0xff]
      %v1884 = vld [vmem:[#allocation2 + $0x72] sm:$0xff]
      %v1885 = vld [vmem:[#allocation2 + $0x7a] sm:$0xff]
      %v1886 = vld [vmem:[#allocation2 + $0x82] sm:$0xff]
      %v1887 = vld [vmem:[#allocation2 + $0x8a] sm:$0xff]
      %v1888 = vld [vmem:[#allocation2 + $0x92] sm:$0xff]
      %v1889 = vld [vmem:[#allocation2 + $0x9a] sm:$0xff]
      %v1890 = vld [vmem:[#allocation2 + $0xa2] sm:$0xff]
      %v1891 = vld [vmem:[#allocation2 + $0xaa] sm:$0xff]
      %v1892 = vld [vmem:[#allocation2 + $0xb2] sm:$0xff]
      %v1893 = vld [vmem:[#allocation2 + $0xba] sm:$0xff]
      %v1894 = vld [vmem:[#allocation2 + $0xc2] sm:$0xff]
      %v1895 = vld [vmem:[#allocation2 + $0xca] sm:$0xff]
      %v1896 = vld [vmem:[#allocation2 + $0xd2] sm:$0xff]
      %v1897 = vld [vmem:[#allocation2 + $0xda] sm:$0xff]
      %v1898 = vld [vmem:[#allocation2 + $0xe2] sm:$0xff]
      %v1899 = vld [vmem:[#allocation2 + $0xea] sm:$0xff]
      %v1900 = vld [vmem:[#allocation2 + $0xf2] sm:$0xff]
      %v1901 = vpack.c.bf16 %v1876, %v1875
      %v1902 = vpack.c.bf16 %v1878, %v1877
      %v1903 = vpack.c.bf16 %v1880, %v1879
      %v1904 = vpack.c.bf16 %v1882, %v1881
      %v1905 = vpack.c.bf16 %v1884, %v1883
      %v1906 = vpack.c.bf16 %v1886, %v1885
      %v1907 = vpack.c.bf16 %v1888, %v1887
      %v1908 = vpack.c.bf16 %v1890, %v1889
      %v1909 = vpack.c.bf16 %v1892, %v1891
      %v1910 = vpack.c.bf16 %v1894, %v1893
      %v1911 = vpack.c.bf16 %v1896, %v1895
      %v1912 = vpack.c.bf16 %v1898, %v1897
      %v1913 = vpack.c.bf16 %v1900, %v1899
      %s1914 = scalar_lea.vmem %s2, 16
      %v1915 = vld [vmem:[%s1914] sm:$0x3]
      %v1917 = vsel %vm430, %v1901, 0
      %v1920 = vsel %vm430, %v1902, 0
      %v1923 = vsel %vm430, %v1903, 0
      %v1926 = vsel %vm430, %v1904, 0
      %v1929 = vsel %vm430, %v1905, 0
      %v1932 = vsel %vm430, %v1906, 0
      %v1935 = vsel %vm430, %v1907, 0
      %v1938 = vsel %vm430, %v1908, 0
      %v1941 = vsel %vm430, %v1909, 0
      %v1944 = vsel %vm430, %v1910, 0
      %v1947 = vsel %vm430, %v1911, 0
      %v1950 = vsel %vm430, %v1912, 0
      %v1953 = vsel %vm430, %v1913, 0
      %v1956 = vsel %vm583, %v1915, 0
      %1958 = vmatpush.bf16.msra.mxu0 0
      %1959 = vmatpush.bf16.msra.mxu0 0
      %1960 = vmatpush.bf16.msra.mxu0 0
      %1961 = vmatpush.bf16.msra.mxu0 0
      %1962 = vmatpush.bf16.msra.mxu0 0
      %1963 = vmatpush.bf16.msra.mxu0 0
      %1964 = vmatpush.bf16.msra.mxu0 0
      %1965 = vmatpush.bf16.msra.mxu0 %v1956
      %1966 = vmatmul.bf16.gmra.mxu0 %v1917
      %v1967 = vpop.f32.mrf.mxu0
      %v1968 = vadd.f32 0.0, %v1967
      %v1969 = vpop.f32.mrf.mxu0
      %v1970 = vadd.f32 0.0, %v1969
      %1971 = vmatmul.bf16.gmra.mxu0 %v1920
      %v1972 = vpop.f32.mrf.mxu0
      %v1973 = vadd.f32 0.0, %v1972
      %v1974 = vpop.f32.mrf.mxu0
      %v1975 = vadd.f32 0.0, %v1974
      %1976 = vmatmul.bf16.gmra.mxu0 %v1923
      %v1977 = vpop.f32.mrf.mxu0
      %v1978 = vadd.f32 0.0, %v1977
      %v1979 = vpop.f32.mrf.mxu0
      %v1980 = vadd.f32 0.0, %v1979
      %1981 = vmatmul.bf16.gmra.mxu0 %v1926
      %v1982 = vpop.f32.mrf.mxu0
      %v1983 = vadd.f32 0.0, %v1982
      %v1984 = vpop.f32.mrf.mxu0
      %v1985 = vadd.f32 0.0, %v1984
      %1986 = vmatmul.bf16.gmra.mxu0 %v1929
      %v1987 = vpop.f32.mrf.mxu0
      %v1988 = vadd.f32 0.0, %v1987
      %v1989 = vpop.f32.mrf.mxu0
      %v1990 = vadd.f32 0.0, %v1989
      %1991 = vmatmul.bf16.gmra.mxu0 %v1932
      %v1992 = vpop.f32.mrf.mxu0
      %v1993 = vadd.f32 0.0, %v1992
      %v1994 = vpop.f32.mrf.mxu0
      %v1995 = vadd.f32 0.0, %v1994
      %1996 = vmatmul.bf16.gmra.mxu0 %v1935
      %v1997 = vpop.f32.mrf.mxu0
      %v1998 = vadd.f32 0.0, %v1997
      %v1999 = vpop.f32.mrf.mxu0
      %v2000 = vadd.f32 0.0, %v1999
      %2001 = vmatmul.bf16.gmra.mxu0 %v1938
      %v2002 = vpop.f32.mrf.mxu0
      %v2003 = vadd.f32 0.0, %v2002
      %v2004 = vpop.f32.mrf.mxu0
      %v2005 = vadd.f32 0.0, %v2004
      %2006 = vmatmul.bf16.gmra.mxu0 %v1941
      %v2007 = vpop.f32.mrf.mxu0
      %v2008 = vadd.f32 0.0, %v2007
      %v2009 = vpop.f32.mrf.mxu0
      %v2010 = vadd.f32 0.0, %v2009
      %2011 = vmatmul.bf16.gmra.mxu0 %v1944
      %v2012 = vpop.f32.mrf.mxu0
      %v2013 = vadd.f32 0.0, %v2012
      %v2014 = vpop.f32.mrf.mxu0
      %v2015 = vadd.f32 0.0, %v2014
      %2016 = vmatmul.bf16.gmra.mxu0 %v1947
      %v2017 = vpop.f32.mrf.mxu0
      %v2018 = vadd.f32 0.0, %v2017
      %v2019 = vpop.f32.mrf.mxu0
      %v2020 = vadd.f32 0.0, %v2019
      %2021 = vmatmul.bf16.gmra.mxu0 %v1950
      %v2022 = vpop.f32.mrf.mxu0
      %v2023 = vadd.f32 0.0, %v2022
      %v2024 = vpop.f32.mrf.mxu0
      %v2025 = vadd.f32 0.0, %v2024
      %2026 = vmatmul.bf16.gmra.mxu0 %v1953
      %v2027 = vpop.f32.mrf.mxu0
      %v2028 = vadd.f32 0.0, %v2027
      %v2029 = vpop.f32.mrf.mxu0
      %v2030 = vadd.f32 0.0, %v2029
      %2031 = vdwg.mxu0
      %v2032 = vadd.f32 %v1849, %v1968
      %v2033 = vadd.f32 %v1850, %v1970
      %v2034 = vadd.f32 %v1851, %v1973
      %v2035 = vadd.f32 %v1852, %v1975
      %v2036 = vadd.f32 %v1853, %v1978
      %v2037 = vadd.f32 %v1854, %v1980
      %v2038 = vadd.f32 %v1855, %v1983
      %v2039 = vadd.f32 %v1856, %v1985
      %v2040 = vadd.f32 %v1857, %v1988
      %v2041 = vadd.f32 %v1858, %v1990
      %v2042 = vadd.f32 %v1859, %v1993
      %v2043 = vadd.f32 %v1860, %v1995
      %v2044 = vadd.f32 %v1861, %v1998
      %v2045 = vadd.f32 %v1862, %v2000
      %v2046 = vadd.f32 %v1863, %v2003
      %v2047 = vadd.f32 %v1864, %v2005
      %v2048 = vadd.f32 %v1865, %v2008
      %v2049 = vadd.f32 %v1866, %v2010
      %v2050 = vadd.f32 %v1867, %v2013
      %v2051 = vadd.f32 %v1868, %v2015
      %v2052 = vadd.f32 %v1869, %v2018
      %v2053 = vadd.f32 %v1870, %v2020
      %v2054 = vadd.f32 %v1871, %v2023
      %v2055 = vadd.f32 %v1872, %v2025
      %v2056 = vadd.f32 %v1873, %v2028
      %v2057 = vadd.f32 %v1874, %v2030
      %v2058 = vld [vmem:[%s3] sm:$0x1]
      %v2060 = vperm.slane %v2058, 0
      %v2062 = vadd.f32 %v2032, %v2060
      %v2063 = vadd.f32 %v2033, %v2060
      %v2064 = vadd.f32 %v2034, %v2060
      %v2065 = vadd.f32 %v2035, %v2060
      %v2066 = vadd.f32 %v2036, %v2060
      %v2067 = vadd.f32 %v2037, %v2060
      %v2068 = vadd.f32 %v2038, %v2060
      %v2069 = vadd.f32 %v2039, %v2060
      %v2070 = vadd.f32 %v2040, %v2060
      %v2071 = vadd.f32 %v2041, %v2060
      %v2072 = vadd.f32 %v2042, %v2060
      %v2073 = vadd.f32 %v2043, %v2060
      %v2074 = vadd.f32 %v2044, %v2060
      %v2075 = vadd.f32 %v2045, %v2060
      %v2076 = vadd.f32 %v2046, %v2060
      %v2077 = vadd.f32 %v2047, %v2060
      %v2078 = vadd.f32 %v2048, %v2060
      %v2079 = vadd.f32 %v2049, %v2060
      %v2080 = vadd.f32 %v2050, %v2060
      %v2081 = vadd.f32 %v2051, %v2060
      %v2082 = vadd.f32 %v2052, %v2060
      %v2083 = vadd.f32 %v2053, %v2060
      %v2084 = vadd.f32 %v2054, %v2060
      %v2085 = vadd.f32 %v2055, %v2060
      %v2086 = vadd.f32 %v2056, %v2060
      %v2087 = vadd.f32 %v2057, %v2060
      %v2088 = vsub.f32 0.0, %v2062
      %v2089 = vsub.f32 0.0, %v2063
      %v2090 = vsub.f32 0.0, %v2064
      %v2091 = vsub.f32 0.0, %v2065
      %v2092 = vsub.f32 0.0, %v2066
      %v2093 = vsub.f32 0.0, %v2067
      %v2094 = vsub.f32 0.0, %v2068
      %v2095 = vsub.f32 0.0, %v2069
      %v2096 = vsub.f32 0.0, %v2070
      %v2097 = vsub.f32 0.0, %v2071
      %v2098 = vsub.f32 0.0, %v2072
      %v2099 = vsub.f32 0.0, %v2073
      %v2100 = vsub.f32 0.0, %v2074
      %v2101 = vsub.f32 0.0, %v2075
      %v2102 = vsub.f32 0.0, %v2076
      %v2103 = vsub.f32 0.0, %v2077
      %v2104 = vsub.f32 0.0, %v2078
      %v2105 = vsub.f32 0.0, %v2079
      %v2106 = vsub.f32 0.0, %v2080
      %v2107 = vsub.f32 0.0, %v2081
      %v2108 = vsub.f32 0.0, %v2082
      %v2109 = vsub.f32 0.0, %v2083
      %v2110 = vsub.f32 0.0, %v2084
      %v2111 = vsub.f32 0.0, %v2085
      %v2112 = vsub.f32 0.0, %v2086
      %v2113 = vsub.f32 0.0, %v2087
      %v2114 = vmul.f32 %v2088, 1.442695
      %v2115 = vpow.pop %v2114
      %v2116 = vmul.f32 %v2089, 1.442695
      %v2117 = vpow.pop %v2116
      %v2118 = vmul.f32 %v2090, 1.442695
      %v2119 = vpow.pop %v2118
      %v2120 = vmul.f32 %v2091, 1.442695
      %v2121 = vpow.pop %v2120
      %v2122 = vmul.f32 %v2092, 1.442695
      %v2123 = vpow.pop %v2122
      %v2124 = vmul.f32 %v2093, 1.442695
      %v2125 = vpow.pop %v2124
      %v2126 = vmul.f32 %v2094, 1.442695
      %v2127 = vpow.pop %v2126
      %v2128 = vmul.f32 %v2095, 1.442695
      %v2129 = vpow.pop %v2128
      %v2130 = vmul.f32 %v2096, 1.442695
      %v2131 = vpow.pop %v2130
      %v2132 = vmul.f32 %v2097, 1.442695
      %v2133 = vpow.pop %v2132
      %v2134 = vmul.f32 %v2098, 1.442695
      %v2135 = vpow.pop %v2134
      %v2136 = vmul.f32 %v2099, 1.442695
      %v2137 = vpow.pop %v2136
      %v2138 = vmul.f32 %v2100, 1.442695
      %v2139 = vpow.pop %v2138
      %v2140 = vmul.f32 %v2101, 1.442695
      %v2141 = vpow.pop %v2140
      %v2142 = vmul.f32 %v2102, 1.442695
      %v2143 = vpow.pop %v2142
      %v2144 = vmul.f32 %v2103, 1.442695
      %v2145 = vpow.pop %v2144
      %v2146 = vmul.f32 %v2104, 1.442695
      %v2147 = vpow.pop %v2146
      %v2148 = vmul.f32 %v2105, 1.442695
      %v2149 = vpow.pop %v2148
      %v2150 = vmul.f32 %v2106, 1.442695
      %v2151 = vpow.pop %v2150
      %v2152 = vmul.f32 %v2107, 1.442695
      %v2153 = vpow.pop %v2152
      %v2154 = vmul.f32 %v2108, 1.442695
      %v2155 = vpow.pop %v2154
      %v2156 = vmul.f32 %v2109, 1.442695
      %v2157 = vpow.pop %v2156
      %v2158 = vmul.f32 %v2110, 1.442695
      %v2159 = vpow.pop %v2158
      %v2160 = vmul.f32 %v2111, 1.442695
      %v2161 = vpow.pop %v2160
      %v2162 = vmul.f32 %v2112, 1.442695
      %v2163 = vpow.pop %v2162
      %v2164 = vmul.f32 %v2113, 1.442695
      %v2165 = vpow.pop %v2164
      %v2166 = vadd.f32 %v2115, 1.0
      %v2167 = vadd.f32 %v2117, 1.0
      %v2168 = vadd.f32 %v2119, 1.0
      %v2169 = vadd.f32 %v2121, 1.0
      %v2170 = vadd.f32 %v2123, 1.0
      %v2171 = vadd.f32 %v2125, 1.0
      %v2172 = vadd.f32 %v2127, 1.0
      %v2173 = vadd.f32 %v2129, 1.0
      %v2174 = vadd.f32 %v2131, 1.0
      %v2175 = vadd.f32 %v2133, 1.0
      %v2176 = vadd.f32 %v2135, 1.0
      %v2177 = vadd.f32 %v2137, 1.0
      %v2178 = vadd.f32 %v2139, 1.0
      %v2179 = vadd.f32 %v2141, 1.0
      %v2180 = vadd.f32 %v2143, 1.0
      %v2181 = vadd.f32 %v2145, 1.0
      %v2182 = vadd.f32 %v2147, 1.0
      %v2183 = vadd.f32 %v2149, 1.0
      %v2184 = vadd.f32 %v2151, 1.0
      %v2185 = vadd.f32 %v2153, 1.0
      %v2186 = vadd.f32 %v2155, 1.0
      %v2187 = vadd.f32 %v2157, 1.0
      %v2188 = vadd.f32 %v2159, 1.0
      %v2189 = vadd.f32 %v2161, 1.0
      %v2190 = vadd.f32 %v2163, 1.0
      %v2191 = vadd.f32 %v2165, 1.0
      %v2192 = vrcp.pop %v2166
      %v2193 = vrcp.pop %v2167
      %v2194 = vrcp.pop %v2168
      %v2195 = vrcp.pop %v2169
      %v2196 = vrcp.pop %v2170
      %v2197 = vrcp.pop %v2171
      %v2198 = vrcp.pop %v2172
      %v2199 = vrcp.pop %v2173
      %v2200 = vrcp.pop %v2174
      %v2201 = vrcp.pop %v2175
      %v2202 = vrcp.pop %v2176
      %v2203 = vrcp.pop %v2177
      %v2204 = vrcp.pop %v2178
      %v2205 = vrcp.pop %v2179
      %v2206 = vrcp.pop %v2180
      %v2207 = vrcp.pop %v2181
      %v2208 = vrcp.pop %v2182
      %v2209 = vrcp.pop %v2183
      %v2210 = vrcp.pop %v2184
      %v2211 = vrcp.pop %v2185
      %v2212 = vrcp.pop %v2186
      %v2213 = vrcp.pop %v2187
      %v2214 = vrcp.pop %v2188
      %v2215 = vrcp.pop %v2189
      %v2216 = vrcp.pop %v2190
      %v2217 = vrcp.pop %v2191
      %v2218 = vmul.f32 %v2062, %v2192
      %v2219 = vmul.f32 %v2063, %v2193
      %v2220 = vmul.f32 %v2064, %v2194
      %v2221 = vmul.f32 %v2065, %v2195
      %v2222 = vmul.f32 %v2066, %v2196
      %v2223 = vmul.f32 %v2067, %v2197
      %v2224 = vmul.f32 %v2068, %v2198
      %v2225 = vmul.f32 %v2069, %v2199
      %v2226 = vmul.f32 %v2070, %v2200
      %v2227 = vmul.f32 %v2071, %v2201
      %v2228 = vmul.f32 %v2072, %v2202
      %v2229 = vmul.f32 %v2073, %v2203
      %v2230 = vmul.f32 %v2074, %v2204
      %v2231 = vmul.f32 %v2075, %v2205
      %v2232 = vmul.f32 %v2076, %v2206
      %v2233 = vmul.f32 %v2077, %v2207
      %v2234 = vmul.f32 %v2078, %v2208
      %v2235 = vmul.f32 %v2079, %v2209
      %v2236 = vmul.f32 %v2080, %v2210
      %v2237 = vmul.f32 %v2081, %v2211
      %v2238 = vmul.f32 %v2082, %v2212
      %v2239 = vmul.f32 %v2083, %v2213
      %v2240 = vmul.f32 %v2084, %v2214
      %v2241 = vmul.f32 %v2085, %v2215
      %v2242 = vmul.f32 %v2086, %v2216
      %v2243 = vmul.f32 %v2087, %v2217
      %v2244 = vld [vmem:[%s353] sm:$0xff]
      %v2245 = vld [vmem:[%s353 + $0x8] sm:$0xff]
      %v2246 = vld [vmem:[%s353 + $0x10] sm:$0xff]
      %v2247 = vld [vmem:[%s353 + $0x18] sm:$0xff]
      %v2248 = vld [vmem:[%s353 + $0x20] sm:$0xff]
      %v2249 = vld [vmem:[%s353 + $0x28] sm:$0xff]
      %v2250 = vld [vmem:[%s353 + $0x30] sm:$0xff]
      %v2251 = vld [vmem:[%s353 + $0x38] sm:$0xff]
      %v2252 = vld [vmem:[%s353 + $0x40] sm:$0xff]
      %v2253 = vld [vmem:[%s353 + $0x48] sm:$0xff]
      %v2254 = vld [vmem:[%s353 + $0x50] sm:$0xff]
      %v2255 = vld [vmem:[%s353 + $0x58] sm:$0xff]
      %v2256 = vld [vmem:[%s353 + $0x60] sm:$0xff]
      %v2257 = vld [vmem:[%s353 + $0x68] sm:$0xff]
      %v2258 = vld [vmem:[%s353 + $0x70] sm:$0xff]
      %v2259 = vld [vmem:[%s353 + $0x78] sm:$0xff]
      %v2260 = vld [vmem:[%s353 + $0x80] sm:$0xff]
      %v2261 = vld [vmem:[%s353 + $0x88] sm:$0xff]
      %v2262 = vld [vmem:[%s353 + $0x90] sm:$0xff]
      %v2263 = vld [vmem:[%s353 + $0x98] sm:$0xff]
      %v2264 = vld [vmem:[%s353 + $0xa0] sm:$0xff]
      %v2265 = vld [vmem:[%s353 + $0xa8] sm:$0xff]
      %v2266 = vld [vmem:[%s353 + $0xb0] sm:$0xff]
      %v2267 = vld [vmem:[%s353 + $0xb8] sm:$0xff]
      %v2268 = vld [vmem:[%s353 + $0xc0] sm:$0xff]
      %v2269 = vld [vmem:[%s353 + $0xc8] sm:$0xff]
      %2271 = vset.pattern.permute.xlu0 0
      %2272 = vperm.xlu0 %2271, %v2244
      %v2273 = vpop.permute.xlu0 %2272
      %2276 = vset.pattern.permute.xlu0 0
      %2277 = vperm.xlu0 %2276, %v2245
      %v2278 = vpop.permute.xlu0 %2277
      %2281 = vset.pattern.permute.xlu0 0
      %2282 = vperm.xlu0 %2281, %v2246
      %v2283 = vpop.permute.xlu0 %2282
      %2286 = vset.pattern.permute.xlu0 0
      %2287 = vperm.xlu0 %2286, %v2247
      %v2288 = vpop.permute.xlu0 %2287
      %2291 = vset.pattern.permute.xlu0 0
      %2292 = vperm.xlu0 %2291, %v2248
      %v2293 = vpop.permute.xlu0 %2292
      %2296 = vset.pattern.permute.xlu0 0
      %2297 = vperm.xlu0 %2296, %v2249
      %v2298 = vpop.permute.xlu0 %2297
      %2301 = vset.pattern.permute.xlu0 0
      %2302 = vperm.xlu0 %2301, %v2250
      %v2303 = vpop.permute.xlu0 %2302
      %2306 = vset.pattern.permute.xlu0 0
      %2307 = vperm.xlu0 %2306, %v2251
      %v2308 = vpop.permute.xlu0 %2307
      %2311 = vset.pattern.permute.xlu0 0
      %2312 = vperm.xlu0 %2311, %v2252
      %v2313 = vpop.permute.xlu0 %2312
      %2316 = vset.pattern.permute.xlu0 0
      %2317 = vperm.xlu0 %2316, %v2253
      %v2318 = vpop.permute.xlu0 %2317
      %2321 = vset.pattern.permute.xlu0 0
      %2322 = vperm.xlu0 %2321, %v2254
      %v2323 = vpop.permute.xlu0 %2322
      %2326 = vset.pattern.permute.xlu0 0
      %2327 = vperm.xlu0 %2326, %v2255
      %v2328 = vpop.permute.xlu0 %2327
      %2331 = vset.pattern.permute.xlu0 0
      %2332 = vperm.xlu0 %2331, %v2256
      %v2333 = vpop.permute.xlu0 %2332
      %2336 = vset.pattern.permute.xlu0 0
      %2337 = vperm.xlu0 %2336, %v2257
      %v2338 = vpop.permute.xlu0 %2337
      %2341 = vset.pattern.permute.xlu0 0
      %2342 = vperm.xlu0 %2341, %v2258
      %v2343 = vpop.permute.xlu0 %2342
      %2346 = vset.pattern.permute.xlu0 0
      %2347 = vperm.xlu0 %2346, %v2259
      %v2348 = vpop.permute.xlu0 %2347
      %2351 = vset.pattern.permute.xlu0 0
      %2352 = vperm.xlu0 %2351, %v2260
      %v2353 = vpop.permute.xlu0 %2352
      %2356 = vset.pattern.permute.xlu0 0
      %2357 = vperm.xlu0 %2356, %v2261
      %v2358 = vpop.permute.xlu0 %2357
      %2361 = vset.pattern.permute.xlu0 0
      %2362 = vperm.xlu0 %2361, %v2262
      %v2363 = vpop.permute.xlu0 %2362
      %2366 = vset.pattern.permute.xlu0 0
      %2367 = vperm.xlu0 %2366, %v2263
      %v2368 = vpop.permute.xlu0 %2367
      %2371 = vset.pattern.permute.xlu0 0
      %2372 = vperm.xlu0 %2371, %v2264
      %v2373 = vpop.permute.xlu0 %2372
      %2376 = vset.pattern.permute.xlu0 0
      %2377 = vperm.xlu0 %2376, %v2265
      %v2378 = vpop.permute.xlu0 %2377
      %2381 = vset.pattern.permute.xlu0 0
      %2382 = vperm.xlu0 %2381, %v2266
      %v2383 = vpop.permute.xlu0 %2382
      %2386 = vset.pattern.permute.xlu0 0
      %2387 = vperm.xlu0 %2386, %v2267
      %v2388 = vpop.permute.xlu0 %2387
      %2391 = vset.pattern.permute.xlu0 0
      %2392 = vperm.xlu0 %2391, %v2268
      %v2393 = vpop.permute.xlu0 %2392
      %2396 = vset.pattern.permute.xlu0 0
      %2397 = vperm.xlu0 %2396, %v2269
      %v2398 = vpop.permute.xlu0 %2397
      %v2400 = vmul.f32 %v2218, %v2273
      %v2401 = vmul.f32 %v2219, %v2278
      %v2402 = vmul.f32 %v2220, %v2283
      %v2403 = vmul.f32 %v2221, %v2288
      %v2404 = vmul.f32 %v2222, %v2293
      %v2405 = vmul.f32 %v2223, %v2298
      %v2406 = vmul.f32 %v2224, %v2303
      %v2407 = vmul.f32 %v2225, %v2308
      %v2408 = vmul.f32 %v2226, %v2313
      %v2409 = vmul.f32 %v2227, %v2318
      %v2410 = vmul.f32 %v2228, %v2323
      %v2411 = vmul.f32 %v2229, %v2328
      %v2412 = vmul.f32 %v2230, %v2333
      %v2413 = vmul.f32 %v2231, %v2338
      %v2414 = vmul.f32 %v2232, %v2343
      %v2415 = vmul.f32 %v2233, %v2348
      %v2416 = vmul.f32 %v2234, %v2353
      %v2417 = vmul.f32 %v2235, %v2358
      %v2418 = vmul.f32 %v2236, %v2363
      %v2419 = vmul.f32 %v2237, %v2368
      %v2420 = vmul.f32 %v2238, %v2373
      %v2421 = vmul.f32 %v2239, %v2378
      %v2422 = vmul.f32 %v2240, %v2383
      %v2423 = vmul.f32 %v2241, %v2388
      %v2424 = vmul.f32 %v2242, %v2393
      %v2425 = vmul.f32 %v2243, %v2398
      %vm2426 = vcmask 64512
      %2427 = vst.msk [vmem:[#allocation3] sm:$0xff] %vm2426, %v2400
      %2428 = vst.msk [vmem:[#allocation3 + $0x8] sm:$0xff] %vm2426, %v2401
      %2429 = vst.msk [vmem:[#allocation3 + $0x10] sm:$0xff] %vm2426, %v2402
      %2430 = vst.msk [vmem:[#allocation3 + $0x18] sm:$0xff] %vm2426, %v2403
      %2431 = vst.msk [vmem:[#allocation3 + $0x20] sm:$0xff] %vm2426, %v2404
      %2432 = vst.msk [vmem:[#allocation3 + $0x28] sm:$0xff] %vm2426, %v2405
      %2433 = vst.msk [vmem:[#allocation3 + $0x30] sm:$0xff] %vm2426, %v2406
      %2434 = vst.msk [vmem:[#allocation3 + $0x38] sm:$0xff] %vm2426, %v2407
      %2435 = vst.msk [vmem:[#allocation3 + $0x40] sm:$0xff] %vm2426, %v2408
      %2436 = vst.msk [vmem:[#allocation3 + $0x48] sm:$0xff] %vm2426, %v2409
      %2437 = vst.msk [vmem:[#allocation3 + $0x50] sm:$0xff] %vm2426, %v2410
      %2438 = vst.msk [vmem:[#allocation3 + $0x58] sm:$0xff] %vm2426, %v2411
      %2439 = vst.msk [vmem:[#allocation3 + $0x60] sm:$0xff] %vm2426, %v2412
      %2440 = vst.msk [vmem:[#allocation3 + $0x68] sm:$0xff] %vm2426, %v2413
      %2441 = vst.msk [vmem:[#allocation3 + $0x70] sm:$0xff] %vm2426, %v2414
      %2442 = vst.msk [vmem:[#allocation3 + $0x78] sm:$0xff] %vm2426, %v2415
      %2443 = vst.msk [vmem:[#allocation3 + $0x80] sm:$0xff] %vm2426, %v2416
      %2444 = vst.msk [vmem:[#allocation3 + $0x88] sm:$0xff] %vm2426, %v2417
      %2445 = vst.msk [vmem:[#allocation3 + $0x90] sm:$0xff] %vm2426, %v2418
      %2446 = vst.msk [vmem:[#allocation3 + $0x98] sm:$0xff] %vm2426, %v2419
      %2447 = vst.msk [vmem:[#allocation3 + $0xa0] sm:$0xff] %vm2426, %v2420
      %2448 = vst.msk [vmem:[#allocation3 + $0xa8] sm:$0xff] %vm2426, %v2421
      %2449 = vst.msk [vmem:[#allocation3 + $0xb0] sm:$0xff] %vm2426, %v2422
      %2450 = vst.msk [vmem:[#allocation3 + $0xb8] sm:$0xff] %vm2426, %v2423
      %2451 = vst.msk [vmem:[#allocation3 + $0xc0] sm:$0xff] %vm2426, %v2424
      %2452 = vst.msk [vmem:[#allocation3 + $0xc8] sm:$0xff] %vm2426, %v2425
      %v2453 = vld [vmem:[#allocation3] sm:$0xff]
      %v2454 = vld [vmem:[#allocation3 + $0x8] sm:$0xff]
      %v2455 = vld [vmem:[#allocation3 + $0x10] sm:$0xff]
      %v2456 = vld [vmem:[#allocation3 + $0x18] sm:$0xff]
      %v2457 = vld [vmem:[#allocation3 + $0x20] sm:$0xff]
      %v2458 = vld [vmem:[#allocation3 + $0x28] sm:$0xff]
      %v2459 = vld [vmem:[#allocation3 + $0x30] sm:$0xff]
      %v2460 = vld [vmem:[#allocation3 + $0x38] sm:$0xff]
      %v2461 = vld [vmem:[#allocation3 + $0x40] sm:$0xff]
      %v2462 = vld [vmem:[#allocation3 + $0x48] sm:$0xff]
      %v2463 = vld [vmem:[#allocation3 + $0x50] sm:$0xff]
      %v2464 = vld [vmem:[#allocation3 + $0x58] sm:$0xff]
      %v2465 = vld [vmem:[#allocation3 + $0x60] sm:$0xff]
      %v2466 = vld [vmem:[#allocation3 + $0x68] sm:$0xff]
      %v2467 = vld [vmem:[#allocation3 + $0x70] sm:$0xff]
      %v2468 = vld [vmem:[#allocation3 + $0x78] sm:$0xff]
      %v2469 = vld [vmem:[#allocation3 + $0x80] sm:$0xff]
      %v2470 = vld [vmem:[#allocation3 + $0x88] sm:$0xff]
      %v2471 = vld [vmem:[#allocation3 + $0x90] sm:$0xff]
      %v2472 = vld [vmem:[#allocation3 + $0x98] sm:$0xff]
      %v2473 = vpack.c.bf16 %v2454, %v2453
      %v2474 = vpack.c.bf16 %v2456, %v2455
      %v2475 = vpack.c.bf16 %v2458, %v2457
      %v2476 = vpack.c.bf16 %v2460, %v2459
      %v2477 = vpack.c.bf16 %v2462, %v2461
      %v2478 = vpack.c.bf16 %v2464, %v2463
      %v2479 = vpack.c.bf16 %v2466, %v2465
      %v2480 = vpack.c.bf16 %v2468, %v2467
      %v2481 = vpack.c.bf16 %v2470, %v2469
      %v2482 = vpack.c.bf16 %v2472, %v2471
      %v2483 = vld [vmem:[%s4] sm:$0xf]
      %v2484 = vld [vmem:[#allocation3 + $0x1] sm:$0xff]
      %v2485 = vld [vmem:[#allocation3 + $0x9] sm:$0xff]
      %v2486 = vld [vmem:[#allocation3 + $0x11] sm:$0xff]
      %v2487 = vld [vmem:[#allocation3 + $0x19] sm:$0xff]
      %v2488 = vld [vmem:[#allocation3 + $0x21] sm:$0xff]
      %v2489 = vld [vmem:[#allocation3 + $0x29] sm:$0xff]
      %v2490 = vld [vmem:[#allocation3 + $0x31] sm:$0xff]
      %v2491 = vld [vmem:[#allocation3 + $0x39] sm:$0xff]
      %v2492 = vld [vmem:[#allocation3 + $0x41] sm:$0xff]
      %v2493 = vld [vmem:[#allocation3 + $0x49] sm:$0xff]
      %v2494 = vld [vmem:[#allocation3 + $0x51] sm:$0xff]
      %v2495 = vld [vmem:[#allocation3 + $0x59] sm:$0xff]
      %v2496 = vld [vmem:[#allocation3 + $0x61] sm:$0xff]
      %v2497 = vld [vmem:[#allocation3 + $0x69] sm:$0xff]
      %v2498 = vld [vmem:[#allocation3 + $0x71] sm:$0xff]
      %v2499 = vld [vmem:[#allocation3 + $0x79] sm:$0xff]
      %v2500 = vld [vmem:[#allocation3 + $0x81] sm:$0xff]
      %v2501 = vld [vmem:[#allocation3 + $0x89] sm:$0xff]
      %v2502 = vld [vmem:[#allocation3 + $0x91] sm:$0xff]
      %v2503 = vld [vmem:[#allocation3 + $0x99] sm:$0xff]
      %v2504 = vpack.c.bf16 %v2485, %v2484
      %v2505 = vpack.c.bf16 %v2487, %v2486
      %v2506 = vpack.c.bf16 %v2489, %v2488
      %v2507 = vpack.c.bf16 %v2491, %v2490
      %v2508 = vpack.c.bf16 %v2493, %v2492
      %v2509 = vpack.c.bf16 %v2495, %v2494
      %v2510 = vpack.c.bf16 %v2497, %v2496
      %v2511 = vpack.c.bf16 %v2499, %v2498
      %v2512 = vpack.c.bf16 %v2501, %v2500
      %v2513 = vpack.c.bf16 %v2503, %v2502
      %s2514 = scalar_lea.vmem %s4, 4
      %v2515 = vld [vmem:[%s2514] sm:$0xf]
      %v2517 = vsel %vm2426, %v2504, 0
      %v2520 = vsel %vm2426, %v2505, 0
      %v2523 = vsel %vm2426, %v2506, 0
      %v2526 = vsel %vm2426, %v2507, 0
      %v2529 = vsel %vm2426, %v2508, 0
      %v2532 = vsel %vm2426, %v2509, 0
      %v2535 = vsel %vm2426, %v2510, 0
      %v2538 = vsel %vm2426, %v2511, 0
      %v2541 = vsel %vm2426, %v2512, 0
      %v2544 = vsel %vm2426, %v2513, 0
      %vm2546 = vcmask 1043456
      %v2548 = vsel %vm2546, %v2515, 0
      %2550 = vmatpush.bf16.msra.mxu0 0
      %2551 = vmatpush.bf16.msra.mxu0 0
      %2552 = vmatpush.bf16.msra.mxu0 0
      %2553 = vmatpush.bf16.msra.mxu0 0
      %2554 = vmatpush.bf16.msra.mxu0 0
      %2555 = vmatpush.bf16.msra.mxu0 0
      %2556 = vmatpush.bf16.msra.mxu0 0
      %2557 = vmatpush.bf16.msra.mxu0 %v2548
      %2558 = vmatmul.bf16.gmra.mxu0 %v2517
      %v2559 = vpop.f32.mrf.mxu0
      %v2560 = vadd.f32 0.0, %v2559
      %v2561 = vpop.f32.mrf.mxu0
      %v2562 = vadd.f32 0.0, %v2561
      %2563 = vmatmul.bf16.gmra.mxu0 %v2520
      %v2564 = vpop.f32.mrf.mxu0
      %v2565 = vadd.f32 0.0, %v2564
      %v2566 = vpop.f32.mrf.mxu0
      %v2567 = vadd.f32 0.0, %v2566
      %2568 = vmatmul.bf16.gmra.mxu0 %v2523
      %v2569 = vpop.f32.mrf.mxu0
      %v2570 = vadd.f32 0.0, %v2569
      %v2571 = vpop.f32.mrf.mxu0
      %v2572 = vadd.f32 0.0, %v2571
      %2573 = vmatmul.bf16.gmra.mxu0 %v2526
      %v2574 = vpop.f32.mrf.mxu0
      %v2575 = vadd.f32 0.0, %v2574
      %v2576 = vpop.f32.mrf.mxu0
      %v2577 = vadd.f32 0.0, %v2576
      %2578 = vmatmul.bf16.gmra.mxu0 %v2529
      %v2579 = vpop.f32.mrf.mxu0
      %v2580 = vadd.f32 0.0, %v2579
      %v2581 = vpop.f32.mrf.mxu0
      %v2582 = vadd.f32 0.0, %v2581
      %2583 = vmatmul.bf16.gmra.mxu0 %v2532
      %v2584 = vpop.f32.mrf.mxu0
      %v2585 = vadd.f32 0.0, %v2584
      %v2586 = vpop.f32.mrf.mxu0
      %v2587 = vadd.f32 0.0, %v2586
      %2588 = vmatmul.bf16.gmra.mxu0 %v2535
      %v2589 = vpop.f32.mrf.mxu0
      %v2590 = vadd.f32 0.0, %v2589
      %v2591 = vpop.f32.mrf.mxu0
      %v2592 = vadd.f32 0.0, %v2591
      %2593 = vmatmul.bf16.gmra.mxu0 %v2538
      %v2594 = vpop.f32.mrf.mxu0
      %v2595 = vadd.f32 0.0, %v2594
      %v2596 = vpop.f32.mrf.mxu0
      %v2597 = vadd.f32 0.0, %v2596
      %2598 = vmatmul.bf16.gmra.mxu0 %v2541
      %v2599 = vpop.f32.mrf.mxu0
      %v2600 = vadd.f32 0.0, %v2599
      %v2601 = vpop.f32.mrf.mxu0
      %v2602 = vadd.f32 0.0, %v2601
      %2603 = vmatmul.bf16.gmra.mxu0 %v2544
      %v2604 = vpop.f32.mrf.mxu0
      %v2605 = vadd.f32 0.0, %v2604
      %v2606 = vpop.f32.mrf.mxu0
      %v2607 = vadd.f32 0.0, %v2606
      %2608 = vdwg.mxu0
      %v2610 = vsel %vm2426, %v2473, 0
      %v2613 = vsel %vm2426, %v2474, 0
      %v2616 = vsel %vm2426, %v2475, 0
      %v2619 = vsel %vm2426, %v2476, 0
      %v2622 = vsel %vm2426, %v2477, 0
      %v2625 = vsel %vm2426, %v2478, 0
      %v2628 = vsel %vm2426, %v2479, 0
      %v2631 = vsel %vm2426, %v2480, 0
      %v2634 = vsel %vm2426, %v2481, 0
      %v2637 = vsel %vm2426, %v2482, 0
      %v2640 = vsel %vm2546, %v2483, 0
      %2642 = vmatpush.bf16.msra.mxu0 0
      %2643 = vmatpush.bf16.msra.mxu0 0
      %2644 = vmatpush.bf16.msra.mxu0 0
      %2645 = vmatpush.bf16.msra.mxu0 0
      %2646 = vmatpush.bf16.msra.mxu0 0
      %2647 = vmatpush.bf16.msra.mxu0 0
      %2648 = vmatpush.bf16.msra.mxu0 0
      %2649 = vmatpush.bf16.msra.mxu0 %v2640
      %2650 = vmatmul.bf16.gmra.mxu0 %v2610
      %v2651 = vpop.f32.mrf.mxu0
      %v2652 = vadd.f32 %v2560, %v2651
      %v2653 = vpop.f32.mrf.mxu0
      %v2654 = vadd.f32 %v2562, %v2653
      %2655 = vmatmul.bf16.gmra.mxu0 %v2613
      %v2656 = vpop.f32.mrf.mxu0
      %v2657 = vadd.f32 %v2565, %v2656
      %v2658 = vpop.f32.mrf.mxu0
      %v2659 = vadd.f32 %v2567, %v2658
      %2660 = vmatmul.bf16.gmra.mxu0 %v2616
      %v2661 = vpop.f32.mrf.mxu0
      %v2662 = vadd.f32 %v2570, %v2661
      %v2663 = vpop.f32.mrf.mxu0
      %v2664 = vadd.f32 %v2572, %v2663
      %2665 = vmatmul.bf16.gmra.mxu0 %v2619
      %v2666 = vpop.f32.mrf.mxu0
      %v2667 = vadd.f32 %v2575, %v2666
      %v2668 = vpop.f32.mrf.mxu0
      %v2669 = vadd.f32 %v2577, %v2668
      %2670 = vmatmul.bf16.gmra.mxu0 %v2622
      %v2671 = vpop.f32.mrf.mxu0
      %v2672 = vadd.f32 %v2580, %v2671
      %v2673 = vpop.f32.mrf.mxu0
      %v2674 = vadd.f32 %v2582, %v2673
      %2675 = vmatmul.bf16.gmra.mxu0 %v2625
      %v2676 = vpop.f32.mrf.mxu0
      %v2677 = vadd.f32 %v2585, %v2676
      %v2678 = vpop.f32.mrf.mxu0
      %v2679 = vadd.f32 %v2587, %v2678
      %2680 = vmatmul.bf16.gmra.mxu0 %v2628
      %v2681 = vpop.f32.mrf.mxu0
      %v2682 = vadd.f32 %v2590, %v2681
      %v2683 = vpop.f32.mrf.mxu0
      %v2684 = vadd.f32 %v2592, %v2683
      %2685 = vmatmul.bf16.gmra.mxu0 %v2631
      %v2686 = vpop.f32.mrf.mxu0
      %v2687 = vadd.f32 %v2595, %v2686
      %v2688 = vpop.f32.mrf.mxu0
      %v2689 = vadd.f32 %v2597, %v2688
      %2690 = vmatmul.bf16.gmra.mxu0 %v2634
      %v2691 = vpop.f32.mrf.mxu0
      %v2692 = vadd.f32 %v2600, %v2691
      %v2693 = vpop.f32.mrf.mxu0
      %v2694 = vadd.f32 %v2602, %v2693
      %2695 = vmatmul.bf16.gmra.mxu0 %v2637
      %v2696 = vpop.f32.mrf.mxu0
      %v2697 = vadd.f32 %v2605, %v2696
      %v2698 = vpop.f32.mrf.mxu0
      %v2699 = vadd.f32 %v2607, %v2698
      %2700 = vdwg.mxu0
      %v2701 = vld [vmem:[#allocation3 + $0x2] sm:$0xff]
      %v2702 = vld [vmem:[#allocation3 + $0xa] sm:$0xff]
      %v2703 = vld [vmem:[#allocation3 + $0x12] sm:$0xff]
      %v2704 = vld [vmem:[#allocation3 + $0x1a] sm:$0xff]
      %v2705 = vld [vmem:[#allocation3 + $0x22] sm:$0xff]
      %v2706 = vld [vmem:[#allocation3 + $0x2a] sm:$0xff]
      %v2707 = vld [vmem:[#allocation3 + $0x32] sm:$0xff]
      %v2708 = vld [vmem:[#allocation3 + $0x3a] sm:$0xff]
      %v2709 = vld [vmem:[#allocation3 + $0x42] sm:$0xff]
      %v2710 = vld [vmem:[#allocation3 + $0x4a] sm:$0xff]
      %v2711 = vld [vmem:[#allocation3 + $0x52] sm:$0xff]
      %v2712 = vld [vmem:[#allocation3 + $0x5a] sm:$0xff]
      %v2713 = vld [vmem:[#allocation3 + $0x62] sm:$0xff]
      %v2714 = vld [vmem:[#allocation3 + $0x6a] sm:$0xff]
      %v2715 = vld [vmem:[#allocation3 + $0x72] sm:$0xff]
      %v2716 = vld [vmem:[#allocation3 + $0x7a] sm:$0xff]
      %v2717 = vld [vmem:[#allocation3 + $0x82] sm:$0xff]
      %v2718 = vld [vmem:[#allocation3 + $0x8a] sm:$0xff]
      %v2719 = vld [vmem:[#allocation3 + $0x92] sm:$0xff]
      %v2720 = vld [vmem:[#allocation3 + $0x9a] sm:$0xff]
      %v2721 = vpack.c.bf16 %v2702, %v2701
      %v2722 = vpack.c.bf16 %v2704, %v2703
      %v2723 = vpack.c.bf16 %v2706, %v2705
      %v2724 = vpack.c.bf16 %v2708, %v2707
      %v2725 = vpack.c.bf16 %v2710, %v2709
      %v2726 = vpack.c.bf16 %v2712, %v2711
      %v2727 = vpack.c.bf16 %v2714, %v2713
      %v2728 = vpack.c.bf16 %v2716, %v2715
      %v2729 = vpack.c.bf16 %v2718, %v2717
      %v2730 = vpack.c.bf16 %v2720, %v2719
      %s2731 = scalar_lea.vmem %s4, 8
      %v2732 = vld [vmem:[%s2731] sm:$0xf]
      %v2734 = vsel %vm2426, %v2721, 0
      %v2737 = vsel %vm2426, %v2722, 0
      %v2740 = vsel %vm2426, %v2723, 0
      %v2743 = vsel %vm2426, %v2724, 0
      %v2746 = vsel %vm2426, %v2725, 0
      %v2749 = vsel %vm2426, %v2726, 0
      %v2752 = vsel %vm2426, %v2727, 0
      %v2755 = vsel %vm2426, %v2728, 0
      %v2758 = vsel %vm2426, %v2729, 0
      %v2761 = vsel %vm2426, %v2730, 0
      %v2764 = vsel %vm2546, %v2732, 0
      %2766 = vmatpush.bf16.msra.mxu0 0
      %2767 = vmatpush.bf16.msra.mxu0 0
      %2768 = vmatpush.bf16.msra.mxu0 0
      %2769 = vmatpush.bf16.msra.mxu0 0
      %2770 = vmatpush.bf16.msra.mxu0 0
      %2771 = vmatpush.bf16.msra.mxu0 0
      %2772 = vmatpush.bf16.msra.mxu0 0
      %2773 = vmatpush.bf16.msra.mxu0 %v2764
      %2774 = vmatmul.bf16.gmra.mxu0 %v2734
      %v2775 = vpop.f32.mrf.mxu0
      %v2776 = vadd.f32 0.0, %v2775
      %v2777 = vpop.f32.mrf.mxu0
      %v2778 = vadd.f32 0.0, %v2777
      %2779 = vmatmul.bf16.gmra.mxu0 %v2737
      %v2780 = vpop.f32.mrf.mxu0
      %v2781 = vadd.f32 0.0, %v2780
      %v2782 = vpop.f32.mrf.mxu0
      %v2783 = vadd.f32 0.0, %v2782
      %2784 = vmatmul.bf16.gmra.mxu0 %v2740
      %v2785 = vpop.f32.mrf.mxu0
      %v2786 = vadd.f32 0.0, %v2785
      %v2787 = vpop.f32.mrf.mxu0
      %v2788 = vadd.f32 0.0, %v2787
      %2789 = vmatmul.bf16.gmra.mxu0 %v2743
      %v2790 = vpop.f32.mrf.mxu0
      %v2791 = vadd.f32 0.0, %v2790
      %v2792 = vpop.f32.mrf.mxu0
      %v2793 = vadd.f32 0.0, %v2792
      %2794 = vmatmul.bf16.gmra.mxu0 %v2746
      %v2795 = vpop.f32.mrf.mxu0
      %v2796 = vadd.f32 0.0, %v2795
      %v2797 = vpop.f32.mrf.mxu0
      %v2798 = vadd.f32 0.0, %v2797
      %2799 = vmatmul.bf16.gmra.mxu0 %v2749
      %v2800 = vpop.f32.mrf.mxu0
      %v2801 = vadd.f32 0.0, %v2800
      %v2802 = vpop.f32.mrf.mxu0
      %v2803 = vadd.f32 0.0, %v2802
      %2804 = vmatmul.bf16.gmra.mxu0 %v2752
      %v2805 = vpop.f32.mrf.mxu0
      %v2806 = vadd.f32 0.0, %v2805
      %v2807 = vpop.f32.mrf.mxu0
      %v2808 = vadd.f32 0.0, %v2807
      %2809 = vmatmul.bf16.gmra.mxu0 %v2755
      %v2810 = vpop.f32.mrf.mxu0
      %v2811 = vadd.f32 0.0, %v2810
      %v2812 = vpop.f32.mrf.mxu0
      %v2813 = vadd.f32 0.0, %v2812
      %2814 = vmatmul.bf16.gmra.mxu0 %v2758
      %v2815 = vpop.f32.mrf.mxu0
      %v2816 = vadd.f32 0.0, %v2815
      %v2817 = vpop.f32.mrf.mxu0
      %v2818 = vadd.f32 0.0, %v2817
      %2819 = vmatmul.bf16.gmra.mxu0 %v2761
      %v2820 = vpop.f32.mrf.mxu0
      %v2821 = vadd.f32 0.0, %v2820
      %v2822 = vpop.f32.mrf.mxu0
      %v2823 = vadd.f32 0.0, %v2822
      %2824 = vdwg.mxu0
      %v2825 = vadd.f32 %v2652, %v2776
      %v2826 = vadd.f32 %v2654, %v2778
      %v2827 = vadd.f32 %v2657, %v2781
      %v2828 = vadd.f32 %v2659, %v2783
      %v2829 = vadd.f32 %v2662, %v2786
      %v2830 = vadd.f32 %v2664, %v2788
      %v2831 = vadd.f32 %v2667, %v2791
      %v2832 = vadd.f32 %v2669, %v2793
      %v2833 = vadd.f32 %v2672, %v2796
      %v2834 = vadd.f32 %v2674, %v2798
      %v2835 = vadd.f32 %v2677, %v2801
      %v2836 = vadd.f32 %v2679, %v2803
      %v2837 = vadd.f32 %v2682, %v2806
      %v2838 = vadd.f32 %v2684, %v2808
      %v2839 = vadd.f32 %v2687, %v2811
      %v2840 = vadd.f32 %v2689, %v2813
      %v2841 = vadd.f32 %v2692, %v2816
      %v2842 = vadd.f32 %v2694, %v2818
      %v2843 = vadd.f32 %v2697, %v2821
      %v2844 = vadd.f32 %v2699, %v2823
      %v2845 = vld [vmem:[#allocation3 + $0x14] sm:$0xff]
      %v2846 = vld [vmem:[#allocation3 + $0x1c] sm:$0xff]
      %v2847 = vld [vmem:[#allocation3 + $0x24] sm:$0xff]
      %v2848 = vld [vmem:[#allocation3 + $0x2c] sm:$0xff]
      %v2849 = vld [vmem:[#allocation3 + $0x34] sm:$0xff]
      %v2850 = vld [vmem:[#allocation3 + $0x3c] sm:$0xff]
      %v2851 = vld [vmem:[#allocation3 + $0x44] sm:$0xff]
      %v2852 = vld [vmem:[#allocation3 + $0x4c] sm:$0xff]
      %v2853 = vld [vmem:[#allocation3 + $0x54] sm:$0xff]
      %v2854 = vld [vmem:[#allocation3 + $0x5c] sm:$0xff]
      %v2855 = vld [vmem:[#allocation3 + $0x64] sm:$0xff]
      %v2856 = vld [vmem:[#allocation3 + $0x6c] sm:$0xff]
      %v2857 = vld [vmem:[#allocation3 + $0x74] sm:$0xff]
      %v2858 = vld [vmem:[#allocation3 + $0x7c] sm:$0xff]
      %v2859 = vld [vmem:[#allocation3 + $0x84] sm:$0xff]
      %v2860 = vld [vmem:[#allocation3 + $0x8c] sm:$0xff]
      %v2861 = vld [vmem:[#allocation3 + $0x94] sm:$0xff]
      %v2862 = vld [vmem:[#allocation3 + $0x9c] sm:$0xff]
      %v2863 = vld [vmem:[#allocation3 + $0xa4] sm:$0xff]
      %v2864 = vld [vmem:[#allocation3 + $0xac] sm:$0xff]
      %v2865 = vpack.c.bf16 %v2846, %v2845
      %v2866 = vpack.c.bf16 %v2848, %v2847
      %v2867 = vpack.c.bf16 %v2850, %v2849
      %v2868 = vpack.c.bf16 %v2852, %v2851
      %v2869 = vpack.c.bf16 %v2854, %v2853
      %v2870 = vpack.c.bf16 %v2856, %v2855
      %v2871 = vpack.c.bf16 %v2858, %v2857
      %v2872 = vpack.c.bf16 %v2860, %v2859
      %v2873 = vpack.c.bf16 %v2862, %v2861
      %v2874 = vpack.c.bf16 %v2864, %v2863
      %s2875 = scalar_lea.vmem %s4, 12
      %v2876 = vld [vmem:[%s2875] sm:$0xf]
      %v2878 = vsel %vm2426, %v2865, 0
      %v2881 = vsel %vm2426, %v2866, 0
      %v2884 = vsel %vm2426, %v2867, 0
      %v2887 = vsel %vm2426, %v2868, 0
      %v2890 = vsel %vm2426, %v2869, 0
      %v2893 = vsel %vm2426, %v2870, 0
      %v2896 = vsel %vm2426, %v2871, 0
      %v2899 = vsel %vm2426, %v2872, 0
      %v2902 = vsel %vm2426, %v2873, 0
      %v2905 = vsel %vm2426, %v2874, 0
      %v2908 = vsel %vm2546, %v2876, 0
      %2910 = vmatpush.bf16.msra.mxu0 0
      %2911 = vmatpush.bf16.msra.mxu0 0
      %2912 = vmatpush.bf16.msra.mxu0 0
      %2913 = vmatpush.bf16.msra.mxu0 0
      %2914 = vmatpush.bf16.msra.mxu0 0
      %2915 = vmatpush.bf16.msra.mxu0 0
      %2916 = vmatpush.bf16.msra.mxu0 0
      %2917 = vmatpush.bf16.msra.mxu0 %v2908
      %2918 = vmatmul.bf16.gmra.mxu0 %v2878
      %v2919 = vpop.f32.mrf.mxu0
      %v2920 = vadd.f32 0.0, %v2919
      %v2921 = vpop.f32.mrf.mxu0
      %v2922 = vadd.f32 0.0, %v2921
      %2923 = vmatmul.bf16.gmra.mxu0 %v2881
      %v2924 = vpop.f32.mrf.mxu0
      %v2925 = vadd.f32 0.0, %v2924
      %v2926 = vpop.f32.mrf.mxu0
      %v2927 = vadd.f32 0.0, %v2926
      %2928 = vmatmul.bf16.gmra.mxu0 %v2884
      %v2929 = vpop.f32.mrf.mxu0
      %v2930 = vadd.f32 0.0, %v2929
      %v2931 = vpop.f32.mrf.mxu0
      %v2932 = vadd.f32 0.0, %v2931
      %2933 = vmatmul.bf16.gmra.mxu0 %v2887
      %v2934 = vpop.f32.mrf.mxu0
      %v2935 = vadd.f32 0.0, %v2934
      %v2936 = vpop.f32.mrf.mxu0
      %v2937 = vadd.f32 0.0, %v2936
      %2938 = vmatmul.bf16.gmra.mxu0 %v2890
      %v2939 = vpop.f32.mrf.mxu0
      %v2940 = vadd.f32 0.0, %v2939
      %v2941 = vpop.f32.mrf.mxu0
      %v2942 = vadd.f32 0.0, %v2941
      %2943 = vmatmul.bf16.gmra.mxu0 %v2893
      %v2944 = vpop.f32.mrf.mxu0
      %v2945 = vadd.f32 0.0, %v2944
      %v2946 = vpop.f32.mrf.mxu0
      %v2947 = vadd.f32 0.0, %v2946
      %2948 = vmatmul.bf16.gmra.mxu0 %v2896
      %v2949 = vpop.f32.mrf.mxu0
      %v2950 = vadd.f32 0.0, %v2949
      %v2951 = vpop.f32.mrf.mxu0
      %v2952 = vadd.f32 0.0, %v2951
      %2953 = vmatmul.bf16.gmra.mxu0 %v2899
      %v2954 = vpop.f32.mrf.mxu0
      %v2955 = vadd.f32 0.0, %v2954
      %v2956 = vpop.f32.mrf.mxu0
      %v2957 = vadd.f32 0.0, %v2956
      %2958 = vmatmul.bf16.gmra.mxu0 %v2902
      %v2959 = vpop.f32.mrf.mxu0
      %v2960 = vadd.f32 0.0, %v2959
      %v2961 = vpop.f32.mrf.mxu0
      %v2962 = vadd.f32 0.0, %v2961
      %2963 = vmatmul.bf16.gmra.mxu0 %v2905
      %v2964 = vpop.f32.mrf.mxu0
      %v2965 = vadd.f32 0.0, %v2964
      %v2966 = vpop.f32.mrf.mxu0
      %v2967 = vadd.f32 0.0, %v2966
      %2968 = vdwg.mxu0
      %v2969 = vadd.f32 %v2825, %v2920
      %v2970 = vadd.f32 %v2826, %v2922
      %v2971 = vadd.f32 %v2827, %v2925
      %v2972 = vadd.f32 %v2828, %v2927
      %v2973 = vadd.f32 %v2829, %v2930
      %v2974 = vadd.f32 %v2830, %v2932
      %v2975 = vadd.f32 %v2831, %v2935
      %v2976 = vadd.f32 %v2832, %v2937
      %v2977 = vadd.f32 %v2833, %v2940
      %v2978 = vadd.f32 %v2834, %v2942
      %v2979 = vadd.f32 %v2835, %v2945
      %v2980 = vadd.f32 %v2836, %v2947
      %v2981 = vadd.f32 %v2837, %v2950
      %v2982 = vadd.f32 %v2838, %v2952
      %v2983 = vadd.f32 %v2839, %v2955
      %v2984 = vadd.f32 %v2840, %v2957
      %v2985 = vadd.f32 %v2841, %v2960
      %v2986 = vadd.f32 %v2842, %v2962
      %v2987 = vadd.f32 %v2843, %v2965
      %v2988 = vadd.f32 %v2844, %v2967
      %v2989 = vld [vmem:[#allocation3 + $0x15] sm:$0xff]
      %v2990 = vld [vmem:[#allocation3 + $0x1d] sm:$0xff]
      %v2991 = vld [vmem:[#allocation3 + $0x25] sm:$0xff]
      %v2992 = vld [vmem:[#allocation3 + $0x2d] sm:$0xff]
      %v2993 = vld [vmem:[#allocation3 + $0x35] sm:$0xff]
      %v2994 = vld [vmem:[#allocation3 + $0x3d] sm:$0xff]
      %v2995 = vld [vmem:[#allocation3 + $0x45] sm:$0xff]
      %v2996 = vld [vmem:[#allocation3 + $0x4d] sm:$0xff]
      %v2997 = vld [vmem:[#allocation3 + $0x55] sm:$0xff]
      %v2998 = vld [vmem:[#allocation3 + $0x5d] sm:$0xff]
      %v2999 = vld [vmem:[#allocation3 + $0x65] sm:$0xff]
      %v3000 = vld [vmem:[#allocation3 + $0x6d] sm:$0xff]
      %v3001 = vld [vmem:[#allocation3 + $0x75] sm:$0xff]
      %v3002 = vld [vmem:[#allocation3 + $0x7d] sm:$0xff]
      %v3003 = vld [vmem:[#allocation3 + $0x85] sm:$0xff]
      %v3004 = vld [vmem:[#allocation3 + $0x8d] sm:$0xff]
      %v3005 = vld [vmem:[#allocation3 + $0x95] sm:$0xff]
      %v3006 = vld [vmem:[#allocation3 + $0x9d] sm:$0xff]
      %v3007 = vld [vmem:[#allocation3 + $0xa5] sm:$0xff]
      %v3008 = vld [vmem:[#allocation3 + $0xad] sm:$0xff]
      %v3009 = vpack.c.bf16 %v2990, %v2989
      %v3010 = vpack.c.bf16 %v2992, %v2991
      %v3011 = vpack.c.bf16 %v2994, %v2993
      %v3012 = vpack.c.bf16 %v2996, %v2995
      %v3013 = vpack.c.bf16 %v2998, %v2997
      %v3014 = vpack.c.bf16 %v3000, %v2999
      %v3015 = vpack.c.bf16 %v3002, %v3001
      %v3016 = vpack.c.bf16 %v3004, %v3003
      %v3017 = vpack.c.bf16 %v3006, %v3005
      %v3018 = vpack.c.bf16 %v3008, %v3007
      %s3019 = scalar_lea.vmem %s4, 16
      %v3020 = vld [vmem:[%s3019] sm:$0xf]
      %v3022 = vsel %vm2426, %v3009, 0
      %v3025 = vsel %vm2426, %v3010, 0
      %v3028 = vsel %vm2426, %v3011, 0
      %v3031 = vsel %vm2426, %v3012, 0
      %v3034 = vsel %vm2426, %v3013, 0
      %v3037 = vsel %vm2426, %v3014, 0
      %v3040 = vsel %vm2426, %v3015, 0
      %v3043 = vsel %vm2426, %v3016, 0
      %v3046 = vsel %vm2426, %v3017, 0
      %v3049 = vsel %vm2426, %v3018, 0
      %v3052 = vsel %vm2546, %v3020, 0
      %3054 = vmatpush.bf16.msra.mxu0 0
      %3055 = vmatpush.bf16.msra.mxu0 0
      %3056 = vmatpush.bf16.msra.mxu0 0
      %3057 = vmatpush.bf16.msra.mxu0 0
      %3058 = vmatpush.bf16.msra.mxu0 0
      %3059 = vmatpush.bf16.msra.mxu0 0
      %3060 = vmatpush.bf16.msra.mxu0 0
      %3061 = vmatpush.bf16.msra.mxu0 %v3052
      %3062 = vmatmul.bf16.gmra.mxu0 %v3022
      %v3063 = vpop.f32.mrf.mxu0
      %v3064 = vadd.f32 0.0, %v3063
      %v3065 = vpop.f32.mrf.mxu0
      %v3066 = vadd.f32 0.0, %v3065
      %3067 = vmatmul.bf16.gmra.mxu0 %v3025
      %v3068 = vpop.f32.mrf.mxu0
      %v3069 = vadd.f32 0.0, %v3068
      %v3070 = vpop.f32.mrf.mxu0
      %v3071 = vadd.f32 0.0, %v3070
      %3072 = vmatmul.bf16.gmra.mxu0 %v3028
      %v3073 = vpop.f32.mrf.mxu0
      %v3074 = vadd.f32 0.0, %v3073
      %v3075 = vpop.f32.mrf.mxu0
      %v3076 = vadd.f32 0.0, %v3075
      %3077 = vmatmul.bf16.gmra.mxu0 %v3031
      %v3078 = vpop.f32.mrf.mxu0
      %v3079 = vadd.f32 0.0, %v3078
      %v3080 = vpop.f32.mrf.mxu0
      %v3081 = vadd.f32 0.0, %v3080
      %3082 = vmatmul.bf16.gmra.mxu0 %v3034
      %v3083 = vpop.f32.mrf.mxu0
      %v3084 = vadd.f32 0.0, %v3083
      %v3085 = vpop.f32.mrf.mxu0
      %v3086 = vadd.f32 0.0, %v3085
      %3087 = vmatmul.bf16.gmra.mxu0 %v3037
      %v3088 = vpop.f32.mrf.mxu0
      %v3089 = vadd.f32 0.0, %v3088
      %v3090 = vpop.f32.mrf.mxu0
      %v3091 = vadd.f32 0.0, %v3090
      %3092 = vmatmul.bf16.gmra.mxu0 %v3040
      %v3093 = vpop.f32.mrf.mxu0
      %v3094 = vadd.f32 0.0, %v3093
      %v3095 = vpop.f32.mrf.mxu0
      %v3096 = vadd.f32 0.0, %v3095
      %3097 = vmatmul.bf16.gmra.mxu0 %v3043
      %v3098 = vpop.f32.mrf.mxu0
      %v3099 = vadd.f32 0.0, %v3098
      %v3100 = vpop.f32.mrf.mxu0
      %v3101 = vadd.f32 0.0, %v3100
      %3102 = vmatmul.bf16.gmra.mxu0 %v3046
      %v3103 = vpop.f32.mrf.mxu0
      %v3104 = vadd.f32 0.0, %v3103
      %v3105 = vpop.f32.mrf.mxu0
      %v3106 = vadd.f32 0.0, %v3105
      %3107 = vmatmul.bf16.gmra.mxu0 %v3049
      %v3108 = vpop.f32.mrf.mxu0
      %v3109 = vadd.f32 0.0, %v3108
      %v3110 = vpop.f32.mrf.mxu0
      %v3111 = vadd.f32 0.0, %v3110
      %3112 = vdwg.mxu0
      %v3113 = vadd.f32 %v2969, %v3064
      %v3114 = vadd.f32 %v2970, %v3066
      %v3115 = vadd.f32 %v2971, %v3069
      %v3116 = vadd.f32 %v2972, %v3071
      %v3117 = vadd.f32 %v2973, %v3074
      %v3118 = vadd.f32 %v2974, %v3076
      %v3119 = vadd.f32 %v2975, %v3079
      %v3120 = vadd.f32 %v2976, %v3081
      %v3121 = vadd.f32 %v2977, %v3084
      %v3122 = vadd.f32 %v2978, %v3086
      %v3123 = vadd.f32 %v2979, %v3089
      %v3124 = vadd.f32 %v2980, %v3091
      %v3125 = vadd.f32 %v2981, %v3094
      %v3126 = vadd.f32 %v2982, %v3096
      %v3127 = vadd.f32 %v2983, %v3099
      %v3128 = vadd.f32 %v2984, %v3101
      %v3129 = vadd.f32 %v2985, %v3104
      %v3130 = vadd.f32 %v2986, %v3106
      %v3131 = vadd.f32 %v2987, %v3109
      %v3132 = vadd.f32 %v2988, %v3111
      %v3133 = vld [vmem:[#allocation3 + $0x16] sm:$0xff]
      %v3134 = vld [vmem:[#allocation3 + $0x1e] sm:$0xff]
      %v3135 = vld [vmem:[#allocation3 + $0x26] sm:$0xff]
      %v3136 = vld [vmem:[#allocation3 + $0x2e] sm:$0xff]
      %v3137 = vld [vmem:[#allocation3 + $0x36] sm:$0xff]
      %v3138 = vld [vmem:[#allocation3 + $0x3e] sm:$0xff]
      %v3139 = vld [vmem:[#allocation3 + $0x46] sm:$0xff]
      %v3140 = vld [vmem:[#allocation3 + $0x4e] sm:$0xff]
      %v3141 = vld [vmem:[#allocation3 + $0x56] sm:$0xff]
      %v3142 = vld [vmem:[#allocation3 + $0x5e] sm:$0xff]
      %v3143 = vld [vmem:[#allocation3 + $0x66] sm:$0xff]
      %v3144 = vld [vmem:[#allocation3 + $0x6e] sm:$0xff]
      %v3145 = vld [vmem:[#allocation3 + $0x76] sm:$0xff]
      %v3146 = vld [vmem:[#allocation3 + $0x7e] sm:$0xff]
      %v3147 = vld [vmem:[#allocation3 + $0x86] sm:$0xff]
      %v3148 = vld [vmem:[#allocation3 + $0x8e] sm:$0xff]
      %v3149 = vld [vmem:[#allocation3 + $0x96] sm:$0xff]
      %v3150 = vld [vmem:[#allocation3 + $0x9e] sm:$0xff]
      %v3151 = vld [vmem:[#allocation3 + $0xa6] sm:$0xff]
      %v3152 = vld [vmem:[#allocation3 + $0xae] sm:$0xff]
      %v3153 = vpack.c.bf16 %v3134, %v3133
      %v3154 = vpack.c.bf16 %v3136, %v3135
      %v3155 = vpack.c.bf16 %v3138, %v3137
      %v3156 = vpack.c.bf16 %v3140, %v3139
      %v3157 = vpack.c.bf16 %v3142, %v3141
      %v3158 = vpack.c.bf16 %v3144, %v3143
      %v3159 = vpack.c.bf16 %v3146, %v3145
      %v3160 = vpack.c.bf16 %v3148, %v3147
      %v3161 = vpack.c.bf16 %v3150, %v3149
      %v3162 = vpack.c.bf16 %v3152, %v3151
      %s3163 = scalar_lea.vmem %s4, 20
      %v3164 = vld [vmem:[%s3163] sm:$0xf]
      %v3166 = vsel %vm2426, %v3153, 0
      %v3169 = vsel %vm2426, %v3154, 0
      %v3172 = vsel %vm2426, %v3155, 0
      %v3175 = vsel %vm2426, %v3156, 0
      %v3178 = vsel %vm2426, %v3157, 0
      %v3181 = vsel %vm2426, %v3158, 0
      %v3184 = vsel %vm2426, %v3159, 0
      %v3187 = vsel %vm2426, %v3160, 0
      %v3190 = vsel %vm2426, %v3161, 0
      %v3193 = vsel %vm2426, %v3162, 0
      %v3196 = vsel %vm2546, %v3164, 0
      %3198 = vmatpush.bf16.msra.mxu0 0
      %3199 = vmatpush.bf16.msra.mxu0 0
      %3200 = vmatpush.bf16.msra.mxu0 0
      %3201 = vmatpush.bf16.msra.mxu0 0
      %3202 = vmatpush.bf16.msra.mxu0 0
      %3203 = vmatpush.bf16.msra.mxu0 0
      %3204 = vmatpush.bf16.msra.mxu0 0
      %3205 = vmatpush.bf16.msra.mxu0 %v3196
      %3206 = vmatmul.bf16.gmra.mxu0 %v3166
      %v3207 = vpop.f32.mrf.mxu0
      %v3208 = vadd.f32 0.0, %v3207
      %v3209 = vpop.f32.mrf.mxu0
      %v3210 = vadd.f32 0.0, %v3209
      %3211 = vmatmul.bf16.gmra.mxu0 %v3169
      %v3212 = vpop.f32.mrf.mxu0
      %v3213 = vadd.f32 0.0, %v3212
      %v3214 = vpop.f32.mrf.mxu0
      %v3215 = vadd.f32 0.0, %v3214
      %3216 = vmatmul.bf16.gmra.mxu0 %v3172
      %v3217 = vpop.f32.mrf.mxu0
      %v3218 = vadd.f32 0.0, %v3217
      %v3219 = vpop.f32.mrf.mxu0
      %v3220 = vadd.f32 0.0, %v3219
      %3221 = vmatmul.bf16.gmra.mxu0 %v3175
      %v3222 = vpop.f32.mrf.mxu0
      %v3223 = vadd.f32 0.0, %v3222
      %v3224 = vpop.f32.mrf.mxu0
      %v3225 = vadd.f32 0.0, %v3224
      %3226 = vmatmul.bf16.gmra.mxu0 %v3178
      %v3227 = vpop.f32.mrf.mxu0
      %v3228 = vadd.f32 0.0, %v3227
      %v3229 = vpop.f32.mrf.mxu0
      %v3230 = vadd.f32 0.0, %v3229
      %3231 = vmatmul.bf16.gmra.mxu0 %v3181
      %v3232 = vpop.f32.mrf.mxu0
      %v3233 = vadd.f32 0.0, %v3232
      %v3234 = vpop.f32.mrf.mxu0
      %v3235 = vadd.f32 0.0, %v3234
      %3236 = vmatmul.bf16.gmra.mxu0 %v3184
      %v3237 = vpop.f32.mrf.mxu0
      %v3238 = vadd.f32 0.0, %v3237
      %v3239 = vpop.f32.mrf.mxu0
      %v3240 = vadd.f32 0.0, %v3239
      %3241 = vmatmul.bf16.gmra.mxu0 %v3187
      %v3242 = vpop.f32.mrf.mxu0
      %v3243 = vadd.f32 0.0, %v3242
      %v3244 = vpop.f32.mrf.mxu0
      %v3245 = vadd.f32 0.0, %v3244
      %3246 = vmatmul.bf16.gmra.mxu0 %v3190
      %v3247 = vpop.f32.mrf.mxu0
      %v3248 = vadd.f32 0.0, %v3247
      %v3249 = vpop.f32.mrf.mxu0
      %v3250 = vadd.f32 0.0, %v3249
      %3251 = vmatmul.bf16.gmra.mxu0 %v3193
      %v3252 = vpop.f32.mrf.mxu0
      %v3253 = vadd.f32 0.0, %v3252
      %v3254 = vpop.f32.mrf.mxu0
      %v3255 = vadd.f32 0.0, %v3254
      %3256 = vdwg.mxu0
      %v3257 = vadd.f32 %v3113, %v3208
      %v3258 = vadd.f32 %v3114, %v3210
      %v3259 = vadd.f32 %v3115, %v3213
      %v3260 = vadd.f32 %v3116, %v3215
      %v3261 = vadd.f32 %v3117, %v3218
      %v3262 = vadd.f32 %v3118, %v3220
      %v3263 = vadd.f32 %v3119, %v3223
      %v3264 = vadd.f32 %v3120, %v3225
      %v3265 = vadd.f32 %v3121, %v3228
      %v3266 = vadd.f32 %v3122, %v3230
      %v3267 = vadd.f32 %v3123, %v3233
      %v3268 = vadd.f32 %v3124, %v3235
      %v3269 = vadd.f32 %v3125, %v3238
      %v3270 = vadd.f32 %v3126, %v3240
      %v3271 = vadd.f32 %v3127, %v3243
      %v3272 = vadd.f32 %v3128, %v3245
      %v3273 = vadd.f32 %v3129, %v3248
      %v3274 = vadd.f32 %v3130, %v3250
      %v3275 = vadd.f32 %v3131, %v3253
      %v3276 = vadd.f32 %v3132, %v3255
      %v3277 = vld [vmem:[#allocation3 + $0x28] sm:$0xff]
      %v3278 = vld [vmem:[#allocation3 + $0x30] sm:$0xff]
      %v3279 = vld [vmem:[#allocation3 + $0x38] sm:$0xff]
      %v3280 = vld [vmem:[#allocation3 + $0x40] sm:$0xff]
      %v3281 = vld [vmem:[#allocation3 + $0x48] sm:$0xff]
      %v3282 = vld [vmem:[#allocation3 + $0x50] sm:$0xff]
      %v3283 = vld [vmem:[#allocation3 + $0x58] sm:$0xff]
      %v3284 = vld [vmem:[#allocation3 + $0x60] sm:$0xff]
      %v3285 = vld [vmem:[#allocation3 + $0x68] sm:$0xff]
      %v3286 = vld [vmem:[#allocation3 + $0x70] sm:$0xff]
      %v3287 = vld [vmem:[#allocation3 + $0x78] sm:$0xff]
      %v3288 = vld [vmem:[#allocation3 + $0x80] sm:$0xff]
      %v3289 = vld [vmem:[#allocation3 + $0x88] sm:$0xff]
      %v3290 = vld [vmem:[#allocation3 + $0x90] sm:$0xff]
      %v3291 = vld [vmem:[#allocation3 + $0x98] sm:$0xff]
      %v3292 = vld [vmem:[#allocation3 + $0xa0] sm:$0xff]
      %v3293 = vld [vmem:[#allocation3 + $0xa8] sm:$0xff]
      %v3294 = vld [vmem:[#allocation3 + $0xb0] sm:$0xff]
      %v3295 = vld [vmem:[#allocation3 + $0xb8] sm:$0xff]
      %v3296 = vld [vmem:[#allocation3 + $0xc0] sm:$0xff]
      %v3297 = vpack.c.bf16 %v3278, %v3277
      %v3298 = vpack.c.bf16 %v3280, %v3279
      %v3299 = vpack.c.bf16 %v3282, %v3281
      %v3300 = vpack.c.bf16 %v3284, %v3283
      %v3301 = vpack.c.bf16 %v3286, %v3285
      %v3302 = vpack.c.bf16 %v3288, %v3287
      %v3303 = vpack.c.bf16 %v3290, %v3289
      %v3304 = vpack.c.bf16 %v3292, %v3291
      %v3305 = vpack.c.bf16 %v3294, %v3293
      %v3306 = vpack.c.bf16 %v3296, %v3295
      %s3307 = scalar_lea.vmem %s4, 24
      %v3308 = vld [vmem:[%s3307] sm:$0xf]
      %v3310 = vsel %vm2426, %v3297, 0
      %v3313 = vsel %vm2426, %v3298, 0
      %v3316 = vsel %vm2426, %v3299, 0
      %v3319 = vsel %vm2426, %v3300, 0
      %v3322 = vsel %vm2426, %v3301, 0
      %v3325 = vsel %vm2426, %v3302, 0
      %v3328 = vsel %vm2426, %v3303, 0
      %v3331 = vsel %vm2426, %v3304, 0
      %v3334 = vsel %vm2426, %v3305, 0
      %v3337 = vsel %vm2426, %v3306, 0
      %v3340 = vsel %vm2546, %v3308, 0
      %3342 = vmatpush.bf16.msra.mxu0 0
      %3343 = vmatpush.bf16.msra.mxu0 0
      %3344 = vmatpush.bf16.msra.mxu0 0
      %3345 = vmatpush.bf16.msra.mxu0 0
      %3346 = vmatpush.bf16.msra.mxu0 0
      %3347 = vmatpush.bf16.msra.mxu0 0
      %3348 = vmatpush.bf16.msra.mxu0 0
      %3349 = vmatpush.bf16.msra.mxu0 %v3340
      %3350 = vmatmul.bf16.gmra.mxu0 %v3310
      %v3351 = vpop.f32.mrf.mxu0
      %v3352 = vadd.f32 0.0, %v3351
      %v3353 = vpop.f32.mrf.mxu0
      %v3354 = vadd.f32 0.0, %v3353
      %3355 = vmatmul.bf16.gmra.mxu0 %v3313
      %v3356 = vpop.f32.mrf.mxu0
      %v3357 = vadd.f32 0.0, %v3356
      %v3358 = vpop.f32.mrf.mxu0
      %v3359 = vadd.f32 0.0, %v3358
      %3360 = vmatmul.bf16.gmra.mxu0 %v3316
      %v3361 = vpop.f32.mrf.mxu0
      %v3362 = vadd.f32 0.0, %v3361
      %v3363 = vpop.f32.mrf.mxu0
      %v3364 = vadd.f32 0.0, %v3363
      %3365 = vmatmul.bf16.gmra.mxu0 %v3319
      %v3366 = vpop.f32.mrf.mxu0
      %v3367 = vadd.f32 0.0, %v3366
      %v3368 = vpop.f32.mrf.mxu0
      %v3369 = vadd.f32 0.0, %v3368
      %3370 = vmatmul.bf16.gmra.mxu0 %v3322
      %v3371 = vpop.f32.mrf.mxu0
      %v3372 = vadd.f32 0.0, %v3371
      %v3373 = vpop.f32.mrf.mxu0
      %v3374 = vadd.f32 0.0, %v3373
      %3375 = vmatmul.bf16.gmra.mxu0 %v3325
      %v3376 = vpop.f32.mrf.mxu0
      %v3377 = vadd.f32 0.0, %v3376
      %v3378 = vpop.f32.mrf.mxu0
      %v3379 = vadd.f32 0.0, %v3378
      %3380 = vmatmul.bf16.gmra.mxu0 %v3328
      %v3381 = vpop.f32.mrf.mxu0
      %v3382 = vadd.f32 0.0, %v3381
      %v3383 = vpop.f32.mrf.mxu0
      %v3384 = vadd.f32 0.0, %v3383
      %3385 = vmatmul.bf16.gmra.mxu0 %v3331
      %v3386 = vpop.f32.mrf.mxu0
      %v3387 = vadd.f32 0.0, %v3386
      %v3388 = vpop.f32.mrf.mxu0
      %v3389 = vadd.f32 0.0, %v3388
      %3390 = vmatmul.bf16.gmra.mxu0 %v3334
      %v3391 = vpop.f32.mrf.mxu0
      %v3392 = vadd.f32 0.0, %v3391
      %v3393 = vpop.f32.mrf.mxu0
      %v3394 = vadd.f32 0.0, %v3393
      %3395 = vmatmul.bf16.gmra.mxu0 %v3337
      %v3396 = vpop.f32.mrf.mxu0
      %v3397 = vadd.f32 0.0, %v3396
      %v3398 = vpop.f32.mrf.mxu0
      %v3399 = vadd.f32 0.0, %v3398
      %3400 = vdwg.mxu0
      %v3401 = vadd.f32 %v3257, %v3352
      %v3402 = vadd.f32 %v3258, %v3354
      %v3403 = vadd.f32 %v3259, %v3357
      %v3404 = vadd.f32 %v3260, %v3359
      %v3405 = vadd.f32 %v3261, %v3362
      %v3406 = vadd.f32 %v3262, %v3364
      %v3407 = vadd.f32 %v3263, %v3367
      %v3408 = vadd.f32 %v3264, %v3369
      %v3409 = vadd.f32 %v3265, %v3372
      %v3410 = vadd.f32 %v3266, %v3374
      %v3411 = vadd.f32 %v3267, %v3377
      %v3412 = vadd.f32 %v3268, %v3379
      %v3413 = vadd.f32 %v3269, %v3382
      %v3414 = vadd.f32 %v3270, %v3384
      %v3415 = vadd.f32 %v3271, %v3387
      %v3416 = vadd.f32 %v3272, %v3389
      %v3417 = vadd.f32 %v3273, %v3392
      %v3418 = vadd.f32 %v3274, %v3394
      %v3419 = vadd.f32 %v3275, %v3397
      %v3420 = vadd.f32 %v3276, %v3399
      %v3421 = vld [vmem:[#allocation3 + $0x29] sm:$0xff]
      %v3422 = vld [vmem:[#allocation3 + $0x31] sm:$0xff]
      %v3423 = vld [vmem:[#allocation3 + $0x39] sm:$0xff]
      %v3424 = vld [vmem:[#allocation3 + $0x41] sm:$0xff]
      %v3425 = vld [vmem:[#allocation3 + $0x49] sm:$0xff]
      %v3426 = vld [vmem:[#allocation3 + $0x51] sm:$0xff]
      %v3427 = vld [vmem:[#allocation3 + $0x59] sm:$0xff]
      %v3428 = vld [vmem:[#allocation3 + $0x61] sm:$0xff]
      %v3429 = vld [vmem:[#allocation3 + $0x69] sm:$0xff]
      %v3430 = vld [vmem:[#allocation3 + $0x71] sm:$0xff]
      %v3431 = vld [vmem:[#allocation3 + $0x79] sm:$0xff]
      %v3432 = vld [vmem:[#allocation3 + $0x81] sm:$0xff]
      %v3433 = vld [vmem:[#allocation3 + $0x89] sm:$0xff]
      %v3434 = vld [vmem:[#allocation3 + $0x91] sm:$0xff]
      %v3435 = vld [vmem:[#allocation3 + $0x99] sm:$0xff]
      %v3436 = vld [vmem:[#allocation3 + $0xa1] sm:$0xff]
      %v3437 = vld [vmem:[#allocation3 + $0xa9] sm:$0xff]
      %v3438 = vld [vmem:[#allocation3 + $0xb1] sm:$0xff]
      %v3439 = vld [vmem:[#allocation3 + $0xb9] sm:$0xff]
      %v3440 = vld [vmem:[#allocation3 + $0xc1] sm:$0xff]
      %v3441 = vpack.c.bf16 %v3422, %v3421
      %v3442 = vpack.c.bf16 %v3424, %v3423
      %v3443 = vpack.c.bf16 %v3426, %v3425
      %v3444 = vpack.c.bf16 %v3428, %v3427
      %v3445 = vpack.c.bf16 %v3430, %v3429
      %v3446 = vpack.c.bf16 %v3432, %v3431
      %v3447 = vpack.c.bf16 %v3434, %v3433
      %v3448 = vpack.c.bf16 %v3436, %v3435
      %v3449 = vpack.c.bf16 %v3438, %v3437
      %v3450 = vpack.c.bf16 %v3440, %v3439
      %s3451 = scalar_lea.vmem %s4, 28
      %v3452 = vld [vmem:[%s3451] sm:$0xf]
      %v3454 = vsel %vm2426, %v3441, 0
      %v3457 = vsel %vm2426, %v3442, 0
      %v3460 = vsel %vm2426, %v3443, 0
      %v3463 = vsel %vm2426, %v3444, 0
      %v3466 = vsel %vm2426, %v3445, 0
      %v3469 = vsel %vm2426, %v3446, 0
      %v3472 = vsel %vm2426, %v3447, 0
      %v3475 = vsel %vm2426, %v3448, 0
      %v3478 = vsel %vm2426, %v3449, 0
      %v3481 = vsel %vm2426, %v3450, 0
      %v3484 = vsel %vm2546, %v3452, 0
      %3486 = vmatpush.bf16.msra.mxu0 0
      %3487 = vmatpush.bf16.msra.mxu0 0
      %3488 = vmatpush.bf16.msra.mxu0 0
      %3489 = vmatpush.bf16.msra.mxu0 0
      %3490 = vmatpush.bf16.msra.mxu0 0
      %3491 = vmatpush.bf16.msra.mxu0 0
      %3492 = vmatpush.bf16.msra.mxu0 0
      %3493 = vmatpush.bf16.msra.mxu0 %v3484
      %3494 = vmatmul.bf16.gmra.mxu0 %v3454
      %v3495 = vpop.f32.mrf.mxu0
      %v3496 = vadd.f32 0.0, %v3495
      %v3497 = vpop.f32.mrf.mxu0
      %v3498 = vadd.f32 0.0, %v3497
      %3499 = vmatmul.bf16.gmra.mxu0 %v3457
      %v3500 = vpop.f32.mrf.mxu0
      %v3501 = vadd.f32 0.0, %v3500
      %v3502 = vpop.f32.mrf.mxu0
      %v3503 = vadd.f32 0.0, %v3502
      %3504 = vmatmul.bf16.gmra.mxu0 %v3460
      %v3505 = vpop.f32.mrf.mxu0
      %v3506 = vadd.f32 0.0, %v3505
      %v3507 = vpop.f32.mrf.mxu0
      %v3508 = vadd.f32 0.0, %v3507
      %3509 = vmatmul.bf16.gmra.mxu0 %v3463
      %v3510 = vpop.f32.mrf.mxu0
      %v3511 = vadd.f32 0.0, %v3510
      %v3512 = vpop.f32.mrf.mxu0
      %v3513 = vadd.f32 0.0, %v3512
      %3514 = vmatmul.bf16.gmra.mxu0 %v3466
      %v3515 = vpop.f32.mrf.mxu0
      %v3516 = vadd.f32 0.0, %v3515
      %v3517 = vpop.f32.mrf.mxu0
      %v3518 = vadd.f32 0.0, %v3517
      %3519 = vmatmul.bf16.gmra.mxu0 %v3469
      %v3520 = vpop.f32.mrf.mxu0
      %v3521 = vadd.f32 0.0, %v3520
      %v3522 = vpop.f32.mrf.mxu0
      %v3523 = vadd.f32 0.0, %v3522
      %3524 = vmatmul.bf16.gmra.mxu0 %v3472
      %v3525 = vpop.f32.mrf.mxu0
      %v3526 = vadd.f32 0.0, %v3525
      %v3527 = vpop.f32.mrf.mxu0
      %v3528 = vadd.f32 0.0, %v3527
      %3529 = vmatmul.bf16.gmra.mxu0 %v3475
      %v3530 = vpop.f32.mrf.mxu0
      %v3531 = vadd.f32 0.0, %v3530
      %v3532 = vpop.f32.mrf.mxu0
      %v3533 = vadd.f32 0.0, %v3532
      %3534 = vmatmul.bf16.gmra.mxu0 %v3478
      %v3535 = vpop.f32.mrf.mxu0
      %v3536 = vadd.f32 0.0, %v3535
      %v3537 = vpop.f32.mrf.mxu0
      %v3538 = vadd.f32 0.0, %v3537
      %3539 = vmatmul.bf16.gmra.mxu0 %v3481
      %v3540 = vpop.f32.mrf.mxu0
      %v3541 = vadd.f32 0.0, %v3540
      %v3542 = vpop.f32.mrf.mxu0
      %v3543 = vadd.f32 0.0, %v3542
      %3544 = vdwg.mxu0
      %v3545 = vadd.f32 %v3401, %v3496
      %v3546 = vadd.f32 %v3402, %v3498
      %v3547 = vadd.f32 %v3403, %v3501
      %v3548 = vadd.f32 %v3404, %v3503
      %v3549 = vadd.f32 %v3405, %v3506
      %v3550 = vadd.f32 %v3406, %v3508
      %v3551 = vadd.f32 %v3407, %v3511
      %v3552 = vadd.f32 %v3408, %v3513
      %v3553 = vadd.f32 %v3409, %v3516
      %v3554 = vadd.f32 %v3410, %v3518
      %v3555 = vadd.f32 %v3411, %v3521
      %v3556 = vadd.f32 %v3412, %v3523
      %v3557 = vadd.f32 %v3413, %v3526
      %v3558 = vadd.f32 %v3414, %v3528
      %v3559 = vadd.f32 %v3415, %v3531
      %v3560 = vadd.f32 %v3416, %v3533
      %v3561 = vadd.f32 %v3417, %v3536
      %v3562 = vadd.f32 %v3418, %v3538
      %v3563 = vadd.f32 %v3419, %v3541
      %v3564 = vadd.f32 %v3420, %v3543
      %v3565 = vld [vmem:[#allocation3 + $0x2a] sm:$0xff]
      %v3566 = vld [vmem:[#allocation3 + $0x32] sm:$0xff]
      %v3567 = vld [vmem:[#allocation3 + $0x3a] sm:$0xff]
      %v3568 = vld [vmem:[#allocation3 + $0x42] sm:$0xff]
      %v3569 = vld [vmem:[#allocation3 + $0x4a] sm:$0xff]
      %v3570 = vld [vmem:[#allocation3 + $0x52] sm:$0xff]
      %v3571 = vld [vmem:[#allocation3 + $0x5a] sm:$0xff]
      %v3572 = vld [vmem:[#allocation3 + $0x62] sm:$0xff]
      %v3573 = vld [vmem:[#allocation3 + $0x6a] sm:$0xff]
      %v3574 = vld [vmem:[#allocation3 + $0x72] sm:$0xff]
      %v3575 = vld [vmem:[#allocation3 + $0x7a] sm:$0xff]
      %v3576 = vld [vmem:[#allocation3 + $0x82] sm:$0xff]
      %v3577 = vld [vmem:[#allocation3 + $0x8a] sm:$0xff]
      %v3578 = vld [vmem:[#allocation3 + $0x92] sm:$0xff]
      %v3579 = vld [vmem:[#allocation3 + $0x9a] sm:$0xff]
      %v3580 = vld [vmem:[#allocation3 + $0xa2] sm:$0xff]
      %v3581 = vld [vmem:[#allocation3 + $0xaa] sm:$0xff]
      %v3582 = vld [vmem:[#allocation3 + $0xb2] sm:$0xff]
      %v3583 = vld [vmem:[#allocation3 + $0xba] sm:$0xff]
      %v3584 = vld [vmem:[#allocation3 + $0xc2] sm:$0xff]
      %v3585 = vpack.c.bf16 %v3566, %v3565
      %v3586 = vpack.c.bf16 %v3568, %v3567
      %v3587 = vpack.c.bf16 %v3570, %v3569
      %v3588 = vpack.c.bf16 %v3572, %v3571
      %v3589 = vpack.c.bf16 %v3574, %v3573
      %v3590 = vpack.c.bf16 %v3576, %v3575
      %v3591 = vpack.c.bf16 %v3578, %v3577
      %v3592 = vpack.c.bf16 %v3580, %v3579
      %v3593 = vpack.c.bf16 %v3582, %v3581
      %v3594 = vpack.c.bf16 %v3584, %v3583
      %s3595 = scalar_lea.vmem %s4, 32
      %v3596 = vld [vmem:[%s3595] sm:$0xf]
      %v3598 = vsel %vm2426, %v3585, 0
      %v3601 = vsel %vm2426, %v3586, 0
      %v3604 = vsel %vm2426, %v3587, 0
      %v3607 = vsel %vm2426, %v3588, 0
      %v3610 = vsel %vm2426, %v3589, 0
      %v3613 = vsel %vm2426, %v3590, 0
      %v3616 = vsel %vm2426, %v3591, 0
      %v3619 = vsel %vm2426, %v3592, 0
      %v3622 = vsel %vm2426, %v3593, 0
      %v3625 = vsel %vm2426, %v3594, 0
      %v3628 = vsel %vm2546, %v3596, 0
      %3630 = vmatpush.bf16.msra.mxu0 0
      %3631 = vmatpush.bf16.msra.mxu0 0
      %3632 = vmatpush.bf16.msra.mxu0 0
      %3633 = vmatpush.bf16.msra.mxu0 0
      %3634 = vmatpush.bf16.msra.mxu0 0
      %3635 = vmatpush.bf16.msra.mxu0 0
      %3636 = vmatpush.bf16.msra.mxu0 0
      %3637 = vmatpush.bf16.msra.mxu0 %v3628
      %3638 = vmatmul.bf16.gmra.mxu0 %v3598
      %v3639 = vpop.f32.mrf.mxu0
      %v3640 = vadd.f32 0.0, %v3639
      %v3641 = vpop.f32.mrf.mxu0
      %v3642 = vadd.f32 0.0, %v3641
      %3643 = vmatmul.bf16.gmra.mxu0 %v3601
      %v3644 = vpop.f32.mrf.mxu0
      %v3645 = vadd.f32 0.0, %v3644
      %v3646 = vpop.f32.mrf.mxu0
      %v3647 = vadd.f32 0.0, %v3646
      %3648 = vmatmul.bf16.gmra.mxu0 %v3604
      %v3649 = vpop.f32.mrf.mxu0
      %v3650 = vadd.f32 0.0, %v3649
      %v3651 = vpop.f32.mrf.mxu0
      %v3652 = vadd.f32 0.0, %v3651
      %3653 = vmatmul.bf16.gmra.mxu0 %v3607
      %v3654 = vpop.f32.mrf.mxu0
      %v3655 = vadd.f32 0.0, %v3654
      %v3656 = vpop.f32.mrf.mxu0
      %v3657 = vadd.f32 0.0, %v3656
      %3658 = vmatmul.bf16.gmra.mxu0 %v3610
      %v3659 = vpop.f32.mrf.mxu0
      %v3660 = vadd.f32 0.0, %v3659
      %v3661 = vpop.f32.mrf.mxu0
      %v3662 = vadd.f32 0.0, %v3661
      %3663 = vmatmul.bf16.gmra.mxu0 %v3613
      %v3664 = vpop.f32.mrf.mxu0
      %v3665 = vadd.f32 0.0, %v3664
      %v3666 = vpop.f32.mrf.mxu0
      %v3667 = vadd.f32 0.0, %v3666
      %3668 = vmatmul.bf16.gmra.mxu0 %v3616
      %v3669 = vpop.f32.mrf.mxu0
      %v3670 = vadd.f32 0.0, %v3669
      %v3671 = vpop.f32.mrf.mxu0
      %v3672 = vadd.f32 0.0, %v3671
      %3673 = vmatmul.bf16.gmra.mxu0 %v3619
      %v3674 = vpop.f32.mrf.mxu0
      %v3675 = vadd.f32 0.0, %v3674
      %v3676 = vpop.f32.mrf.mxu0
      %v3677 = vadd.f32 0.0, %v3676
      %3678 = vmatmul.bf16.gmra.mxu0 %v3622
      %v3679 = vpop.f32.mrf.mxu0
      %v3680 = vadd.f32 0.0, %v3679
      %v3681 = vpop.f32.mrf.mxu0
      %v3682 = vadd.f32 0.0, %v3681
      %3683 = vmatmul.bf16.gmra.mxu0 %v3625
      %v3684 = vpop.f32.mrf.mxu0
      %v3685 = vadd.f32 0.0, %v3684
      %v3686 = vpop.f32.mrf.mxu0
      %v3687 = vadd.f32 0.0, %v3686
      %3688 = vdwg.mxu0
      %v3689 = vadd.f32 %v3545, %v3640
      %v3690 = vadd.f32 %v3546, %v3642
      %v3691 = vadd.f32 %v3547, %v3645
      %v3692 = vadd.f32 %v3548, %v3647
      %v3693 = vadd.f32 %v3549, %v3650
      %v3694 = vadd.f32 %v3550, %v3652
      %v3695 = vadd.f32 %v3551, %v3655
      %v3696 = vadd.f32 %v3552, %v3657
      %v3697 = vadd.f32 %v3553, %v3660
      %v3698 = vadd.f32 %v3554, %v3662
      %v3699 = vadd.f32 %v3555, %v3665
      %v3700 = vadd.f32 %v3556, %v3667
      %v3701 = vadd.f32 %v3557, %v3670
      %v3702 = vadd.f32 %v3558, %v3672
      %v3703 = vadd.f32 %v3559, %v3675
      %v3704 = vadd.f32 %v3560, %v3677
      %v3705 = vadd.f32 %v3561, %v3680
      %v3706 = vadd.f32 %v3562, %v3682
      %v3707 = vadd.f32 %v3563, %v3685
      %v3708 = vadd.f32 %v3564, %v3687
      %v3709 = vld [vmem:[%s5] sm:$0x1]
      %v3711 = vperm.slane %v3709, 0
      %v3713 = vadd.f32 %v3689, %v3711
      %v3714 = vadd.f32 %v3690, %v3711
      %v3715 = vadd.f32 %v3691, %v3711
      %v3716 = vadd.f32 %v3692, %v3711
      %v3717 = vadd.f32 %v3693, %v3711
      %v3718 = vadd.f32 %v3694, %v3711
      %v3719 = vadd.f32 %v3695, %v3711
      %v3720 = vadd.f32 %v3696, %v3711
      %v3721 = vadd.f32 %v3697, %v3711
      %v3722 = vadd.f32 %v3698, %v3711
      %v3723 = vadd.f32 %v3699, %v3711
      %v3724 = vadd.f32 %v3700, %v3711
      %v3725 = vadd.f32 %v3701, %v3711
      %v3726 = vadd.f32 %v3702, %v3711
      %v3727 = vadd.f32 %v3703, %v3711
      %v3728 = vadd.f32 %v3704, %v3711
      %v3729 = vadd.f32 %v3705, %v3711
      %v3730 = vadd.f32 %v3706, %v3711
      %v3731 = vadd.f32 %v3707, %v3711
      %v3732 = vadd.f32 %v3708, %v3711
      %v3733 = vld [vmem:[#allocation2 + $0x2a] sm:$0xff]
      %v3734 = vld [vmem:[#allocation2 + $0x32] sm:$0xff]
      %v3735 = vld [vmem:[#allocation2 + $0x3a] sm:$0xff]
      %v3736 = vld [vmem:[#allocation2 + $0x42] sm:$0xff]
      %v3737 = vld [vmem:[#allocation2 + $0x4a] sm:$0xff]
      %v3738 = vld [vmem:[#allocation2 + $0x52] sm:$0xff]
      %v3739 = vld [vmem:[#allocation2 + $0x5a] sm:$0xff]
      %v3740 = vld [vmem:[#allocation2 + $0x62] sm:$0xff]
      %v3741 = vld [vmem:[#allocation2 + $0x6a] sm:$0xff]
      %v3742 = vld [vmem:[#allocation2 + $0x72] sm:$0xff]
      %v3743 = vld [vmem:[#allocation2 + $0x7a] sm:$0xff]
      %v3744 = vld [vmem:[#allocation2 + $0x82] sm:$0xff]
      %v3745 = vld [vmem:[#allocation2 + $0x8a] sm:$0xff]
      %v3746 = vld [vmem:[#allocation2 + $0x92] sm:$0xff]
      %v3747 = vld [vmem:[#allocation2 + $0x9a] sm:$0xff]
      %v3748 = vld [vmem:[#allocation2 + $0xa2] sm:$0xff]
      %v3749 = vld [vmem:[#allocation2 + $0xaa] sm:$0xff]
      %v3750 = vld [vmem:[#allocation2 + $0xb2] sm:$0xff]
      %v3751 = vld [vmem:[#allocation2 + $0xba] sm:$0xff]
      %v3752 = vld [vmem:[#allocation2 + $0xc2] sm:$0xff]
      %v3753 = vpack.c.bf16 %v3734, %v3733
      %v3754 = vpack.c.bf16 %v3736, %v3735
      %v3755 = vpack.c.bf16 %v3738, %v3737
      %v3756 = vpack.c.bf16 %v3740, %v3739
      %v3757 = vpack.c.bf16 %v3742, %v3741
      %v3758 = vpack.c.bf16 %v3744, %v3743
      %v3759 = vpack.c.bf16 %v3746, %v3745
      %v3760 = vpack.c.bf16 %v3748, %v3747
      %v3761 = vpack.c.bf16 %v3750, %v3749
      %v3762 = vpack.c.bf16 %v3752, %v3751
      %v3763 = vld [vmem:[%s6] sm:$0x3]
      %v3764 = vld [vmem:[%s7] sm:$0x1]
      %v3766 = vperm.slane %v3764, 0
      %v3769 = vsel %vm430, %v3753, 0
      %v3772 = vsel %vm430, %v3754, 0
      %v3775 = vsel %vm430, %v3755, 0
      %v3778 = vsel %vm430, %v3756, 0
      %v3781 = vsel %vm430, %v3757, 0
      %v3784 = vsel %vm430, %v3758, 0
      %v3787 = vsel %vm430, %v3759, 0
      %v3790 = vsel %vm430, %v3760, 0
      %v3793 = vsel %vm430, %v3761, 0
      %v3796 = vsel %vm430, %v3762, 0
      %v3799 = vsel %vm583, %v3763, 0
      %3801 = vmatpush.bf16.msra.mxu0 0
      %3802 = vmatpush.bf16.msra.mxu0 0
      %3803 = vmatpush.bf16.msra.mxu0 0
      %3804 = vmatpush.bf16.msra.mxu0 0
      %3805 = vmatpush.bf16.msra.mxu0 0
      %3806 = vmatpush.bf16.msra.mxu0 0
      %3807 = vmatpush.bf16.msra.mxu0 0
      %3808 = vmatpush.bf16.msra.mxu0 %v3799
      %3809 = vmatmul.bf16.gmra.mxu0 %v3769
      %v3810 = vpop.f32.mrf.mxu0
      %v3811 = vadd.f32 %v3766, %v3810
      %v3812 = vpop.f32.mrf.mxu0
      %v3813 = vadd.f32 %v3766, %v3812
      %3814 = vmatmul.bf16.gmra.mxu0 %v3772
      %v3815 = vpop.f32.mrf.mxu0
      %v3816 = vadd.f32 %v3766, %v3815
      %v3817 = vpop.f32.mrf.mxu0
      %v3818 = vadd.f32 %v3766, %v3817
      %3819 = vmatmul.bf16.gmra.mxu0 %v3775
      %v3820 = vpop.f32.mrf.mxu0
      %v3821 = vadd.f32 %v3766, %v3820
      %v3822 = vpop.f32.mrf.mxu0
      %v3823 = vadd.f32 %v3766, %v3822
      %3824 = vmatmul.bf16.gmra.mxu0 %v3778
      %v3825 = vpop.f32.mrf.mxu0
      %v3826 = vadd.f32 %v3766, %v3825
      %v3827 = vpop.f32.mrf.mxu0
      %v3828 = vadd.f32 %v3766, %v3827
      %3829 = vmatmul.bf16.gmra.mxu0 %v3781
      %v3830 = vpop.f32.mrf.mxu0
      %v3831 = vadd.f32 %v3766, %v3830
      %v3832 = vpop.f32.mrf.mxu0
      %v3833 = vadd.f32 %v3766, %v3832
      %3834 = vmatmul.bf16.gmra.mxu0 %v3784
      %v3835 = vpop.f32.mrf.mxu0
      %v3836 = vadd.f32 %v3766, %v3835
      %v3837 = vpop.f32.mrf.mxu0
      %v3838 = vadd.f32 %v3766, %v3837
      %3839 = vmatmul.bf16.gmra.mxu0 %v3787
      %v3840 = vpop.f32.mrf.mxu0
      %v3841 = vadd.f32 %v3766, %v3840
      %v3842 = vpop.f32.mrf.mxu0
      %v3843 = vadd.f32 %v3766, %v3842
      %3844 = vmatmul.bf16.gmra.mxu0 %v3790
      %v3845 = vpop.f32.mrf.mxu0
      %v3846 = vadd.f32 %v3766, %v3845
      %v3847 = vpop.f32.mrf.mxu0
      %v3848 = vadd.f32 %v3766, %v3847
      %3849 = vmatmul.bf16.gmra.mxu0 %v3793
      %v3850 = vpop.f32.mrf.mxu0
      %v3851 = vadd.f32 %v3766, %v3850
      %v3852 = vpop.f32.mrf.mxu0
      %v3853 = vadd.f32 %v3766, %v3852
      %3854 = vmatmul.bf16.gmra.mxu0 %v3796
      %v3855 = vpop.f32.mrf.mxu0
      %v3856 = vadd.f32 %v3766, %v3855
      %v3857 = vpop.f32.mrf.mxu0
      %v3858 = vadd.f32 %v3766, %v3857
      %3859 = vdwg.mxu0
      %v3860 = vadd.f32 %v3713, %v3811
      %v3861 = vadd.f32 %v3714, %v3813
      %v3862 = vadd.f32 %v3715, %v3816
      %v3863 = vadd.f32 %v3716, %v3818
      %v3864 = vadd.f32 %v3717, %v3821
      %v3865 = vadd.f32 %v3718, %v3823
      %v3866 = vadd.f32 %v3719, %v3826
      %v3867 = vadd.f32 %v3720, %v3828
      %v3868 = vadd.f32 %v3721, %v3831
      %v3869 = vadd.f32 %v3722, %v3833
      %v3870 = vadd.f32 %v3723, %v3836
      %v3871 = vadd.f32 %v3724, %v3838
      %v3872 = vadd.f32 %v3725, %v3841
      %v3873 = vadd.f32 %v3726, %v3843
      %v3874 = vadd.f32 %v3727, %v3846
      %v3875 = vadd.f32 %v3728, %v3848
      %v3876 = vadd.f32 %v3729, %v3851
      %v3877 = vadd.f32 %v3730, %v3853
      %v3878 = vadd.f32 %v3731, %v3856
      %v3879 = vadd.f32 %v3732, %v3858
      %3880 = vst.msk [vmem:[#allocation4] sm:$0xff] %vm2426, %v3860
      %3881 = vst.msk [vmem:[#allocation4 + $0x8] sm:$0xff] %vm2426, %v3861
      %3882 = vst.msk [vmem:[#allocation4 + $0x10] sm:$0xff] %vm2426, %v3862
      %3883 = vst.msk [vmem:[#allocation4 + $0x18] sm:$0xff] %vm2426, %v3863
      %3884 = vst.msk [vmem:[#allocation4 + $0x20] sm:$0xff] %vm2426, %v3864
      %3885 = vst.msk [vmem:[#allocation4 + $0x28] sm:$0xff] %vm2426, %v3865
      %3886 = vst.msk [vmem:[#allocation4 + $0x30] sm:$0xff] %vm2426, %v3866
      %3887 = vst.msk [vmem:[#allocation4 + $0x38] sm:$0xff] %vm2426, %v3867
      %3888 = vst.msk [vmem:[#allocation4 + $0x40] sm:$0xff] %vm2426, %v3868
      %3889 = vst.msk [vmem:[#allocation4 + $0x48] sm:$0xff] %vm2426, %v3869
      %3890 = vst.msk [vmem:[#allocation4 + $0x50] sm:$0xff] %vm2426, %v3870
      %3891 = vst.msk [vmem:[#allocation4 + $0x58] sm:$0xff] %vm2426, %v3871
      %3892 = vst.msk [vmem:[#allocation4 + $0x60] sm:$0xff] %vm2426, %v3872
      %3893 = vst.msk [vmem:[#allocation4 + $0x68] sm:$0xff] %vm2426, %v3873
      %3894 = vst.msk [vmem:[#allocation4 + $0x70] sm:$0xff] %vm2426, %v3874
      %3895 = vst.msk [vmem:[#allocation4 + $0x78] sm:$0xff] %vm2426, %v3875
      %3896 = vst.msk [vmem:[#allocation4 + $0x80] sm:$0xff] %vm2426, %v3876
      %3897 = vst.msk [vmem:[#allocation4 + $0x88] sm:$0xff] %vm2426, %v3877
      %3898 = vst.msk [vmem:[#allocation4 + $0x90] sm:$0xff] %vm2426, %v3878
      %3899 = vst.msk [vmem:[#allocation4 + $0x98] sm:$0xff] %vm2426, %v3879
      %v3900 = vld [vmem:[#allocation4] sm:$0xff]
      %v3901 = vld [vmem:[#allocation4 + $0x8] sm:$0xff]
      %v3902 = vpack.c.bf16 %v3900, %v3900
      %v3903 = vpack.c.bf16 %v3901, %v3901
      %vm3904 = vcmask 60416
      %3905 = vst.msk [vmem:[%s363] sm:$0xf] %vm3904, %v3902
      %3906 = vst.msk [vmem:[%s363 + $0x4] sm:$0xf] %vm3904, %v3903
      %v3907 = vld [vmem:[#allocation4 + $0x14] sm:$0xff]
      %v3908 = vld [vmem:[#allocation4 + $0x1c] sm:$0xff]
      %v3909 = vpack.c.bf16 %v3907, %v3907
      %v3910 = vpack.c.bf16 %v3908, %v3908
      %s3911 = scalar_lea.vmem %s363, 8
      %3912 = vst.msk [vmem:[%s3911] sm:$0xf] %vm3904, %v3909
      %3913 = vst.msk [vmem:[%s3911 + $0x4] sm:$0xf] %vm3904, %v3910
      %v3914 = vld [vmem:[#allocation4 + $0x28] sm:$0xff]
      %v3915 = vld [vmem:[#allocation4 + $0x30] sm:$0xff]
      %v3916 = vpack.c.bf16 %v3914, %v3914
      %v3917 = vpack.c.bf16 %v3915, %v3915
      %s3918 = scalar_lea.vmem %s363, 16
      %3919 = vst.msk [vmem:[%s3918] sm:$0xf] %vm3904, %v3916
      %3920 = vst.msk [vmem:[%s3918 + $0x4] sm:$0xf] %vm3904, %v3917
      %v3921 = vld [vmem:[#allocation4 + $0x3c] sm:$0xff]
      %v3922 = vld [vmem:[#allocation4 + $0x44] sm:$0xff]
      %v3923 = vpack.c.bf16 %v3921, %v3921
      %v3924 = vpack.c.bf16 %v3922, %v3922
      %s3925 = scalar_lea.vmem %s363, 24
      %3926 = vst.msk [vmem:[%s3925] sm:$0xf] %vm3904, %v3923
      %3927 = vst.msk [vmem:[%s3925 + $0x4] sm:$0xf] %vm3904, %v3924
      %v3928 = vld [vmem:[#allocation4 + $0x50] sm:$0xff]
      %v3929 = vld [vmem:[#allocation4 + $0x58] sm:$0xff]
      %v3930 = vpack.c.bf16 %v3928, %v3928
      %v3931 = vpack.c.bf16 %v3929, %v3929
      %s3932 = scalar_lea.vmem %s363, 32
      %3933 = vst.msk [vmem:[%s3932] sm:$0xf] %vm3904, %v3930
      %3934 = vst.msk [vmem:[%s3932 + $0x4] sm:$0xf] %vm3904, %v3931
      %v3935 = vld [vmem:[#allocation4 + $0x64] sm:$0xff]
      %v3936 = vld [vmem:[#allocation4 + $0x6c] sm:$0xff]
      %v3937 = vpack.c.bf16 %v3935, %v3935
      %v3938 = vpack.c.bf16 %v3936, %v3936
      %s3939 = scalar_lea.vmem %s363, 40
      %3940 = vst.msk [vmem:[%s3939] sm:$0xf] %vm3904, %v3937
      %3941 = vst.msk [vmem:[%s3939 + $0x4] sm:$0xf] %vm3904, %v3938
      %v3942 = vld [vmem:[#allocation4 + $0x78] sm:$0xff]
      %v3943 = vld [vmem:[#allocation4 + $0x80] sm:$0xff]
      %v3944 = vpack.c.bf16 %v3942, %v3942
      %v3945 = vpack.c.bf16 %v3943, %v3943
      %s3946 = scalar_lea.vmem %s363, 48
      %3947 = vst.msk [vmem:[%s3946] sm:$0xf] %vm3904, %v3944
      %3948 = vst.msk [vmem:[%s3946 + $0x4] sm:$0xf] %vm3904, %v3945
      %v3949 = vld [vmem:[#allocation4 + $0x8c] sm:$0xff]
      %v3950 = vld [vmem:[#allocation4 + $0x94] sm:$0xff]
      %v3951 = vpack.c.bf16 %v3949, %v3949
      %v3952 = vpack.c.bf16 %v3950, %v3950
      %s3953 = scalar_lea.vmem %s363, 56
      %3954 = vst.msk [vmem:[%s3953] sm:$0xf] %vm3904, %v3951
      %3955 = vst.msk [vmem:[%s3953 + $0x4] sm:$0xf] %vm3904, %v3952
      %s3956 = smul.u32 8, %s24
      %p3957 = scmp.lt.s32.totalorder %s23, 1
      %s3958 = scalar_select %p3957, %s23, 1
      %p3959 = scmp.lt.s32.totalorder %s3956, 15
      %s3960 = scalar_select %p3959, %s3956, 15
      %s3961 = smul.addr %s3960, 2
      %s3962 = smul.addr %s3958, 32
      %s3963 = sadd.s32 %s3961, %s3962
      %s3964 = smul.addr %s3963, 4
      %s3965 = scalar_lea.vmem %s8, %s3964
      // Predicated region
      $region53: #{_lambda_.2} parent=51 // pred_check
        %p3966 = pneg %p231
      $region54: #{_lambda_.2} parent=51 // pred_check_branch
        %3968 = sbr.rel (%p3966) target = $region56
      $region55: #{_lambda_.2} parent=51 // pred_region
        %s3969 = smul.u32 8, %s24
      $region56: #{_lambda_.2} parent=51 // pred_fallthru
        _
    $region52: #{_lambda_.2} parent=5 // pred_fallthru
      _
    %p3970 = scmp.le.s32.totalorder 2, %s14
    // Predicated region
    $region57: #{_lambda_.2} parent=5 // pred_check
      %p3971 = pneg %p3970
    $region58: #{_lambda_.2} parent=5 // pred_check_branch
      %3973 = sbr.rel (%p3971) target = $region60
    $region59: #{_lambda_.2} parent=5 // pred_region
      %s3974 = ssub.s32 %s14, 2
      // Predicated region
      $region61: #{_lambda_.2} parent=59 // pred_check
        %p3975 = pneg %p237
      $region62: #{_lambda_.2} parent=59 // pred_check_branch
        %3977 = sbr.rel (%p3975) target = $region64
      $region63: #{_lambda_.2} parent=59 // pred_region
        %s3978 = smul.u32 8, %s26
        %p3979 = scmp.lt.s32.totalorder %s25, 1
        %s3980 = scalar_select %p3979, %s25, 1
        %p3981 = scmp.lt.s32.totalorder %s3978, 15
        %s3982 = scalar_select %p3981, %s3978, 15
        %s3983 = smul.addr %s3982, 2
        %s3984 = smul.addr %s3980, 32
        %s3985 = sadd.s32 %s3983, %s3984
        %s3986 = smul.addr %s3985, 4
        %s3987 = scalar_lea.vmem %s8, %s3986
      $region64: #{_lambda_.2} parent=59 // pred_fallthru
        _
    $region60: #{_lambda_.2} parent=5 // pred_fallthru
      _
  $region6: #{_lambda_.2} parent=0 // loop_footer
    %s18 = sadd.s32 1, %s14
  $region7: #{_lambda_.2} parent=0 // loop_footer_branch
    %13 = sbr.rel target = $region3
  $region8: #{_lambda_.2} parent=0 // loop_exit
    _

// kernel: _lambda_.3
$region0: #{_lambda_.3}
  #allocation0 [shape = 'u32[]', space=smem, size = 0x4, offset = 0x4, fixed_abs, tag = 'smem constant byte address 0x4 - core index']
  #allocation1 [shape = 'u32[72,128]{1,0:T(1,128)}', space=vmem, size = 0x9000, scoped, tag = 'internal scratch']
  #allocation2 [shape = 'f32[256,8]{1,0:T(8,128)}', space=vmem, size = 0x20000, scoped, tag = 'scratch operand']
  #allocation3 [shape = 'f32[208,8]{1,0:T(8,128)}', space=vmem, size = 0x1a000, scoped, tag = 'scratch operand']
  #allocation4 [shape = 'f32[160,8]{1,0:T(8,128)}', space=vmem, size = 0x14000, scoped, tag = 'scratch operand']
  %s0 = inlined_call_operand.vmem [shape: bf16[2,2,256,8], index: 0, kind: input, shape index: {}]
  %s1 = inlined_call_operand.vmem [shape: f32[2,208,1], index: 1, kind: input, shape index: {}]
  %s2 = inlined_call_operand.vmem [shape: bf16[9,8,8], index: 2, kind: input, shape index: {}]
  %s3 = inlined_call_operand.vmem [shape: f32[1,8], index: 3, kind: input, shape index: {}, may-alias: {3,5}]
  %s4 = inlined_call_operand.vmem [shape: bf16[9,8,8], index: 4, kind: input, shape index: {}]
  %s5 = inlined_call_operand.vmem [shape: f32[1,8], index: 5, kind: input, shape index: {}, may-alias: {3,5}]
  %s6 = inlined_call_operand.vmem [shape: f32[2,2,2,16,16,8], index: 6, kind: output, shape index: {}]
  %s7 = sld [smem:[#allocation0]]
  $region91: #{_lambda_.3} parent=0
    _
  %s9 = ssub.s32 1, %s7
  %s10 = scalar_select 0, %s9, %s7
  $region1: #{_lambda_.3} parent=0
    #allocation5 [shape = 'u8[524288]{0}', space=vmem, size = 0x80000, scoped, tag = 'output window, operand 0']
    loop: start=0, step=1, limit=6
    $region2: #{_lambda_.3} parent=1 // loop_pre_header
      _
    $region3: #{_lambda_.3} parent=1 // loop_header
      %s12 = sphi 0, %s16
      %p13 = scmp.ge.s32.totalorder %s12, 6
      %s19 = sphi 0, %s31
      %s20 = sphi 0, %s27
      %s21 = sphi 0, %s19
      %s22 = sphi 0, %s20
      %s23 = sphi 0, %s21
      %s24 = sphi 0, %s22
      %s36 = sphi 0, %s38
      %s39 = sphi 0, %s36
      %s40 = sphi 0, %s39
      %s56 = sphi 0, %s40
      %s62 = sphi 0, %s64
      %s65 = sphi 0, %s62
      %s66 = sphi 0, %s65
      %s82 = sphi 0, %s66
      %s86 = sphi 0, %s86
      %s88 = sphi 0, %s86
      %s89 = sphi 0, %s88
      %s103 = sphi 0, %s89
      %s107 = sphi 0, %s107
      %s109 = sphi 0, %s107
      %s110 = sphi 0, %s109
      %s124 = sphi 0, %s110
      %s128 = sphi 0, %s128
      %s130 = sphi 0, %s128
      %s131 = sphi 0, %s130
      %s145 = sphi 0, %s131
      %s149 = sphi 0, %s149
      %s151 = sphi 0, %s149
      %s152 = sphi 0, %s151
      %s166 = sphi 0, %s152
      %s174 = sphi 0, %s176
      %s177 = sphi 0, %s174
      %s178 = sphi 0, %s177
      %s194 = sphi 0, %s178
    $region4: #{_lambda_.3} parent=1 // loop_header_branch
      %15 = sbr.rel (%p13) target = $region8
    $region5: #{_lambda_.3} parent=1 // loop_body
      %s17 = ssub.s32 %s12, 1
      %s18 = ssub.s32 %s12, 2
      %s25 = sadd.s32 1, %s20
      %p26 = scmp.ge.s32.totalorder %s25, 2
      %s27 = scalar_select %p26, 0, %s25
      %s28 = sadd.s32 1, %s19
      %s29 = scalar_select %p26, %s28, %s19
      %p30 = scmp.ge.s32.totalorder %s29, 2
      %s31 = scalar_select %p30, 0, %s29
      %s32 = ssub.s32 %s19, %s31
      %s33 = ssub.s32 %s20, %s27
      %s34 = sor.u32 %s32, %s33
      %p35 = scmp.eq.s32.totalorder %s34, 0
      %s37 = sadd.s32 %s36, 1
      %s38 = scalar_select %p35, %s36, %s37
      %p41 = pneg %p35
      %p42 = scmp.eq.s32.totalorder %s12, 3
      %p43 = por %p41, %p42
      %p44 = scmp.ne.s32.totalorder %s36, %s39
      %p45 = scmp.eq.s32.totalorder %s12, 0
      %p46 = por %p44, %p45
      %p47 = scmp.ne.s32.totalorder %s36, %s39
      %p48 = scmp.eq.s32.totalorder %s17, 3
      %p49 = por %p47, %p48
      %p50 = scmp.ne.s32.totalorder %s39, %s40
      %p51 = scmp.eq.s32.totalorder %s17, 0
      %p52 = por %p50, %p51
      %p53 = scmp.ne.s32.totalorder %s39, %s40
      %p54 = scmp.eq.s32.totalorder %s18, 3
      %p55 = por %p53, %p54
      %p57 = scmp.ne.s32.totalorder %s40, %s56
      %p58 = scmp.eq.s32.totalorder %s18, 0
      %p59 = por %p57, %p58
      %s60 = ssub.s32 %s20, %s27
      %p61 = scmp.eq.s32.totalorder %s60, 0
      %s63 = sadd.s32 %s62, 1
      %s64 = scalar_select %p61, %s62, %s63
      %p67 = pneg %p61
      %p68 = scmp.eq.s32.totalorder %s12, 3
      %p69 = por %p67, %p68
      %p70 = scmp.ne.s32.totalorder %s62, %s65
      %p71 = scmp.eq.s32.totalorder %s12, 0
      %p72 = por %p70, %p71
      %p73 = scmp.ne.s32.totalorder %s62, %s65
      %p74 = scmp.eq.s32.totalorder %s17, 3
      %p75 = por %p73, %p74
      %p76 = scmp.ne.s32.totalorder %s65, %s66
      %p77 = scmp.eq.s32.totalorder %s17, 0
      %p78 = por %p76, %p77
      %p79 = scmp.ne.s32.totalorder %s65, %s66
      %p80 = scmp.eq.s32.totalorder %s18, 3
      %p81 = por %p79, %p80
      %p83 = scmp.ne.s32.totalorder %s66, %s82
      %p84 = scmp.eq.s32.totalorder %s18, 0
      %p85 = por %p83, %p84
      %s87 = sadd.s32 %s86, 1
      %p90 = scmp.eq.s32.totalorder %s12, 3
      %p91 = scmp.ne.s32.totalorder %s86, %s88
      %p92 = scmp.eq.s32.totalorder %s12, 0
      %p93 = por %p91, %p92
      %p94 = scmp.ne.s32.totalorder %s86, %s88
      %p95 = scmp.eq.s32.totalorder %s17, 3
      %p96 = por %p94, %p95
      %p97 = scmp.ne.s32.totalorder %s88, %s89
      %p98 = scmp.eq.s32.totalorder %s17, 0
      %p99 = por %p97, %p98
      %p100 = scmp.ne.s32.totalorder %s88, %s89
      %p101 = scmp.eq.s32.totalorder %s18, 3
      %p102 = por %p100, %p101
      %p104 = scmp.ne.s32.totalorder %s89, %s103
      %p105 = scmp.eq.s32.totalorder %s18, 0
      %p106 = por %p104, %p105
      %s108 = sadd.s32 %s107, 1
      %p111 = scmp.eq.s32.totalorder %s12, 3
      %p112 = scmp.ne.s32.totalorder %s107, %s109
      %p113 = scmp.eq.s32.totalorder %s12, 0
      %p114 = por %p112, %p113
      %p115 = scmp.ne.s32.totalorder %s107, %s109
      %p116 = scmp.eq.s32.totalorder %s17, 3
      %p117 = por %p115, %p116
      %p118 = scmp.ne.s32.totalorder %s109, %s110
      %p119 = scmp.eq.s32.totalorder %s17, 0
      %p120 = por %p118, %p119
      %p121 = scmp.ne.s32.totalorder %s109, %s110
      %p122 = scmp.eq.s32.totalorder %s18, 3
      %p123 = por %p121, %p122
      %p125 = scmp.ne.s32.totalorder %s110, %s124
      %p126 = scmp.eq.s32.totalorder %s18, 0
      %p127 = por %p125, %p126
      %s129 = sadd.s32 %s128, 1
      %p132 = scmp.eq.s32.totalorder %s12, 3
      %p133 = scmp.ne.s32.totalorder %s128, %s130
      %p134 = scmp.eq.s32.totalorder %s12, 0
      %p135 = por %p133, %p134
      %p136 = scmp.ne.s32.totalorder %s128, %s130
      %p137 = scmp.eq.s32.totalorder %s17, 3
      %p138 = por %p136, %p137
      %p139 = scmp.ne.s32.totalorder %s130, %s131
      %p140 = scmp.eq.s32.totalorder %s17, 0
      %p141 = por %p139, %p140
      %p142 = scmp.ne.s32.totalorder %s130, %s131
      %p143 = scmp.eq.s32.totalorder %s18, 3
      %p144 = por %p142, %p143
      %p146 = scmp.ne.s32.totalorder %s131, %s145
      %p147 = scmp.eq.s32.totalorder %s18, 0
      %p148 = por %p146, %p147
      %s150 = sadd.s32 %s149, 1
      %p153 = scmp.eq.s32.totalorder %s12, 3
      %p154 = scmp.ne.s32.totalorder %s149, %s151
      %p155 = scmp.eq.s32.totalorder %s12, 0
      %p156 = por %p154, %p155
      %p157 = scmp.ne.s32.totalorder %s149, %s151
      %p158 = scmp.eq.s32.totalorder %s17, 3
      %p159 = por %p157, %p158
      %p160 = scmp.ne.s32.totalorder %s151, %s152
      %p161 = scmp.eq.s32.totalorder %s17, 0
      %p162 = por %p160, %p161
      %p163 = scmp.ne.s32.totalorder %s151, %s152
      %p164 = scmp.eq.s32.totalorder %s18, 3
      %p165 = por %p163, %p164
      %p167 = scmp.ne.s32.totalorder %s152, %s166
      %p168 = scmp.eq.s32.totalorder %s18, 0
      %p169 = por %p167, %p168
      %s170 = ssub.s32 %s19, %s31
      %s171 = ssub.s32 %s20, %s27
      %s172 = sor.u32 %s170, %s171
      %p173 = scmp.eq.s32.totalorder %s172, 0
      %s175 = sadd.s32 %s174, 1
      %s176 = scalar_select %p173, %s174, %s175
      %p179 = pneg %p173
      %p180 = scmp.eq.s32.totalorder %s12, 3
      %p181 = por %p179, %p180
      %p182 = scmp.ne.s32.totalorder %s174, %s177
      %p183 = scmp.eq.s32.totalorder %s12, 0
      %p184 = por %p182, %p183
      %p185 = scmp.ne.s32.totalorder %s174, %s177
      %p186 = scmp.eq.s32.totalorder %s17, 3
      %p187 = por %p185, %p186
      %p188 = scmp.ne.s32.totalorder %s177, %s178
      %p189 = scmp.eq.s32.totalorder %s17, 0
      %p190 = por %p188, %p189
      %p191 = scmp.ne.s32.totalorder %s177, %s178
      %p192 = scmp.eq.s32.totalorder %s18, 3
      %p193 = por %p191, %p192
      %p195 = scmp.ne.s32.totalorder %s178, %s194
      %p196 = scmp.eq.s32.totalorder %s18, 0
      %p197 = por %p195, %p196
      %p198 = scmp.le.s32.totalorder 1, %s12
      %p199 = scmp.lt.s32.totalorder %s12, 5
      %p200 = pnand %p198, %p199
      %p201 = pneg %p200
      // Predicated region
      $region9: #{_lambda_.3} parent=5 // pred_check
        _
      $region10: #{_lambda_.3} parent=5 // pred_check_branch
        %203 = sbr.rel (%p200) target = $region12
      $region11: #{_lambda_.3} parent=5 // pred_region
        %s204 = ssub.s32 %s12, 1
        // Predicated region
        $region13: #{_lambda_.3} parent=11 // pred_check
          %p205 = pneg %p99
        $region14: #{_lambda_.3} parent=11 // pred_check_branch
          %207 = sbr.rel (%p205) target = $region16
        $region15: #{_lambda_.3} parent=11 // pred_region
          _
        $region16: #{_lambda_.3} parent=11 // pred_fallthru
          _
        // Predicated region
        $region17: #{_lambda_.3} parent=11 // pred_check
          %p208 = pneg %p120
        $region18: #{_lambda_.3} parent=11 // pred_check_branch
          %210 = sbr.rel (%p208) target = $region20
        $region19: #{_lambda_.3} parent=11 // pred_region
          _
        $region20: #{_lambda_.3} parent=11 // pred_fallthru
          _
        // Predicated region
        $region21: #{_lambda_.3} parent=11 // pred_check
          %p211 = pneg %p141
        $region22: #{_lambda_.3} parent=11 // pred_check_branch
          %213 = sbr.rel (%p211) target = $region24
        $region23: #{_lambda_.3} parent=11 // pred_region
          _
        $region24: #{_lambda_.3} parent=11 // pred_fallthru
          _
        // Predicated region
        $region25: #{_lambda_.3} parent=11 // pred_check
          %p214 = pneg %p162
        $region26: #{_lambda_.3} parent=11 // pred_check_branch
          %216 = sbr.rel (%p214) target = $region28
        $region27: #{_lambda_.3} parent=11 // pred_region
          _
        $region28: #{_lambda_.3} parent=11 // pred_fallthru
          _
      $region12: #{_lambda_.3} parent=5 // pred_fallthru
        _
      %p217 = scmp.lt.s32.totalorder %s12, 4
      // Predicated region
      $region29: #{_lambda_.3} parent=5 // pred_check
        %p218 = pneg %p217
      $region30: #{_lambda_.3} parent=5 // pred_check_branch
        %220 = sbr.rel (%p218) target = $region32
      $region31: #{_lambda_.3} parent=5 // pred_region
        // Predicated region
        $region33: #{_lambda_.3} parent=31 // pred_check
          %p221 = pneg %p46
        $region34: #{_lambda_.3} parent=31 // pred_check_branch
          %223 = sbr.rel (%p221) target = $region36
        $region35: #{_lambda_.3} parent=31 // pred_region
          %p224 = scmp.lt.s32.totalorder %s19, 1
          %s225 = scalar_select %p224, %s19, 1
          %p226 = scmp.lt.s32.totalorder %s20, 1
          %s227 = scalar_select %p226, %s20, 1
          %s228 = smul.addr %s227, 32
          %s229 = smul.addr %s225, 64
          %s230 = sadd.s32 %s228, %s229
          %s231 = smul.addr %s230, 4
          %s232 = scalar_lea.vmem %s0, %s231
        $region36: #{_lambda_.3} parent=31 // pred_fallthru
          _
        // Predicated region
        $region37: #{_lambda_.3} parent=31 // pred_check
          %p233 = pneg %p72
        $region38: #{_lambda_.3} parent=31 // pred_check_branch
          %235 = sbr.rel (%p233) target = $region40
        $region39: #{_lambda_.3} parent=31 // pred_region
          %p236 = scmp.lt.s32.totalorder %s20, 1
          %s237 = scalar_select %p236, %s20, 1
          %s238 = smul.addr %s237, 26
          %s239 = smul.addr %s238, 8
          %s240 = scalar_lea.vmem %s1, %s239
        $region40: #{_lambda_.3} parent=31 // pred_fallthru
          _
      $region32: #{_lambda_.3} parent=5 // pred_fallthru
        _
      %p241 = scmp.le.s32.totalorder 1, %s12
      %p242 = scmp.lt.s32.totalorder %s12, 5
      %p243 = pnand %p241, %p242
      %p244 = pneg %p243
      // Predicated region
      $region41: #{_lambda_.3} parent=5 // pred_check
        _
      $region42: #{_lambda_.3} parent=5 // pred_check_branch
        %246 = sbr.rel (%p243) target = $region44
      $region43: #{_lambda_.3} parent=5 // pred_region
        %s247 = ssub.s32 %s12, 1
        %p248 = scmp.lt.s32.totalorder %s21, 1
        %s249 = scalar_select %p248, %s21, 1
        %p250 = scmp.lt.s32.totalorder %s22, 1
        %s251 = scalar_select %p250, %s22, 1
        %s252 = smul.addr %s251, 32
        %s253 = smul.addr %s249, 64
        %s254 = sadd.s32 %s252, %s253
        %s255 = smul.addr %s254, 4
        %s256 = scalar_lea.vmem %s0, %s255
        %p257 = pneg %p52
        %p258 = pneg %p49
        %p259 = scmp.lt.s32.totalorder %s22, 1
        %s260 = scalar_select %p259, %s22, 1
        %s261 = smul.addr %s260, 26
        %s262 = smul.addr %s261, 8
        %s263 = scalar_lea.vmem %s1, %s262
        %p264 = pneg %p78
        %p265 = pneg %p75
        %p266 = pneg %p99
        %p267 = pneg %p96
        %p268 = pneg %p120
        %p269 = pneg %p117
        %p270 = pneg %p141
        %p271 = pneg %p138
        %p272 = pneg %p162
        %p273 = pneg %p159
        %p274 = pneg %p190
        %p275 = pneg %p187
        %s276 = sand.u32 %s177, 1
        %s277 = sand.u32 %s177, 1
        %s278 = smul.addr %s277, 512
        %s279 = scalar_lea.vmem [#allocation5], %s278
        %p280 = scmp.lt.s32.totalorder %s21, 1
        %s281 = scalar_select %p280, %s21, 1
        %p282 = scmp.lt.s32.totalorder %s22, 1
        %s283 = scalar_select %p282, %s22, 1
        %s284 = smul.addr %s283, 32
        %s285 = smul.addr %s281, 64
        %s286 = sadd.s32 %s284, %s285
        %s287 = smul.addr %s286, 4
        %s288 = scalar_lea.vmem %s0, %s287
        %p289 = scmp.lt.s32.totalorder %s22, 1
        %s290 = scalar_select %p289, %s22, 1
        %s291 = smul.addr %s290, 26
        %s292 = smul.addr %s291, 8
        %s293 = scalar_lea.vmem %s1, %s292
        %s294 = smul.u32 8, %s22
        %v296 = vld [vmem:[%s288] sm:$0xf]
        %v297 = vld [vmem:[%s288 + $0x4] sm:$0xf]
        %v298 = vld [vmem:[%s288 + $0x8] sm:$0xf]
        %v299 = vld [vmem:[%s288 + $0xc] sm:$0xf]
        %v300 = vld [vmem:[%s288 + $0x10] sm:$0xf]
        %v301 = vld [vmem:[%s288 + $0x14] sm:$0xf]
        %v302 = vld [vmem:[%s288 + $0x18] sm:$0xf]
        %v303 = vld [vmem:[%s288 + $0x1c] sm:$0xf]
        %v304 = vld [vmem:[%s288 + $0x20] sm:$0xf]
        %v305 = vld [vmem:[%s288 + $0x24] sm:$0xf]
        %v306 = vld [vmem:[%s288 + $0x28] sm:$0xf]
        %v307 = vld [vmem:[%s288 + $0x2c] sm:$0xf]
        %v308 = vld [vmem:[%s288 + $0x30] sm:$0xf]
        %v309 = vld [vmem:[%s288 + $0x34] sm:$0xf]
        %v310 = vld [vmem:[%s288 + $0x38] sm:$0xf]
        %v311 = vld [vmem:[%s288 + $0x3c] sm:$0xf]
        %v312 = vld [vmem:[%s288 + $0x40] sm:$0xf]
        %v313 = vld [vmem:[%s288 + $0x44] sm:$0xf]
        %v314 = vld [vmem:[%s288 + $0x48] sm:$0xf]
        %v315 = vld [vmem:[%s288 + $0x4c] sm:$0xf]
        %v316 = vld [vmem:[%s288 + $0x50] sm:$0xf]
        %v317 = vld [vmem:[%s288 + $0x54] sm:$0xf]
        %v318 = vld [vmem:[%s288 + $0x58] sm:$0xf]
        %v319 = vld [vmem:[%s288 + $0x5c] sm:$0xf]
        %v320 = vld [vmem:[%s288 + $0x60] sm:$0xf]
        %v321 = vld [vmem:[%s288 + $0x64] sm:$0xf]
        %v322 = vld [vmem:[%s288 + $0x68] sm:$0xf]
        %v323 = vld [vmem:[%s288 + $0x6c] sm:$0xf]
        %v324 = vld [vmem:[%s288 + $0x70] sm:$0xf]
        %v325 = vld [vmem:[%s288 + $0x74] sm:$0xf]
        %v326 = vld [vmem:[%s288 + $0x78] sm:$0xf]
        %v327 = vld [vmem:[%s288 + $0x7c] sm:$0xf]
        %v328 = vunpack.c.l.bf16 %v296
        %v329 = vunpack.c.l.bf16 %v297
        %v330 = vunpack.c.l.bf16 %v298
        %v331 = vunpack.c.l.bf16 %v299
        %v332 = vunpack.c.l.bf16 %v300
        %v333 = vunpack.c.l.bf16 %v301
        %v334 = vunpack.c.l.bf16 %v302
        %v335 = vunpack.c.l.bf16 %v303
        %v336 = vunpack.c.l.bf16 %v304
        %v337 = vunpack.c.l.bf16 %v305
        %v338 = vunpack.c.l.bf16 %v306
        %v339 = vunpack.c.l.bf16 %v307
        %v340 = vunpack.c.l.bf16 %v308
        %v341 = vunpack.c.l.bf16 %v309
        %v342 = vunpack.c.l.bf16 %v310
        %v343 = vunpack.c.l.bf16 %v311
        %v344 = vunpack.c.l.bf16 %v312
        %v345 = vunpack.c.l.bf16 %v313
        %v346 = vunpack.c.l.bf16 %v314
        %v347 = vunpack.c.l.bf16 %v315
        %v348 = vunpack.c.l.bf16 %v316
        %v349 = vunpack.c.l.bf16 %v317
        %v350 = vunpack.c.l.bf16 %v318
        %v351 = vunpack.c.l.bf16 %v319
        %v352 = vunpack.c.l.bf16 %v320
        %v353 = vunpack.c.l.bf16 %v321
        %v354 = vunpack.c.l.bf16 %v322
        %v355 = vunpack.c.l.bf16 %v323
        %v356 = vunpack.c.l.bf16 %v324
        %v357 = vunpack.c.l.bf16 %v325
        %v358 = vunpack.c.l.bf16 %v326
        %v359 = vunpack.c.l.bf16 %v327
        %vm360 = vcmask 64512
        %361 = vst.msk [vmem:[#allocation2] sm:$0xff] %vm360, %v328
        %362 = vst.msk [vmem:[#allocation2 + $0x8] sm:$0xff] %vm360, %v329
        %363 = vst.msk [vmem:[#allocation2 + $0x10] sm:$0xff] %vm360, %v330
        %364 = vst.msk [vmem:[#allocation2 + $0x18] sm:$0xff] %vm360, %v331
        %365 = vst.msk [vmem:[#allocation2 + $0x20] sm:$0xff] %vm360, %v332
        %366 = vst.msk [vmem:[#allocation2 + $0x28] sm:$0xff] %vm360, %v333
        %367 = vst.msk [vmem:[#allocation2 + $0x30] sm:$0xff] %vm360, %v334
        %368 = vst.msk [vmem:[#allocation2 + $0x38] sm:$0xff] %vm360, %v335
        %369 = vst.msk [vmem:[#allocation2 + $0x40] sm:$0xff] %vm360, %v336
        %370 = vst.msk [vmem:[#allocation2 + $0x48] sm:$0xff] %vm360, %v337
        %371 = vst.msk [vmem:[#allocation2 + $0x50] sm:$0xff] %vm360, %v338
        %372 = vst.msk [vmem:[#allocation2 + $0x58] sm:$0xff] %vm360, %v339
        %373 = vst.msk [vmem:[#allocation2 + $0x60] sm:$0xff] %vm360, %v340
        %374 = vst.msk [vmem:[#allocation2 + $0x68] sm:$0xff] %vm360, %v341
        %375 = vst.msk [vmem:[#allocation2 + $0x70] sm:$0xff] %vm360, %v342
        %376 = vst.msk [vmem:[#allocation2 + $0x78] sm:$0xff] %vm360, %v343
        %377 = vst.msk [vmem:[#allocation2 + $0x80] sm:$0xff] %vm360, %v344
        %378 = vst.msk [vmem:[#allocation2 + $0x88] sm:$0xff] %vm360, %v345
        %379 = vst.msk [vmem:[#allocation2 + $0x90] sm:$0xff] %vm360, %v346
        %380 = vst.msk [vmem:[#allocation2 + $0x98] sm:$0xff] %vm360, %v347
        %381 = vst.msk [vmem:[#allocation2 + $0xa0] sm:$0xff] %vm360, %v348
        %382 = vst.msk [vmem:[#allocation2 + $0xa8] sm:$0xff] %vm360, %v349
        %383 = vst.msk [vmem:[#allocation2 + $0xb0] sm:$0xff] %vm360, %v350
        %384 = vst.msk [vmem:[#allocation2 + $0xb8] sm:$0xff] %vm360, %v351
        %385 = vst.msk [vmem:[#allocation2 + $0xc0] sm:$0xff] %vm360, %v352
        %386 = vst.msk [vmem:[#allocation2 + $0xc8] sm:$0xff] %vm360, %v353
        %387 = vst.msk [vmem:[#allocation2 + $0xd0] sm:$0xff] %vm360, %v354
        %388 = vst.msk [vmem:[#allocation2 + $0xd8] sm:$0xff] %vm360, %v355
        %389 = vst.msk [vmem:[#allocation2 + $0xe0] sm:$0xff] %vm360, %v356
        %390 = vst.msk [vmem:[#allocation2 + $0xe8] sm:$0xff] %vm360, %v357
        %391 = vst.msk [vmem:[#allocation2 + $0xf0] sm:$0xff] %vm360, %v358
        %392 = vst.msk [vmem:[#allocation2 + $0xf8] sm:$0xff] %vm360, %v359
        %v393 = vld [vmem:[#allocation2] sm:$0xff]
        %v394 = vld [vmem:[#allocation2 + $0x8] sm:$0xff]
        %v395 = vld [vmem:[#allocation2 + $0x10] sm:$0xff]
        %v396 = vld [vmem:[#allocation2 + $0x18] sm:$0xff]
        %v397 = vld [vmem:[#allocation2 + $0x20] sm:$0xff]
        %v398 = vld [vmem:[#allocation2 + $0x28] sm:$0xff]
        %v399 = vld [vmem:[#allocation2 + $0x30] sm:$0xff]
        %v400 = vld [vmem:[#allocation2 + $0x38] sm:$0xff]
        %v401 = vld [vmem:[#allocation2 + $0x40] sm:$0xff]
        %v402 = vld [vmem:[#allocation2 + $0x48] sm:$0xff]
        %v403 = vld [vmem:[#allocation2 + $0x50] sm:$0xff]
        %v404 = vld [vmem:[#allocation2 + $0x58] sm:$0xff]
        %v405 = vld [vmem:[#allocation2 + $0x60] sm:$0xff]
        %v406 = vld [vmem:[#allocation2 + $0x68] sm:$0xff]
        %v407 = vld [vmem:[#allocation2 + $0x70] sm:$0xff]
        %v408 = vld [vmem:[#allocation2 + $0x78] sm:$0xff]
        %v409 = vld [vmem:[#allocation2 + $0x80] sm:$0xff]
        %v410 = vld [vmem:[#allocation2 + $0x88] sm:$0xff]
        %v411 = vld [vmem:[#allocation2 + $0x90] sm:$0xff]
        %v412 = vld [vmem:[#allocation2 + $0x98] sm:$0xff]
        %v413 = vld [vmem:[#allocation2 + $0xa0] sm:$0xff]
        %v414 = vld [vmem:[#allocation2 + $0xa8] sm:$0xff]
        %v415 = vld [vmem:[#allocation2 + $0xb0] sm:$0xff]
        %v416 = vld [vmem:[#allocation2 + $0xb8] sm:$0xff]
        %v417 = vld [vmem:[#allocation2 + $0xc0] sm:$0xff]
        %v418 = vld [vmem:[#allocation2 + $0xc8] sm:$0xff]
        %v419 = vpack.c.bf16 %v394, %v393
        %v420 = vpack.c.bf16 %v396, %v395
        %v421 = vpack.c.bf16 %v398, %v397
        %v422 = vpack.c.bf16 %v400, %v399
        %v423 = vpack.c.bf16 %v402, %v401
        %v424 = vpack.c.bf16 %v404, %v403
        %v425 = vpack.c.bf16 %v406, %v405
        %v426 = vpack.c.bf16 %v408, %v407
        %v427 = vpack.c.bf16 %v410, %v409
        %v428 = vpack.c.bf16 %v412, %v411
        %v429 = vpack.c.bf16 %v414, %v413
        %v430 = vpack.c.bf16 %v416, %v415
        %v431 = vpack.c.bf16 %v418, %v417
        %v432 = vld [vmem:[%s2] sm:$0xf]
        %v433 = vld [vmem:[#allocation2 + $0x1] sm:$0xff]
        %v434 = vld [vmem:[#allocation2 + $0x9] sm:$0xff]
        %v435 = vld [vmem:[#allocation2 + $0x11] sm:$0xff]
        %v436 = vld [vmem:[#allocation2 + $0x19] sm:$0xff]
        %v437 = vld [vmem:[#allocation2 + $0x21] sm:$0xff]
        %v438 = vld [vmem:[#allocation2 + $0x29] sm:$0xff]
        %v439 = vld [vmem:[#allocation2 + $0x31] sm:$0xff]
        %v440 = vld [vmem:[#allocation2 + $0x39] sm:$0xff]
        %v441 = vld [vmem:[#allocation2 + $0x41] sm:$0xff]
        %v442 = vld [vmem:[#allocation2 + $0x49] sm:$0xff]
        %v443 = vld [vmem:[#allocation2 + $0x51] sm:$0xff]
        %v444 = vld [vmem:[#allocation2 + $0x59] sm:$0xff]
        %v445 = vld [vmem:[#allocation2 + $0x61] sm:$0xff]
        %v446 = vld [vmem:[#allocation2 + $0x69] sm:$0xff]
        %v447 = vld [vmem:[#allocation2 + $0x71] sm:$0xff]
        %v448 = vld [vmem:[#allocation2 + $0x79] sm:$0xff]
        %v449 = vld [vmem:[#allocation2 + $0x81] sm:$0xff]
        %v450 = vld [vmem:[#allocation2 + $0x89] sm:$0xff]
        %v451 = vld [vmem:[#allocation2 + $0x91] sm:$0xff]
        %v452 = vld [vmem:[#allocation2 + $0x99] sm:$0xff]
        %v453 = vld [vmem:[#allocation2 + $0xa1] sm:$0xff]
        %v454 = vld [vmem:[#allocation2 + $0xa9] sm:$0xff]
        %v455 = vld [vmem:[#allocation2 + $0xb1] sm:$0xff]
        %v456 = vld [vmem:[#allocation2 + $0xb9] sm:$0xff]
        %v457 = vld [vmem:[#allocation2 + $0xc1] sm:$0xff]
        %v458 = vld [vmem:[#allocation2 + $0xc9] sm:$0xff]
        %v459 = vpack.c.bf16 %v434, %v433
        %v460 = vpack.c.bf16 %v436, %v435
        %v461 = vpack.c.bf16 %v438, %v437
        %v462 = vpack.c.bf16 %v440, %v439
        %v463 = vpack.c.bf16 %v442, %v441
        %v464 = vpack.c.bf16 %v444, %v443
        %v465 = vpack.c.bf16 %v446, %v445
        %v466 = vpack.c.bf16 %v448, %v447
        %v467 = vpack.c.bf16 %v450, %v449
        %v468 = vpack.c.bf16 %v452, %v451
        %v469 = vpack.c.bf16 %v454, %v453
        %v470 = vpack.c.bf16 %v456, %v455
        %v471 = vpack.c.bf16 %v458, %v457
        %s472 = scalar_lea.vmem %s2, 4
        %v473 = vld [vmem:[%s472] sm:$0xf]
        %v475 = vsel %vm360, %v459, 0
        %v478 = vsel %vm360, %v460, 0
        %v481 = vsel %vm360, %v461, 0
        %v484 = vsel %vm360, %v462, 0
        %v487 = vsel %vm360, %v463, 0
        %v490 = vsel %vm360, %v464, 0
        %v493 = vsel %vm360, %v465, 0
        %v496 = vsel %vm360, %v466, 0
        %v499 = vsel %vm360, %v467, 0
        %v502 = vsel %vm360, %v468, 0
        %v505 = vsel %vm360, %v469, 0
        %v508 = vsel %vm360, %v470, 0
        %v511 = vsel %vm360, %v471, 0
        %vm513 = vcmask 1043456
        %v515 = vsel %vm513, %v473, 0
        %517 = vmatpush.bf16.msra.mxu0 0
        %518 = vmatpush.bf16.msra.mxu0 0
        %519 = vmatpush.bf16.msra.mxu0 0
        %520 = vmatpush.bf16.msra.mxu0 0
        %521 = vmatpush.bf16.msra.mxu0 0
        %522 = vmatpush.bf16.msra.mxu0 0
        %523 = vmatpush.bf16.msra.mxu0 0
        %524 = vmatpush.bf16.msra.mxu0 %v515
        %525 = vmatmul.bf16.gmra.mxu0 %v475
        %v526 = vpop.f32.mrf.mxu0
        %v527 = vadd.f32 0.0, %v526
        %v528 = vpop.f32.mrf.mxu0
        %v529 = vadd.f32 0.0, %v528
        %530 = vmatmul.bf16.gmra.mxu0 %v478
        %v531 = vpop.f32.mrf.mxu0
        %v532 = vadd.f32 0.0, %v531
        %v533 = vpop.f32.mrf.mxu0
        %v534 = vadd.f32 0.0, %v533
        %535 = vmatmul.bf16.gmra.mxu0 %v481
        %v536 = vpop.f32.mrf.mxu0
        %v537 = vadd.f32 0.0, %v536
        %v538 = vpop.f32.mrf.mxu0
        %v539 = vadd.f32 0.0, %v538
        %540 = vmatmul.bf16.gmra.mxu0 %v484
        %v541 = vpop.f32.mrf.mxu0
        %v542 = vadd.f32 0.0, %v541
        %v543 = vpop.f32.mrf.mxu0
        %v544 = vadd.f32 0.0, %v543
        %545 = vmatmul.bf16.gmra.mxu0 %v487
        %v546 = vpop.f32.mrf.mxu0
        %v547 = vadd.f32 0.0, %v546
        %v548 = vpop.f32.mrf.mxu0
        %v549 = vadd.f32 0.0, %v548
        %550 = vmatmul.bf16.gmra.mxu0 %v490
        %v551 = vpop.f32.mrf.mxu0
        %v552 = vadd.f32 0.0, %v551
        %v553 = vpop.f32.mrf.mxu0
        %v554 = vadd.f32 0.0, %v553
        %555 = vmatmul.bf16.gmra.mxu0 %v493
        %v556 = vpop.f32.mrf.mxu0
        %v557 = vadd.f32 0.0, %v556
        %v558 = vpop.f32.mrf.mxu0
        %v559 = vadd.f32 0.0, %v558
        %560 = vmatmul.bf16.gmra.mxu0 %v496
        %v561 = vpop.f32.mrf.mxu0
        %v562 = vadd.f32 0.0, %v561
        %v563 = vpop.f32.mrf.mxu0
        %v564 = vadd.f32 0.0, %v563
        %565 = vmatmul.bf16.gmra.mxu0 %v499
        %v566 = vpop.f32.mrf.mxu0
        %v567 = vadd.f32 0.0, %v566
        %v568 = vpop.f32.mrf.mxu0
        %v569 = vadd.f32 0.0, %v568
        %570 = vmatmul.bf16.gmra.mxu0 %v502
        %v571 = vpop.f32.mrf.mxu0
        %v572 = vadd.f32 0.0, %v571
        %v573 = vpop.f32.mrf.mxu0
        %v574 = vadd.f32 0.0, %v573
        %575 = vmatmul.bf16.gmra.mxu0 %v505
        %v576 = vpop.f32.mrf.mxu0
        %v577 = vadd.f32 0.0, %v576
        %v578 = vpop.f32.mrf.mxu0
        %v579 = vadd.f32 0.0, %v578
        %580 = vmatmul.bf16.gmra.mxu0 %v508
        %v581 = vpop.f32.mrf.mxu0
        %v582 = vadd.f32 0.0, %v581
        %v583 = vpop.f32.mrf.mxu0
        %v584 = vadd.f32 0.0, %v583
        %585 = vmatmul.bf16.gmra.mxu0 %v511
        %v586 = vpop.f32.mrf.mxu0
        %v587 = vadd.f32 0.0, %v586
        %v588 = vpop.f32.mrf.mxu0
        %v589 = vadd.f32 0.0, %v588
        %590 = vdwg.mxu0
        %v592 = vsel %vm360, %v419, 0
        %v595 = vsel %vm360, %v420, 0
        %v598 = vsel %vm360, %v421, 0
        %v601 = vsel %vm360, %v422, 0
        %v604 = vsel %vm360, %v423, 0
        %v607 = vsel %vm360, %v424, 0
        %v610 = vsel %vm360, %v425, 0
        %v613 = vsel %vm360, %v426, 0
        %v616 = vsel %vm360, %v427, 0
        %v619 = vsel %vm360, %v428, 0
        %v622 = vsel %vm360, %v429, 0
        %v625 = vsel %vm360, %v430, 0
        %v628 = vsel %vm360, %v431, 0
        %v631 = vsel %vm513, %v432, 0
        %633 = vmatpush.bf16.msra.mxu0 0
        %634 = vmatpush.bf16.msra.mxu0 0
        %635 = vmatpush.bf16.msra.mxu0 0
        %636 = vmatpush.bf16.msra.mxu0 0
        %637 = vmatpush.bf16.msra.mxu0 0
        %638 = vmatpush.bf16.msra.mxu0 0
        %639 = vmatpush.bf16.msra.mxu0 0
        %640 = vmatpush.bf16.msra.mxu0 %v631
        %641 = vmatmul.bf16.gmra.mxu0 %v592
        %v642 = vpop.f32.mrf.mxu0
        %v643 = vadd.f32 %v527, %v642
        %v644 = vpop.f32.mrf.mxu0
        %v645 = vadd.f32 %v529, %v644
        %646 = vmatmul.bf16.gmra.mxu0 %v595
        %v647 = vpop.f32.mrf.mxu0
        %v648 = vadd.f32 %v532, %v647
        %v649 = vpop.f32.mrf.mxu0
        %v650 = vadd.f32 %v534, %v649
        %651 = vmatmul.bf16.gmra.mxu0 %v598
        %v652 = vpop.f32.mrf.mxu0
        %v653 = vadd.f32 %v537, %v652
        %v654 = vpop.f32.mrf.mxu0
        %v655 = vadd.f32 %v539, %v654
        %656 = vmatmul.bf16.gmra.mxu0 %v601
        %v657 = vpop.f32.mrf.mxu0
        %v658 = vadd.f32 %v542, %v657
        %v659 = vpop.f32.mrf.mxu0
        %v660 = vadd.f32 %v544, %v659
        %661 = vmatmul.bf16.gmra.mxu0 %v604
        %v662 = vpop.f32.mrf.mxu0
        %v663 = vadd.f32 %v547, %v662
        %v664 = vpop.f32.mrf.mxu0
        %v665 = vadd.f32 %v549, %v664
        %666 = vmatmul.bf16.gmra.mxu0 %v607
        %v667 = vpop.f32.mrf.mxu0
        %v668 = vadd.f32 %v552, %v667
        %v669 = vpop.f32.mrf.mxu0
        %v670 = vadd.f32 %v554, %v669
        %671 = vmatmul.bf16.gmra.mxu0 %v610
        %v672 = vpop.f32.mrf.mxu0
        %v673 = vadd.f32 %v557, %v672
        %v674 = vpop.f32.mrf.mxu0
        %v675 = vadd.f32 %v559, %v674
        %676 = vmatmul.bf16.gmra.mxu0 %v613
        %v677 = vpop.f32.mrf.mxu0
        %v678 = vadd.f32 %v562, %v677
        %v679 = vpop.f32.mrf.mxu0
        %v680 = vadd.f32 %v564, %v679
        %681 = vmatmul.bf16.gmra.mxu0 %v616
        %v682 = vpop.f32.mrf.mxu0
        %v683 = vadd.f32 %v567, %v682
        %v684 = vpop.f32.mrf.mxu0
        %v685 = vadd.f32 %v569, %v684
        %686 = vmatmul.bf16.gmra.mxu0 %v619
        %v687 = vpop.f32.mrf.mxu0
        %v688 = vadd.f32 %v572, %v687
        %v689 = vpop.f32.mrf.mxu0
        %v690 = vadd.f32 %v574, %v689
        %691 = vmatmul.bf16.gmra.mxu0 %v622
        %v692 = vpop.f32.mrf.mxu0
        %v693 = vadd.f32 %v577, %v692
        %v694 = vpop.f32.mrf.mxu0
        %v695 = vadd.f32 %v579, %v694
        %696 = vmatmul.bf16.gmra.mxu0 %v625
        %v697 = vpop.f32.mrf.mxu0
        %v698 = vadd.f32 %v582, %v697
        %v699 = vpop.f32.mrf.mxu0
        %v700 = vadd.f32 %v584, %v699
        %701 = vmatmul.bf16.gmra.mxu0 %v628
        %v702 = vpop.f32.mrf.mxu0
        %v703 = vadd.f32 %v587, %v702
        %v704 = vpop.f32.mrf.mxu0
        %v705 = vadd.f32 %v589, %v704
        %706 = vdwg.mxu0
        %v707 = vld [vmem:[#allocation2 + $0x2] sm:$0xff]
        %v708 = vld [vmem:[#allocation2 + $0xa] sm:$0xff]
        %v709 = vld [vmem:[#allocation2 + $0x12] sm:$0xff]
        %v710 = vld [vmem:[#allocation2 + $0x1a] sm:$0xff]
        %v711 = vld [vmem:[#allocation2 + $0x22] sm:$0xff]
        %v712 = vld [vmem:[#allocation2 + $0x2a] sm:$0xff]
        %v713 = vld [vmem:[#allocation2 + $0x32] sm:$0xff]
        %v714 = vld [vmem:[#allocation2 + $0x3a] sm:$0xff]
        %v715 = vld [vmem:[#allocation2 + $0x42] sm:$0xff]
        %v716 = vld [vmem:[#allocation2 + $0x4a] sm:$0xff]
        %v717 = vld [vmem:[#allocation2 + $0x52] sm:$0xff]
        %v718 = vld [vmem:[#allocation2 + $0x5a] sm:$0xff]
        %v719 = vld [vmem:[#allocation2 + $0x62] sm:$0xff]
        %v720 = vld [vmem:[#allocation2 + $0x6a] sm:$0xff]
        %v721 = vld [vmem:[#allocation2 + $0x72] sm:$0xff]
        %v722 = vld [vmem:[#allocation2 + $0x7a] sm:$0xff]
        %v723 = vld [vmem:[#allocation2 + $0x82] sm:$0xff]
        %v724 = vld [vmem:[#allocation2 + $0x8a] sm:$0xff]
        %v725 = vld [vmem:[#allocation2 + $0x92] sm:$0xff]
        %v726 = vld [vmem:[#allocation2 + $0x9a] sm:$0xff]
        %v727 = vld [vmem:[#allocation2 + $0xa2] sm:$0xff]
        %v728 = vld [vmem:[#allocation2 + $0xaa] sm:$0xff]
        %v729 = vld [vmem:[#allocation2 + $0xb2] sm:$0xff]
        %v730 = vld [vmem:[#allocation2 + $0xba] sm:$0xff]
        %v731 = vld [vmem:[#allocation2 + $0xc2] sm:$0xff]
        %v732 = vld [vmem:[#allocation2 + $0xca] sm:$0xff]
        %v733 = vpack.c.bf16 %v708, %v707
        %v734 = vpack.c.bf16 %v710, %v709
        %v735 = vpack.c.bf16 %v712, %v711
        %v736 = vpack.c.bf16 %v714, %v713
        %v737 = vpack.c.bf16 %v716, %v715
        %v738 = vpack.c.bf16 %v718, %v717
        %v739 = vpack.c.bf16 %v720, %v719
        %v740 = vpack.c.bf16 %v722, %v721
        %v741 = vpack.c.bf16 %v724, %v723
        %v742 = vpack.c.bf16 %v726, %v725
        %v743 = vpack.c.bf16 %v728, %v727
        %v744 = vpack.c.bf16 %v730, %v729
        %v745 = vpack.c.bf16 %v732, %v731
        %s746 = scalar_lea.vmem %s2, 8
        %v747 = vld [vmem:[%s746] sm:$0xf]
        %v749 = vsel %vm360, %v733, 0
        %v752 = vsel %vm360, %v734, 0
        %v755 = vsel %vm360, %v735, 0
        %v758 = vsel %vm360, %v736, 0
        %v761 = vsel %vm360, %v737, 0
        %v764 = vsel %vm360, %v738, 0
        %v767 = vsel %vm360, %v739, 0
        %v770 = vsel %vm360, %v740, 0
        %v773 = vsel %vm360, %v741, 0
        %v776 = vsel %vm360, %v742, 0
        %v779 = vsel %vm360, %v743, 0
        %v782 = vsel %vm360, %v744, 0
        %v785 = vsel %vm360, %v745, 0
        %v788 = vsel %vm513, %v747, 0
        %790 = vmatpush.bf16.msra.mxu0 0
        %791 = vmatpush.bf16.msra.mxu0 0
        %792 = vmatpush.bf16.msra.mxu0 0
        %793 = vmatpush.bf16.msra.mxu0 0
        %794 = vmatpush.bf16.msra.mxu0 0
        %795 = vmatpush.bf16.msra.mxu0 0
        %796 = vmatpush.bf16.msra.mxu0 0
        %797 = vmatpush.bf16.msra.mxu0 %v788
        %798 = vmatmul.bf16.gmra.mxu0 %v749
        %v799 = vpop.f32.mrf.mxu0
        %v800 = vadd.f32 0.0, %v799
        %v801 = vpop.f32.mrf.mxu0
        %v802 = vadd.f32 0.0, %v801
        %803 = vmatmul.bf16.gmra.mxu0 %v752
        %v804 = vpop.f32.mrf.mxu0
        %v805 = vadd.f32 0.0, %v804
        %v806 = vpop.f32.mrf.mxu0
        %v807 = vadd.f32 0.0, %v806
        %808 = vmatmul.bf16.gmra.mxu0 %v755
        %v809 = vpop.f32.mrf.mxu0
        %v810 = vadd.f32 0.0, %v809
        %v811 = vpop.f32.mrf.mxu0
        %v812 = vadd.f32 0.0, %v811
        %813 = vmatmul.bf16.gmra.mxu0 %v758
        %v814 = vpop.f32.mrf.mxu0
        %v815 = vadd.f32 0.0, %v814
        %v816 = vpop.f32.mrf.mxu0
        %v817 = vadd.f32 0.0, %v816
        %818 = vmatmul.bf16.gmra.mxu0 %v761
        %v819 = vpop.f32.mrf.mxu0
        %v820 = vadd.f32 0.0, %v819
        %v821 = vpop.f32.mrf.mxu0
        %v822 = vadd.f32 0.0, %v821
        %823 = vmatmul.bf16.gmra.mxu0 %v764
        %v824 = vpop.f32.mrf.mxu0
        %v825 = vadd.f32 0.0, %v824
        %v826 = vpop.f32.mrf.mxu0
        %v827 = vadd.f32 0.0, %v826
        %828 = vmatmul.bf16.gmra.mxu0 %v767
        %v829 = vpop.f32.mrf.mxu0
        %v830 = vadd.f32 0.0, %v829
        %v831 = vpop.f32.mrf.mxu0
        %v832 = vadd.f32 0.0, %v831
        %833 = vmatmul.bf16.gmra.mxu0 %v770
        %v834 = vpop.f32.mrf.mxu0
        %v835 = vadd.f32 0.0, %v834
        %v836 = vpop.f32.mrf.mxu0
        %v837 = vadd.f32 0.0, %v836
        %838 = vmatmul.bf16.gmra.mxu0 %v773
        %v839 = vpop.f32.mrf.mxu0
        %v840 = vadd.f32 0.0, %v839
        %v841 = vpop.f32.mrf.mxu0
        %v842 = vadd.f32 0.0, %v841
        %843 = vmatmul.bf16.gmra.mxu0 %v776
        %v844 = vpop.f32.mrf.mxu0
        %v845 = vadd.f32 0.0, %v844
        %v846 = vpop.f32.mrf.mxu0
        %v847 = vadd.f32 0.0, %v846
        %848 = vmatmul.bf16.gmra.mxu0 %v779
        %v849 = vpop.f32.mrf.mxu0
        %v850 = vadd.f32 0.0, %v849
        %v851 = vpop.f32.mrf.mxu0
        %v852 = vadd.f32 0.0, %v851
        %853 = vmatmul.bf16.gmra.mxu0 %v782
        %v854 = vpop.f32.mrf.mxu0
        %v855 = vadd.f32 0.0, %v854
        %v856 = vpop.f32.mrf.mxu0
        %v857 = vadd.f32 0.0, %v856
        %858 = vmatmul.bf16.gmra.mxu0 %v785
        %v859 = vpop.f32.mrf.mxu0
        %v860 = vadd.f32 0.0, %v859
        %v861 = vpop.f32.mrf.mxu0
        %v862 = vadd.f32 0.0, %v861
        %863 = vdwg.mxu0
        %v864 = vadd.f32 %v643, %v800
        %v865 = vadd.f32 %v645, %v802
        %v866 = vadd.f32 %v648, %v805
        %v867 = vadd.f32 %v650, %v807
        %v868 = vadd.f32 %v653, %v810
        %v869 = vadd.f32 %v655, %v812
        %v870 = vadd.f32 %v658, %v815
        %v871 = vadd.f32 %v660, %v817
        %v872 = vadd.f32 %v663, %v820
        %v873 = vadd.f32 %v665, %v822
        %v874 = vadd.f32 %v668, %v825
        %v875 = vadd.f32 %v670, %v827
        %v876 = vadd.f32 %v673, %v830
        %v877 = vadd.f32 %v675, %v832
        %v878 = vadd.f32 %v678, %v835
        %v879 = vadd.f32 %v680, %v837
        %v880 = vadd.f32 %v683, %v840
        %v881 = vadd.f32 %v685, %v842
        %v882 = vadd.f32 %v688, %v845
        %v883 = vadd.f32 %v690, %v847
        %v884 = vadd.f32 %v693, %v850
        %v885 = vadd.f32 %v695, %v852
        %v886 = vadd.f32 %v698, %v855
        %v887 = vadd.f32 %v700, %v857
        %v888 = vadd.f32 %v703, %v860
        %v889 = vadd.f32 %v705, %v862
        %v890 = vld [vmem:[#allocation2 + $0x14] sm:$0xff]
        %v891 = vld [vmem:[#allocation2 + $0x1c] sm:$0xff]
        %v892 = vld [vmem:[#allocation2 + $0x24] sm:$0xff]
        %v893 = vld [vmem:[#allocation2 + $0x2c] sm:$0xff]
        %v894 = vld [vmem:[#allocation2 + $0x34] sm:$0xff]
        %v895 = vld [vmem:[#allocation2 + $0x3c] sm:$0xff]
        %v896 = vld [vmem:[#allocation2 + $0x44] sm:$0xff]
        %v897 = vld [vmem:[#allocation2 + $0x4c] sm:$0xff]
        %v898 = vld [vmem:[#allocation2 + $0x54] sm:$0xff]
        %v899 = vld [vmem:[#allocation2 + $0x5c] sm:$0xff]
        %v900 = vld [vmem:[#allocation2 + $0x64] sm:$0xff]
        %v901 = vld [vmem:[#allocation2 + $0x6c] sm:$0xff]
        %v902 = vld [vmem:[#allocation2 + $0x74] sm:$0xff]
        %v903 = vld [vmem:[#allocation2 + $0x7c] sm:$0xff]
        %v904 = vld [vmem:[#allocation2 + $0x84] sm:$0xff]
        %v905 = vld [vmem:[#allocation2 + $0x8c] sm:$0xff]
        %v906 = vld [vmem:[#allocation2 + $0x94] sm:$0xff]
        %v907 = vld [vmem:[#allocation2 + $0x9c] sm:$0xff]
        %v908 = vld [vmem:[#allocation2 + $0xa4] sm:$0xff]
        %v909 = vld [vmem:[#allocation2 + $0xac] sm:$0xff]
        %v910 = vld [vmem:[#allocation2 + $0xb4] sm:$0xff]
        %v911 = vld [vmem:[#allocation2 + $0xbc] sm:$0xff]
        %v912 = vld [vmem:[#allocation2 + $0xc4] sm:$0xff]
        %v913 = vld [vmem:[#allocation2 + $0xcc] sm:$0xff]
        %v914 = vld [vmem:[#allocation2 + $0xd4] sm:$0xff]
        %v915 = vld [vmem:[#allocation2 + $0xdc] sm:$0xff]
        %v916 = vpack.c.bf16 %v891, %v890
        %v917 = vpack.c.bf16 %v893, %v892
        %v918 = vpack.c.bf16 %v895, %v894
        %v919 = vpack.c.bf16 %v897, %v896
        %v920 = vpack.c.bf16 %v899, %v898
        %v921 = vpack.c.bf16 %v901, %v900
        %v922 = vpack.c.bf16 %v903, %v902
        %v923 = vpack.c.bf16 %v905, %v904
        %v924 = vpack.c.bf16 %v907, %v906
        %v925 = vpack.c.bf16 %v909, %v908
        %v926 = vpack.c.bf16 %v911, %v910
        %v927 = vpack.c.bf16 %v913, %v912
        %v928 = vpack.c.bf16 %v915, %v914
        %s929 = scalar_lea.vmem %s2, 12
        %v930 = vld [vmem:[%s929] sm:$0xf]
        %v932 = vsel %vm360, %v916, 0
        %v935 = vsel %vm360, %v917, 0
        %v938 = vsel %vm360, %v918, 0
        %v941 = vsel %vm360, %v919, 0
        %v944 = vsel %vm360, %v920, 0
        %v947 = vsel %vm360, %v921, 0
        %v950 = vsel %vm360, %v922, 0
        %v953 = vsel %vm360, %v923, 0
        %v956 = vsel %vm360, %v924, 0
        %v959 = vsel %vm360, %v925, 0
        %v962 = vsel %vm360, %v926, 0
        %v965 = vsel %vm360, %v927, 0
        %v968 = vsel %vm360, %v928, 0
        %v971 = vsel %vm513, %v930, 0
        %973 = vmatpush.bf16.msra.mxu0 0
        %974 = vmatpush.bf16.msra.mxu0 0
        %975 = vmatpush.bf16.msra.mxu0 0
        %976 = vmatpush.bf16.msra.mxu0 0
        %977 = vmatpush.bf16.msra.mxu0 0
        %978 = vmatpush.bf16.msra.mxu0 0
        %979 = vmatpush.bf16.msra.mxu0 0
        %980 = vmatpush.bf16.msra.mxu0 %v971
        %981 = vmatmul.bf16.gmra.mxu0 %v932
        %v982 = vpop.f32.mrf.mxu0
        %v983 = vadd.f32 0.0, %v982
        %v984 = vpop.f32.mrf.mxu0
        %v985 = vadd.f32 0.0, %v984
        %986 = vmatmul.bf16.gmra.mxu0 %v935
        %v987 = vpop.f32.mrf.mxu0
        %v988 = vadd.f32 0.0, %v987
        %v989 = vpop.f32.mrf.mxu0
        %v990 = vadd.f32 0.0, %v989
        %991 = vmatmul.bf16.gmra.mxu0 %v938
        %v992 = vpop.f32.mrf.mxu0
        %v993 = vadd.f32 0.0, %v992
        %v994 = vpop.f32.mrf.mxu0
        %v995 = vadd.f32 0.0, %v994
        %996 = vmatmul.bf16.gmra.mxu0 %v941
        %v997 = vpop.f32.mrf.mxu0
        %v998 = vadd.f32 0.0, %v997
        %v999 = vpop.f32.mrf.mxu0
        %v1000 = vadd.f32 0.0, %v999
        %1001 = vmatmul.bf16.gmra.mxu0 %v944
        %v1002 = vpop.f32.mrf.mxu0
        %v1003 = vadd.f32 0.0, %v1002
        %v1004 = vpop.f32.mrf.mxu0
        %v1005 = vadd.f32 0.0, %v1004
        %1006 = vmatmul.bf16.gmra.mxu0 %v947
        %v1007 = vpop.f32.mrf.mxu0
        %v1008 = vadd.f32 0.0, %v1007
        %v1009 = vpop.f32.mrf.mxu0
        %v1010 = vadd.f32 0.0, %v1009
        %1011 = vmatmul.bf16.gmra.mxu0 %v950
        %v1012 = vpop.f32.mrf.mxu0
        %v1013 = vadd.f32 0.0, %v1012
        %v1014 = vpop.f32.mrf.mxu0
        %v1015 = vadd.f32 0.0, %v1014
        %1016 = vmatmul.bf16.gmra.mxu0 %v953
        %v1017 = vpop.f32.mrf.mxu0
        %v1018 = vadd.f32 0.0, %v1017
        %v1019 = vpop.f32.mrf.mxu0
        %v1020 = vadd.f32 0.0, %v1019
        %1021 = vmatmul.bf16.gmra.mxu0 %v956
        %v1022 = vpop.f32.mrf.mxu0
        %v1023 = vadd.f32 0.0, %v1022
        %v1024 = vpop.f32.mrf.mxu0
        %v1025 = vadd.f32 0.0, %v1024
        %1026 = vmatmul.bf16.gmra.mxu0 %v959
        %v1027 = vpop.f32.mrf.mxu0
        %v1028 = vadd.f32 0.0, %v1027
        %v1029 = vpop.f32.mrf.mxu0
        %v1030 = vadd.f32 0.0, %v1029
        %1031 = vmatmul.bf16.gmra.mxu0 %v962
        %v1032 = vpop.f32.mrf.mxu0
        %v1033 = vadd.f32 0.0, %v1032
        %v1034 = vpop.f32.mrf.mxu0
        %v1035 = vadd.f32 0.0, %v1034
        %1036 = vmatmul.bf16.gmra.mxu0 %v965
        %v1037 = vpop.f32.mrf.mxu0
        %v1038 = vadd.f32 0.0, %v1037
        %v1039 = vpop.f32.mrf.mxu0
        %v1040 = vadd.f32 0.0, %v1039
        %1041 = vmatmul.bf16.gmra.mxu0 %v968
        %v1042 = vpop.f32.mrf.mxu0
        %v1043 = vadd.f32 0.0, %v1042
        %v1044 = vpop.f32.mrf.mxu0
        %v1045 = vadd.f32 0.0, %v1044
        %1046 = vdwg.mxu0
        %v1047 = vadd.f32 %v864, %v983
        %v1048 = vadd.f32 %v865, %v985
        %v1049 = vadd.f32 %v866, %v988
        %v1050 = vadd.f32 %v867, %v990
        %v1051 = vadd.f32 %v868, %v993
        %v1052 = vadd.f32 %v869, %v995
        %v1053 = vadd.f32 %v870, %v998
        %v1054 = vadd.f32 %v871, %v1000
        %v1055 = vadd.f32 %v872, %v1003
        %v1056 = vadd.f32 %v873, %v1005
        %v1057 = vadd.f32 %v874, %v1008
        %v1058 = vadd.f32 %v875, %v1010
        %v1059 = vadd.f32 %v876, %v1013
        %v1060 = vadd.f32 %v877, %v1015
        %v1061 = vadd.f32 %v878, %v1018
        %v1062 = vadd.f32 %v879, %v1020
        %v1063 = vadd.f32 %v880, %v1023
        %v1064 = vadd.f32 %v881, %v1025
        %v1065 = vadd.f32 %v882, %v1028
        %v1066 = vadd.f32 %v883, %v1030
        %v1067 = vadd.f32 %v884, %v1033
        %v1068 = vadd.f32 %v885, %v1035
        %v1069 = vadd.f32 %v886, %v1038
        %v1070 = vadd.f32 %v887, %v1040
        %v1071 = vadd.f32 %v888, %v1043
        %v1072 = vadd.f32 %v889, %v1045
        %v1073 = vld [vmem:[#allocation2 + $0x15] sm:$0xff]
        %v1074 = vld [vmem:[#allocation2 + $0x1d] sm:$0xff]
        %v1075 = vld [vmem:[#allocation2 + $0x25] sm:$0xff]
        %v1076 = vld [vmem:[#allocation2 + $0x2d] sm:$0xff]
        %v1077 = vld [vmem:[#allocation2 + $0x35] sm:$0xff]
        %v1078 = vld [vmem:[#allocation2 + $0x3d] sm:$0xff]
        %v1079 = vld [vmem:[#allocation2 + $0x45] sm:$0xff]
        %v1080 = vld [vmem:[#allocation2 + $0x4d] sm:$0xff]
        %v1081 = vld [vmem:[#allocation2 + $0x55] sm:$0xff]
        %v1082 = vld [vmem:[#allocation2 + $0x5d] sm:$0xff]
        %v1083 = vld [vmem:[#allocation2 + $0x65] sm:$0xff]
        %v1084 = vld [vmem:[#allocation2 + $0x6d] sm:$0xff]
        %v1085 = vld [vmem:[#allocation2 + $0x75] sm:$0xff]
        %v1086 = vld [vmem:[#allocation2 + $0x7d] sm:$0xff]
        %v1087 = vld [vmem:[#allocation2 + $0x85] sm:$0xff]
        %v1088 = vld [vmem:[#allocation2 + $0x8d] sm:$0xff]
        %v1089 = vld [vmem:[#allocation2 + $0x95] sm:$0xff]
        %v1090 = vld [vmem:[#allocation2 + $0x9d] sm:$0xff]
        %v1091 = vld [vmem:[#allocation2 + $0xa5] sm:$0xff]
        %v1092 = vld [vmem:[#allocation2 + $0xad] sm:$0xff]
        %v1093 = vld [vmem:[#allocation2 + $0xb5] sm:$0xff]
        %v1094 = vld [vmem:[#allocation2 + $0xbd] sm:$0xff]
        %v1095 = vld [vmem:[#allocation2 + $0xc5] sm:$0xff]
        %v1096 = vld [vmem:[#allocation2 + $0xcd] sm:$0xff]
        %v1097 = vld [vmem:[#allocation2 + $0xd5] sm:$0xff]
        %v1098 = vld [vmem:[#allocation2 + $0xdd] sm:$0xff]
        %v1099 = vpack.c.bf16 %v1074, %v1073
        %v1100 = vpack.c.bf16 %v1076, %v1075
        %v1101 = vpack.c.bf16 %v1078, %v1077
        %v1102 = vpack.c.bf16 %v1080, %v1079
        %v1103 = vpack.c.bf16 %v1082, %v1081
        %v1104 = vpack.c.bf16 %v1084, %v1083
        %v1105 = vpack.c.bf16 %v1086, %v1085
        %v1106 = vpack.c.bf16 %v1088, %v1087
        %v1107 = vpack.c.bf16 %v1090, %v1089
        %v1108 = vpack.c.bf16 %v1092, %v1091
        %v1109 = vpack.c.bf16 %v1094, %v1093
        %v1110 = vpack.c.bf16 %v1096, %v1095
        %v1111 = vpack.c.bf16 %v1098, %v1097
        %s1112 = scalar_lea.vmem %s2, 16
        %v1113 = vld [vmem:[%s1112] sm:$0xf]
        %v1115 = vsel %vm360, %v1099, 0
        %v1118 = vsel %vm360, %v1100, 0
        %v1121 = vsel %vm360, %v1101, 0
        %v1124 = vsel %vm360, %v1102, 0
        %v1127 = vsel %vm360, %v1103, 0
        %v1130 = vsel %vm360, %v1104, 0
        %v1133 = vsel %vm360, %v1105, 0
        %v1136 = vsel %vm360, %v1106, 0
        %v1139 = vsel %vm360, %v1107, 0
        %v1142 = vsel %vm360, %v1108, 0
        %v1145 = vsel %vm360, %v1109, 0
        %v1148 = vsel %vm360, %v1110, 0
        %v1151 = vsel %vm360, %v1111, 0
        %v1154 = vsel %vm513, %v1113, 0
        %1156 = vmatpush.bf16.msra.mxu0 0
        %1157 = vmatpush.bf16.msra.mxu0 0
        %1158 = vmatpush.bf16.msra.mxu0 0
        %1159 = vmatpush.bf16.msra.mxu0 0
        %1160 = vmatpush.bf16.msra.mxu0 0
        %1161 = vmatpush.bf16.msra.mxu0 0
        %1162 = vmatpush.bf16.msra.mxu0 0
        %1163 = vmatpush.bf16.msra.mxu0 %v1154
        %1164 = vmatmul.bf16.gmra.mxu0 %v1115
        %v1165 = vpop.f32.mrf.mxu0
        %v1166 = vadd.f32 0.0, %v1165
        %v1167 = vpop.f32.mrf.mxu0
        %v1168 = vadd.f32 0.0, %v1167
        %1169 = vmatmul.bf16.gmra.mxu0 %v1118
        %v1170 = vpop.f32.mrf.mxu0
        %v1171 = vadd.f32 0.0, %v1170
        %v1172 = vpop.f32.mrf.mxu0
        %v1173 = vadd.f32 0.0, %v1172
        %1174 = vmatmul.bf16.gmra.mxu0 %v1121
        %v1175 = vpop.f32.mrf.mxu0
        %v1176 = vadd.f32 0.0, %v1175
        %v1177 = vpop.f32.mrf.mxu0
        %v1178 = vadd.f32 0.0, %v1177
        %1179 = vmatmul.bf16.gmra.mxu0 %v1124
        %v1180 = vpop.f32.mrf.mxu0
        %v1181 = vadd.f32 0.0, %v1180
        %v1182 = vpop.f32.mrf.mxu0
        %v1183 = vadd.f32 0.0, %v1182
        %1184 = vmatmul.bf16.gmra.mxu0 %v1127
        %v1185 = vpop.f32.mrf.mxu0
        %v1186 = vadd.f32 0.0, %v1185
        %v1187 = vpop.f32.mrf.mxu0
        %v1188 = vadd.f32 0.0, %v1187
        %1189 = vmatmul.bf16.gmra.mxu0 %v1130
        %v1190 = vpop.f32.mrf.mxu0
        %v1191 = vadd.f32 0.0, %v1190
        %v1192 = vpop.f32.mrf.mxu0
        %v1193 = vadd.f32 0.0, %v1192
        %1194 = vmatmul.bf16.gmra.mxu0 %v1133
        %v1195 = vpop.f32.mrf.mxu0
        %v1196 = vadd.f32 0.0, %v1195
        %v1197 = vpop.f32.mrf.mxu0
        %v1198 = vadd.f32 0.0, %v1197
        %1199 = vmatmul.bf16.gmra.mxu0 %v1136
        %v1200 = vpop.f32.mrf.mxu0
        %v1201 = vadd.f32 0.0, %v1200
        %v1202 = vpop.f32.mrf.mxu0
        %v1203 = vadd.f32 0.0, %v1202
        %1204 = vmatmul.bf16.gmra.mxu0 %v1139
        %v1205 = vpop.f32.mrf.mxu0
        %v1206 = vadd.f32 0.0, %v1205
        %v1207 = vpop.f32.mrf.mxu0
        %v1208 = vadd.f32 0.0, %v1207
        %1209 = vmatmul.bf16.gmra.mxu0 %v1142
        %v1210 = vpop.f32.mrf.mxu0
        %v1211 = vadd.f32 0.0, %v1210
        %v1212 = vpop.f32.mrf.mxu0
        %v1213 = vadd.f32 0.0, %v1212
        %1214 = vmatmul.bf16.gmra.mxu0 %v1145
        %v1215 = vpop.f32.mrf.mxu0
        %v1216 = vadd.f32 0.0, %v1215
        %v1217 = vpop.f32.mrf.mxu0
        %v1218 = vadd.f32 0.0, %v1217
        %1219 = vmatmul.bf16.gmra.mxu0 %v1148
        %v1220 = vpop.f32.mrf.mxu0
        %v1221 = vadd.f32 0.0, %v1220
        %v1222 = vpop.f32.mrf.mxu0
        %v1223 = vadd.f32 0.0, %v1222
        %1224 = vmatmul.bf16.gmra.mxu0 %v1151
        %v1225 = vpop.f32.mrf.mxu0
        %v1226 = vadd.f32 0.0, %v1225
        %v1227 = vpop.f32.mrf.mxu0
        %v1228 = vadd.f32 0.0, %v1227
        %1229 = vdwg.mxu0
        %v1230 = vadd.f32 %v1047, %v1166
        %v1231 = vadd.f32 %v1048, %v1168
        %v1232 = vadd.f32 %v1049, %v1171
        %v1233 = vadd.f32 %v1050, %v1173
        %v1234 = vadd.f32 %v1051, %v1176
        %v1235 = vadd.f32 %v1052, %v1178
        %v1236 = vadd.f32 %v1053, %v1181
        %v1237 = vadd.f32 %v1054, %v1183
        %v1238 = vadd.f32 %v1055, %v1186
        %v1239 = vadd.f32 %v1056, %v1188
        %v1240 = vadd.f32 %v1057, %v1191
        %v1241 = vadd.f32 %v1058, %v1193
        %v1242 = vadd.f32 %v1059, %v1196
        %v1243 = vadd.f32 %v1060, %v1198
        %v1244 = vadd.f32 %v1061, %v1201
        %v1245 = vadd.f32 %v1062, %v1203
        %v1246 = vadd.f32 %v1063, %v1206
        %v1247 = vadd.f32 %v1064, %v1208
        %v1248 = vadd.f32 %v1065, %v1211
        %v1249 = vadd.f32 %v1066, %v1213
        %v1250 = vadd.f32 %v1067, %v1216
        %v1251 = vadd.f32 %v1068, %v1218
        %v1252 = vadd.f32 %v1069, %v1221
        %v1253 = vadd.f32 %v1070, %v1223
        %v1254 = vadd.f32 %v1071, %v1226
        %v1255 = vadd.f32 %v1072, %v1228
        %v1256 = vld [vmem:[#allocation2 + $0x16] sm:$0xff]
        %v1257 = vld [vmem:[#allocation2 + $0x1e] sm:$0xff]
        %v1258 = vld [vmem:[#allocation2 + $0x26] sm:$0xff]
        %v1259 = vld [vmem:[#allocation2 + $0x2e] sm:$0xff]
        %v1260 = vld [vmem:[#allocation2 + $0x36] sm:$0xff]
        %v1261 = vld [vmem:[#allocation2 + $0x3e] sm:$0xff]
        %v1262 = vld [vmem:[#allocation2 + $0x46] sm:$0xff]
        %v1263 = vld [vmem:[#allocation2 + $0x4e] sm:$0xff]
        %v1264 = vld [vmem:[#allocation2 + $0x56] sm:$0xff]
        %v1265 = vld [vmem:[#allocation2 + $0x5e] sm:$0xff]
        %v1266 = vld [vmem:[#allocation2 + $0x66] sm:$0xff]
        %v1267 = vld [vmem:[#allocation2 + $0x6e] sm:$0xff]
        %v1268 = vld [vmem:[#allocation2 + $0x76] sm:$0xff]
        %v1269 = vld [vmem:[#allocation2 + $0x7e] sm:$0xff]
        %v1270 = vld [vmem:[#allocation2 + $0x86] sm:$0xff]
        %v1271 = vld [vmem:[#allocation2 + $0x8e] sm:$0xff]
        %v1272 = vld [vmem:[#allocation2 + $0x96] sm:$0xff]
        %v1273 = vld [vmem:[#allocation2 + $0x9e] sm:$0xff]
        %v1274 = vld [vmem:[#allocation2 + $0xa6] sm:$0xff]
        %v1275 = vld [vmem:[#allocation2 + $0xae] sm:$0xff]
        %v1276 = vld [vmem:[#allocation2 + $0xb6] sm:$0xff]
        %v1277 = vld [vmem:[#allocation2 + $0xbe] sm:$0xff]
        %v1278 = vld [vmem:[#allocation2 + $0xc6] sm:$0xff]
        %v1279 = vld [vmem:[#allocation2 + $0xce] sm:$0xff]
        %v1280 = vld [vmem:[#allocation2 + $0xd6] sm:$0xff]
        %v1281 = vld [vmem:[#allocation2 + $0xde] sm:$0xff]
        %v1282 = vpack.c.bf16 %v1257, %v1256
        %v1283 = vpack.c.bf16 %v1259, %v1258
        %v1284 = vpack.c.bf16 %v1261, %v1260
        %v1285 = vpack.c.bf16 %v1263, %v1262
        %v1286 = vpack.c.bf16 %v1265, %v1264
        %v1287 = vpack.c.bf16 %v1267, %v1266
        %v1288 = vpack.c.bf16 %v1269, %v1268
        %v1289 = vpack.c.bf16 %v1271, %v1270
        %v1290 = vpack.c.bf16 %v1273, %v1272
        %v1291 = vpack.c.bf16 %v1275, %v1274
        %v1292 = vpack.c.bf16 %v1277, %v1276
        %v1293 = vpack.c.bf16 %v1279, %v1278
        %v1294 = vpack.c.bf16 %v1281, %v1280
        %s1295 = scalar_lea.vmem %s2, 20
        %v1296 = vld [vmem:[%s1295] sm:$0xf]
        %v1298 = vsel %vm360, %v1282, 0
        %v1301 = vsel %vm360, %v1283, 0
        %v1304 = vsel %vm360, %v1284, 0
        %v1307 = vsel %vm360, %v1285, 0
        %v1310 = vsel %vm360, %v1286, 0
        %v1313 = vsel %vm360, %v1287, 0
        %v1316 = vsel %vm360, %v1288, 0
        %v1319 = vsel %vm360, %v1289, 0
        %v1322 = vsel %vm360, %v1290, 0
        %v1325 = vsel %vm360, %v1291, 0
        %v1328 = vsel %vm360, %v1292, 0
        %v1331 = vsel %vm360, %v1293, 0
        %v1334 = vsel %vm360, %v1294, 0
        %v1337 = vsel %vm513, %v1296, 0
        %1339 = vmatpush.bf16.msra.mxu0 0
        %1340 = vmatpush.bf16.msra.mxu0 0
        %1341 = vmatpush.bf16.msra.mxu0 0
        %1342 = vmatpush.bf16.msra.mxu0 0
        %1343 = vmatpush.bf16.msra.mxu0 0
        %1344 = vmatpush.bf16.msra.mxu0 0
        %1345 = vmatpush.bf16.msra.mxu0 0
        %1346 = vmatpush.bf16.msra.mxu0 %v1337
        %1347 = vmatmul.bf16.gmra.mxu0 %v1298
        %v1348 = vpop.f32.mrf.mxu0
        %v1349 = vadd.f32 0.0, %v1348
        %v1350 = vpop.f32.mrf.mxu0
        %v1351 = vadd.f32 0.0, %v1350
        %1352 = vmatmul.bf16.gmra.mxu0 %v1301
        %v1353 = vpop.f32.mrf.mxu0
        %v1354 = vadd.f32 0.0, %v1353
        %v1355 = vpop.f32.mrf.mxu0
        %v1356 = vadd.f32 0.0, %v1355
        %1357 = vmatmul.bf16.gmra.mxu0 %v1304
        %v1358 = vpop.f32.mrf.mxu0
        %v1359 = vadd.f32 0.0, %v1358
        %v1360 = vpop.f32.mrf.mxu0
        %v1361 = vadd.f32 0.0, %v1360
        %1362 = vmatmul.bf16.gmra.mxu0 %v1307
        %v1363 = vpop.f32.mrf.mxu0
        %v1364 = vadd.f32 0.0, %v1363
        %v1365 = vpop.f32.mrf.mxu0
        %v1366 = vadd.f32 0.0, %v1365
        %1367 = vmatmul.bf16.gmra.mxu0 %v1310
        %v1368 = vpop.f32.mrf.mxu0
        %v1369 = vadd.f32 0.0, %v1368
        %v1370 = vpop.f32.mrf.mxu0
        %v1371 = vadd.f32 0.0, %v1370
        %1372 = vmatmul.bf16.gmra.mxu0 %v1313
        %v1373 = vpop.f32.mrf.mxu0
        %v1374 = vadd.f32 0.0, %v1373
        %v1375 = vpop.f32.mrf.mxu0
        %v1376 = vadd.f32 0.0, %v1375
        %1377 = vmatmul.bf16.gmra.mxu0 %v1316
        %v1378 = vpop.f32.mrf.mxu0
        %v1379 = vadd.f32 0.0, %v1378
        %v1380 = vpop.f32.mrf.mxu0
        %v1381 = vadd.f32 0.0, %v1380
        %1382 = vmatmul.bf16.gmra.mxu0 %v1319
        %v1383 = vpop.f32.mrf.mxu0
        %v1384 = vadd.f32 0.0, %v1383
        %v1385 = vpop.f32.mrf.mxu0
        %v1386 = vadd.f32 0.0, %v1385
        %1387 = vmatmul.bf16.gmra.mxu0 %v1322
        %v1388 = vpop.f32.mrf.mxu0
        %v1389 = vadd.f32 0.0, %v1388
        %v1390 = vpop.f32.mrf.mxu0
        %v1391 = vadd.f32 0.0, %v1390
        %1392 = vmatmul.bf16.gmra.mxu0 %v1325
        %v1393 = vpop.f32.mrf.mxu0
        %v1394 = vadd.f32 0.0, %v1393
        %v1395 = vpop.f32.mrf.mxu0
        %v1396 = vadd.f32 0.0, %v1395
        %1397 = vmatmul.bf16.gmra.mxu0 %v1328
        %v1398 = vpop.f32.mrf.mxu0
        %v1399 = vadd.f32 0.0, %v1398
        %v1400 = vpop.f32.mrf.mxu0
        %v1401 = vadd.f32 0.0, %v1400
        %1402 = vmatmul.bf16.gmra.mxu0 %v1331
        %v1403 = vpop.f32.mrf.mxu0
        %v1404 = vadd.f32 0.0, %v1403
        %v1405 = vpop.f32.mrf.mxu0
        %v1406 = vadd.f32 0.0, %v1405
        %1407 = vmatmul.bf16.gmra.mxu0 %v1334
        %v1408 = vpop.f32.mrf.mxu0
        %v1409 = vadd.f32 0.0, %v1408
        %v1410 = vpop.f32.mrf.mxu0
        %v1411 = vadd.f32 0.0, %v1410
        %1412 = vdwg.mxu0
        %v1413 = vadd.f32 %v1230, %v1349
        %v1414 = vadd.f32 %v1231, %v1351
        %v1415 = vadd.f32 %v1232, %v1354
        %v1416 = vadd.f32 %v1233, %v1356
        %v1417 = vadd.f32 %v1234, %v1359
        %v1418 = vadd.f32 %v1235, %v1361
        %v1419 = vadd.f32 %v1236, %v1364
        %v1420 = vadd.f32 %v1237, %v1366
        %v1421 = vadd.f32 %v1238, %v1369
        %v1422 = vadd.f32 %v1239, %v1371
        %v1423 = vadd.f32 %v1240, %v1374
        %v1424 = vadd.f32 %v1241, %v1376
        %v1425 = vadd.f32 %v1242, %v1379
        %v1426 = vadd.f32 %v1243, %v1381
        %v1427 = vadd.f32 %v1244, %v1384
        %v1428 = vadd.f32 %v1245, %v1386
        %v1429 = vadd.f32 %v1246, %v1389
        %v1430 = vadd.f32 %v1247, %v1391
        %v1431 = vadd.f32 %v1248, %v1394
        %v1432 = vadd.f32 %v1249, %v1396
        %v1433 = vadd.f32 %v1250, %v1399
        %v1434 = vadd.f32 %v1251, %v1401
        %v1435 = vadd.f32 %v1252, %v1404
        %v1436 = vadd.f32 %v1253, %v1406
        %v1437 = vadd.f32 %v1254, %v1409
        %v1438 = vadd.f32 %v1255, %v1411
        %v1439 = vld [vmem:[#allocation2 + $0x28] sm:$0xff]
        %v1440 = vld [vmem:[#allocation2 + $0x30] sm:$0xff]
        %v1441 = vld [vmem:[#allocation2 + $0x38] sm:$0xff]
        %v1442 = vld [vmem:[#allocation2 + $0x40] sm:$0xff]
        %v1443 = vld [vmem:[#allocation2 + $0x48] sm:$0xff]
        %v1444 = vld [vmem:[#allocation2 + $0x50] sm:$0xff]
        %v1445 = vld [vmem:[#allocation2 + $0x58] sm:$0xff]
        %v1446 = vld [vmem:[#allocation2 + $0x60] sm:$0xff]
        %v1447 = vld [vmem:[#allocation2 + $0x68] sm:$0xff]
        %v1448 = vld [vmem:[#allocation2 + $0x70] sm:$0xff]
        %v1449 = vld [vmem:[#allocation2 + $0x78] sm:$0xff]
        %v1450 = vld [vmem:[#allocation2 + $0x80] sm:$0xff]
        %v1451 = vld [vmem:[#allocation2 + $0x88] sm:$0xff]
        %v1452 = vld [vmem:[#allocation2 + $0x90] sm:$0xff]
        %v1453 = vld [vmem:[#allocation2 + $0x98] sm:$0xff]
        %v1454 = vld [vmem:[#allocation2 + $0xa0] sm:$0xff]
        %v1455 = vld [vmem:[#allocation2 + $0xa8] sm:$0xff]
        %v1456 = vld [vmem:[#allocation2 + $0xb0] sm:$0xff]
        %v1457 = vld [vmem:[#allocation2 + $0xb8] sm:$0xff]
        %v1458 = vld [vmem:[#allocation2 + $0xc0] sm:$0xff]
        %v1459 = vld [vmem:[#allocation2 + $0xc8] sm:$0xff]
        %v1460 = vld [vmem:[#allocation2 + $0xd0] sm:$0xff]
        %v1461 = vld [vmem:[#allocation2 + $0xd8] sm:$0xff]
        %v1462 = vld [vmem:[#allocation2 + $0xe0] sm:$0xff]
        %v1463 = vld [vmem:[#allocation2 + $0xe8] sm:$0xff]
        %v1464 = vld [vmem:[#allocation2 + $0xf0] sm:$0xff]
        %v1465 = vpack.c.bf16 %v1440, %v1439
        %v1466 = vpack.c.bf16 %v1442, %v1441
        %v1467 = vpack.c.bf16 %v1444, %v1443
        %v1468 = vpack.c.bf16 %v1446, %v1445
        %v1469 = vpack.c.bf16 %v1448, %v1447
        %v1470 = vpack.c.bf16 %v1450, %v1449
        %v1471 = vpack.c.bf16 %v1452, %v1451
        %v1472 = vpack.c.bf16 %v1454, %v1453
        %v1473 = vpack.c.bf16 %v1456, %v1455
        %v1474 = vpack.c.bf16 %v1458, %v1457
        %v1475 = vpack.c.bf16 %v1460, %v1459
        %v1476 = vpack.c.bf16 %v1462, %v1461
        %v1477 = vpack.c.bf16 %v1464, %v1463
        %s1478 = scalar_lea.vmem %s2, 24
        %v1479 = vld [vmem:[%s1478] sm:$0xf]
        %v1481 = vsel %vm360, %v1465, 0
        %v1484 = vsel %vm360, %v1466, 0
        %v1487 = vsel %vm360, %v1467, 0
        %v1490 = vsel %vm360, %v1468, 0
        %v1493 = vsel %vm360, %v1469, 0
        %v1496 = vsel %vm360, %v1470, 0
        %v1499 = vsel %vm360, %v1471, 0
        %v1502 = vsel %vm360, %v1472, 0
        %v1505 = vsel %vm360, %v1473, 0
        %v1508 = vsel %vm360, %v1474, 0
        %v1511 = vsel %vm360, %v1475, 0
        %v1514 = vsel %vm360, %v1476, 0
        %v1517 = vsel %vm360, %v1477, 0
        %v1520 = vsel %vm513, %v1479, 0
        %1522 = vmatpush.bf16.msra.mxu0 0
        %1523 = vmatpush.bf16.msra.mxu0 0
        %1524 = vmatpush.bf16.msra.mxu0 0
        %1525 = vmatpush.bf16.msra.mxu0 0
        %1526 = vmatpush.bf16.msra.mxu0 0
        %1527 = vmatpush.bf16.msra.mxu0 0
        %1528 = vmatpush.bf16.msra.mxu0 0
        %1529 = vmatpush.bf16.msra.mxu0 %v1520
        %1530 = vmatmul.bf16.gmra.mxu0 %v1481
        %v1531 = vpop.f32.mrf.mxu0
        %v1532 = vadd.f32 0.0, %v1531
        %v1533 = vpop.f32.mrf.mxu0
        %v1534 = vadd.f32 0.0, %v1533
        %1535 = vmatmul.bf16.gmra.mxu0 %v1484
        %v1536 = vpop.f32.mrf.mxu0
        %v1537 = vadd.f32 0.0, %v1536
        %v1538 = vpop.f32.mrf.mxu0
        %v1539 = vadd.f32 0.0, %v1538
        %1540 = vmatmul.bf16.gmra.mxu0 %v1487
        %v1541 = vpop.f32.mrf.mxu0
        %v1542 = vadd.f32 0.0, %v1541
        %v1543 = vpop.f32.mrf.mxu0
        %v1544 = vadd.f32 0.0, %v1543
        %1545 = vmatmul.bf16.gmra.mxu0 %v1490
        %v1546 = vpop.f32.mrf.mxu0
        %v1547 = vadd.f32 0.0, %v1546
        %v1548 = vpop.f32.mrf.mxu0
        %v1549 = vadd.f32 0.0, %v1548
        %1550 = vmatmul.bf16.gmra.mxu0 %v1493
        %v1551 = vpop.f32.mrf.mxu0
        %v1552 = vadd.f32 0.0, %v1551
        %v1553 = vpop.f32.mrf.mxu0
        %v1554 = vadd.f32 0.0, %v1553
        %1555 = vmatmul.bf16.gmra.mxu0 %v1496
        %v1556 = vpop.f32.mrf.mxu0
        %v1557 = vadd.f32 0.0, %v1556
        %v1558 = vpop.f32.mrf.mxu0
        %v1559 = vadd.f32 0.0, %v1558
        %1560 = vmatmul.bf16.gmra.mxu0 %v1499
        %v1561 = vpop.f32.mrf.mxu0
        %v1562 = vadd.f32 0.0, %v1561
        %v1563 = vpop.f32.mrf.mxu0
        %v1564 = vadd.f32 0.0, %v1563
        %1565 = vmatmul.bf16.gmra.mxu0 %v1502
        %v1566 = vpop.f32.mrf.mxu0
        %v1567 = vadd.f32 0.0, %v1566
        %v1568 = vpop.f32.mrf.mxu0
        %v1569 = vadd.f32 0.0, %v1568
        %1570 = vmatmul.bf16.gmra.mxu0 %v1505
        %v1571 = vpop.f32.mrf.mxu0
        %v1572 = vadd.f32 0.0, %v1571
        %v1573 = vpop.f32.mrf.mxu0
        %v1574 = vadd.f32 0.0, %v1573
        %1575 = vmatmul.bf16.gmra.mxu0 %v1508
        %v1576 = vpop.f32.mrf.mxu0
        %v1577 = vadd.f32 0.0, %v1576
        %v1578 = vpop.f32.mrf.mxu0
        %v1579 = vadd.f32 0.0, %v1578
        %1580 = vmatmul.bf16.gmra.mxu0 %v1511
        %v1581 = vpop.f32.mrf.mxu0
        %v1582 = vadd.f32 0.0, %v1581
        %v1583 = vpop.f32.mrf.mxu0
        %v1584 = vadd.f32 0.0, %v1583
        %1585 = vmatmul.bf16.gmra.mxu0 %v1514
        %v1586 = vpop.f32.mrf.mxu0
        %v1587 = vadd.f32 0.0, %v1586
        %v1588 = vpop.f32.mrf.mxu0
        %v1589 = vadd.f32 0.0, %v1588
        %1590 = vmatmul.bf16.gmra.mxu0 %v1517
        %v1591 = vpop.f32.mrf.mxu0
        %v1592 = vadd.f32 0.0, %v1591
        %v1593 = vpop.f32.mrf.mxu0
        %v1594 = vadd.f32 0.0, %v1593
        %1595 = vdwg.mxu0
        %v1596 = vadd.f32 %v1413, %v1532
        %v1597 = vadd.f32 %v1414, %v1534
        %v1598 = vadd.f32 %v1415, %v1537
        %v1599 = vadd.f32 %v1416, %v1539
        %v1600 = vadd.f32 %v1417, %v1542
        %v1601 = vadd.f32 %v1418, %v1544
        %v1602 = vadd.f32 %v1419, %v1547
        %v1603 = vadd.f32 %v1420, %v1549
        %v1604 = vadd.f32 %v1421, %v1552
        %v1605 = vadd.f32 %v1422, %v1554
        %v1606 = vadd.f32 %v1423, %v1557
        %v1607 = vadd.f32 %v1424, %v1559
        %v1608 = vadd.f32 %v1425, %v1562
        %v1609 = vadd.f32 %v1426, %v1564
        %v1610 = vadd.f32 %v1427, %v1567
        %v1611 = vadd.f32 %v1428, %v1569
        %v1612 = vadd.f32 %v1429, %v1572
        %v1613 = vadd.f32 %v1430, %v1574
        %v1614 = vadd.f32 %v1431, %v1577
        %v1615 = vadd.f32 %v1432, %v1579
        %v1616 = vadd.f32 %v1433, %v1582
        %v1617 = vadd.f32 %v1434, %v1584
        %v1618 = vadd.f32 %v1435, %v1587
        %v1619 = vadd.f32 %v1436, %v1589
        %v1620 = vadd.f32 %v1437, %v1592
        %v1621 = vadd.f32 %v1438, %v1594
        %v1622 = vld [vmem:[#allocation2 + $0x29] sm:$0xff]
        %v1623 = vld [vmem:[#allocation2 + $0x31] sm:$0xff]
        %v1624 = vld [vmem:[#allocation2 + $0x39] sm:$0xff]
        %v1625 = vld [vmem:[#allocation2 + $0x41] sm:$0xff]
        %v1626 = vld [vmem:[#allocation2 + $0x49] sm:$0xff]
        %v1627 = vld [vmem:[#allocation2 + $0x51] sm:$0xff]
        %v1628 = vld [vmem:[#allocation2 + $0x59] sm:$0xff]
        %v1629 = vld [vmem:[#allocation2 + $0x61] sm:$0xff]
        %v1630 = vld [vmem:[#allocation2 + $0x69] sm:$0xff]
        %v1631 = vld [vmem:[#allocation2 + $0x71] sm:$0xff]
        %v1632 = vld [vmem:[#allocation2 + $0x79] sm:$0xff]
        %v1633 = vld [vmem:[#allocation2 + $0x81] sm:$0xff]
        %v1634 = vld [vmem:[#allocation2 + $0x89] sm:$0xff]
        %v1635 = vld [vmem:[#allocation2 + $0x91] sm:$0xff]
        %v1636 = vld [vmem:[#allocation2 + $0x99] sm:$0xff]
        %v1637 = vld [vmem:[#allocation2 + $0xa1] sm:$0xff]
        %v1638 = vld [vmem:[#allocation2 + $0xa9] sm:$0xff]
        %v1639 = vld [vmem:[#allocation2 + $0xb1] sm:$0xff]
        %v1640 = vld [vmem:[#allocation2 + $0xb9] sm:$0xff]
        %v1641 = vld [vmem:[#allocation2 + $0xc1] sm:$0xff]
        %v1642 = vld [vmem:[#allocation2 + $0xc9] sm:$0xff]
        %v1643 = vld [vmem:[#allocation2 + $0xd1] sm:$0xff]
        %v1644 = vld [vmem:[#allocation2 + $0xd9] sm:$0xff]
        %v1645 = vld [vmem:[#allocation2 + $0xe1] sm:$0xff]
        %v1646 = vld [vmem:[#allocation2 + $0xe9] sm:$0xff]
        %v1647 = vld [vmem:[#allocation2 + $0xf1] sm:$0xff]
        %v1648 = vpack.c.bf16 %v1623, %v1622
        %v1649 = vpack.c.bf16 %v1625, %v1624
        %v1650 = vpack.c.bf16 %v1627, %v1626
        %v1651 = vpack.c.bf16 %v1629, %v1628
        %v1652 = vpack.c.bf16 %v1631, %v1630
        %v1653 = vpack.c.bf16 %v1633, %v1632
        %v1654 = vpack.c.bf16 %v1635, %v1634
        %v1655 = vpack.c.bf16 %v1637, %v1636
        %v1656 = vpack.c.bf16 %v1639, %v1638
        %v1657 = vpack.c.bf16 %v1641, %v1640
        %v1658 = vpack.c.bf16 %v1643, %v1642
        %v1659 = vpack.c.bf16 %v1645, %v1644
        %v1660 = vpack.c.bf16 %v1647, %v1646
        %s1661 = scalar_lea.vmem %s2, 28
        %v1662 = vld [vmem:[%s1661] sm:$0xf]
        %v1664 = vsel %vm360, %v1648, 0
        %v1667 = vsel %vm360, %v1649, 0
        %v1670 = vsel %vm360, %v1650, 0
        %v1673 = vsel %vm360, %v1651, 0
        %v1676 = vsel %vm360, %v1652, 0
        %v1679 = vsel %vm360, %v1653, 0
        %v1682 = vsel %vm360, %v1654, 0
        %v1685 = vsel %vm360, %v1655, 0
        %v1688 = vsel %vm360, %v1656, 0
        %v1691 = vsel %vm360, %v1657, 0
        %v1694 = vsel %vm360, %v1658, 0
        %v1697 = vsel %vm360, %v1659, 0
        %v1700 = vsel %vm360, %v1660, 0
        %v1703 = vsel %vm513, %v1662, 0
        %1705 = vmatpush.bf16.msra.mxu0 0
        %1706 = vmatpush.bf16.msra.mxu0 0
        %1707 = vmatpush.bf16.msra.mxu0 0
        %1708 = vmatpush.bf16.msra.mxu0 0
        %1709 = vmatpush.bf16.msra.mxu0 0
        %1710 = vmatpush.bf16.msra.mxu0 0
        %1711 = vmatpush.bf16.msra.mxu0 0
        %1712 = vmatpush.bf16.msra.mxu0 %v1703
        %1713 = vmatmul.bf16.gmra.mxu0 %v1664
        %v1714 = vpop.f32.mrf.mxu0
        %v1715 = vadd.f32 0.0, %v1714
        %v1716 = vpop.f32.mrf.mxu0
        %v1717 = vadd.f32 0.0, %v1716
        %1718 = vmatmul.bf16.gmra.mxu0 %v1667
        %v1719 = vpop.f32.mrf.mxu0
        %v1720 = vadd.f32 0.0, %v1719
        %v1721 = vpop.f32.mrf.mxu0
        %v1722 = vadd.f32 0.0, %v1721
        %1723 = vmatmul.bf16.gmra.mxu0 %v1670
        %v1724 = vpop.f32.mrf.mxu0
        %v1725 = vadd.f32 0.0, %v1724
        %v1726 = vpop.f32.mrf.mxu0
        %v1727 = vadd.f32 0.0, %v1726
        %1728 = vmatmul.bf16.gmra.mxu0 %v1673
        %v1729 = vpop.f32.mrf.mxu0
        %v1730 = vadd.f32 0.0, %v1729
        %v1731 = vpop.f32.mrf.mxu0
        %v1732 = vadd.f32 0.0, %v1731
        %1733 = vmatmul.bf16.gmra.mxu0 %v1676
        %v1734 = vpop.f32.mrf.mxu0
        %v1735 = vadd.f32 0.0, %v1734
        %v1736 = vpop.f32.mrf.mxu0
        %v1737 = vadd.f32 0.0, %v1736
        %1738 = vmatmul.bf16.gmra.mxu0 %v1679
        %v1739 = vpop.f32.mrf.mxu0
        %v1740 = vadd.f32 0.0, %v1739
        %v1741 = vpop.f32.mrf.mxu0
        %v1742 = vadd.f32 0.0, %v1741
        %1743 = vmatmul.bf16.gmra.mxu0 %v1682
        %v1744 = vpop.f32.mrf.mxu0
        %v1745 = vadd.f32 0.0, %v1744
        %v1746 = vpop.f32.mrf.mxu0
        %v1747 = vadd.f32 0.0, %v1746
        %1748 = vmatmul.bf16.gmra.mxu0 %v1685
        %v1749 = vpop.f32.mrf.mxu0
        %v1750 = vadd.f32 0.0, %v1749
        %v1751 = vpop.f32.mrf.mxu0
        %v1752 = vadd.f32 0.0, %v1751
        %1753 = vmatmul.bf16.gmra.mxu0 %v1688
        %v1754 = vpop.f32.mrf.mxu0
        %v1755 = vadd.f32 0.0, %v1754
        %v1756 = vpop.f32.mrf.mxu0
        %v1757 = vadd.f32 0.0, %v1756
        %1758 = vmatmul.bf16.gmra.mxu0 %v1691
        %v1759 = vpop.f32.mrf.mxu0
        %v1760 = vadd.f32 0.0, %v1759
        %v1761 = vpop.f32.mrf.mxu0
        %v1762 = vadd.f32 0.0, %v1761
        %1763 = vmatmul.bf16.gmra.mxu0 %v1694
        %v1764 = vpop.f32.mrf.mxu0
        %v1765 = vadd.f32 0.0, %v1764
        %v1766 = vpop.f32.mrf.mxu0
        %v1767 = vadd.f32 0.0, %v1766
        %1768 = vmatmul.bf16.gmra.mxu0 %v1697
        %v1769 = vpop.f32.mrf.mxu0
        %v1770 = vadd.f32 0.0, %v1769
        %v1771 = vpop.f32.mrf.mxu0
        %v1772 = vadd.f32 0.0, %v1771
        %1773 = vmatmul.bf16.gmra.mxu0 %v1700
        %v1774 = vpop.f32.mrf.mxu0
        %v1775 = vadd.f32 0.0, %v1774
        %v1776 = vpop.f32.mrf.mxu0
        %v1777 = vadd.f32 0.0, %v1776
        %1778 = vdwg.mxu0
        %v1779 = vadd.f32 %v1596, %v1715
        %v1780 = vadd.f32 %v1597, %v1717
        %v1781 = vadd.f32 %v1598, %v1720
        %v1782 = vadd.f32 %v1599, %v1722
        %v1783 = vadd.f32 %v1600, %v1725
        %v1784 = vadd.f32 %v1601, %v1727
        %v1785 = vadd.f32 %v1602, %v1730
        %v1786 = vadd.f32 %v1603, %v1732
        %v1787 = vadd.f32 %v1604, %v1735
        %v1788 = vadd.f32 %v1605, %v1737
        %v1789 = vadd.f32 %v1606, %v1740
        %v1790 = vadd.f32 %v1607, %v1742
        %v1791 = vadd.f32 %v1608, %v1745
        %v1792 = vadd.f32 %v1609, %v1747
        %v1793 = vadd.f32 %v1610, %v1750
        %v1794 = vadd.f32 %v1611, %v1752
        %v1795 = vadd.f32 %v1612, %v1755
        %v1796 = vadd.f32 %v1613, %v1757
        %v1797 = vadd.f32 %v1614, %v1760
        %v1798 = vadd.f32 %v1615, %v1762
        %v1799 = vadd.f32 %v1616, %v1765
        %v1800 = vadd.f32 %v1617, %v1767
        %v1801 = vadd.f32 %v1618, %v1770
        %v1802 = vadd.f32 %v1619, %v1772
        %v1803 = vadd.f32 %v1620, %v1775
        %v1804 = vadd.f32 %v1621, %v1777
        %v1805 = vld [vmem:[#allocation2 + $0x2a] sm:$0xff]
        %v1806 = vld [vmem:[#allocation2 + $0x32] sm:$0xff]
        %v1807 = vld [vmem:[#allocation2 + $0x3a] sm:$0xff]
        %v1808 = vld [vmem:[#allocation2 + $0x42] sm:$0xff]
        %v1809 = vld [vmem:[#allocation2 + $0x4a] sm:$0xff]
        %v1810 = vld [vmem:[#allocation2 + $0x52] sm:$0xff]
        %v1811 = vld [vmem:[#allocation2 + $0x5a] sm:$0xff]
        %v1812 = vld [vmem:[#allocation2 + $0x62] sm:$0xff]
        %v1813 = vld [vmem:[#allocation2 + $0x6a] sm:$0xff]
        %v1814 = vld [vmem:[#allocation2 + $0x72] sm:$0xff]
        %v1815 = vld [vmem:[#allocation2 + $0x7a] sm:$0xff]
        %v1816 = vld [vmem:[#allocation2 + $0x82] sm:$0xff]
        %v1817 = vld [vmem:[#allocation2 + $0x8a] sm:$0xff]
        %v1818 = vld [vmem:[#allocation2 + $0x92] sm:$0xff]
        %v1819 = vld [vmem:[#allocation2 + $0x9a] sm:$0xff]
        %v1820 = vld [vmem:[#allocation2 + $0xa2] sm:$0xff]
        %v1821 = vld [vmem:[#allocation2 + $0xaa] sm:$0xff]
        %v1822 = vld [vmem:[#allocation2 + $0xb2] sm:$0xff]
        %v1823 = vld [vmem:[#allocation2 + $0xba] sm:$0xff]
        %v1824 = vld [vmem:[#allocation2 + $0xc2] sm:$0xff]
        %v1825 = vld [vmem:[#allocation2 + $0xca] sm:$0xff]
        %v1826 = vld [vmem:[#allocation2 + $0xd2] sm:$0xff]
        %v1827 = vld [vmem:[#allocation2 + $0xda] sm:$0xff]
        %v1828 = vld [vmem:[#allocation2 + $0xe2] sm:$0xff]
        %v1829 = vld [vmem:[#allocation2 + $0xea] sm:$0xff]
        %v1830 = vld [vmem:[#allocation2 + $0xf2] sm:$0xff]
        %v1831 = vpack.c.bf16 %v1806, %v1805
        %v1832 = vpack.c.bf16 %v1808, %v1807
        %v1833 = vpack.c.bf16 %v1810, %v1809
        %v1834 = vpack.c.bf16 %v1812, %v1811
        %v1835 = vpack.c.bf16 %v1814, %v1813
        %v1836 = vpack.c.bf16 %v1816, %v1815
        %v1837 = vpack.c.bf16 %v1818, %v1817
        %v1838 = vpack.c.bf16 %v1820, %v1819
        %v1839 = vpack.c.bf16 %v1822, %v1821
        %v1840 = vpack.c.bf16 %v1824, %v1823
        %v1841 = vpack.c.bf16 %v1826, %v1825
        %v1842 = vpack.c.bf16 %v1828, %v1827
        %v1843 = vpack.c.bf16 %v1830, %v1829
        %s1844 = scalar_lea.vmem %s2, 32
        %v1845 = vld [vmem:[%s1844] sm:$0xf]
        %v1847 = vsel %vm360, %v1831, 0
        %v1850 = vsel %vm360, %v1832, 0
        %v1853 = vsel %vm360, %v1833, 0
        %v1856 = vsel %vm360, %v1834, 0
        %v1859 = vsel %vm360, %v1835, 0
        %v1862 = vsel %vm360, %v1836, 0
        %v1865 = vsel %vm360, %v1837, 0
        %v1868 = vsel %vm360, %v1838, 0
        %v1871 = vsel %vm360, %v1839, 0
        %v1874 = vsel %vm360, %v1840, 0
        %v1877 = vsel %vm360, %v1841, 0
        %v1880 = vsel %vm360, %v1842, 0
        %v1883 = vsel %vm360, %v1843, 0
        %v1886 = vsel %vm513, %v1845, 0
        %1888 = vmatpush.bf16.msra.mxu0 0
        %1889 = vmatpush.bf16.msra.mxu0 0
        %1890 = vmatpush.bf16.msra.mxu0 0
        %1891 = vmatpush.bf16.msra.mxu0 0
        %1892 = vmatpush.bf16.msra.mxu0 0
        %1893 = vmatpush.bf16.msra.mxu0 0
        %1894 = vmatpush.bf16.msra.mxu0 0
        %1895 = vmatpush.bf16.msra.mxu0 %v1886
        %1896 = vmatmul.bf16.gmra.mxu0 %v1847
        %v1897 = vpop.f32.mrf.mxu0
        %v1898 = vadd.f32 0.0, %v1897
        %v1899 = vpop.f32.mrf.mxu0
        %v1900 = vadd.f32 0.0, %v1899
        %1901 = vmatmul.bf16.gmra.mxu0 %v1850
        %v1902 = vpop.f32.mrf.mxu0
        %v1903 = vadd.f32 0.0, %v1902
        %v1904 = vpop.f32.mrf.mxu0
        %v1905 = vadd.f32 0.0, %v1904
        %1906 = vmatmul.bf16.gmra.mxu0 %v1853
        %v1907 = vpop.f32.mrf.mxu0
        %v1908 = vadd.f32 0.0, %v1907
        %v1909 = vpop.f32.mrf.mxu0
        %v1910 = vadd.f32 0.0, %v1909
        %1911 = vmatmul.bf16.gmra.mxu0 %v1856
        %v1912 = vpop.f32.mrf.mxu0
        %v1913 = vadd.f32 0.0, %v1912
        %v1914 = vpop.f32.mrf.mxu0
        %v1915 = vadd.f32 0.0, %v1914
        %1916 = vmatmul.bf16.gmra.mxu0 %v1859
        %v1917 = vpop.f32.mrf.mxu0
        %v1918 = vadd.f32 0.0, %v1917
        %v1919 = vpop.f32.mrf.mxu0
        %v1920 = vadd.f32 0.0, %v1919
        %1921 = vmatmul.bf16.gmra.mxu0 %v1862
        %v1922 = vpop.f32.mrf.mxu0
        %v1923 = vadd.f32 0.0, %v1922
        %v1924 = vpop.f32.mrf.mxu0
        %v1925 = vadd.f32 0.0, %v1924
        %1926 = vmatmul.bf16.gmra.mxu0 %v1865
        %v1927 = vpop.f32.mrf.mxu0
        %v1928 = vadd.f32 0.0, %v1927
        %v1929 = vpop.f32.mrf.mxu0
        %v1930 = vadd.f32 0.0, %v1929
        %1931 = vmatmul.bf16.gmra.mxu0 %v1868
        %v1932 = vpop.f32.mrf.mxu0
        %v1933 = vadd.f32 0.0, %v1932
        %v1934 = vpop.f32.mrf.mxu0
        %v1935 = vadd.f32 0.0, %v1934
        %1936 = vmatmul.bf16.gmra.mxu0 %v1871
        %v1937 = vpop.f32.mrf.mxu0
        %v1938 = vadd.f32 0.0, %v1937
        %v1939 = vpop.f32.mrf.mxu0
        %v1940 = vadd.f32 0.0, %v1939
        %1941 = vmatmul.bf16.gmra.mxu0 %v1874
        %v1942 = vpop.f32.mrf.mxu0
        %v1943 = vadd.f32 0.0, %v1942
        %v1944 = vpop.f32.mrf.mxu0
        %v1945 = vadd.f32 0.0, %v1944
        %1946 = vmatmul.bf16.gmra.mxu0 %v1877
        %v1947 = vpop.f32.mrf.mxu0
        %v1948 = vadd.f32 0.0, %v1947
        %v1949 = vpop.f32.mrf.mxu0
        %v1950 = vadd.f32 0.0, %v1949
        %1951 = vmatmul.bf16.gmra.mxu0 %v1880
        %v1952 = vpop.f32.mrf.mxu0
        %v1953 = vadd.f32 0.0, %v1952
        %v1954 = vpop.f32.mrf.mxu0
        %v1955 = vadd.f32 0.0, %v1954
        %1956 = vmatmul.bf16.gmra.mxu0 %v1883
        %v1957 = vpop.f32.mrf.mxu0
        %v1958 = vadd.f32 0.0, %v1957
        %v1959 = vpop.f32.mrf.mxu0
        %v1960 = vadd.f32 0.0, %v1959
        %1961 = vdwg.mxu0
        %v1962 = vadd.f32 %v1779, %v1898
        %v1963 = vadd.f32 %v1780, %v1900
        %v1964 = vadd.f32 %v1781, %v1903
        %v1965 = vadd.f32 %v1782, %v1905
        %v1966 = vadd.f32 %v1783, %v1908
        %v1967 = vadd.f32 %v1784, %v1910
        %v1968 = vadd.f32 %v1785, %v1913
        %v1969 = vadd.f32 %v1786, %v1915
        %v1970 = vadd.f32 %v1787, %v1918
        %v1971 = vadd.f32 %v1788, %v1920
        %v1972 = vadd.f32 %v1789, %v1923
        %v1973 = vadd.f32 %v1790, %v1925
        %v1974 = vadd.f32 %v1791, %v1928
        %v1975 = vadd.f32 %v1792, %v1930
        %v1976 = vadd.f32 %v1793, %v1933
        %v1977 = vadd.f32 %v1794, %v1935
        %v1978 = vadd.f32 %v1795, %v1938
        %v1979 = vadd.f32 %v1796, %v1940
        %v1980 = vadd.f32 %v1797, %v1943
        %v1981 = vadd.f32 %v1798, %v1945
        %v1982 = vadd.f32 %v1799, %v1948
        %v1983 = vadd.f32 %v1800, %v1950
        %v1984 = vadd.f32 %v1801, %v1953
        %v1985 = vadd.f32 %v1802, %v1955
        %v1986 = vadd.f32 %v1803, %v1958
        %v1987 = vadd.f32 %v1804, %v1960
        %v1988 = vld [vmem:[%s3] sm:$0x1]
        %v1990 = vperm.slane %v1988, 0
        %v1992 = vadd.f32 %v1962, %v1990
        %v1993 = vadd.f32 %v1963, %v1990
        %v1994 = vadd.f32 %v1964, %v1990
        %v1995 = vadd.f32 %v1965, %v1990
        %v1996 = vadd.f32 %v1966, %v1990
        %v1997 = vadd.f32 %v1967, %v1990
        %v1998 = vadd.f32 %v1968, %v1990
        %v1999 = vadd.f32 %v1969, %v1990
        %v2000 = vadd.f32 %v1970, %v1990
        %v2001 = vadd.f32 %v1971, %v1990
        %v2002 = vadd.f32 %v1972, %v1990
        %v2003 = vadd.f32 %v1973, %v1990
        %v2004 = vadd.f32 %v1974, %v1990
        %v2005 = vadd.f32 %v1975, %v1990
        %v2006 = vadd.f32 %v1976, %v1990
        %v2007 = vadd.f32 %v1977, %v1990
        %v2008 = vadd.f32 %v1978, %v1990
        %v2009 = vadd.f32 %v1979, %v1990
        %v2010 = vadd.f32 %v1980, %v1990
        %v2011 = vadd.f32 %v1981, %v1990
        %v2012 = vadd.f32 %v1982, %v1990
        %v2013 = vadd.f32 %v1983, %v1990
        %v2014 = vadd.f32 %v1984, %v1990
        %v2015 = vadd.f32 %v1985, %v1990
        %v2016 = vadd.f32 %v1986, %v1990
        %v2017 = vadd.f32 %v1987, %v1990
        %v2018 = vsub.f32 0.0, %v1992
        %v2019 = vsub.f32 0.0, %v1993
        %v2020 = vsub.f32 0.0, %v1994
        %v2021 = vsub.f32 0.0, %v1995
        %v2022 = vsub.f32 0.0, %v1996
        %v2023 = vsub.f32 0.0, %v1997
        %v2024 = vsub.f32 0.0, %v1998
        %v2025 = vsub.f32 0.0, %v1999
        %v2026 = vsub.f32 0.0, %v2000
        %v2027 = vsub.f32 0.0, %v2001
        %v2028 = vsub.f32 0.0, %v2002
        %v2029 = vsub.f32 0.0, %v2003
        %v2030 = vsub.f32 0.0, %v2004
        %v2031 = vsub.f32 0.0, %v2005
        %v2032 = vsub.f32 0.0, %v2006
        %v2033 = vsub.f32 0.0, %v2007
        %v2034 = vsub.f32 0.0, %v2008
        %v2035 = vsub.f32 0.0, %v2009
        %v2036 = vsub.f32 0.0, %v2010
        %v2037 = vsub.f32 0.0, %v2011
        %v2038 = vsub.f32 0.0, %v2012
        %v2039 = vsub.f32 0.0, %v2013
        %v2040 = vsub.f32 0.0, %v2014
        %v2041 = vsub.f32 0.0, %v2015
        %v2042 = vsub.f32 0.0, %v2016
        %v2043 = vsub.f32 0.0, %v2017
        %v2044 = vmul.f32 %v2018, 1.442695
        %v2045 = vpow.pop %v2044
        %v2046 = vmul.f32 %v2019, 1.442695
        %v2047 = vpow.pop %v2046
        %v2048 = vmul.f32 %v2020, 1.442695
        %v2049 = vpow.pop %v2048
        %v2050 = vmul.f32 %v2021, 1.442695
        %v2051 = vpow.pop %v2050
        %v2052 = vmul.f32 %v2022, 1.442695
        %v2053 = vpow.pop %v2052
        %v2054 = vmul.f32 %v2023, 1.442695
        %v2055 = vpow.pop %v2054
        %v2056 = vmul.f32 %v2024, 1.442695
        %v2057 = vpow.pop %v2056
        %v2058 = vmul.f32 %v2025, 1.442695
        %v2059 = vpow.pop %v2058
        %v2060 = vmul.f32 %v2026, 1.442695
        %v2061 = vpow.pop %v2060
        %v2062 = vmul.f32 %v2027, 1.442695
        %v2063 = vpow.pop %v2062
        %v2064 = vmul.f32 %v2028, 1.442695
        %v2065 = vpow.pop %v2064
        %v2066 = vmul.f32 %v2029, 1.442695
        %v2067 = vpow.pop %v2066
        %v2068 = vmul.f32 %v2030, 1.442695
        %v2069 = vpow.pop %v2068
        %v2070 = vmul.f32 %v2031, 1.442695
        %v2071 = vpow.pop %v2070
        %v2072 = vmul.f32 %v2032, 1.442695
        %v2073 = vpow.pop %v2072
        %v2074 = vmul.f32 %v2033, 1.442695
        %v2075 = vpow.pop %v2074
        %v2076 = vmul.f32 %v2034, 1.442695
        %v2077 = vpow.pop %v2076
        %v2078 = vmul.f32 %v2035, 1.442695
        %v2079 = vpow.pop %v2078
        %v2080 = vmul.f32 %v2036, 1.442695
        %v2081 = vpow.pop %v2080
        %v2082 = vmul.f32 %v2037, 1.442695
        %v2083 = vpow.pop %v2082
        %v2084 = vmul.f32 %v2038, 1.442695
        %v2085 = vpow.pop %v2084
        %v2086 = vmul.f32 %v2039, 1.442695
        %v2087 = vpow.pop %v2086
        %v2088 = vmul.f32 %v2040, 1.442695
        %v2089 = vpow.pop %v2088
        %v2090 = vmul.f32 %v2041, 1.442695
        %v2091 = vpow.pop %v2090
        %v2092 = vmul.f32 %v2042, 1.442695
        %v2093 = vpow.pop %v2092
        %v2094 = vmul.f32 %v2043, 1.442695
        %v2095 = vpow.pop %v2094
        %v2096 = vadd.f32 %v2045, 1.0
        %v2097 = vadd.f32 %v2047, 1.0
        %v2098 = vadd.f32 %v2049, 1.0
        %v2099 = vadd.f32 %v2051, 1.0
        %v2100 = vadd.f32 %v2053, 1.0
        %v2101 = vadd.f32 %v2055, 1.0
        %v2102 = vadd.f32 %v2057, 1.0
        %v2103 = vadd.f32 %v2059, 1.0
        %v2104 = vadd.f32 %v2061, 1.0
        %v2105 = vadd.f32 %v2063, 1.0
        %v2106 = vadd.f32 %v2065, 1.0
        %v2107 = vadd.f32 %v2067, 1.0
        %v2108 = vadd.f32 %v2069, 1.0
        %v2109 = vadd.f32 %v2071, 1.0
        %v2110 = vadd.f32 %v2073, 1.0
        %v2111 = vadd.f32 %v2075, 1.0
        %v2112 = vadd.f32 %v2077, 1.0
        %v2113 = vadd.f32 %v2079, 1.0
        %v2114 = vadd.f32 %v2081, 1.0
        %v2115 = vadd.f32 %v2083, 1.0
        %v2116 = vadd.f32 %v2085, 1.0
        %v2117 = vadd.f32 %v2087, 1.0
        %v2118 = vadd.f32 %v2089, 1.0
        %v2119 = vadd.f32 %v2091, 1.0
        %v2120 = vadd.f32 %v2093, 1.0
        %v2121 = vadd.f32 %v2095, 1.0
        %v2122 = vrcp.pop %v2096
        %v2123 = vrcp.pop %v2097
        %v2124 = vrcp.pop %v2098
        %v2125 = vrcp.pop %v2099
        %v2126 = vrcp.pop %v2100
        %v2127 = vrcp.pop %v2101
        %v2128 = vrcp.pop %v2102
        %v2129 = vrcp.pop %v2103
        %v2130 = vrcp.pop %v2104
        %v2131 = vrcp.pop %v2105
        %v2132 = vrcp.pop %v2106
        %v2133 = vrcp.pop %v2107
        %v2134 = vrcp.pop %v2108
        %v2135 = vrcp.pop %v2109
        %v2136 = vrcp.pop %v2110
        %v2137 = vrcp.pop %v2111
        %v2138 = vrcp.pop %v2112
        %v2139 = vrcp.pop %v2113
        %v2140 = vrcp.pop %v2114
        %v2141 = vrcp.pop %v2115
        %v2142 = vrcp.pop %v2116
        %v2143 = vrcp.pop %v2117
        %v2144 = vrcp.pop %v2118
        %v2145 = vrcp.pop %v2119
        %v2146 = vrcp.pop %v2120
        %v2147 = vrcp.pop %v2121
        %v2148 = vmul.f32 %v1992, %v2122
        %v2149 = vmul.f32 %v1993, %v2123
        %v2150 = vmul.f32 %v1994, %v2124
        %v2151 = vmul.f32 %v1995, %v2125
        %v2152 = vmul.f32 %v1996, %v2126
        %v2153 = vmul.f32 %v1997, %v2127
        %v2154 = vmul.f32 %v1998, %v2128
        %v2155 = vmul.f32 %v1999, %v2129
        %v2156 = vmul.f32 %v2000, %v2130
        %v2157 = vmul.f32 %v2001, %v2131
        %v2158 = vmul.f32 %v2002, %v2132
        %v2159 = vmul.f32 %v2003, %v2133
        %v2160 = vmul.f32 %v2004, %v2134
        %v2161 = vmul.f32 %v2005, %v2135
        %v2162 = vmul.f32 %v2006, %v2136
        %v2163 = vmul.f32 %v2007, %v2137
        %v2164 = vmul.f32 %v2008, %v2138
        %v2165 = vmul.f32 %v2009, %v2139
        %v2166 = vmul.f32 %v2010, %v2140
        %v2167 = vmul.f32 %v2011, %v2141
        %v2168 = vmul.f32 %v2012, %v2142
        %v2169 = vmul.f32 %v2013, %v2143
        %v2170 = vmul.f32 %v2014, %v2144
        %v2171 = vmul.f32 %v2015, %v2145
        %v2172 = vmul.f32 %v2016, %v2146
        %v2173 = vmul.f32 %v2017, %v2147
        %v2174 = vld [vmem:[%s293] sm:$0xff]
        %v2175 = vld [vmem:[%s293 + $0x8] sm:$0xff]
        %v2176 = vld [vmem:[%s293 + $0x10] sm:$0xff]
        %v2177 = vld [vmem:[%s293 + $0x18] sm:$0xff]
        %v2178 = vld [vmem:[%s293 + $0x20] sm:$0xff]
        %v2179 = vld [vmem:[%s293 + $0x28] sm:$0xff]
        %v2180 = vld [vmem:[%s293 + $0x30] sm:$0xff]
        %v2181 = vld [vmem:[%s293 + $0x38] sm:$0xff]
        %v2182 = vld [vmem:[%s293 + $0x40] sm:$0xff]
        %v2183 = vld [vmem:[%s293 + $0x48] sm:$0xff]
        %v2184 = vld [vmem:[%s293 + $0x50] sm:$0xff]
        %v2185 = vld [vmem:[%s293 + $0x58] sm:$0xff]
        %v2186 = vld [vmem:[%s293 + $0x60] sm:$0xff]
        %v2187 = vld [vmem:[%s293 + $0x68] sm:$0xff]
        %v2188 = vld [vmem:[%s293 + $0x70] sm:$0xff]
        %v2189 = vld [vmem:[%s293 + $0x78] sm:$0xff]
        %v2190 = vld [vmem:[%s293 + $0x80] sm:$0xff]
        %v2191 = vld [vmem:[%s293 + $0x88] sm:$0xff]
        %v2192 = vld [vmem:[%s293 + $0x90] sm:$0xff]
        %v2193 = vld [vmem:[%s293 + $0x98] sm:$0xff]
        %v2194 = vld [vmem:[%s293 + $0xa0] sm:$0xff]
        %v2195 = vld [vmem:[%s293 + $0xa8] sm:$0xff]
        %v2196 = vld [vmem:[%s293 + $0xb0] sm:$0xff]
        %v2197 = vld [vmem:[%s293 + $0xb8] sm:$0xff]
        %v2198 = vld [vmem:[%s293 + $0xc0] sm:$0xff]
        %v2199 = vld [vmem:[%s293 + $0xc8] sm:$0xff]
        %2201 = vset.pattern.permute.xlu0 0
        %2202 = vperm.xlu0 %2201, %v2174
        %v2203 = vpop.permute.xlu0 %2202
        %2206 = vset.pattern.permute.xlu0 0
        %2207 = vperm.xlu0 %2206, %v2175
        %v2208 = vpop.permute.xlu0 %2207
        %2211 = vset.pattern.permute.xlu0 0
        %2212 = vperm.xlu0 %2211, %v2176
        %v2213 = vpop.permute.xlu0 %2212
        %2216 = vset.pattern.permute.xlu0 0
        %2217 = vperm.xlu0 %2216, %v2177
        %v2218 = vpop.permute.xlu0 %2217
        %2221 = vset.pattern.permute.xlu0 0
        %2222 = vperm.xlu0 %2221, %v2178
        %v2223 = vpop.permute.xlu0 %2222
        %2226 = vset.pattern.permute.xlu0 0
        %2227 = vperm.xlu0 %2226, %v2179
        %v2228 = vpop.permute.xlu0 %2227
        %2231 = vset.pattern.permute.xlu0 0
        %2232 = vperm.xlu0 %2231, %v2180
        %v2233 = vpop.permute.xlu0 %2232
        %2236 = vset.pattern.permute.xlu0 0
        %2237 = vperm.xlu0 %2236, %v2181
        %v2238 = vpop.permute.xlu0 %2237
        %2241 = vset.pattern.permute.xlu0 0
        %2242 = vperm.xlu0 %2241, %v2182
        %v2243 = vpop.permute.xlu0 %2242
        %2246 = vset.pattern.permute.xlu0 0
        %2247 = vperm.xlu0 %2246, %v2183
        %v2248 = vpop.permute.xlu0 %2247
        %2251 = vset.pattern.permute.xlu0 0
        %2252 = vperm.xlu0 %2251, %v2184
        %v2253 = vpop.permute.xlu0 %2252
        %2256 = vset.pattern.permute.xlu0 0
        %2257 = vperm.xlu0 %2256, %v2185
        %v2258 = vpop.permute.xlu0 %2257
        %2261 = vset.pattern.permute.xlu0 0
        %2262 = vperm.xlu0 %2261, %v2186
        %v2263 = vpop.permute.xlu0 %2262
        %2266 = vset.pattern.permute.xlu0 0
        %2267 = vperm.xlu0 %2266, %v2187
        %v2268 = vpop.permute.xlu0 %2267
        %2271 = vset.pattern.permute.xlu0 0
        %2272 = vperm.xlu0 %2271, %v2188
        %v2273 = vpop.permute.xlu0 %2272
        %2276 = vset.pattern.permute.xlu0 0
        %2277 = vperm.xlu0 %2276, %v2189
        %v2278 = vpop.permute.xlu0 %2277
        %2281 = vset.pattern.permute.xlu0 0
        %2282 = vperm.xlu0 %2281, %v2190
        %v2283 = vpop.permute.xlu0 %2282
        %2286 = vset.pattern.permute.xlu0 0
        %2287 = vperm.xlu0 %2286, %v2191
        %v2288 = vpop.permute.xlu0 %2287
        %2291 = vset.pattern.permute.xlu0 0
        %2292 = vperm.xlu0 %2291, %v2192
        %v2293 = vpop.permute.xlu0 %2292
        %2296 = vset.pattern.permute.xlu0 0
        %2297 = vperm.xlu0 %2296, %v2193
        %v2298 = vpop.permute.xlu0 %2297
        %2301 = vset.pattern.permute.xlu0 0
        %2302 = vperm.xlu0 %2301, %v2194
        %v2303 = vpop.permute.xlu0 %2302
        %2306 = vset.pattern.permute.xlu0 0
        %2307 = vperm.xlu0 %2306, %v2195
        %v2308 = vpop.permute.xlu0 %2307
        %2311 = vset.pattern.permute.xlu0 0
        %2312 = vperm.xlu0 %2311, %v2196
        %v2313 = vpop.permute.xlu0 %2312
        %2316 = vset.pattern.permute.xlu0 0
        %2317 = vperm.xlu0 %2316, %v2197
        %v2318 = vpop.permute.xlu0 %2317
        %2321 = vset.pattern.permute.xlu0 0
        %2322 = vperm.xlu0 %2321, %v2198
        %v2323 = vpop.permute.xlu0 %2322
        %2326 = vset.pattern.permute.xlu0 0
        %2327 = vperm.xlu0 %2326, %v2199
        %v2328 = vpop.permute.xlu0 %2327
        %v2330 = vmul.f32 %v2148, %v2203
        %v2331 = vmul.f32 %v2149, %v2208
        %v2332 = vmul.f32 %v2150, %v2213
        %v2333 = vmul.f32 %v2151, %v2218
        %v2334 = vmul.f32 %v2152, %v2223
        %v2335 = vmul.f32 %v2153, %v2228
        %v2336 = vmul.f32 %v2154, %v2233
        %v2337 = vmul.f32 %v2155, %v2238
        %v2338 = vmul.f32 %v2156, %v2243
        %v2339 = vmul.f32 %v2157, %v2248
        %v2340 = vmul.f32 %v2158, %v2253
        %v2341 = vmul.f32 %v2159, %v2258
        %v2342 = vmul.f32 %v2160, %v2263
        %v2343 = vmul.f32 %v2161, %v2268
        %v2344 = vmul.f32 %v2162, %v2273
        %v2345 = vmul.f32 %v2163, %v2278
        %v2346 = vmul.f32 %v2164, %v2283
        %v2347 = vmul.f32 %v2165, %v2288
        %v2348 = vmul.f32 %v2166, %v2293
        %v2349 = vmul.f32 %v2167, %v2298
        %v2350 = vmul.f32 %v2168, %v2303
        %v2351 = vmul.f32 %v2169, %v2308
        %v2352 = vmul.f32 %v2170, %v2313
        %v2353 = vmul.f32 %v2171, %v2318
        %v2354 = vmul.f32 %v2172, %v2323
        %v2355 = vmul.f32 %v2173, %v2328
        %2356 = vst.msk [vmem:[#allocation3] sm:$0xff] %vm360, %v2330
        %2357 = vst.msk [vmem:[#allocation3 + $0x8] sm:$0xff] %vm360, %v2331
        %2358 = vst.msk [vmem:[#allocation3 + $0x10] sm:$0xff] %vm360, %v2332
        %2359 = vst.msk [vmem:[#allocation3 + $0x18] sm:$0xff] %vm360, %v2333
        %2360 = vst.msk [vmem:[#allocation3 + $0x20] sm:$0xff] %vm360, %v2334
        %2361 = vst.msk [vmem:[#allocation3 + $0x28] sm:$0xff] %vm360, %v2335
        %2362 = vst.msk [vmem:[#allocation3 + $0x30] sm:$0xff] %vm360, %v2336
        %2363 = vst.msk [vmem:[#allocation3 + $0x38] sm:$0xff] %vm360, %v2337
        %2364 = vst.msk [vmem:[#allocation3 + $0x40] sm:$0xff] %vm360, %v2338
        %2365 = vst.msk [vmem:[#allocation3 + $0x48] sm:$0xff] %vm360, %v2339
        %2366 = vst.msk [vmem:[#allocation3 + $0x50] sm:$0xff] %vm360, %v2340
        %2367 = vst.msk [vmem:[#allocation3 + $0x58] sm:$0xff] %vm360, %v2341
        %2368 = vst.msk [vmem:[#allocation3 + $0x60] sm:$0xff] %vm360, %v2342
        %2369 = vst.msk [vmem:[#allocation3 + $0x68] sm:$0xff] %vm360, %v2343
        %2370 = vst.msk [vmem:[#allocation3 + $0x70] sm:$0xff] %vm360, %v2344
        %2371 = vst.msk [vmem:[#allocation3 + $0x78] sm:$0xff] %vm360, %v2345
        %2372 = vst.msk [vmem:[#allocation3 + $0x80] sm:$0xff] %vm360, %v2346
        %2373 = vst.msk [vmem:[#allocation3 + $0x88] sm:$0xff] %vm360, %v2347
        %2374 = vst.msk [vmem:[#allocation3 + $0x90] sm:$0xff] %vm360, %v2348
        %2375 = vst.msk [vmem:[#allocation3 + $0x98] sm:$0xff] %vm360, %v2349
        %2376 = vst.msk [vmem:[#allocation3 + $0xa0] sm:$0xff] %vm360, %v2350
        %2377 = vst.msk [vmem:[#allocation3 + $0xa8] sm:$0xff] %vm360, %v2351
        %2378 = vst.msk [vmem:[#allocation3 + $0xb0] sm:$0xff] %vm360, %v2352
        %2379 = vst.msk [vmem:[#allocation3 + $0xb8] sm:$0xff] %vm360, %v2353
        %2380 = vst.msk [vmem:[#allocation3 + $0xc0] sm:$0xff] %vm360, %v2354
        %2381 = vst.msk [vmem:[#allocation3 + $0xc8] sm:$0xff] %vm360, %v2355
        %v2382 = vld [vmem:[#allocation3] sm:$0xff]
        %v2383 = vld [vmem:[#allocation3 + $0x8] sm:$0xff]
        %v2384 = vld [vmem:[#allocation3 + $0x10] sm:$0xff]
        %v2385 = vld [vmem:[#allocation3 + $0x18] sm:$0xff]
        %v2386 = vld [vmem:[#allocation3 + $0x20] sm:$0xff]
        %v2387 = vld [vmem:[#allocation3 + $0x28] sm:$0xff]
        %v2388 = vld [vmem:[#allocation3 + $0x30] sm:$0xff]
        %v2389 = vld [vmem:[#allocation3 + $0x38] sm:$0xff]
        %v2390 = vld [vmem:[#allocation3 + $0x40] sm:$0xff]
        %v2391 = vld [vmem:[#allocation3 + $0x48] sm:$0xff]
        %v2392 = vld [vmem:[#allocation3 + $0x50] sm:$0xff]
        %v2393 = vld [vmem:[#allocation3 + $0x58] sm:$0xff]
        %v2394 = vld [vmem:[#allocation3 + $0x60] sm:$0xff]
        %v2395 = vld [vmem:[#allocation3 + $0x68] sm:$0xff]
        %v2396 = vld [vmem:[#allocation3 + $0x70] sm:$0xff]
        %v2397 = vld [vmem:[#allocation3 + $0x78] sm:$0xff]
        %v2398 = vld [vmem:[#allocation3 + $0x80] sm:$0xff]
        %v2399 = vld [vmem:[#allocation3 + $0x88] sm:$0xff]
        %v2400 = vld [vmem:[#allocation3 + $0x90] sm:$0xff]
        %v2401 = vld [vmem:[#allocation3 + $0x98] sm:$0xff]
        %v2402 = vpack.c.bf16 %v2383, %v2382
        %v2403 = vpack.c.bf16 %v2385, %v2384
        %v2404 = vpack.c.bf16 %v2387, %v2386
        %v2405 = vpack.c.bf16 %v2389, %v2388
        %v2406 = vpack.c.bf16 %v2391, %v2390
        %v2407 = vpack.c.bf16 %v2393, %v2392
        %v2408 = vpack.c.bf16 %v2395, %v2394
        %v2409 = vpack.c.bf16 %v2397, %v2396
        %v2410 = vpack.c.bf16 %v2399, %v2398
        %v2411 = vpack.c.bf16 %v2401, %v2400
        %v2412 = vld [vmem:[%s4] sm:$0xf]
        %v2413 = vld [vmem:[#allocation3 + $0x1] sm:$0xff]
        %v2414 = vld [vmem:[#allocation3 + $0x9] sm:$0xff]
        %v2415 = vld [vmem:[#allocation3 + $0x11] sm:$0xff]
        %v2416 = vld [vmem:[#allocation3 + $0x19] sm:$0xff]
        %v2417 = vld [vmem:[#allocation3 + $0x21] sm:$0xff]
        %v2418 = vld [vmem:[#allocation3 + $0x29] sm:$0xff]
        %v2419 = vld [vmem:[#allocation3 + $0x31] sm:$0xff]
        %v2420 = vld [vmem:[#allocation3 + $0x39] sm:$0xff]
        %v2421 = vld [vmem:[#allocation3 + $0x41] sm:$0xff]
        %v2422 = vld [vmem:[#allocation3 + $0x49] sm:$0xff]
        %v2423 = vld [vmem:[#allocation3 + $0x51] sm:$0xff]
        %v2424 = vld [vmem:[#allocation3 + $0x59] sm:$0xff]
        %v2425 = vld [vmem:[#allocation3 + $0x61] sm:$0xff]
        %v2426 = vld [vmem:[#allocation3 + $0x69] sm:$0xff]
        %v2427 = vld [vmem:[#allocation3 + $0x71] sm:$0xff]
        %v2428 = vld [vmem:[#allocation3 + $0x79] sm:$0xff]
        %v2429 = vld [vmem:[#allocation3 + $0x81] sm:$0xff]
        %v2430 = vld [vmem:[#allocation3 + $0x89] sm:$0xff]
        %v2431 = vld [vmem:[#allocation3 + $0x91] sm:$0xff]
        %v2432 = vld [vmem:[#allocation3 + $0x99] sm:$0xff]
        %v2433 = vpack.c.bf16 %v2414, %v2413
        %v2434 = vpack.c.bf16 %v2416, %v2415
        %v2435 = vpack.c.bf16 %v2418, %v2417
        %v2436 = vpack.c.bf16 %v2420, %v2419
        %v2437 = vpack.c.bf16 %v2422, %v2421
        %v2438 = vpack.c.bf16 %v2424, %v2423
        %v2439 = vpack.c.bf16 %v2426, %v2425
        %v2440 = vpack.c.bf16 %v2428, %v2427
        %v2441 = vpack.c.bf16 %v2430, %v2429
        %v2442 = vpack.c.bf16 %v2432, %v2431
        %s2443 = scalar_lea.vmem %s4, 4
        %v2444 = vld [vmem:[%s2443] sm:$0xf]
        %v2446 = vsel %vm360, %v2433, 0
        %v2449 = vsel %vm360, %v2434, 0
        %v2452 = vsel %vm360, %v2435, 0
        %v2455 = vsel %vm360, %v2436, 0
        %v2458 = vsel %vm360, %v2437, 0
        %v2461 = vsel %vm360, %v2438, 0
        %v2464 = vsel %vm360, %v2439, 0
        %v2467 = vsel %vm360, %v2440, 0
        %v2470 = vsel %vm360, %v2441, 0
        %v2473 = vsel %vm360, %v2442, 0
        %v2476 = vsel %vm513, %v2444, 0
        %2478 = vmatpush.bf16.msra.mxu0 0
        %2479 = vmatpush.bf16.msra.mxu0 0
        %2480 = vmatpush.bf16.msra.mxu0 0
        %2481 = vmatpush.bf16.msra.mxu0 0
        %2482 = vmatpush.bf16.msra.mxu0 0
        %2483 = vmatpush.bf16.msra.mxu0 0
        %2484 = vmatpush.bf16.msra.mxu0 0
        %2485 = vmatpush.bf16.msra.mxu0 %v2476
        %2486 = vmatmul.bf16.gmra.mxu0 %v2446
        %v2487 = vpop.f32.mrf.mxu0
        %v2488 = vadd.f32 0.0, %v2487
        %v2489 = vpop.f32.mrf.mxu0
        %v2490 = vadd.f32 0.0, %v2489
        %2491 = vmatmul.bf16.gmra.mxu0 %v2449
        %v2492 = vpop.f32.mrf.mxu0
        %v2493 = vadd.f32 0.0, %v2492
        %v2494 = vpop.f32.mrf.mxu0
        %v2495 = vadd.f32 0.0, %v2494
        %2496 = vmatmul.bf16.gmra.mxu0 %v2452
        %v2497 = vpop.f32.mrf.mxu0
        %v2498 = vadd.f32 0.0, %v2497
        %v2499 = vpop.f32.mrf.mxu0
        %v2500 = vadd.f32 0.0, %v2499
        %2501 = vmatmul.bf16.gmra.mxu0 %v2455
        %v2502 = vpop.f32.mrf.mxu0
        %v2503 = vadd.f32 0.0, %v2502
        %v2504 = vpop.f32.mrf.mxu0
        %v2505 = vadd.f32 0.0, %v2504
        %2506 = vmatmul.bf16.gmra.mxu0 %v2458
        %v2507 = vpop.f32.mrf.mxu0
        %v2508 = vadd.f32 0.0, %v2507
        %v2509 = vpop.f32.mrf.mxu0
        %v2510 = vadd.f32 0.0, %v2509
        %2511 = vmatmul.bf16.gmra.mxu0 %v2461
        %v2512 = vpop.f32.mrf.mxu0
        %v2513 = vadd.f32 0.0, %v2512
        %v2514 = vpop.f32.mrf.mxu0
        %v2515 = vadd.f32 0.0, %v2514
        %2516 = vmatmul.bf16.gmra.mxu0 %v2464
        %v2517 = vpop.f32.mrf.mxu0
        %v2518 = vadd.f32 0.0, %v2517
        %v2519 = vpop.f32.mrf.mxu0
        %v2520 = vadd.f32 0.0, %v2519
        %2521 = vmatmul.bf16.gmra.mxu0 %v2467
        %v2522 = vpop.f32.mrf.mxu0
        %v2523 = vadd.f32 0.0, %v2522
        %v2524 = vpop.f32.mrf.mxu0
        %v2525 = vadd.f32 0.0, %v2524
        %2526 = vmatmul.bf16.gmra.mxu0 %v2470
        %v2527 = vpop.f32.mrf.mxu0
        %v2528 = vadd.f32 0.0, %v2527
        %v2529 = vpop.f32.mrf.mxu0
        %v2530 = vadd.f32 0.0, %v2529
        %2531 = vmatmul.bf16.gmra.mxu0 %v2473
        %v2532 = vpop.f32.mrf.mxu0
        %v2533 = vadd.f32 0.0, %v2532
        %v2534 = vpop.f32.mrf.mxu0
        %v2535 = vadd.f32 0.0, %v2534
        %2536 = vdwg.mxu0
        %v2538 = vsel %vm360, %v2402, 0
        %v2541 = vsel %vm360, %v2403, 0
        %v2544 = vsel %vm360, %v2404, 0
        %v2547 = vsel %vm360, %v2405, 0
        %v2550 = vsel %vm360, %v2406, 0
        %v2553 = vsel %vm360, %v2407, 0
        %v2556 = vsel %vm360, %v2408, 0
        %v2559 = vsel %vm360, %v2409, 0
        %v2562 = vsel %vm360, %v2410, 0
        %v2565 = vsel %vm360, %v2411, 0
        %v2568 = vsel %vm513, %v2412, 0
        %2570 = vmatpush.bf16.msra.mxu0 0
        %2571 = vmatpush.bf16.msra.mxu0 0
        %2572 = vmatpush.bf16.msra.mxu0 0
        %2573 = vmatpush.bf16.msra.mxu0 0
        %2574 = vmatpush.bf16.msra.mxu0 0
        %2575 = vmatpush.bf16.msra.mxu0 0
        %2576 = vmatpush.bf16.msra.mxu0 0
        %2577 = vmatpush.bf16.msra.mxu0 %v2568
        %2578 = vmatmul.bf16.gmra.mxu0 %v2538
        %v2579 = vpop.f32.mrf.mxu0
        %v2580 = vadd.f32 %v2488, %v2579
        %v2581 = vpop.f32.mrf.mxu0
        %v2582 = vadd.f32 %v2490, %v2581
        %2583 = vmatmul.bf16.gmra.mxu0 %v2541
        %v2584 = vpop.f32.mrf.mxu0
        %v2585 = vadd.f32 %v2493, %v2584
        %v2586 = vpop.f32.mrf.mxu0
        %v2587 = vadd.f32 %v2495, %v2586
        %2588 = vmatmul.bf16.gmra.mxu0 %v2544
        %v2589 = vpop.f32.mrf.mxu0
        %v2590 = vadd.f32 %v2498, %v2589
        %v2591 = vpop.f32.mrf.mxu0
        %v2592 = vadd.f32 %v2500, %v2591
        %2593 = vmatmul.bf16.gmra.mxu0 %v2547
        %v2594 = vpop.f32.mrf.mxu0
        %v2595 = vadd.f32 %v2503, %v2594
        %v2596 = vpop.f32.mrf.mxu0
        %v2597 = vadd.f32 %v2505, %v2596
        %2598 = vmatmul.bf16.gmra.mxu0 %v2550
        %v2599 = vpop.f32.mrf.mxu0
        %v2600 = vadd.f32 %v2508, %v2599
        %v2601 = vpop.f32.mrf.mxu0
        %v2602 = vadd.f32 %v2510, %v2601
        %2603 = vmatmul.bf16.gmra.mxu0 %v2553
        %v2604 = vpop.f32.mrf.mxu0
        %v2605 = vadd.f32 %v2513, %v2604
        %v2606 = vpop.f32.mrf.mxu0
        %v2607 = vadd.f32 %v2515, %v2606
        %2608 = vmatmul.bf16.gmra.mxu0 %v2556
        %v2609 = vpop.f32.mrf.mxu0
        %v2610 = vadd.f32 %v2518, %v2609
        %v2611 = vpop.f32.mrf.mxu0
        %v2612 = vadd.f32 %v2520, %v2611
        %2613 = vmatmul.bf16.gmra.mxu0 %v2559
        %v2614 = vpop.f32.mrf.mxu0
        %v2615 = vadd.f32 %v2523, %v2614
        %v2616 = vpop.f32.mrf.mxu0
        %v2617 = vadd.f32 %v2525, %v2616
        %2618 = vmatmul.bf16.gmra.mxu0 %v2562
        %v2619 = vpop.f32.mrf.mxu0
        %v2620 = vadd.f32 %v2528, %v2619
        %v2621 = vpop.f32.mrf.mxu0
        %v2622 = vadd.f32 %v2530, %v2621
        %2623 = vmatmul.bf16.gmra.mxu0 %v2565
        %v2624 = vpop.f32.mrf.mxu0
        %v2625 = vadd.f32 %v2533, %v2624
        %v2626 = vpop.f32.mrf.mxu0
        %v2627 = vadd.f32 %v2535, %v2626
        %2628 = vdwg.mxu0
        %v2629 = vld [vmem:[#allocation3 + $0x2] sm:$0xff]
        %v2630 = vld [vmem:[#allocation3 + $0xa] sm:$0xff]
        %v2631 = vld [vmem:[#allocation3 + $0x12] sm:$0xff]
        %v2632 = vld [vmem:[#allocation3 + $0x1a] sm:$0xff]
        %v2633 = vld [vmem:[#allocation3 + $0x22] sm:$0xff]
        %v2634 = vld [vmem:[#allocation3 + $0x2a] sm:$0xff]
        %v2635 = vld [vmem:[#allocation3 + $0x32] sm:$0xff]
        %v2636 = vld [vmem:[#allocation3 + $0x3a] sm:$0xff]
        %v2637 = vld [vmem:[#allocation3 + $0x42] sm:$0xff]
        %v2638 = vld [vmem:[#allocation3 + $0x4a] sm:$0xff]
        %v2639 = vld [vmem:[#allocation3 + $0x52] sm:$0xff]
        %v2640 = vld [vmem:[#allocation3 + $0x5a] sm:$0xff]
        %v2641 = vld [vmem:[#allocation3 + $0x62] sm:$0xff]
        %v2642 = vld [vmem:[#allocation3 + $0x6a] sm:$0xff]
        %v2643 = vld [vmem:[#allocation3 + $0x72] sm:$0xff]
        %v2644 = vld [vmem:[#allocation3 + $0x7a] sm:$0xff]
        %v2645 = vld [vmem:[#allocation3 + $0x82] sm:$0xff]
        %v2646 = vld [vmem:[#allocation3 + $0x8a] sm:$0xff]
        %v2647 = vld [vmem:[#allocation3 + $0x92] sm:$0xff]
        %v2648 = vld [vmem:[#allocation3 + $0x9a] sm:$0xff]
        %v2649 = vpack.c.bf16 %v2630, %v2629
        %v2650 = vpack.c.bf16 %v2632, %v2631
        %v2651 = vpack.c.bf16 %v2634, %v2633
        %v2652 = vpack.c.bf16 %v2636, %v2635
        %v2653 = vpack.c.bf16 %v2638, %v2637
        %v2654 = vpack.c.bf16 %v2640, %v2639
        %v2655 = vpack.c.bf16 %v2642, %v2641
        %v2656 = vpack.c.bf16 %v2644, %v2643
        %v2657 = vpack.c.bf16 %v2646, %v2645
        %v2658 = vpack.c.bf16 %v2648, %v2647
        %s2659 = scalar_lea.vmem %s4, 8
        %v2660 = vld [vmem:[%s2659] sm:$0xf]
        %v2662 = vsel %vm360, %v2649, 0
        %v2665 = vsel %vm360, %v2650, 0
        %v2668 = vsel %vm360, %v2651, 0
        %v2671 = vsel %vm360, %v2652, 0
        %v2674 = vsel %vm360, %v2653, 0
        %v2677 = vsel %vm360, %v2654, 0
        %v2680 = vsel %vm360, %v2655, 0
        %v2683 = vsel %vm360, %v2656, 0
        %v2686 = vsel %vm360, %v2657, 0
        %v2689 = vsel %vm360, %v2658, 0
        %v2692 = vsel %vm513, %v2660, 0
        %2694 = vmatpush.bf16.msra.mxu0 0
        %2695 = vmatpush.bf16.msra.mxu0 0
        %2696 = vmatpush.bf16.msra.mxu0 0
        %2697 = vmatpush.bf16.msra.mxu0 0
        %2698 = vmatpush.bf16.msra.mxu0 0
        %2699 = vmatpush.bf16.msra.mxu0 0
        %2700 = vmatpush.bf16.msra.mxu0 0
        %2701 = vmatpush.bf16.msra.mxu0 %v2692
        %2702 = vmatmul.bf16.gmra.mxu0 %v2662
        %v2703 = vpop.f32.mrf.mxu0
        %v2704 = vadd.f32 0.0, %v2703
        %v2705 = vpop.f32.mrf.mxu0
        %v2706 = vadd.f32 0.0, %v2705
        %2707 = vmatmul.bf16.gmra.mxu0 %v2665
        %v2708 = vpop.f32.mrf.mxu0
        %v2709 = vadd.f32 0.0, %v2708
        %v2710 = vpop.f32.mrf.mxu0
        %v2711 = vadd.f32 0.0, %v2710
        %2712 = vmatmul.bf16.gmra.mxu0 %v2668
        %v2713 = vpop.f32.mrf.mxu0
        %v2714 = vadd.f32 0.0, %v2713
        %v2715 = vpop.f32.mrf.mxu0
        %v2716 = vadd.f32 0.0, %v2715
        %2717 = vmatmul.bf16.gmra.mxu0 %v2671
        %v2718 = vpop.f32.mrf.mxu0
        %v2719 = vadd.f32 0.0, %v2718
        %v2720 = vpop.f32.mrf.mxu0
        %v2721 = vadd.f32 0.0, %v2720
        %2722 = vmatmul.bf16.gmra.mxu0 %v2674
        %v2723 = vpop.f32.mrf.mxu0
        %v2724 = vadd.f32 0.0, %v2723
        %v2725 = vpop.f32.mrf.mxu0
        %v2726 = vadd.f32 0.0, %v2725
        %2727 = vmatmul.bf16.gmra.mxu0 %v2677
        %v2728 = vpop.f32.mrf.mxu0
        %v2729 = vadd.f32 0.0, %v2728
        %v2730 = vpop.f32.mrf.mxu0
        %v2731 = vadd.f32 0.0, %v2730
        %2732 = vmatmul.bf16.gmra.mxu0 %v2680
        %v2733 = vpop.f32.mrf.mxu0
        %v2734 = vadd.f32 0.0, %v2733
        %v2735 = vpop.f32.mrf.mxu0
        %v2736 = vadd.f32 0.0, %v2735
        %2737 = vmatmul.bf16.gmra.mxu0 %v2683
        %v2738 = vpop.f32.mrf.mxu0
        %v2739 = vadd.f32 0.0, %v2738
        %v2740 = vpop.f32.mrf.mxu0
        %v2741 = vadd.f32 0.0, %v2740
        %2742 = vmatmul.bf16.gmra.mxu0 %v2686
        %v2743 = vpop.f32.mrf.mxu0
        %v2744 = vadd.f32 0.0, %v2743
        %v2745 = vpop.f32.mrf.mxu0
        %v2746 = vadd.f32 0.0, %v2745
        %2747 = vmatmul.bf16.gmra.mxu0 %v2689
        %v2748 = vpop.f32.mrf.mxu0
        %v2749 = vadd.f32 0.0, %v2748
        %v2750 = vpop.f32.mrf.mxu0
        %v2751 = vadd.f32 0.0, %v2750
        %2752 = vdwg.mxu0
        %v2753 = vadd.f32 %v2580, %v2704
        %v2754 = vadd.f32 %v2582, %v2706
        %v2755 = vadd.f32 %v2585, %v2709
        %v2756 = vadd.f32 %v2587, %v2711
        %v2757 = vadd.f32 %v2590, %v2714
        %v2758 = vadd.f32 %v2592, %v2716
        %v2759 = vadd.f32 %v2595, %v2719
        %v2760 = vadd.f32 %v2597, %v2721
        %v2761 = vadd.f32 %v2600, %v2724
        %v2762 = vadd.f32 %v2602, %v2726
        %v2763 = vadd.f32 %v2605, %v2729
        %v2764 = vadd.f32 %v2607, %v2731
        %v2765 = vadd.f32 %v2610, %v2734
        %v2766 = vadd.f32 %v2612, %v2736
        %v2767 = vadd.f32 %v2615, %v2739
        %v2768 = vadd.f32 %v2617, %v2741
        %v2769 = vadd.f32 %v2620, %v2744
        %v2770 = vadd.f32 %v2622, %v2746
        %v2771 = vadd.f32 %v2625, %v2749
        %v2772 = vadd.f32 %v2627, %v2751
        %v2773 = vld [vmem:[#allocation3 + $0x14] sm:$0xff]
        %v2774 = vld [vmem:[#allocation3 + $0x1c] sm:$0xff]
        %v2775 = vld [vmem:[#allocation3 + $0x24] sm:$0xff]
        %v2776 = vld [vmem:[#allocation3 + $0x2c] sm:$0xff]
        %v2777 = vld [vmem:[#allocation3 + $0x34] sm:$0xff]
        %v2778 = vld [vmem:[#allocation3 + $0x3c] sm:$0xff]
        %v2779 = vld [vmem:[#allocation3 + $0x44] sm:$0xff]
        %v2780 = vld [vmem:[#allocation3 + $0x4c] sm:$0xff]
        %v2781 = vld [vmem:[#allocation3 + $0x54] sm:$0xff]
        %v2782 = vld [vmem:[#allocation3 + $0x5c] sm:$0xff]
        %v2783 = vld [vmem:[#allocation3 + $0x64] sm:$0xff]
        %v2784 = vld [vmem:[#allocation3 + $0x6c] sm:$0xff]
        %v2785 = vld [vmem:[#allocation3 + $0x74] sm:$0xff]
        %v2786 = vld [vmem:[#allocation3 + $0x7c] sm:$0xff]
        %v2787 = vld [vmem:[#allocation3 + $0x84] sm:$0xff]
        %v2788 = vld [vmem:[#allocation3 + $0x8c] sm:$0xff]
        %v2789 = vld [vmem:[#allocation3 + $0x94] sm:$0xff]
        %v2790 = vld [vmem:[#allocation3 + $0x9c] sm:$0xff]
        %v2791 = vld [vmem:[#allocation3 + $0xa4] sm:$0xff]
        %v2792 = vld [vmem:[#allocation3 + $0xac] sm:$0xff]
        %v2793 = vpack.c.bf16 %v2774, %v2773
        %v2794 = vpack.c.bf16 %v2776, %v2775
        %v2795 = vpack.c.bf16 %v2778, %v2777
        %v2796 = vpack.c.bf16 %v2780, %v2779
        %v2797 = vpack.c.bf16 %v2782, %v2781
        %v2798 = vpack.c.bf16 %v2784, %v2783
        %v2799 = vpack.c.bf16 %v2786, %v2785
        %v2800 = vpack.c.bf16 %v2788, %v2787
        %v2801 = vpack.c.bf16 %v2790, %v2789
        %v2802 = vpack.c.bf16 %v2792, %v2791
        %s2803 = scalar_lea.vmem %s4, 12
        %v2804 = vld [vmem:[%s2803] sm:$0xf]
        %v2806 = vsel %vm360, %v2793, 0
        %v2809 = vsel %vm360, %v2794, 0
        %v2812 = vsel %vm360, %v2795, 0
        %v2815 = vsel %vm360, %v2796, 0
        %v2818 = vsel %vm360, %v2797, 0
        %v2821 = vsel %vm360, %v2798, 0
        %v2824 = vsel %vm360, %v2799, 0
        %v2827 = vsel %vm360, %v2800, 0
        %v2830 = vsel %vm360, %v2801, 0
        %v2833 = vsel %vm360, %v2802, 0
        %v2836 = vsel %vm513, %v2804, 0
        %2838 = vmatpush.bf16.msra.mxu0 0
        %2839 = vmatpush.bf16.msra.mxu0 0
        %2840 = vmatpush.bf16.msra.mxu0 0
        %2841 = vmatpush.bf16.msra.mxu0 0
        %2842 = vmatpush.bf16.msra.mxu0 0
        %2843 = vmatpush.bf16.msra.mxu0 0
        %2844 = vmatpush.bf16.msra.mxu0 0
        %2845 = vmatpush.bf16.msra.mxu0 %v2836
        %2846 = vmatmul.bf16.gmra.mxu0 %v2806
        %v2847 = vpop.f32.mrf.mxu0
        %v2848 = vadd.f32 0.0, %v2847
        %v2849 = vpop.f32.mrf.mxu0
        %v2850 = vadd.f32 0.0, %v2849
        %2851 = vmatmul.bf16.gmra.mxu0 %v2809
        %v2852 = vpop.f32.mrf.mxu0
        %v2853 = vadd.f32 0.0, %v2852
        %v2854 = vpop.f32.mrf.mxu0
        %v2855 = vadd.f32 0.0, %v2854
        %2856 = vmatmul.bf16.gmra.mxu0 %v2812
        %v2857 = vpop.f32.mrf.mxu0
        %v2858 = vadd.f32 0.0, %v2857
        %v2859 = vpop.f32.mrf.mxu0
        %v2860 = vadd.f32 0.0, %v2859
        %2861 = vmatmul.bf16.gmra.mxu0 %v2815
        %v2862 = vpop.f32.mrf.mxu0
        %v2863 = vadd.f32 0.0, %v2862
        %v2864 = vpop.f32.mrf.mxu0
        %v2865 = vadd.f32 0.0, %v2864
        %2866 = vmatmul.bf16.gmra.mxu0 %v2818
        %v2867 = vpop.f32.mrf.mxu0
        %v2868 = vadd.f32 0.0, %v2867
        %v2869 = vpop.f32.mrf.mxu0
        %v2870 = vadd.f32 0.0, %v2869
        %2871 = vmatmul.bf16.gmra.mxu0 %v2821
        %v2872 = vpop.f32.mrf.mxu0
        %v2873 = vadd.f32 0.0, %v2872
        %v2874 = vpop.f32.mrf.mxu0
        %v2875 = vadd.f32 0.0, %v2874
        %2876 = vmatmul.bf16.gmra.mxu0 %v2824
        %v2877 = vpop.f32.mrf.mxu0
        %v2878 = vadd.f32 0.0, %v2877
        %v2879 = vpop.f32.mrf.mxu0
        %v2880 = vadd.f32 0.0, %v2879
        %2881 = vmatmul.bf16.gmra.mxu0 %v2827
        %v2882 = vpop.f32.mrf.mxu0
        %v2883 = vadd.f32 0.0, %v2882
        %v2884 = vpop.f32.mrf.mxu0
        %v2885 = vadd.f32 0.0, %v2884
        %2886 = vmatmul.bf16.gmra.mxu0 %v2830
        %v2887 = vpop.f32.mrf.mxu0
        %v2888 = vadd.f32 0.0, %v2887
        %v2889 = vpop.f32.mrf.mxu0
        %v2890 = vadd.f32 0.0, %v2889
        %2891 = vmatmul.bf16.gmra.mxu0 %v2833
        %v2892 = vpop.f32.mrf.mxu0
        %v2893 = vadd.f32 0.0, %v2892
        %v2894 = vpop.f32.mrf.mxu0
        %v2895 = vadd.f32 0.0, %v2894
        %2896 = vdwg.mxu0
        %v2897 = vadd.f32 %v2753, %v2848
        %v2898 = vadd.f32 %v2754, %v2850
        %v2899 = vadd.f32 %v2755, %v2853
        %v2900 = vadd.f32 %v2756, %v2855
        %v2901 = vadd.f32 %v2757, %v2858
        %v2902 = vadd.f32 %v2758, %v2860
        %v2903 = vadd.f32 %v2759, %v2863
        %v2904 = vadd.f32 %v2760, %v2865
        %v2905 = vadd.f32 %v2761, %v2868
        %v2906 = vadd.f32 %v2762, %v2870
        %v2907 = vadd.f32 %v2763, %v2873
        %v2908 = vadd.f32 %v2764, %v2875
        %v2909 = vadd.f32 %v2765, %v2878
        %v2910 = vadd.f32 %v2766, %v2880
        %v2911 = vadd.f32 %v2767, %v2883
        %v2912 = vadd.f32 %v2768, %v2885
        %v2913 = vadd.f32 %v2769, %v2888
        %v2914 = vadd.f32 %v2770, %v2890
        %v2915 = vadd.f32 %v2771, %v2893
        %v2916 = vadd.f32 %v2772, %v2895
        %v2917 = vld [vmem:[#allocation3 + $0x15] sm:$0xff]
        %v2918 = vld [vmem:[#allocation3 + $0x1d] sm:$0xff]
        %v2919 = vld [vmem:[#allocation3 + $0x25] sm:$0xff]
        %v2920 = vld [vmem:[#allocation3 + $0x2d] sm:$0xff]
        %v2921 = vld [vmem:[#allocation3 + $0x35] sm:$0xff]
        %v2922 = vld [vmem:[#allocation3 + $0x3d] sm:$0xff]
        %v2923 = vld [vmem:[#allocation3 + $0x45] sm:$0xff]
        %v2924 = vld [vmem:[#allocation3 + $0x4d] sm:$0xff]
        %v2925 = vld [vmem:[#allocation3 + $0x55] sm:$0xff]
        %v2926 = vld [vmem:[#allocation3 + $0x5d] sm:$0xff]
        %v2927 = vld [vmem:[#allocation3 + $0x65] sm:$0xff]
        %v2928 = vld [vmem:[#allocation3 + $0x6d] sm:$0xff]
        %v2929 = vld [vmem:[#allocation3 + $0x75] sm:$0xff]
        %v2930 = vld [vmem:[#allocation3 + $0x7d] sm:$0xff]
        %v2931 = vld [vmem:[#allocation3 + $0x85] sm:$0xff]
        %v2932 = vld [vmem:[#allocation3 + $0x8d] sm:$0xff]
        %v2933 = vld [vmem:[#allocation3 + $0x95] sm:$0xff]
        %v2934 = vld [vmem:[#allocation3 + $0x9d] sm:$0xff]
        %v2935 = vld [vmem:[#allocation3 + $0xa5] sm:$0xff]
        %v2936 = vld [vmem:[#allocation3 + $0xad] sm:$0xff]
        %v2937 = vpack.c.bf16 %v2918, %v2917
        %v2938 = vpack.c.bf16 %v2920, %v2919
        %v2939 = vpack.c.bf16 %v2922, %v2921
        %v2940 = vpack.c.bf16 %v2924, %v2923
        %v2941 = vpack.c.bf16 %v2926, %v2925
        %v2942 = vpack.c.bf16 %v2928, %v2927
        %v2943 = vpack.c.bf16 %v2930, %v2929
        %v2944 = vpack.c.bf16 %v2932, %v2931
        %v2945 = vpack.c.bf16 %v2934, %v2933
        %v2946 = vpack.c.bf16 %v2936, %v2935
        %s2947 = scalar_lea.vmem %s4, 16
        %v2948 = vld [vmem:[%s2947] sm:$0xf]
        %v2950 = vsel %vm360, %v2937, 0
        %v2953 = vsel %vm360, %v2938, 0
        %v2956 = vsel %vm360, %v2939, 0
        %v2959 = vsel %vm360, %v2940, 0
        %v2962 = vsel %vm360, %v2941, 0
        %v2965 = vsel %vm360, %v2942, 0
        %v2968 = vsel %vm360, %v2943, 0
        %v2971 = vsel %vm360, %v2944, 0
        %v2974 = vsel %vm360, %v2945, 0
        %v2977 = vsel %vm360, %v2946, 0
        %v2980 = vsel %vm513, %v2948, 0
        %2982 = vmatpush.bf16.msra.mxu0 0
        %2983 = vmatpush.bf16.msra.mxu0 0
        %2984 = vmatpush.bf16.msra.mxu0 0
        %2985 = vmatpush.bf16.msra.mxu0 0
        %2986 = vmatpush.bf16.msra.mxu0 0
        %2987 = vmatpush.bf16.msra.mxu0 0
        %2988 = vmatpush.bf16.msra.mxu0 0
        %2989 = vmatpush.bf16.msra.mxu0 %v2980
        %2990 = vmatmul.bf16.gmra.mxu0 %v2950
        %v2991 = vpop.f32.mrf.mxu0
        %v2992 = vadd.f32 0.0, %v2991
        %v2993 = vpop.f32.mrf.mxu0
        %v2994 = vadd.f32 0.0, %v2993
        %2995 = vmatmul.bf16.gmra.mxu0 %v2953
        %v2996 = vpop.f32.mrf.mxu0
        %v2997 = vadd.f32 0.0, %v2996
        %v2998 = vpop.f32.mrf.mxu0
        %v2999 = vadd.f32 0.0, %v2998
        %3000 = vmatmul.bf16.gmra.mxu0 %v2956
        %v3001 = vpop.f32.mrf.mxu0
        %v3002 = vadd.f32 0.0, %v3001
        %v3003 = vpop.f32.mrf.mxu0
        %v3004 = vadd.f32 0.0, %v3003
        %3005 = vmatmul.bf16.gmra.mxu0 %v2959
        %v3006 = vpop.f32.mrf.mxu0
        %v3007 = vadd.f32 0.0, %v3006
        %v3008 = vpop.f32.mrf.mxu0
        %v3009 = vadd.f32 0.0, %v3008
        %3010 = vmatmul.bf16.gmra.mxu0 %v2962
        %v3011 = vpop.f32.mrf.mxu0
        %v3012 = vadd.f32 0.0, %v3011
        %v3013 = vpop.f32.mrf.mxu0
        %v3014 = vadd.f32 0.0, %v3013
        %3015 = vmatmul.bf16.gmra.mxu0 %v2965
        %v3016 = vpop.f32.mrf.mxu0
        %v3017 = vadd.f32 0.0, %v3016
        %v3018 = vpop.f32.mrf.mxu0
        %v3019 = vadd.f32 0.0, %v3018
        %3020 = vmatmul.bf16.gmra.mxu0 %v2968
        %v3021 = vpop.f32.mrf.mxu0
        %v3022 = vadd.f32 0.0, %v3021
        %v3023 = vpop.f32.mrf.mxu0
        %v3024 = vadd.f32 0.0, %v3023
        %3025 = vmatmul.bf16.gmra.mxu0 %v2971
        %v3026 = vpop.f32.mrf.mxu0
        %v3027 = vadd.f32 0.0, %v3026
        %v3028 = vpop.f32.mrf.mxu0
        %v3029 = vadd.f32 0.0, %v3028
        %3030 = vmatmul.bf16.gmra.mxu0 %v2974
        %v3031 = vpop.f32.mrf.mxu0
        %v3032 = vadd.f32 0.0, %v3031
        %v3033 = vpop.f32.mrf.mxu0
        %v3034 = vadd.f32 0.0, %v3033
        %3035 = vmatmul.bf16.gmra.mxu0 %v2977
        %v3036 = vpop.f32.mrf.mxu0
        %v3037 = vadd.f32 0.0, %v3036
        %v3038 = vpop.f32.mrf.mxu0
        %v3039 = vadd.f32 0.0, %v3038
        %3040 = vdwg.mxu0
        %v3041 = vadd.f32 %v2897, %v2992
        %v3042 = vadd.f32 %v2898, %v2994
        %v3043 = vadd.f32 %v2899, %v2997
        %v3044 = vadd.f32 %v2900, %v2999
        %v3045 = vadd.f32 %v2901, %v3002
        %v3046 = vadd.f32 %v2902, %v3004
        %v3047 = vadd.f32 %v2903, %v3007
        %v3048 = vadd.f32 %v2904, %v3009
        %v3049 = vadd.f32 %v2905, %v3012
        %v3050 = vadd.f32 %v2906, %v3014
        %v3051 = vadd.f32 %v2907, %v3017
        %v3052 = vadd.f32 %v2908, %v3019
        %v3053 = vadd.f32 %v2909, %v3022
        %v3054 = vadd.f32 %v2910, %v3024
        %v3055 = vadd.f32 %v2911, %v3027
        %v3056 = vadd.f32 %v2912, %v3029
        %v3057 = vadd.f32 %v2913, %v3032
        %v3058 = vadd.f32 %v2914, %v3034
        %v3059 = vadd.f32 %v2915, %v3037
        %v3060 = vadd.f32 %v2916, %v3039
        %v3061 = vld [vmem:[#allocation3 + $0x16] sm:$0xff]
        %v3062 = vld [vmem:[#allocation3 + $0x1e] sm:$0xff]
        %v3063 = vld [vmem:[#allocation3 + $0x26] sm:$0xff]
        %v3064 = vld [vmem:[#allocation3 + $0x2e] sm:$0xff]
        %v3065 = vld [vmem:[#allocation3 + $0x36] sm:$0xff]
        %v3066 = vld [vmem:[#allocation3 + $0x3e] sm:$0xff]
        %v3067 = vld [vmem:[#allocation3 + $0x46] sm:$0xff]
        %v3068 = vld [vmem:[#allocation3 + $0x4e] sm:$0xff]
        %v3069 = vld [vmem:[#allocation3 + $0x56] sm:$0xff]
        %v3070 = vld [vmem:[#allocation3 + $0x5e] sm:$0xff]
        %v3071 = vld [vmem:[#allocation3 + $0x66] sm:$0xff]
        %v3072 = vld [vmem:[#allocation3 + $0x6e] sm:$0xff]
        %v3073 = vld [vmem:[#allocation3 + $0x76] sm:$0xff]
        %v3074 = vld [vmem:[#allocation3 + $0x7e] sm:$0xff]
        %v3075 = vld [vmem:[#allocation3 + $0x86] sm:$0xff]
        %v3076 = vld [vmem:[#allocation3 + $0x8e] sm:$0xff]
        %v3077 = vld [vmem:[#allocation3 + $0x96] sm:$0xff]
        %v3078 = vld [vmem:[#allocation3 + $0x9e] sm:$0xff]
        %v3079 = vld [vmem:[#allocation3 + $0xa6] sm:$0xff]
        %v3080 = vld [vmem:[#allocation3 + $0xae] sm:$0xff]
        %v3081 = vpack.c.bf16 %v3062, %v3061
        %v3082 = vpack.c.bf16 %v3064, %v3063
        %v3083 = vpack.c.bf16 %v3066, %v3065
        %v3084 = vpack.c.bf16 %v3068, %v3067
        %v3085 = vpack.c.bf16 %v3070, %v3069
        %v3086 = vpack.c.bf16 %v3072, %v3071
        %v3087 = vpack.c.bf16 %v3074, %v3073
        %v3088 = vpack.c.bf16 %v3076, %v3075
        %v3089 = vpack.c.bf16 %v3078, %v3077
        %v3090 = vpack.c.bf16 %v3080, %v3079
        %s3091 = scalar_lea.vmem %s4, 20
        %v3092 = vld [vmem:[%s3091] sm:$0xf]
        %v3094 = vsel %vm360, %v3081, 0
        %v3097 = vsel %vm360, %v3082, 0
        %v3100 = vsel %vm360, %v3083, 0
        %v3103 = vsel %vm360, %v3084, 0
        %v3106 = vsel %vm360, %v3085, 0
        %v3109 = vsel %vm360, %v3086, 0
        %v3112 = vsel %vm360, %v3087, 0
        %v3115 = vsel %vm360, %v3088, 0
        %v3118 = vsel %vm360, %v3089, 0
        %v3121 = vsel %vm360, %v3090, 0
        %v3124 = vsel %vm513, %v3092, 0
        %3126 = vmatpush.bf16.msra.mxu0 0
        %3127 = vmatpush.bf16.msra.mxu0 0
        %3128 = vmatpush.bf16.msra.mxu0 0
        %3129 = vmatpush.bf16.msra.mxu0 0
        %3130 = vmatpush.bf16.msra.mxu0 0
        %3131 = vmatpush.bf16.msra.mxu0 0
        %3132 = vmatpush.bf16.msra.mxu0 0
        %3133 = vmatpush.bf16.msra.mxu0 %v3124
        %3134 = vmatmul.bf16.gmra.mxu0 %v3094
        %v3135 = vpop.f32.mrf.mxu0
        %v3136 = vadd.f32 0.0, %v3135
        %v3137 = vpop.f32.mrf.mxu0
        %v3138 = vadd.f32 0.0, %v3137
        %3139 = vmatmul.bf16.gmra.mxu0 %v3097
        %v3140 = vpop.f32.mrf.mxu0
        %v3141 = vadd.f32 0.0, %v3140
        %v3142 = vpop.f32.mrf.mxu0
        %v3143 = vadd.f32 0.0, %v3142
        %3144 = vmatmul.bf16.gmra.mxu0 %v3100
        %v3145 = vpop.f32.mrf.mxu0
        %v3146 = vadd.f32 0.0, %v3145
        %v3147 = vpop.f32.mrf.mxu0
        %v3148 = vadd.f32 0.0, %v3147
        %3149 = vmatmul.bf16.gmra.mxu0 %v3103
        %v3150 = vpop.f32.mrf.mxu0
        %v3151 = vadd.f32 0.0, %v3150
        %v3152 = vpop.f32.mrf.mxu0
        %v3153 = vadd.f32 0.0, %v3152
        %3154 = vmatmul.bf16.gmra.mxu0 %v3106
        %v3155 = vpop.f32.mrf.mxu0
        %v3156 = vadd.f32 0.0, %v3155
        %v3157 = vpop.f32.mrf.mxu0
        %v3158 = vadd.f32 0.0, %v3157
        %3159 = vmatmul.bf16.gmra.mxu0 %v3109
        %v3160 = vpop.f32.mrf.mxu0
        %v3161 = vadd.f32 0.0, %v3160
        %v3162 = vpop.f32.mrf.mxu0
        %v3163 = vadd.f32 0.0, %v3162
        %3164 = vmatmul.bf16.gmra.mxu0 %v3112
        %v3165 = vpop.f32.mrf.mxu0
        %v3166 = vadd.f32 0.0, %v3165
        %v3167 = vpop.f32.mrf.mxu0
        %v3168 = vadd.f32 0.0, %v3167
        %3169 = vmatmul.bf16.gmra.mxu0 %v3115
        %v3170 = vpop.f32.mrf.mxu0
        %v3171 = vadd.f32 0.0, %v3170
        %v3172 = vpop.f32.mrf.mxu0
        %v3173 = vadd.f32 0.0, %v3172
        %3174 = vmatmul.bf16.gmra.mxu0 %v3118
        %v3175 = vpop.f32.mrf.mxu0
        %v3176 = vadd.f32 0.0, %v3175
        %v3177 = vpop.f32.mrf.mxu0
        %v3178 = vadd.f32 0.0, %v3177
        %3179 = vmatmul.bf16.gmra.mxu0 %v3121
        %v3180 = vpop.f32.mrf.mxu0
        %v3181 = vadd.f32 0.0, %v3180
        %v3182 = vpop.f32.mrf.mxu0
        %v3183 = vadd.f32 0.0, %v3182
        %3184 = vdwg.mxu0
        %v3185 = vadd.f32 %v3041, %v3136
        %v3186 = vadd.f32 %v3042, %v3138
        %v3187 = vadd.f32 %v3043, %v3141
        %v3188 = vadd.f32 %v3044, %v3143
        %v3189 = vadd.f32 %v3045, %v3146
        %v3190 = vadd.f32 %v3046, %v3148
        %v3191 = vadd.f32 %v3047, %v3151
        %v3192 = vadd.f32 %v3048, %v3153
        %v3193 = vadd.f32 %v3049, %v3156
        %v3194 = vadd.f32 %v3050, %v3158
        %v3195 = vadd.f32 %v3051, %v3161
        %v3196 = vadd.f32 %v3052, %v3163
        %v3197 = vadd.f32 %v3053, %v3166
        %v3198 = vadd.f32 %v3054, %v3168
        %v3199 = vadd.f32 %v3055, %v3171
        %v3200 = vadd.f32 %v3056, %v3173
        %v3201 = vadd.f32 %v3057, %v3176
        %v3202 = vadd.f32 %v3058, %v3178
        %v3203 = vadd.f32 %v3059, %v3181
        %v3204 = vadd.f32 %v3060, %v3183
        %v3205 = vld [vmem:[#allocation3 + $0x28] sm:$0xff]
        %v3206 = vld [vmem:[#allocation3 + $0x30] sm:$0xff]
        %v3207 = vld [vmem:[#allocation3 + $0x38] sm:$0xff]
        %v3208 = vld [vmem:[#allocation3 + $0x40] sm:$0xff]
        %v3209 = vld [vmem:[#allocation3 + $0x48] sm:$0xff]
        %v3210 = vld [vmem:[#allocation3 + $0x50] sm:$0xff]
        %v3211 = vld [vmem:[#allocation3 + $0x58] sm:$0xff]
        %v3212 = vld [vmem:[#allocation3 + $0x60] sm:$0xff]
        %v3213 = vld [vmem:[#allocation3 + $0x68] sm:$0xff]
        %v3214 = vld [vmem:[#allocation3 + $0x70] sm:$0xff]
        %v3215 = vld [vmem:[#allocation3 + $0x78] sm:$0xff]
        %v3216 = vld [vmem:[#allocation3 + $0x80] sm:$0xff]
        %v3217 = vld [vmem:[#allocation3 + $0x88] sm:$0xff]
        %v3218 = vld [vmem:[#allocation3 + $0x90] sm:$0xff]
        %v3219 = vld [vmem:[#allocation3 + $0x98] sm:$0xff]
        %v3220 = vld [vmem:[#allocation3 + $0xa0] sm:$0xff]
        %v3221 = vld [vmem:[#allocation3 + $0xa8] sm:$0xff]
        %v3222 = vld [vmem:[#allocation3 + $0xb0] sm:$0xff]
        %v3223 = vld [vmem:[#allocation3 + $0xb8] sm:$0xff]
        %v3224 = vld [vmem:[#allocation3 + $0xc0] sm:$0xff]
        %v3225 = vpack.c.bf16 %v3206, %v3205
        %v3226 = vpack.c.bf16 %v3208, %v3207
        %v3227 = vpack.c.bf16 %v3210, %v3209
        %v3228 = vpack.c.bf16 %v3212, %v3211
        %v3229 = vpack.c.bf16 %v3214, %v3213
        %v3230 = vpack.c.bf16 %v3216, %v3215
        %v3231 = vpack.c.bf16 %v3218, %v3217
        %v3232 = vpack.c.bf16 %v3220, %v3219
        %v3233 = vpack.c.bf16 %v3222, %v3221
        %v3234 = vpack.c.bf16 %v3224, %v3223
        %s3235 = scalar_lea.vmem %s4, 24
        %v3236 = vld [vmem:[%s3235] sm:$0xf]
        %v3238 = vsel %vm360, %v3225, 0
        %v3241 = vsel %vm360, %v3226, 0
        %v3244 = vsel %vm360, %v3227, 0
        %v3247 = vsel %vm360, %v3228, 0
        %v3250 = vsel %vm360, %v3229, 0
        %v3253 = vsel %vm360, %v3230, 0
        %v3256 = vsel %vm360, %v3231, 0
        %v3259 = vsel %vm360, %v3232, 0
        %v3262 = vsel %vm360, %v3233, 0
        %v3265 = vsel %vm360, %v3234, 0
        %v3268 = vsel %vm513, %v3236, 0
        %3270 = vmatpush.bf16.msra.mxu0 0
        %3271 = vmatpush.bf16.msra.mxu0 0
        %3272 = vmatpush.bf16.msra.mxu0 0
        %3273 = vmatpush.bf16.msra.mxu0 0
        %3274 = vmatpush.bf16.msra.mxu0 0
        %3275 = vmatpush.bf16.msra.mxu0 0
        %3276 = vmatpush.bf16.msra.mxu0 0
        %3277 = vmatpush.bf16.msra.mxu0 %v3268
        %3278 = vmatmul.bf16.gmra.mxu0 %v3238
        %v3279 = vpop.f32.mrf.mxu0
        %v3280 = vadd.f32 0.0, %v3279
        %v3281 = vpop.f32.mrf.mxu0
        %v3282 = vadd.f32 0.0, %v3281
        %3283 = vmatmul.bf16.gmra.mxu0 %v3241
        %v3284 = vpop.f32.mrf.mxu0
        %v3285 = vadd.f32 0.0, %v3284
        %v3286 = vpop.f32.mrf.mxu0
        %v3287 = vadd.f32 0.0, %v3286
        %3288 = vmatmul.bf16.gmra.mxu0 %v3244
        %v3289 = vpop.f32.mrf.mxu0
        %v3290 = vadd.f32 0.0, %v3289
        %v3291 = vpop.f32.mrf.mxu0
        %v3292 = vadd.f32 0.0, %v3291
        %3293 = vmatmul.bf16.gmra.mxu0 %v3247
        %v3294 = vpop.f32.mrf.mxu0
        %v3295 = vadd.f32 0.0, %v3294
        %v3296 = vpop.f32.mrf.mxu0
        %v3297 = vadd.f32 0.0, %v3296
        %3298 = vmatmul.bf16.gmra.mxu0 %v3250
        %v3299 = vpop.f32.mrf.mxu0
        %v3300 = vadd.f32 0.0, %v3299
        %v3301 = vpop.f32.mrf.mxu0
        %v3302 = vadd.f32 0.0, %v3301
        %3303 = vmatmul.bf16.gmra.mxu0 %v3253
        %v3304 = vpop.f32.mrf.mxu0
        %v3305 = vadd.f32 0.0, %v3304
        %v3306 = vpop.f32.mrf.mxu0
        %v3307 = vadd.f32 0.0, %v3306
        %3308 = vmatmul.bf16.gmra.mxu0 %v3256
        %v3309 = vpop.f32.mrf.mxu0
        %v3310 = vadd.f32 0.0, %v3309
        %v3311 = vpop.f32.mrf.mxu0
        %v3312 = vadd.f32 0.0, %v3311
        %3313 = vmatmul.bf16.gmra.mxu0 %v3259
        %v3314 = vpop.f32.mrf.mxu0
        %v3315 = vadd.f32 0.0, %v3314
        %v3316 = vpop.f32.mrf.mxu0
        %v3317 = vadd.f32 0.0, %v3316
        %3318 = vmatmul.bf16.gmra.mxu0 %v3262
        %v3319 = vpop.f32.mrf.mxu0
        %v3320 = vadd.f32 0.0, %v3319
        %v3321 = vpop.f32.mrf.mxu0
        %v3322 = vadd.f32 0.0, %v3321
        %3323 = vmatmul.bf16.gmra.mxu0 %v3265
        %v3324 = vpop.f32.mrf.mxu0
        %v3325 = vadd.f32 0.0, %v3324
        %v3326 = vpop.f32.mrf.mxu0
        %v3327 = vadd.f32 0.0, %v3326
        %3328 = vdwg.mxu0
        %v3329 = vadd.f32 %v3185, %v3280
        %v3330 = vadd.f32 %v3186, %v3282
        %v3331 = vadd.f32 %v3187, %v3285
        %v3332 = vadd.f32 %v3188, %v3287
        %v3333 = vadd.f32 %v3189, %v3290
        %v3334 = vadd.f32 %v3190, %v3292
        %v3335 = vadd.f32 %v3191, %v3295
        %v3336 = vadd.f32 %v3192, %v3297
        %v3337 = vadd.f32 %v3193, %v3300
        %v3338 = vadd.f32 %v3194, %v3302
        %v3339 = vadd.f32 %v3195, %v3305
        %v3340 = vadd.f32 %v3196, %v3307
        %v3341 = vadd.f32 %v3197, %v3310
        %v3342 = vadd.f32 %v3198, %v3312
        %v3343 = vadd.f32 %v3199, %v3315
        %v3344 = vadd.f32 %v3200, %v3317
        %v3345 = vadd.f32 %v3201, %v3320
        %v3346 = vadd.f32 %v3202, %v3322
        %v3347 = vadd.f32 %v3203, %v3325
        %v3348 = vadd.f32 %v3204, %v3327
        %v3349 = vld [vmem:[#allocation3 + $0x29] sm:$0xff]
        %v3350 = vld [vmem:[#allocation3 + $0x31] sm:$0xff]
        %v3351 = vld [vmem:[#allocation3 + $0x39] sm:$0xff]
        %v3352 = vld [vmem:[#allocation3 + $0x41] sm:$0xff]
        %v3353 = vld [vmem:[#allocation3 + $0x49] sm:$0xff]
        %v3354 = vld [vmem:[#allocation3 + $0x51] sm:$0xff]
        %v3355 = vld [vmem:[#allocation3 + $0x59] sm:$0xff]
        %v3356 = vld [vmem:[#allocation3 + $0x61] sm:$0xff]
        %v3357 = vld [vmem:[#allocation3 + $0x69] sm:$0xff]
        %v3358 = vld [vmem:[#allocation3 + $0x71] sm:$0xff]
        %v3359 = vld [vmem:[#allocation3 + $0x79] sm:$0xff]
        %v3360 = vld [vmem:[#allocation3 + $0x81] sm:$0xff]
        %v3361 = vld [vmem:[#allocation3 + $0x89] sm:$0xff]
        %v3362 = vld [vmem:[#allocation3 + $0x91] sm:$0xff]
        %v3363 = vld [vmem:[#allocation3 + $0x99] sm:$0xff]
        %v3364 = vld [vmem:[#allocation3 + $0xa1] sm:$0xff]
        %v3365 = vld [vmem:[#allocation3 + $0xa9] sm:$0xff]
        %v3366 = vld [vmem:[#allocation3 + $0xb1] sm:$0xff]
        %v3367 = vld [vmem:[#allocation3 + $0xb9] sm:$0xff]
        %v3368 = vld [vmem:[#allocation3 + $0xc1] sm:$0xff]
        %v3369 = vpack.c.bf16 %v3350, %v3349
        %v3370 = vpack.c.bf16 %v3352, %v3351
        %v3371 = vpack.c.bf16 %v3354, %v3353
        %v3372 = vpack.c.bf16 %v3356, %v3355
        %v3373 = vpack.c.bf16 %v3358, %v3357
        %v3374 = vpack.c.bf16 %v3360, %v3359
        %v3375 = vpack.c.bf16 %v3362, %v3361
        %v3376 = vpack.c.bf16 %v3364, %v3363
        %v3377 = vpack.c.bf16 %v3366, %v3365
        %v3378 = vpack.c.bf16 %v3368, %v3367
        %s3379 = scalar_lea.vmem %s4, 28
        %v3380 = vld [vmem:[%s3379] sm:$0xf]
        %v3382 = vsel %vm360, %v3369, 0
        %v3385 = vsel %vm360, %v3370, 0
        %v3388 = vsel %vm360, %v3371, 0
        %v3391 = vsel %vm360, %v3372, 0
        %v3394 = vsel %vm360, %v3373, 0
        %v3397 = vsel %vm360, %v3374, 0
        %v3400 = vsel %vm360, %v3375, 0
        %v3403 = vsel %vm360, %v3376, 0
        %v3406 = vsel %vm360, %v3377, 0
        %v3409 = vsel %vm360, %v3378, 0
        %v3412 = vsel %vm513, %v3380, 0
        %3414 = vmatpush.bf16.msra.mxu0 0
        %3415 = vmatpush.bf16.msra.mxu0 0
        %3416 = vmatpush.bf16.msra.mxu0 0
        %3417 = vmatpush.bf16.msra.mxu0 0
        %3418 = vmatpush.bf16.msra.mxu0 0
        %3419 = vmatpush.bf16.msra.mxu0 0
        %3420 = vmatpush.bf16.msra.mxu0 0
        %3421 = vmatpush.bf16.msra.mxu0 %v3412
        %3422 = vmatmul.bf16.gmra.mxu0 %v3382
        %v3423 = vpop.f32.mrf.mxu0
        %v3424 = vadd.f32 0.0, %v3423
        %v3425 = vpop.f32.mrf.mxu0
        %v3426 = vadd.f32 0.0, %v3425
        %3427 = vmatmul.bf16.gmra.mxu0 %v3385
        %v3428 = vpop.f32.mrf.mxu0
        %v3429 = vadd.f32 0.0, %v3428
        %v3430 = vpop.f32.mrf.mxu0
        %v3431 = vadd.f32 0.0, %v3430
        %3432 = vmatmul.bf16.gmra.mxu0 %v3388
        %v3433 = vpop.f32.mrf.mxu0
        %v3434 = vadd.f32 0.0, %v3433
        %v3435 = vpop.f32.mrf.mxu0
        %v3436 = vadd.f32 0.0, %v3435
        %3437 = vmatmul.bf16.gmra.mxu0 %v3391
        %v3438 = vpop.f32.mrf.mxu0
        %v3439 = vadd.f32 0.0, %v3438
        %v3440 = vpop.f32.mrf.mxu0
        %v3441 = vadd.f32 0.0, %v3440
        %3442 = vmatmul.bf16.gmra.mxu0 %v3394
        %v3443 = vpop.f32.mrf.mxu0
        %v3444 = vadd.f32 0.0, %v3443
        %v3445 = vpop.f32.mrf.mxu0
        %v3446 = vadd.f32 0.0, %v3445
        %3447 = vmatmul.bf16.gmra.mxu0 %v3397
        %v3448 = vpop.f32.mrf.mxu0
        %v3449 = vadd.f32 0.0, %v3448
        %v3450 = vpop.f32.mrf.mxu0
        %v3451 = vadd.f32 0.0, %v3450
        %3452 = vmatmul.bf16.gmra.mxu0 %v3400
        %v3453 = vpop.f32.mrf.mxu0
        %v3454 = vadd.f32 0.0, %v3453
        %v3455 = vpop.f32.mrf.mxu0
        %v3456 = vadd.f32 0.0, %v3455
        %3457 = vmatmul.bf16.gmra.mxu0 %v3403
        %v3458 = vpop.f32.mrf.mxu0
        %v3459 = vadd.f32 0.0, %v3458
        %v3460 = vpop.f32.mrf.mxu0
        %v3461 = vadd.f32 0.0, %v3460
        %3462 = vmatmul.bf16.gmra.mxu0 %v3406
        %v3463 = vpop.f32.mrf.mxu0
        %v3464 = vadd.f32 0.0, %v3463
        %v3465 = vpop.f32.mrf.mxu0
        %v3466 = vadd.f32 0.0, %v3465
        %3467 = vmatmul.bf16.gmra.mxu0 %v3409
        %v3468 = vpop.f32.mrf.mxu0
        %v3469 = vadd.f32 0.0, %v3468
        %v3470 = vpop.f32.mrf.mxu0
        %v3471 = vadd.f32 0.0, %v3470
        %3472 = vdwg.mxu0
        %v3473 = vadd.f32 %v3329, %v3424
        %v3474 = vadd.f32 %v3330, %v3426
        %v3475 = vadd.f32 %v3331, %v3429
        %v3476 = vadd.f32 %v3332, %v3431
        %v3477 = vadd.f32 %v3333, %v3434
        %v3478 = vadd.f32 %v3334, %v3436
        %v3479 = vadd.f32 %v3335, %v3439
        %v3480 = vadd.f32 %v3336, %v3441
        %v3481 = vadd.f32 %v3337, %v3444
        %v3482 = vadd.f32 %v3338, %v3446
        %v3483 = vadd.f32 %v3339, %v3449
        %v3484 = vadd.f32 %v3340, %v3451
        %v3485 = vadd.f32 %v3341, %v3454
        %v3486 = vadd.f32 %v3342, %v3456
        %v3487 = vadd.f32 %v3343, %v3459
        %v3488 = vadd.f32 %v3344, %v3461
        %v3489 = vadd.f32 %v3345, %v3464
        %v3490 = vadd.f32 %v3346, %v3466
        %v3491 = vadd.f32 %v3347, %v3469
        %v3492 = vadd.f32 %v3348, %v3471
        %v3493 = vld [vmem:[#allocation3 + $0x2a] sm:$0xff]
        %v3494 = vld [vmem:[#allocation3 + $0x32] sm:$0xff]
        %v3495 = vld [vmem:[#allocation3 + $0x3a] sm:$0xff]
        %v3496 = vld [vmem:[#allocation3 + $0x42] sm:$0xff]
        %v3497 = vld [vmem:[#allocation3 + $0x4a] sm:$0xff]
        %v3498 = vld [vmem:[#allocation3 + $0x52] sm:$0xff]
        %v3499 = vld [vmem:[#allocation3 + $0x5a] sm:$0xff]
        %v3500 = vld [vmem:[#allocation3 + $0x62] sm:$0xff]
        %v3501 = vld [vmem:[#allocation3 + $0x6a] sm:$0xff]
        %v3502 = vld [vmem:[#allocation3 + $0x72] sm:$0xff]
        %v3503 = vld [vmem:[#allocation3 + $0x7a] sm:$0xff]
        %v3504 = vld [vmem:[#allocation3 + $0x82] sm:$0xff]
        %v3505 = vld [vmem:[#allocation3 + $0x8a] sm:$0xff]
        %v3506 = vld [vmem:[#allocation3 + $0x92] sm:$0xff]
        %v3507 = vld [vmem:[#allocation3 + $0x9a] sm:$0xff]
        %v3508 = vld [vmem:[#allocation3 + $0xa2] sm:$0xff]
        %v3509 = vld [vmem:[#allocation3 + $0xaa] sm:$0xff]
        %v3510 = vld [vmem:[#allocation3 + $0xb2] sm:$0xff]
        %v3511 = vld [vmem:[#allocation3 + $0xba] sm:$0xff]
        %v3512 = vld [vmem:[#allocation3 + $0xc2] sm:$0xff]
        %v3513 = vpack.c.bf16 %v3494, %v3493
        %v3514 = vpack.c.bf16 %v3496, %v3495
        %v3515 = vpack.c.bf16 %v3498, %v3497
        %v3516 = vpack.c.bf16 %v3500, %v3499
        %v3517 = vpack.c.bf16 %v3502, %v3501
        %v3518 = vpack.c.bf16 %v3504, %v3503
        %v3519 = vpack.c.bf16 %v3506, %v3505
        %v3520 = vpack.c.bf16 %v3508, %v3507
        %v3521 = vpack.c.bf16 %v3510, %v3509
        %v3522 = vpack.c.bf16 %v3512, %v3511
        %s3523 = scalar_lea.vmem %s4, 32
        %v3524 = vld [vmem:[%s3523] sm:$0xf]
        %v3526 = vsel %vm360, %v3513, 0
        %v3529 = vsel %vm360, %v3514, 0
        %v3532 = vsel %vm360, %v3515, 0
        %v3535 = vsel %vm360, %v3516, 0
        %v3538 = vsel %vm360, %v3517, 0
        %v3541 = vsel %vm360, %v3518, 0
        %v3544 = vsel %vm360, %v3519, 0
        %v3547 = vsel %vm360, %v3520, 0
        %v3550 = vsel %vm360, %v3521, 0
        %v3553 = vsel %vm360, %v3522, 0
        %v3556 = vsel %vm513, %v3524, 0
        %3558 = vmatpush.bf16.msra.mxu0 0
        %3559 = vmatpush.bf16.msra.mxu0 0
        %3560 = vmatpush.bf16.msra.mxu0 0
        %3561 = vmatpush.bf16.msra.mxu0 0
        %3562 = vmatpush.bf16.msra.mxu0 0
        %3563 = vmatpush.bf16.msra.mxu0 0
        %3564 = vmatpush.bf16.msra.mxu0 0
        %3565 = vmatpush.bf16.msra.mxu0 %v3556
        %3566 = vmatmul.bf16.gmra.mxu0 %v3526
        %v3567 = vpop.f32.mrf.mxu0
        %v3568 = vadd.f32 0.0, %v3567
        %v3569 = vpop.f32.mrf.mxu0
        %v3570 = vadd.f32 0.0, %v3569
        %3571 = vmatmul.bf16.gmra.mxu0 %v3529
        %v3572 = vpop.f32.mrf.mxu0
        %v3573 = vadd.f32 0.0, %v3572
        %v3574 = vpop.f32.mrf.mxu0
        %v3575 = vadd.f32 0.0, %v3574
        %3576 = vmatmul.bf16.gmra.mxu0 %v3532
        %v3577 = vpop.f32.mrf.mxu0
        %v3578 = vadd.f32 0.0, %v3577
        %v3579 = vpop.f32.mrf.mxu0
        %v3580 = vadd.f32 0.0, %v3579
        %3581 = vmatmul.bf16.gmra.mxu0 %v3535
        %v3582 = vpop.f32.mrf.mxu0
        %v3583 = vadd.f32 0.0, %v3582
        %v3584 = vpop.f32.mrf.mxu0
        %v3585 = vadd.f32 0.0, %v3584
        %3586 = vmatmul.bf16.gmra.mxu0 %v3538
        %v3587 = vpop.f32.mrf.mxu0
        %v3588 = vadd.f32 0.0, %v3587
        %v3589 = vpop.f32.mrf.mxu0
        %v3590 = vadd.f32 0.0, %v3589
        %3591 = vmatmul.bf16.gmra.mxu0 %v3541
        %v3592 = vpop.f32.mrf.mxu0
        %v3593 = vadd.f32 0.0, %v3592
        %v3594 = vpop.f32.mrf.mxu0
        %v3595 = vadd.f32 0.0, %v3594
        %3596 = vmatmul.bf16.gmra.mxu0 %v3544
        %v3597 = vpop.f32.mrf.mxu0
        %v3598 = vadd.f32 0.0, %v3597
        %v3599 = vpop.f32.mrf.mxu0
        %v3600 = vadd.f32 0.0, %v3599
        %3601 = vmatmul.bf16.gmra.mxu0 %v3547
        %v3602 = vpop.f32.mrf.mxu0
        %v3603 = vadd.f32 0.0, %v3602
        %v3604 = vpop.f32.mrf.mxu0
        %v3605 = vadd.f32 0.0, %v3604
        %3606 = vmatmul.bf16.gmra.mxu0 %v3550
        %v3607 = vpop.f32.mrf.mxu0
        %v3608 = vadd.f32 0.0, %v3607
        %v3609 = vpop.f32.mrf.mxu0
        %v3610 = vadd.f32 0.0, %v3609
        %3611 = vmatmul.bf16.gmra.mxu0 %v3553
        %v3612 = vpop.f32.mrf.mxu0
        %v3613 = vadd.f32 0.0, %v3612
        %v3614 = vpop.f32.mrf.mxu0
        %v3615 = vadd.f32 0.0, %v3614
        %3616 = vdwg.mxu0
        %v3617 = vadd.f32 %v3473, %v3568
        %v3618 = vadd.f32 %v3474, %v3570
        %v3619 = vadd.f32 %v3475, %v3573
        %v3620 = vadd.f32 %v3476, %v3575
        %v3621 = vadd.f32 %v3477, %v3578
        %v3622 = vadd.f32 %v3478, %v3580
        %v3623 = vadd.f32 %v3479, %v3583
        %v3624 = vadd.f32 %v3480, %v3585
        %v3625 = vadd.f32 %v3481, %v3588
        %v3626 = vadd.f32 %v3482, %v3590
        %v3627 = vadd.f32 %v3483, %v3593
        %v3628 = vadd.f32 %v3484, %v3595
        %v3629 = vadd.f32 %v3485, %v3598
        %v3630 = vadd.f32 %v3486, %v3600
        %v3631 = vadd.f32 %v3487, %v3603
        %v3632 = vadd.f32 %v3488, %v3605
        %v3633 = vadd.f32 %v3489, %v3608
        %v3634 = vadd.f32 %v3490, %v3610
        %v3635 = vadd.f32 %v3491, %v3613
        %v3636 = vadd.f32 %v3492, %v3615
        %v3637 = vld [vmem:[%s5] sm:$0x1]
        %v3639 = vperm.slane %v3637, 0
        %v3641 = vadd.f32 %v3617, %v3639
        %v3642 = vadd.f32 %v3618, %v3639
        %v3643 = vadd.f32 %v3619, %v3639
        %v3644 = vadd.f32 %v3620, %v3639
        %v3645 = vadd.f32 %v3621, %v3639
        %v3646 = vadd.f32 %v3622, %v3639
        %v3647 = vadd.f32 %v3623, %v3639
        %v3648 = vadd.f32 %v3624, %v3639
        %v3649 = vadd.f32 %v3625, %v3639
        %v3650 = vadd.f32 %v3626, %v3639
        %v3651 = vadd.f32 %v3627, %v3639
        %v3652 = vadd.f32 %v3628, %v3639
        %v3653 = vadd.f32 %v3629, %v3639
        %v3654 = vadd.f32 %v3630, %v3639
        %v3655 = vadd.f32 %v3631, %v3639
        %v3656 = vadd.f32 %v3632, %v3639
        %v3657 = vadd.f32 %v3633, %v3639
        %v3658 = vadd.f32 %v3634, %v3639
        %v3659 = vadd.f32 %v3635, %v3639
        %v3660 = vadd.f32 %v3636, %v3639
        %v3661 = vld [vmem:[#allocation2 + $0x2a] sm:$0xff]
        %v3662 = vld [vmem:[#allocation2 + $0x32] sm:$0xff]
        %v3663 = vld [vmem:[#allocation2 + $0x3a] sm:$0xff]
        %v3664 = vld [vmem:[#allocation2 + $0x42] sm:$0xff]
        %v3665 = vld [vmem:[#allocation2 + $0x4a] sm:$0xff]
        %v3666 = vld [vmem:[#allocation2 + $0x52] sm:$0xff]
        %v3667 = vld [vmem:[#allocation2 + $0x5a] sm:$0xff]
        %v3668 = vld [vmem:[#allocation2 + $0x62] sm:$0xff]
        %v3669 = vld [vmem:[#allocation2 + $0x6a] sm:$0xff]
        %v3670 = vld [vmem:[#allocation2 + $0x72] sm:$0xff]
        %v3671 = vld [vmem:[#allocation2 + $0x7a] sm:$0xff]
        %v3672 = vld [vmem:[#allocation2 + $0x82] sm:$0xff]
        %v3673 = vld [vmem:[#allocation2 + $0x8a] sm:$0xff]
        %v3674 = vld [vmem:[#allocation2 + $0x92] sm:$0xff]
        %v3675 = vld [vmem:[#allocation2 + $0x9a] sm:$0xff]
        %v3676 = vld [vmem:[#allocation2 + $0xa2] sm:$0xff]
        %v3677 = vld [vmem:[#allocation2 + $0xaa] sm:$0xff]
        %v3678 = vld [vmem:[#allocation2 + $0xb2] sm:$0xff]
        %v3679 = vld [vmem:[#allocation2 + $0xba] sm:$0xff]
        %v3680 = vld [vmem:[#allocation2 + $0xc2] sm:$0xff]
        %v3681 = vadd.f32 %v3641, %v3661
        %v3682 = vadd.f32 %v3642, %v3662
        %v3683 = vadd.f32 %v3643, %v3663
        %v3684 = vadd.f32 %v3644, %v3664
        %v3685 = vadd.f32 %v3645, %v3665
        %v3686 = vadd.f32 %v3646, %v3666
        %v3687 = vadd.f32 %v3647, %v3667
        %v3688 = vadd.f32 %v3648, %v3668
        %v3689 = vadd.f32 %v3649, %v3669
        %v3690 = vadd.f32 %v3650, %v3670
        %v3691 = vadd.f32 %v3651, %v3671
        %v3692 = vadd.f32 %v3652, %v3672
        %v3693 = vadd.f32 %v3653, %v3673
        %v3694 = vadd.f32 %v3654, %v3674
        %v3695 = vadd.f32 %v3655, %v3675
        %v3696 = vadd.f32 %v3656, %v3676
        %v3697 = vadd.f32 %v3657, %v3677
        %v3698 = vadd.f32 %v3658, %v3678
        %v3699 = vadd.f32 %v3659, %v3679
        %v3700 = vadd.f32 %v3660, %v3680
        %3701 = vst.msk [vmem:[#allocation4] sm:$0xff] %vm360, %v3681
        %3702 = vst.msk [vmem:[#allocation4 + $0x8] sm:$0xff] %vm360, %v3682
        %3703 = vst.msk [vmem:[#allocation4 + $0x10] sm:$0xff] %vm360, %v3683
        %3704 = vst.msk [vmem:[#allocation4 + $0x18] sm:$0xff] %vm360, %v3684
        %3705 = vst.msk [vmem:[#allocation4 + $0x20] sm:$0xff] %vm360, %v3685
        %3706 = vst.msk [vmem:[#allocation4 + $0x28] sm:$0xff] %vm360, %v3686
        %3707 = vst.msk [vmem:[#allocation4 + $0x30] sm:$0xff] %vm360, %v3687
        %3708 = vst.msk [vmem:[#allocation4 + $0x38] sm:$0xff] %vm360, %v3688
        %3709 = vst.msk [vmem:[#allocation4 + $0x40] sm:$0xff] %vm360, %v3689
        %3710 = vst.msk [vmem:[#allocation4 + $0x48] sm:$0xff] %vm360, %v3690
        %3711 = vst.msk [vmem:[#allocation4 + $0x50] sm:$0xff] %vm360, %v3691
        %3712 = vst.msk [vmem:[#allocation4 + $0x58] sm:$0xff] %vm360, %v3692
        %3713 = vst.msk [vmem:[#allocation4 + $0x60] sm:$0xff] %vm360, %v3693
        %3714 = vst.msk [vmem:[#allocation4 + $0x68] sm:$0xff] %vm360, %v3694
        %3715 = vst.msk [vmem:[#allocation4 + $0x70] sm:$0xff] %vm360, %v3695
        %3716 = vst.msk [vmem:[#allocation4 + $0x78] sm:$0xff] %vm360, %v3696
        %3717 = vst.msk [vmem:[#allocation4 + $0x80] sm:$0xff] %vm360, %v3697
        %3718 = vst.msk [vmem:[#allocation4 + $0x88] sm:$0xff] %vm360, %v3698
        %3719 = vst.msk [vmem:[#allocation4 + $0x90] sm:$0xff] %vm360, %v3699
        %3720 = vst.msk [vmem:[#allocation4 + $0x98] sm:$0xff] %vm360, %v3700
        %v3721 = vld [vmem:[#allocation4] sm:$0xff]
        %v3722 = vld [vmem:[#allocation4 + $0x8] sm:$0xff]
        %3723 = vst.msk [vmem:[%s279] sm:$0xff] %vm360, %v3721
        %3724 = vst.msk [vmem:[%s279 + $0x8] sm:$0xff] %vm360, %v3722
        %s3725 = scalar_lea.vmem %s279, 128 [#allocation5]
        %3726 = vst.msk [vmem:[%s3725] sm:$0xff] %vm360, %v3721
        %3727 = vst.msk [vmem:[%s3725 + $0x8] sm:$0xff] %vm360, %v3722
        %s3728 = scalar_lea.vmem %s279, 256 [#allocation5]
        %3729 = vst.msk [vmem:[%s3728] sm:$0xff] %vm360, %v3721
        %3730 = vst.msk [vmem:[%s3728 + $0x8] sm:$0xff] %vm360, %v3722
        %s3731 = scalar_lea.vmem %s279, 384 [#allocation5]
        %3732 = vst.msk [vmem:[%s3731] sm:$0xff] %vm360, %v3721
        %3733 = vst.msk [vmem:[%s3731 + $0x8] sm:$0xff] %vm360, %v3722
        %v3734 = vld [vmem:[#allocation4 + $0x14] sm:$0xff]
        %v3735 = vld [vmem:[#allocation4 + $0x1c] sm:$0xff]
        %s3736 = scalar_lea.vmem %s279, 16 [#allocation5]
        %3737 = vst.msk [vmem:[%s3736] sm:$0xff] %vm360, %v3734
        %3738 = vst.msk [vmem:[%s3736 + $0x8] sm:$0xff] %vm360, %v3735
        %s3739 = scalar_lea.vmem %s279, 144 [#allocation5]
        %3740 = vst.msk [vmem:[%s3739] sm:$0xff] %vm360, %v3734
        %3741 = vst.msk [vmem:[%s3739 + $0x8] sm:$0xff] %vm360, %v3735
        %s3742 = scalar_lea.vmem %s279, 272 [#allocation5]
        %3743 = vst.msk [vmem:[%s3742] sm:$0xff] %vm360, %v3734
        %3744 = vst.msk [vmem:[%s3742 + $0x8] sm:$0xff] %vm360, %v3735
        %s3745 = scalar_lea.vmem %s279, 400 [#allocation5]
        %3746 = vst.msk [vmem:[%s3745] sm:$0xff] %vm360, %v3734
        %3747 = vst.msk [vmem:[%s3745 + $0x8] sm:$0xff] %vm360, %v3735
        %v3748 = vld [vmem:[#allocation4 + $0x28] sm:$0xff]
        %v3749 = vld [vmem:[#allocation4 + $0x30] sm:$0xff]
        %s3750 = scalar_lea.vmem %s279, 32 [#allocation5]
        %3751 = vst.msk [vmem:[%s3750] sm:$0xff] %vm360, %v3748
        %3752 = vst.msk [vmem:[%s3750 + $0x8] sm:$0xff] %vm360, %v3749
        %s3753 = scalar_lea.vmem %s279, 160 [#allocation5]
        %3754 = vst.msk [vmem:[%s3753] sm:$0xff] %vm360, %v3748
        %3755 = vst.msk [vmem:[%s3753 + $0x8] sm:$0xff] %vm360, %v3749
        %s3756 = scalar_lea.vmem %s279, 288 [#allocation5]
        %3757 = vst.msk [vmem:[%s3756] sm:$0xff] %vm360, %v3748
        %3758 = vst.msk [vmem:[%s3756 + $0x8] sm:$0xff] %vm360, %v3749
        %s3759 = scalar_lea.vmem %s279, 416 [#allocation5]
        %3760 = vst.msk [vmem:[%s3759] sm:$0xff] %vm360, %v3748
        %3761 = vst.msk [vmem:[%s3759 + $0x8] sm:$0xff] %vm360, %v3749
        %v3762 = vld [vmem:[#allocation4 + $0x3c] sm:$0xff]
        %v3763 = vld [vmem:[#allocation4 + $0x44] sm:$0xff]
        %s3764 = scalar_lea.vmem %s279, 48 [#allocation5]
        %3765 = vst.msk [vmem:[%s3764] sm:$0xff] %vm360, %v3762
        %3766 = vst.msk [vmem:[%s3764 + $0x8] sm:$0xff] %vm360, %v3763
        %s3767 = scalar_lea.vmem %s279, 176 [#allocation5]
        %3768 = vst.msk [vmem:[%s3767] sm:$0xff] %vm360, %v3762
        %3769 = vst.msk [vmem:[%s3767 + $0x8] sm:$0xff] %vm360, %v3763
        %s3770 = scalar_lea.vmem %s279, 304 [#allocation5]
        %3771 = vst.msk [vmem:[%s3770] sm:$0xff] %vm360, %v3762
        %3772 = vst.msk [vmem:[%s3770 + $0x8] sm:$0xff] %vm360, %v3763
        %s3773 = scalar_lea.vmem %s279, 432 [#allocation5]
        %3774 = vst.msk [vmem:[%s3773] sm:$0xff] %vm360, %v3762
        %3775 = vst.msk [vmem:[%s3773 + $0x8] sm:$0xff] %vm360, %v3763
        %v3776 = vld [vmem:[#allocation4 + $0x50] sm:$0xff]
        %v3777 = vld [vmem:[#allocation4 + $0x58] sm:$0xff]
        %s3778 = scalar_lea.vmem %s279, 64 [#allocation5]
        %3779 = vst.msk [vmem:[%s3778] sm:$0xff] %vm360, %v3776
        %3780 = vst.msk [vmem:[%s3778 + $0x8] sm:$0xff] %vm360, %v3777
        %s3781 = scalar_lea.vmem %s279, 192 [#allocation5]
        %3782 = vst.msk [vmem:[%s3781] sm:$0xff] %vm360, %v3776
        %3783 = vst.msk [vmem:[%s3781 + $0x8] sm:$0xff] %vm360, %v3777
        %s3784 = scalar_lea.vmem %s279, 320 [#allocation5]
        %3785 = vst.msk [vmem:[%s3784] sm:$0xff] %vm360, %v3776
        %3786 = vst.msk [vmem:[%s3784 + $0x8] sm:$0xff] %vm360, %v3777
        %s3787 = scalar_lea.vmem %s279, 448 [#allocation5]
        %3788 = vst.msk [vmem:[%s3787] sm:$0xff] %vm360, %v3776
        %3789 = vst.msk [vmem:[%s3787 + $0x8] sm:$0xff] %vm360, %v3777
        %v3790 = vld [vmem:[#allocation4 + $0x64] sm:$0xff]
        %v3791 = vld [vmem:[#allocation4 + $0x6c] sm:$0xff]
        %s3792 = scalar_lea.vmem %s279, 80 [#allocation5]
        %3793 = vst.msk [vmem:[%s3792] sm:$0xff] %vm360, %v3790
        %3794 = vst.msk [vmem:[%s3792 + $0x8] sm:$0xff] %vm360, %v3791
        %s3795 = scalar_lea.vmem %s279, 208 [#allocation5]
        %3796 = vst.msk [vmem:[%s3795] sm:$0xff] %vm360, %v3790
        %3797 = vst.msk [vmem:[%s3795 + $0x8] sm:$0xff] %vm360, %v3791
        %s3798 = scalar_lea.vmem %s279, 336 [#allocation5]
        %3799 = vst.msk [vmem:[%s3798] sm:$0xff] %vm360, %v3790
        %3800 = vst.msk [vmem:[%s3798 + $0x8] sm:$0xff] %vm360, %v3791
        %s3801 = scalar_lea.vmem %s279, 464 [#allocation5]
        %3802 = vst.msk [vmem:[%s3801] sm:$0xff] %vm360, %v3790
        %3803 = vst.msk [vmem:[%s3801 + $0x8] sm:$0xff] %vm360, %v3791
        %v3804 = vld [vmem:[#allocation4 + $0x78] sm:$0xff]
        %v3805 = vld [vmem:[#allocation4 + $0x80] sm:$0xff]
        %s3806 = scalar_lea.vmem %s279, 96 [#allocation5]
        %3807 = vst.msk [vmem:[%s3806] sm:$0xff] %vm360, %v3804
        %3808 = vst.msk [vmem:[%s3806 + $0x8] sm:$0xff] %vm360, %v3805
        %s3809 = scalar_lea.vmem %s279, 224 [#allocation5]
        %3810 = vst.msk [vmem:[%s3809] sm:$0xff] %vm360, %v3804
        %3811 = vst.msk [vmem:[%s3809 + $0x8] sm:$0xff] %vm360, %v3805
        %s3812 = scalar_lea.vmem %s279, 352 [#allocation5]
        %3813 = vst.msk [vmem:[%s3812] sm:$0xff] %vm360, %v3804
        %3814 = vst.msk [vmem:[%s3812 + $0x8] sm:$0xff] %vm360, %v3805
        %s3815 = scalar_lea.vmem %s279, 480 [#allocation5]
        %3816 = vst.msk [vmem:[%s3815] sm:$0xff] %vm360, %v3804
        %3817 = vst.msk [vmem:[%s3815 + $0x8] sm:$0xff] %vm360, %v3805
        %v3818 = vld [vmem:[#allocation4 + $0x8c] sm:$0xff]
        %v3819 = vld [vmem:[#allocation4 + $0x94] sm:$0xff]
        %s3820 = scalar_lea.vmem %s279, 112 [#allocation5]
        %3821 = vst.msk [vmem:[%s3820] sm:$0xff] %vm360, %v3818
        %3822 = vst.msk [vmem:[%s3820 + $0x8] sm:$0xff] %vm360, %v3819
        %s3823 = scalar_lea.vmem %s279, 240 [#allocation5]
        %3824 = vst.msk [vmem:[%s3823] sm:$0xff] %vm360, %v3818
        %3825 = vst.msk [vmem:[%s3823 + $0x8] sm:$0xff] %vm360, %v3819
        %s3826 = scalar_lea.vmem %s279, 368 [#allocation5]
        %3827 = vst.msk [vmem:[%s3826] sm:$0xff] %vm360, %v3818
        %3828 = vst.msk [vmem:[%s3826 + $0x8] sm:$0xff] %vm360, %v3819
        %s3829 = scalar_lea.vmem %s279, 496 [#allocation5]
        %3830 = vst.msk [vmem:[%s3829] sm:$0xff] %vm360, %v3818
        %3831 = vst.msk [vmem:[%s3829 + $0x8] sm:$0xff] %vm360, %v3819
        %s3832 = sand.u32 %s177, 1
        %s3833 = sand.u32 %s177, 1
        %s3834 = smul.addr %s3833, 512
        %s3835 = scalar_lea.vmem [#allocation5], %s3834
        // Predicated region
        $region45: #{_lambda_.3} parent=43 // pred_check
          %p3836 = pneg %p187
        $region46: #{_lambda_.3} parent=43 // pred_check_branch
          %3838 = sbr.rel (%p3836) target = $region48
        $region47: #{_lambda_.3} parent=43 // pred_region
          %s3839 = smul.u32 8, %s22
          %s3840 = smul.addr %s3839, 2
          %s3841 = smul.addr %s21, 128
          %s3842 = sadd.s32 %s3840, %s3841
          %s3843 = smul.addr %s3842, 8
          %s3844 = scalar_lea.vmem %s6, %s3843
          // Predicated region
          $region49: #{_lambda_.3} parent=47 // pred_check
            _
          $region50: #{_lambda_.3} parent=47 // pred_check_branch
            %3846 = sbr.rel (0) target = $region52
          $region51: #{_lambda_.3} parent=47 // pred_region
            // Predicated region
            $region53: #{_lambda_.3} parent=51 // pred_check
              _
            $region54: #{_lambda_.3} parent=51 // pred_check_branch
              %3848 = sbr.rel (0) target = $region56
            $region55: #{_lambda_.3} parent=51 // pred_region
              // Predicated region
              $region68: #{_lambda_.3} parent=55 // pred_check
                _
              $region69: #{_lambda_.3} parent=55 // pred_check_branch
                %3990 = sbr.rel (0) target = $region71
              $region70: #{_lambda_.3} parent=55 // pred_region
                loop: start=0, step=1, limit=1
                $region72: #{_lambda_.3} parent=70 // loop_pre_header
                  _
                $region73: #{_lambda_.3} parent=70 // loop_header
                  %s3992 = sphi 0, %s3996
                  %p3993 = scmp.ge.s32.totalorder %s3992, 1
                  %s3997 = sphi %s3835, %s3835
                  %s3998 = sphi %s3844, %s3844
                $region74: #{_lambda_.3} parent=70 // loop_header_branch
                  %3995 = sbr.rel (%p3993) target = $region78
                $region75: #{_lambda_.3} parent=70 // loop_body
                  %v3999 = vld [vmem:[%s3997] sm:$0xff]
                  %4000 = vst [vmem:[%s3998] sm:$0xff] %v3999
                  %v4001 = vld [vmem:[%s3997 + $0x8] sm:$0xff]
                  %4002 = vst [vmem:[%s3998 + $0x8] sm:$0xff] %v4001
                  %v4003 = vld [vmem:[%s3997 + $0x10] sm:$0xff]
                  %4004 = vst [vmem:[%s3998 + $0x10] sm:$0xff] %v4003
                  %v4005 = vld [vmem:[%s3997 + $0x18] sm:$0xff]
                  %4006 = vst [vmem:[%s3998 + $0x18] sm:$0xff] %v4005
                  %v4007 = vld [vmem:[%s3997 + $0x20] sm:$0xff]
                  %4008 = vst [vmem:[%s3998 + $0x20] sm:$0xff] %v4007
                  %v4009 = vld [vmem:[%s3997 + $0x28] sm:$0xff]
                  %4010 = vst [vmem:[%s3998 + $0x28] sm:$0xff] %v4009
                  %v4011 = vld [vmem:[%s3997 + $0x30] sm:$0xff]
                  %4012 = vst [vmem:[%s3998 + $0x30] sm:$0xff] %v4011
                  %v4013 = vld [vmem:[%s3997 + $0x38] sm:$0xff]
                  %4014 = vst [vmem:[%s3998 + $0x38] sm:$0xff] %v4013
                  %v4015 = vld [vmem:[%s3997 + $0x40] sm:$0xff]
                  %4016 = vst [vmem:[%s3998 + $0x40] sm:$0xff] %v4015
                  %v4017 = vld [vmem:[%s3997 + $0x48] sm:$0xff]
                  %4018 = vst [vmem:[%s3998 + $0x48] sm:$0xff] %v4017
                  %v4019 = vld [vmem:[%s3997 + $0x50] sm:$0xff]
                  %4020 = vst [vmem:[%s3998 + $0x50] sm:$0xff] %v4019
                  %v4021 = vld [vmem:[%s3997 + $0x58] sm:$0xff]
                  %4022 = vst [vmem:[%s3998 + $0x58] sm:$0xff] %v4021
                  %v4023 = vld [vmem:[%s3997 + $0x60] sm:$0xff]
                  %4024 = vst [vmem:[%s3998 + $0x60] sm:$0xff] %v4023
                  %v4025 = vld [vmem:[%s3997 + $0x68] sm:$0xff]
                  %4026 = vst [vmem:[%s3998 + $0x68] sm:$0xff] %v4025
                  %v4027 = vld [vmem:[%s3997 + $0x70] sm:$0xff]
                  %4028 = vst [vmem:[%s3998 + $0x70] sm:$0xff] %v4027
                  %v4029 = vld [vmem:[%s3997 + $0x78] sm:$0xff]
                  %4030 = vst [vmem:[%s3998 + $0x78] sm:$0xff] %v4029
                  %v4031 = vld [vmem:[%s3997 + $0x80] sm:$0xff]
                  %4032 = vst [vmem:[%s3998 + $0x100] sm:$0xff] %v4031
                  %v4033 = vld [vmem:[%s3997 + $0x88] sm:$0xff]
                  %4034 = vst [vmem:[%s3998 + $0x108] sm:$0xff] %v4033
                  %v4035 = vld [vmem:[%s3997 + $0x90] sm:$0xff]
                  %4036 = vst [vmem:[%s3998 + $0x110] sm:$0xff] %v4035
                  %v4037 = vld [vmem:[%s3997 + $0x98] sm:$0xff]
                  %4038 = vst [vmem:[%s3998 + $0x118] sm:$0xff] %v4037
                  %v4039 = vld [vmem:[%s3997 + $0xa0] sm:$0xff]
                  %4040 = vst [vmem:[%s3998 + $0x120] sm:$0xff] %v4039
                  %v4041 = vld [vmem:[%s3997 + $0xa8] sm:$0xff]
                  %4042 = vst [vmem:[%s3998 + $0x128] sm:$0xff] %v4041
                  %v4043 = vld [vmem:[%s3997 + $0xb0] sm:$0xff]
                  %4044 = vst [vmem:[%s3998 + $0x130] sm:$0xff] %v4043
                  %v4045 = vld [vmem:[%s3997 + $0xb8] sm:$0xff]
                  %4046 = vst [vmem:[%s3998 + $0x138] sm:$0xff] %v4045
                  %v4047 = vld [vmem:[%s3997 + $0xc0] sm:$0xff]
                  %4048 = vst [vmem:[%s3998 + $0x140] sm:$0xff] %v4047
                  %v4049 = vld [vmem:[%s3997 + $0xc8] sm:$0xff]
                  %4050 = vst [vmem:[%s3998 + $0x148] sm:$0xff] %v4049
                  %v4051 = vld [vmem:[%s3997 + $0xd0] sm:$0xff]
                  %4052 = vst [vmem:[%s3998 + $0x150] sm:$0xff] %v4051
                  %v4053 = vld [vmem:[%s3997 + $0xd8] sm:$0xff]
                  %4054 = vst [vmem:[%s3998 + $0x158] sm:$0xff] %v4053
                  %v4055 = vld [vmem:[%s3997 + $0xe0] sm:$0xff]
                  %4056 = vst [vmem:[%s3998 + $0x160] sm:$0xff] %v4055
                  %v4057 = vld [vmem:[%s3997 + $0xe8] sm:$0xff]
                  %4058 = vst [vmem:[%s3998 + $0x168] sm:$0xff] %v4057
                  %v4059 = vld [vmem:[%s3997 + $0xf0] sm:$0xff]
                  %4060 = vst [vmem:[%s3998 + $0x170] sm:$0xff] %v4059
                  %v4061 = vld [vmem:[%s3997 + $0xf8] sm:$0xff]
                  %4062 = vst [vmem:[%s3998 + $0x178] sm:$0xff] %v4061
                  %v4063 = vld [vmem:[%s3997 + $0x100] sm:$0xff]
                  %4064 = vst [vmem:[%s3998 + $0x200] sm:$0xff] %v4063
                  %v4065 = vld [vmem:[%s3997 + $0x108] sm:$0xff]
                  %4066 = vst [vmem:[%s3998 + $0x208] sm:$0xff] %v4065
                  %v4067 = vld [vmem:[%s3997 + $0x110] sm:$0xff]
                  %4068 = vst [vmem:[%s3998 + $0x210] sm:$0xff] %v4067
                  %v4069 = vld [vmem:[%s3997 + $0x118] sm:$0xff]
                  %4070 = vst [vmem:[%s3998 + $0x218] sm:$0xff] %v4069
                  %v4071 = vld [vmem:[%s3997 + $0x120] sm:$0xff]
                  %4072 = vst [vmem:[%s3998 + $0x220] sm:$0xff] %v4071
                  %v4073 = vld [vmem:[%s3997 + $0x128] sm:$0xff]
                  %4074 = vst [vmem:[%s3998 + $0x228] sm:$0xff] %v4073
                  %v4075 = vld [vmem:[%s3997 + $0x130] sm:$0xff]
                  %4076 = vst [vmem:[%s3998 + $0x230] sm:$0xff] %v4075
                  %v4077 = vld [vmem:[%s3997 + $0x138] sm:$0xff]
                  %4078 = vst [vmem:[%s3998 + $0x238] sm:$0xff] %v4077
                  %v4079 = vld [vmem:[%s3997 + $0x140] sm:$0xff]
                  %4080 = vst [vmem:[%s3998 + $0x240] sm:$0xff] %v4079
                  %v4081 = vld [vmem:[%s3997 + $0x148] sm:$0xff]
                  %4082 = vst [vmem:[%s3998 + $0x248] sm:$0xff] %v4081
                  %v4083 = vld [vmem:[%s3997 + $0x150] sm:$0xff]
                  %4084 = vst [vmem:[%s3998 + $0x250] sm:$0xff] %v4083
                  %v4085 = vld [vmem:[%s3997 + $0x158] sm:$0xff]
                  %4086 = vst [vmem:[%s3998 + $0x258] sm:$0xff] %v4085
                  %v4087 = vld [vmem:[%s3997 + $0x160] sm:$0xff]
                  %4088 = vst [vmem:[%s3998 + $0x260] sm:$0xff] %v4087
                  %v4089 = vld [vmem:[%s3997 + $0x168] sm:$0xff]
                  %4090 = vst [vmem:[%s3998 + $0x268] sm:$0xff] %v4089
                  %v4091 = vld [vmem:[%s3997 + $0x170] sm:$0xff]
                  %4092 = vst [vmem:[%s3998 + $0x270] sm:$0xff] %v4091
                  %v4093 = vld [vmem:[%s3997 + $0x178] sm:$0xff]
                  %4094 = vst [vmem:[%s3998 + $0x278] sm:$0xff] %v4093
                  %v4095 = vld [vmem:[%s3997 + $0x180] sm:$0xff]
                  %4096 = vst [vmem:[%s3998 + $0x300] sm:$0xff] %v4095
                  %v4097 = vld [vmem:[%s3997 + $0x188] sm:$0xff]
                  %4098 = vst [vmem:[%s3998 + $0x308] sm:$0xff] %v4097
                  %v4099 = vld [vmem:[%s3997 + $0x190] sm:$0xff]
                  %4100 = vst [vmem:[%s3998 + $0x310] sm:$0xff] %v4099
                  %v4101 = vld [vmem:[%s3997 + $0x198] sm:$0xff]
                  %4102 = vst [vmem:[%s3998 + $0x318] sm:$0xff] %v4101
                  %v4103 = vld [vmem:[%s3997 + $0x1a0] sm:$0xff]
                  %4104 = vst [vmem:[%s3998 + $0x320] sm:$0xff] %v4103
                  %v4105 = vld [vmem:[%s3997 + $0x1a8] sm:$0xff]
                  %4106 = vst [vmem:[%s3998 + $0x328] sm:$0xff] %v4105
                  %v4107 = vld [vmem:[%s3997 + $0x1b0] sm:$0xff]
                  %4108 = vst [vmem:[%s3998 + $0x330] sm:$0xff] %v4107
                  %v4109 = vld [vmem:[%s3997 + $0x1b8] sm:$0xff]
                  %4110 = vst [vmem:[%s3998 + $0x338] sm:$0xff] %v4109
                  %v4111 = vld [vmem:[%s3997 + $0x1c0] sm:$0xff]
                  %4112 = vst [vmem:[%s3998 + $0x340] sm:$0xff] %v4111
                  %v4113 = vld [vmem:[%s3997 + $0x1c8] sm:$0xff]
                  %4114 = vst [vmem:[%s3998 + $0x348] sm:$0xff] %v4113
                  %v4115 = vld [vmem:[%s3997 + $0x1d0] sm:$0xff]
                  %4116 = vst [vmem:[%s3998 + $0x350] sm:$0xff] %v4115
                  %v4117 = vld [vmem:[%s3997 + $0x1d8] sm:$0xff]
                  %4118 = vst [vmem:[%s3998 + $0x358] sm:$0xff] %v4117
                  %v4119 = vld [vmem:[%s3997 + $0x1e0] sm:$0xff]
                  %4120 = vst [vmem:[%s3998 + $0x360] sm:$0xff] %v4119
                  %v4121 = vld [vmem:[%s3997 + $0x1e8] sm:$0xff]
                  %4122 = vst [vmem:[%s3998 + $0x368] sm:$0xff] %v4121
                  %v4123 = vld [vmem:[%s3997 + $0x1f0] sm:$0xff]
                  %4124 = vst [vmem:[%s3998 + $0x370] sm:$0xff] %v4123
                  %v4125 = vld [vmem:[%s3997 + $0x1f8] sm:$0xff]
                  %4126 = vst [vmem:[%s3998 + $0x378] sm:$0xff] %v4125
                $region76: #{_lambda_.3} parent=70 // loop_footer
                  %s3996 = sadd.s32 1, %s3992
                $region77: #{_lambda_.3} parent=70 // loop_footer_branch
                  %3991 = sbr.rel target = $region73
                $region78: #{_lambda_.3} parent=70 // loop_exit
                  _
              $region71: #{_lambda_.3} parent=55 // pred_fallthru
                _
              // Predicated region
              $region79: #{_lambda_.3} parent=55 // pred_check
                _
              $region80: #{_lambda_.3} parent=55 // pred_check_branch
                %4128 = sbr.rel target = $region82
              $region81: #{_lambda_.3} parent=55 // pred_region
                _
              $region82: #{_lambda_.3} parent=55 // pred_fallthru
                _
            $region56: #{_lambda_.3} parent=51 // pred_fallthru
              _
            // Predicated region
            $region57: #{_lambda_.3} parent=51 // pred_check
              _
            $region58: #{_lambda_.3} parent=51 // pred_check_branch
              %3850 = sbr.rel target = $region60
            $region59: #{_lambda_.3} parent=51 // pred_region
              %s3852 = ssub.s32 256, 1
              loop: start=0, step=1, limit=1
              $region61: #{_lambda_.3} parent=59 // loop_pre_header
                _
              $region62: #{_lambda_.3} parent=59 // loop_header
                %s3854 = sphi 0, %s3858
                %p3855 = scmp.ge.s32.totalorder %s3854, 1
                %s3859 = sphi %s3835, %s3835
                %s3860 = sphi %s3844, %s3844
              $region63: #{_lambda_.3} parent=59 // loop_header_branch
                %3857 = sbr.rel (%p3855) target = $region67
              $region64: #{_lambda_.3} parent=59 // loop_body
                %v3861 = vld [vmem:[%s3859] sm:%s3852]
                %3862 = vst [vmem:[%s3860] sm:%s3852] %v3861
                %v3863 = vld [vmem:[%s3859 + $0x8] sm:%s3852]
                %3864 = vst [vmem:[%s3860 + $0x8] sm:%s3852] %v3863
                %v3865 = vld [vmem:[%s3859 + $0x10] sm:%s3852]
                %3866 = vst [vmem:[%s3860 + $0x10] sm:%s3852] %v3865
                %v3867 = vld [vmem:[%s3859 + $0x18] sm:%s3852]
                %3868 = vst [vmem:[%s3860 + $0x18] sm:%s3852] %v3867
                %v3869 = vld [vmem:[%s3859 + $0x20] sm:%s3852]
                %3870 = vst [vmem:[%s3860 + $0x20] sm:%s3852] %v3869
                %v3871 = vld [vmem:[%s3859 + $0x28] sm:%s3852]
                %3872 = vst [vmem:[%s3860 + $0x28] sm:%s3852] %v3871
                %v3873 = vld [vmem:[%s3859 + $0x30] sm:%s3852]
                %3874 = vst [vmem:[%s3860 + $0x30] sm:%s3852] %v3873
                %v3875 = vld [vmem:[%s3859 + $0x38] sm:%s3852]
                %3876 = vst [vmem:[%s3860 + $0x38] sm:%s3852] %v3875
                %v3877 = vld [vmem:[%s3859 + $0x40] sm:%s3852]
                %3878 = vst [vmem:[%s3860 + $0x40] sm:%s3852] %v3877
                %v3879 = vld [vmem:[%s3859 + $0x48] sm:%s3852]
                %3880 = vst [vmem:[%s3860 + $0x48] sm:%s3852] %v3879
                %v3881 = vld [vmem:[%s3859 + $0x50] sm:%s3852]
                %3882 = vst [vmem:[%s3860 + $0x50] sm:%s3852] %v3881
                %v3883 = vld [vmem:[%s3859 + $0x58] sm:%s3852]
                %3884 = vst [vmem:[%s3860 + $0x58] sm:%s3852] %v3883
                %v3885 = vld [vmem:[%s3859 + $0x60] sm:%s3852]
                %3886 = vst [vmem:[%s3860 + $0x60] sm:%s3852] %v3885
                %v3887 = vld [vmem:[%s3859 + $0x68] sm:%s3852]
                %3888 = vst [vmem:[%s3860 + $0x68] sm:%s3852] %v3887
                %v3889 = vld [vmem:[%s3859 + $0x70] sm:%s3852]
                %3890 = vst [vmem:[%s3860 + $0x70] sm:%s3852] %v3889
                %v3891 = vld [vmem:[%s3859 + $0x78] sm:%s3852]
                %3892 = vst [vmem:[%s3860 + $0x78] sm:%s3852] %v3891
                %v3893 = vld [vmem:[%s3859 + $0x80] sm:%s3852]
                %3894 = vst [vmem:[%s3860 + $0x100] sm:%s3852] %v3893
                %v3895 = vld [vmem:[%s3859 + $0x88] sm:%s3852]
                %3896 = vst [vmem:[%s3860 + $0x108] sm:%s3852] %v3895
                %v3897 = vld [vmem:[%s3859 + $0x90] sm:%s3852]
                %3898 = vst [vmem:[%s3860 + $0x110] sm:%s3852] %v3897
                %v3899 = vld [vmem:[%s3859 + $0x98] sm:%s3852]
                %3900 = vst [vmem:[%s3860 + $0x118] sm:%s3852] %v3899
                %v3901 = vld [vmem:[%s3859 + $0xa0] sm:%s3852]
                %3902 = vst [vmem:[%s3860 + $0x120] sm:%s3852] %v3901
                %v3903 = vld [vmem:[%s3859 + $0xa8] sm:%s3852]
                %3904 = vst [vmem:[%s3860 + $0x128] sm:%s3852] %v3903
                %v3905 = vld [vmem:[%s3859 + $0xb0] sm:%s3852]
                %3906 = vst [vmem:[%s3860 + $0x130] sm:%s3852] %v3905
                %v3907 = vld [vmem:[%s3859 + $0xb8] sm:%s3852]
                %3908 = vst [vmem:[%s3860 + $0x138] sm:%s3852] %v3907
                %v3909 = vld [vmem:[%s3859 + $0xc0] sm:%s3852]
                %3910 = vst [vmem:[%s3860 + $0x140] sm:%s3852] %v3909
                %v3911 = vld [vmem:[%s3859 + $0xc8] sm:%s3852]
                %3912 = vst [vmem:[%s3860 + $0x148] sm:%s3852] %v3911
                %v3913 = vld [vmem:[%s3859 + $0xd0] sm:%s3852]
                %3914 = vst [vmem:[%s3860 + $0x150] sm:%s3852] %v3913
                %v3915 = vld [vmem:[%s3859 + $0xd8] sm:%s3852]
                %3916 = vst [vmem:[%s3860 + $0x158] sm:%s3852] %v3915
                %v3917 = vld [vmem:[%s3859 + $0xe0] sm:%s3852]
                %3918 = vst [vmem:[%s3860 + $0x160] sm:%s3852] %v3917
                %v3919 = vld [vmem:[%s3859 + $0xe8] sm:%s3852]
                %3920 = vst [vmem:[%s3860 + $0x168] sm:%s3852] %v3919
                %v3921 = vld [vmem:[%s3859 + $0xf0] sm:%s3852]
                %3922 = vst [vmem:[%s3860 + $0x170] sm:%s3852] %v3921
                %v3923 = vld [vmem:[%s3859 + $0xf8] sm:%s3852]
                %3924 = vst [vmem:[%s3860 + $0x178] sm:%s3852] %v3923
                %v3925 = vld [vmem:[%s3859 + $0x100] sm:%s3852]
                %3926 = vst [vmem:[%s3860 + $0x200] sm:%s3852] %v3925
                %v3927 = vld [vmem:[%s3859 + $0x108] sm:%s3852]
                %3928 = vst [vmem:[%s3860 + $0x208] sm:%s3852] %v3927
                %v3929 = vld [vmem:[%s3859 + $0x110] sm:%s3852]
                %3930 = vst [vmem:[%s3860 + $0x210] sm:%s3852] %v3929
                %v3931 = vld [vmem:[%s3859 + $0x118] sm:%s3852]
                %3932 = vst [vmem:[%s3860 + $0x218] sm:%s3852] %v3931
                %v3933 = vld [vmem:[%s3859 + $0x120] sm:%s3852]
                %3934 = vst [vmem:[%s3860 + $0x220] sm:%s3852] %v3933
                %v3935 = vld [vmem:[%s3859 + $0x128] sm:%s3852]
                %3936 = vst [vmem:[%s3860 + $0x228] sm:%s3852] %v3935
                %v3937 = vld [vmem:[%s3859 + $0x130] sm:%s3852]
                %3938 = vst [vmem:[%s3860 + $0x230] sm:%s3852] %v3937
                %v3939 = vld [vmem:[%s3859 + $0x138] sm:%s3852]
                %3940 = vst [vmem:[%s3860 + $0x238] sm:%s3852] %v3939
                %v3941 = vld [vmem:[%s3859 + $0x140] sm:%s3852]
                %3942 = vst [vmem:[%s3860 + $0x240] sm:%s3852] %v3941
                %v3943 = vld [vmem:[%s3859 + $0x148] sm:%s3852]
                %3944 = vst [vmem:[%s3860 + $0x248] sm:%s3852] %v3943
                %v3945 = vld [vmem:[%s3859 + $0x150] sm:%s3852]
                %3946 = vst [vmem:[%s3860 + $0x250] sm:%s3852] %v3945
                %v3947 = vld [vmem:[%s3859 + $0x158] sm:%s3852]
                %3948 = vst [vmem:[%s3860 + $0x258] sm:%s3852] %v3947
                %v3949 = vld [vmem:[%s3859 + $0x160] sm:%s3852]
                %3950 = vst [vmem:[%s3860 + $0x260] sm:%s3852] %v3949
                %v3951 = vld [vmem:[%s3859 + $0x168] sm:%s3852]
                %3952 = vst [vmem:[%s3860 + $0x268] sm:%s3852] %v3951
                %v3953 = vld [vmem:[%s3859 + $0x170] sm:%s3852]
                %3954 = vst [vmem:[%s3860 + $0x270] sm:%s3852] %v3953
                %v3955 = vld [vmem:[%s3859 + $0x178] sm:%s3852]
                %3956 = vst [vmem:[%s3860 + $0x278] sm:%s3852] %v3955
                %v3957 = vld [vmem:[%s3859 + $0x180] sm:%s3852]
                %3958 = vst [vmem:[%s3860 + $0x300] sm:%s3852] %v3957
                %v3959 = vld [vmem:[%s3859 + $0x188] sm:%s3852]
                %3960 = vst [vmem:[%s3860 + $0x308] sm:%s3852] %v3959
                %v3961 = vld [vmem:[%s3859 + $0x190] sm:%s3852]
                %3962 = vst [vmem:[%s3860 + $0x310] sm:%s3852] %v3961
                %v3963 = vld [vmem:[%s3859 + $0x198] sm:%s3852]
                %3964 = vst [vmem:[%s3860 + $0x318] sm:%s3852] %v3963
                %v3965 = vld [vmem:[%s3859 + $0x1a0] sm:%s3852]
                %3966 = vst [vmem:[%s3860 + $0x320] sm:%s3852] %v3965
                %v3967 = vld [vmem:[%s3859 + $0x1a8] sm:%s3852]
                %3968 = vst [vmem:[%s3860 + $0x328] sm:%s3852] %v3967
                %v3969 = vld [vmem:[%s3859 + $0x1b0] sm:%s3852]
                %3970 = vst [vmem:[%s3860 + $0x330] sm:%s3852] %v3969
                %v3971 = vld [vmem:[%s3859 + $0x1b8] sm:%s3852]
                %3972 = vst [vmem:[%s3860 + $0x338] sm:%s3852] %v3971
                %v3973 = vld [vmem:[%s3859 + $0x1c0] sm:%s3852]
                %3974 = vst [vmem:[%s3860 + $0x340] sm:%s3852] %v3973
                %v3975 = vld [vmem:[%s3859 + $0x1c8] sm:%s3852]
                %3976 = vst [vmem:[%s3860 + $0x348] sm:%s3852] %v3975
                %v3977 = vld [vmem:[%s3859 + $0x1d0] sm:%s3852]
                %3978 = vst [vmem:[%s3860 + $0x350] sm:%s3852] %v3977
                %v3979 = vld [vmem:[%s3859 + $0x1d8] sm:%s3852]
                %3980 = vst [vmem:[%s3860 + $0x358] sm:%s3852] %v3979
                %v3981 = vld [vmem:[%s3859 + $0x1e0] sm:%s3852]
                %3982 = vst [vmem:[%s3860 + $0x360] sm:%s3852] %v3981
                %v3983 = vld [vmem:[%s3859 + $0x1e8] sm:%s3852]
                %3984 = vst [vmem:[%s3860 + $0x368] sm:%s3852] %v3983
                %v3985 = vld [vmem:[%s3859 + $0x1f0] sm:%s3852]
                %3986 = vst [vmem:[%s3860 + $0x370] sm:%s3852] %v3985
                %v3987 = vld [vmem:[%s3859 + $0x1f8] sm:%s3852]
                %3988 = vst [vmem:[%s3860 + $0x378] sm:%s3852] %v3987
              $region65: #{_lambda_.3} parent=59 // loop_footer
                %s3858 = sadd.s32 1, %s3854
              $region66: #{_lambda_.3} parent=59 // loop_footer_branch
                %3853 = sbr.rel target = $region62
              $region67: #{_lambda_.3} parent=59 // loop_exit
                _
            $region60: #{_lambda_.3} parent=51 // pred_fallthru
              _
          $region52: #{_lambda_.3} parent=47 // pred_fallthru
            _
          %4129 = vnop
        $region48: #{_lambda_.3} parent=43 // pred_fallthru
          _
      $region44: #{_lambda_.3} parent=5 // pred_fallthru
        _
      %p4130 = scmp.le.s32.totalorder 2, %s12
      // Predicated region
      $region83: #{_lambda_.3} parent=5 // pred_check
        %p4131 = pneg %p4130
      $region84: #{_lambda_.3} parent=5 // pred_check_branch
        %4133 = sbr.rel (%p4131) target = $region86
      $region85: #{_lambda_.3} parent=5 // pred_region
        %s4134 = ssub.s32 %s12, 2
        // Predicated region
        $region87: #{_lambda_.3} parent=85 // pred_check
          %p4135 = pneg %p193
        $region88: #{_lambda_.3} parent=85 // pred_check_branch
          %4137 = sbr.rel (%p4135) target = $region90
        $region89: #{_lambda_.3} parent=85 // pred_region
          %s4138 = sand.u32 %s178, 1
          %s4139 = sand.u32 %s178, 1
          %s4140 = smul.addr %s4139, 512
          %s4141 = scalar_lea.vmem [#allocation5], %s4140
        $region90: #{_lambda_.3} parent=85 // pred_fallthru
          _
      $region86: #{_lambda_.3} parent=5 // pred_fallthru
        _
    $region6: #{_lambda_.3} parent=1 // loop_footer
      %s16 = sadd.s32 1, %s12
    $region7: #{_lambda_.3} parent=1 // loop_footer_branch
      %11 = sbr.rel target = $region3
    $region8: #{_lambda_.3} parent=1 // loop_exit
      _

</llo_original>
